<compile_context>
chip_gen: v5e
topology: v5e:2x2
jax: 0.10.0
libtpu: 0.0.40
codegen_flags: <defaults>
</compile_context>

<pallas_src>
import math

import jax
import jax.numpy as jnp
from jax.experimental import pallas as pl
from jax.experimental.pallas import tpu as pltpu

# ----------------------------- config (small, lane-dense shapes) -----------------------------
B = 2                      # batch of images
C_IN = 3                   # image channels
IMG = 16                   # image resolution
PATCH = 8                  # patch size -> 2x2 = 4 patches
P = (IMG // PATCH) ** 2    # patches per image
S_VIS = P + 1              # vision tokens (cls + patches)
CPP = C_IN * PATCH * PATCH # flattened patch dim

NUM_RANKS = 5              # ordinal ranks (text "classes")
SEQ = 8                    # text sequence length

D = 128                    # transformer width (lane-dense: multiple of 128)
EMBED = 128                # joint embedding dim
MLP = 4 * D
H_VIS, L_VIS = 4, 1
H_TXT, L_TXT = 4, 2

F32 = jnp.float32
BF16 = jnp.bfloat16
NEG_INF = -1e30

VMEM = pl.BlockSpec(memory_space=pltpu.MemorySpace.VMEM)

BLOCK_KEYS = ("ln1_g", "ln1_b", "qkv_w", "qkv_b", "out_w", "out_b",
              "ln2_g", "ln2_b", "fc_w", "fc_b", "proj_w", "proj_b")


# ----------------------------- in-kernel helpers (pure jnp, traced inside kernels) -----------
def _mm(a, b):
    # MXU matmul: bf16 operands, f32 accumulation (native bf16 path on v5e/v6e/v7x).
    return jnp.dot(a.astype(BF16), b.astype(BF16), preferred_element_type=F32)


def _layernorm(x, g, b):
    mu = jnp.mean(x, axis=-1, keepdims=True)
    var = jnp.mean(jnp.square(x - mu), axis=-1, keepdims=True)
    return (x - mu) * jax.lax.rsqrt(var + 1e-5) * g + b


def _softmax(s):
    # f32 score path (mask already added in f32); EUP approx reciprocal for the denom.
    s = s - jnp.max(s, axis=-1, keepdims=True)
    p = jnp.exp(s)
    return p * pl.reciprocal(jnp.sum(p, axis=-1, keepdims=True), approx=True)


def _l2norm(x):
    # eps guards against zero feature vectors (review correctness note).
    return x * jax.lax.rsqrt(jnp.sum(x * x, axis=-1, keepdims=True) + 1e-12)


def _resblock(x, bias, layer, n_heads, blk):
    """One CLIP residual attention block, fully fused. x: (N, D) f32; bias: (N, N) additive."""
    (ln1_g, ln1_b, qkv_w, qkv_b, out_w, out_b,
     ln2_g, ln2_b, fc_w, fc_b, proj_w, proj_b) = blk
    dh = D // n_heads
    scale = 1.0 / math.sqrt(dh)

    h = _layernorm(x, ln1_g[layer], ln1_b[layer])
    attn = jnp.zeros_like(x)
    for head in range(n_heads):                       # static unroll; leading-dim ref slices only
        q = _mm(h, qkv_w[layer, 0, head]) + qkv_b[layer, 0, head]   # (N, Dh)
        k = _mm(h, qkv_w[layer, 1, head]) + qkv_b[layer, 1, head]
        v = _mm(h, qkv_w[layer, 2, head]) + qkv_b[layer, 2, head]
        s = _mm(q, k.T) * scale + bias                # (N, N), block-diag (+causal) mask
        p = _softmax(s)
        attn = attn + _mm(_mm(p, v), out_w[layer, head])            # head merge == sum of per-head proj
    x = x + attn + out_b[layer]

    h = _layernorm(x, ln2_g[layer], ln2_b[layer])
    h = _mm(h, fc_w[layer]) + fc_b[layer]
    h = h * jax.nn.sigmoid(1.702 * h)                 # QuickGELU (f32, VPU)
    return x + _mm(h, proj_w[layer]) + proj_b[layer]


# ----------------------------- fused kernels -----------------------------
def text_encoder_kernel(x_ref, pos_ref, bias_ref, eot_ref,
                        ln1_g, ln1_b, qkv_w, qkv_b, out_w, out_b,
                        ln2_g, ln2_b, fc_w, fc_b, proj_w, proj_b,
                        lnf_g, lnf_b, tproj_ref,
                        txt_out):
    blk = (ln1_g, ln1_b, qkv_w, qkv_b, out_w, out_b,
           ln2_g, ln2_b, fc_w, fc_b, proj_w, proj_b)
    x = x_ref[...].astype(F32) + pos_ref[...].astype(F32)          # (R*S, D)
    bias = bias_ref[...].astype(F32)                               # (R*S, R*S)
    for layer in range(L_TXT):
        x = _resblock(x, bias, layer, H_TXT, blk)
    x = _layernorm(x, lnf_g[...], lnf_b[...])
    # EOT gather via one-hot matmul (exact f32), then text projection + L2 normalize.
    x_eot = jnp.dot(eot_ref[...], x, preferred_element_type=F32)   # (R, D)
    txt = _mm(x_eot, tproj_ref[...])                               # (R, EMBED)
    txt_out[...] = _l2norm(txt).astype(txt_out.dtype)


def image_logits_kernel(patch_ref, posbias_ref, bias_ref, patch_w_ref,
                        lnpre_g, lnpre_b,
                        ln1_g, ln1_b, qkv_w, qkv_b, out_w, out_b,
                        ln2_g, ln2_b, fc_w, fc_b, proj_w, proj_b,
                        lnpost_g, lnpost_b, vproj_ref,
                        txt_ref, ls_ref,
                        logits_out, img_out):
    blk = (ln1_g, ln1_b, qkv_w, qkv_b, out_w, out_b,
           ln2_g, ln2_b, fc_w, fc_b, proj_w, proj_b)
    # patch_ref has a zero row per image at the cls slot; posbias folds cls_emb + pos_emb.
    x = _mm(patch_ref[...], patch_w_ref[...]) + posbias_ref[...].astype(F32)   # (B*S_VIS, D)
    x = _layernorm(x, lnpre_g[...], lnpre_b[...])
    bias = bias_ref[...].astype(F32)                                           # (B*S_VIS, B*S_VIS)
    for layer in range(L_VIS):
        x = _resblock(x, bias, layer, H_VIS, blk)
    # select the cls-token row of each image via a one-hot matmul (no sublane slicing).
    ri = jax.lax.broadcasted_iota(jnp.int32, (B, B * S_VIS), 0)
    ci = jax.lax.broadcasted_iota(jnp.int32, (B, B * S_VIS), 1)
    sel = (ci == ri * S_VIS).astype(F32)
    cls_tok = jnp.dot(sel, x, preferred_element_type=F32)                      # (B, D)
    cls_tok = _layernorm(cls_tok, lnpost_g[...], lnpost_b[...])
    img_n = _l2norm(_mm(cls_tok, vproj_ref[...]))                              # (B, EMBED)
    txt_n = txt_ref[...].astype(F32)                                           # (R, EMBED), pre-normalized
    scale = jnp.exp(ls_ref[0, 0])
    logits_out[...] = (scale * jnp.dot(img_n, txt_n.T,
                                       preferred_element_type=F32)).astype(logits_out.dtype)
    img_out[...] = img_n.astype(img_out.dtype)


# ----------------------------- pallas_call wrappers (no grid: whole arrays in VMEM) ----------
def _block_args(blocks):
    return tuple(blocks[k] for k in BLOCK_KEYS)


def text_features_call(params, pos_full, attn_bias, eot_onehot):
    args = (params["sentence_embeds"].reshape(NUM_RANKS * SEQ, D),
            pos_full, attn_bias, eot_onehot,
            *_block_args(params["text_blocks"]),
            params["ln_final_g"], params["ln_final_b"], params["text_projection"])
    return pl.pallas_call(
        text_encoder_kernel,
        out_shape=jax.ShapeDtypeStruct((NUM_RANKS, EMBED), F32),
        in_specs=[VMEM] * len(args),
        out_specs=VMEM,
    )(*args)


def image_logits_call(params, patches_full, pos_cls_bias, attn_bias, text_features):
    args = (patches_full, pos_cls_bias, attn_bias, params["patch_w"],
            params["ln_pre_g"], params["ln_pre_b"],
            *_block_args(params["vis_blocks"]),
            params["ln_post_g"], params["ln_post_b"], params["vis_proj"],
            text_features, params["logit_scale"])
    return pl.pallas_call(
        image_logits_kernel,
        out_shape=(jax.ShapeDtypeStruct((B, NUM_RANKS), F32),
                   jax.ShapeDtypeStruct((B, EMBED), F32)),
        in_specs=[VMEM] * len(args),
        out_specs=(VMEM, VMEM),
    )(*args)


# ----------------------------- JAX glue (input assembly only; no FLOPs) ----------------------
def _attention_bias(n_batch, seq, causal):
    """Additive mask: 0 within a batch element (and causal if requested), -1e30 elsewhere."""
    idx = jnp.arange(n_batch * seq)
    ok = (idx[:, None] // seq) == (idx[None, :] // seq)
    if causal:
        ok = ok & (idx[None, :] <= idx[:, None])
    return jnp.where(ok, 0.0, NEG_INF).astype(F32)


@jax.jit
def ordinalclip_forward(params, images, psudo_sentence_tokens):
    # --- text branch: prompt_learner() embeds -> fused text-encoder kernel ---
    pos_full = jnp.tile(params["text_pos_emb"], (NUM_RANKS, 1))                 # (R*S, D)
    bias_txt = _attention_bias(NUM_RANKS, SEQ, causal=True)
    eot_idx = jnp.argmax(psudo_sentence_tokens, axis=-1)                        # (R,)
    eot_onehot = jax.nn.one_hot(jnp.arange(NUM_RANKS) * SEQ + eot_idx,
                                NUM_RANKS * SEQ, dtype=F32)                     # (R, R*S)
    text_features = text_features_call(params, pos_full, bias_txt, eot_onehot)  # L2-normalized

    # --- image branch + logits: patchify, then one fused kernel ---
    Bn, C, Hh, Ww = images.shape
    gh, gw = Hh // PATCH, Ww // PATCH
    patches = images.reshape(Bn, C, gh, PATCH, gw, PATCH)
    patches = patches.transpose(0, 2, 4, 1, 3, 5).reshape(Bn, gh * gw, CPP)
    patches_full = jnp.concatenate(
        [jnp.zeros((Bn, 1, CPP), F32), patches], axis=1).reshape(Bn * S_VIS, CPP)
    pos_cls = params["vis_pos_emb"].at[0].add(params["cls_emb"])                # cls folded into pos[0]
    pos_cls_bias = jnp.tile(pos_cls, (Bn, 1))                                   # (B*S_VIS, D)
    bias_vis = _attention_bias(Bn, S_VIS, causal=False)
    logits, image_features = image_logits_call(
        params, patches_full, pos_cls_bias, bias_vis, text_features)
    return logits, image_features, text_features


# ----------------------------- deterministic parameter init -----------------------------
def init_params(key):
    counter = [0]

    def nk():
        counter[0] += 1
        return jax.random.fold_in(key, counter[0])

    def nrm(shape, scale=0.02):
        return scale * jax.random.normal(nk(), shape, dtype=F32)

    def stacked_blocks(n_layers, n_heads):
        dh = D // n_heads
        return dict(
            ln1_g=jnp.ones((n_layers, 1, D), F32), ln1_b=jnp.zeros((n_layers, 1, D), F32),
            qkv_w=nrm((n_layers, 3, n_heads, D, dh)),
            qkv_b=jnp.zeros((n_layers, 3, n_heads, 1, dh), F32),
            out_w=nrm((n_layers, n_heads, dh, D)),
            out_b=jnp.zeros((n_layers, 1, D), F32),
            ln2_g=jnp.ones((n_layers, 1, D), F32), ln2_b=jnp.zeros((n_layers, 1, D), F32),
            fc_w=nrm((n_layers, D, MLP)), fc_b=jnp.zeros((n_layers, 1, MLP), F32),
            proj_w=nrm((n_layers, MLP, D)), proj_b=jnp.zeros((n_layers, 1, D), F32),
        )

    return dict(
        # prompt learner (synthetic)
        sentence_embeds=nrm((NUM_RANKS, SEQ, D)),
        # text encoder
        text_pos_emb=nrm((SEQ, D)),
        text_blocks=stacked_blocks(L_TXT, H_TXT),
        ln_final_g=jnp.ones((1, D), F32), ln_final_b=jnp.zeros((1, D), F32),
        text_projection=nrm((D, EMBED)),
        # image encoder (ViT)
        patch_w=nrm((CPP, D)),
        cls_emb=nrm((D,)),
        vis_pos_emb=nrm((S_VIS, D)),
        ln_pre_g=jnp.ones((1, D), F32), ln_pre_b=jnp.zeros((1, D), F32),
        vis_blocks=stacked_blocks(L_VIS, H_VIS),
        ln_post_g=jnp.ones((1, D), F32), ln_post_b=jnp.zeros((1, D), F32),
        vis_proj=nrm((D, EMBED)),
        # logit scale (CLIP init: log(1/0.07))
        logit_scale=jnp.full((1, 1), math.log(1.0 / 0.07), F32),
    )


# ----------------------------- main -----------------------------
if __name__ == "__main__":
    root_key = jax.random.PRNGKey(0)
    params = init_params(jax.random.fold_in(root_key, 1))

    images = jax.random.normal(jax.random.fold_in(root_key, 2), (B, C_IN, IMG, IMG), dtype=F32)

    # pseudo sentence tokens: EOT token (49407) at deterministic positions -> argmax(-1)
    eot_pos = (4 + jnp.arange(NUM_RANKS) % (SEQ - 4)).astype(jnp.int32)
    psudo_sentence_tokens = jnp.zeros((NUM_RANKS, SEQ), jnp.int32)
    psudo_sentence_tokens = psudo_sentence_tokens.at[jnp.arange(NUM_RANKS), eot_pos].set(49407)

    logits, image_features, text_features = ordinalclip_forward(
        params, images, psudo_sentence_tokens)
    jax.block_until_ready((logits, image_features, text_features))

    assert logits.shape == (B, NUM_RANKS)
    assert image_features.shape == (B, EMBED)
    assert text_features.shape == (NUM_RANKS, EMBED)
    assert bool(jnp.all(jnp.isfinite(logits)))
    print("KERNEL_OK")
</pallas_src>

<mosaic_0001>
module attributes {stable_mosaic.version = 11 : i64} {
  func.func @text_encoder_kernel(%arg0: memref<40x128xf32, #tpu.memory_space<vmem>>, %arg1: memref<40x128xf32, #tpu.memory_space<vmem>>, %arg2: memref<40x40xf32, #tpu.memory_space<vmem>>, %arg3: memref<5x40xf32, #tpu.memory_space<vmem>>, %arg4: memref<2x1x128xf32, #tpu.memory_space<vmem>>, %arg5: memref<2x1x128xf32, #tpu.memory_space<vmem>>, %arg6: memref<2x3x4x128x32xf32, #tpu.memory_space<vmem>>, %arg7: memref<2x3x4x1x32xf32, #tpu.memory_space<vmem>>, %arg8: memref<2x4x32x128xf32, #tpu.memory_space<vmem>>, %arg9: memref<2x1x128xf32, #tpu.memory_space<vmem>>, %arg10: memref<2x1x128xf32, #tpu.memory_space<vmem>>, %arg11: memref<2x1x128xf32, #tpu.memory_space<vmem>>, %arg12: memref<2x128x512xf32, #tpu.memory_space<vmem>>, %arg13: memref<2x1x512xf32, #tpu.memory_space<vmem>>, %arg14: memref<2x512x128xf32, #tpu.memory_space<vmem>>, %arg15: memref<2x1x128xf32, #tpu.memory_space<vmem>>, %arg16: memref<1x128xf32, #tpu.memory_space<vmem>>, %arg17: memref<1x128xf32, #tpu.memory_space<vmem>>, %arg18: memref<128x128xf32, #tpu.memory_space<vmem>>, %arg19: memref<5x128xf32, #tpu.memory_space<vmem>>) attributes {dimension_semantics = [], scalar_prefetch = 0 : i64, scratch_operands = 0 : i64, tpu.core_type = #tpu.core_type<tc>} {
    %c0 = arith.constant 0 : index
    %c0_0 = arith.constant 0 : index
    %0 = vector.load %arg0[%c0, %c0_0] : memref<40x128xf32, #tpu.memory_space<vmem>>, vector<40x128xf32>
    %c0_1 = arith.constant 0 : index
    %c0_2 = arith.constant 0 : index
    %1 = vector.load %arg1[%c0_1, %c0_2] : memref<40x128xf32, #tpu.memory_space<vmem>>, vector<40x128xf32>
    %2 = arith.addf %0, %1 : vector<40x128xf32>
    %c0_3 = arith.constant 0 : index
    %c0_4 = arith.constant 0 : index
    %3 = vector.load %arg2[%c0_3, %c0_4] : memref<40x40xf32, #tpu.memory_space<vmem>>, vector<40x40xf32>
    %c0_5 = arith.constant 0 : index
    %c0_6 = arith.constant 0 : index
    %c0_7 = arith.constant 0 : index
    %4 = vector.load %arg4[%c0_5, %c0_6, %c0_7] : memref<2x1x128xf32, #tpu.memory_space<vmem>>, vector<1x1x128xf32>
    %5 = vector.shape_cast %4 : vector<1x1x128xf32> to vector<1x128xf32>
    %c0_8 = arith.constant 0 : index
    %c0_9 = arith.constant 0 : index
    %c0_10 = arith.constant 0 : index
    %6 = vector.load %arg5[%c0_8, %c0_9, %c0_10] : memref<2x1x128xf32, #tpu.memory_space<vmem>>, vector<1x1x128xf32>
    %7 = vector.shape_cast %6 : vector<1x1x128xf32> to vector<1x128xf32>
    %cst = arith.constant dense<0.000000e+00> : vector<40xf32>
    %8 = vector.multi_reduction <add>, %2, %cst [1] : vector<40x128xf32> to vector<40xf32>
    %9 = vector.shape_cast %8 : vector<40xf32> to vector<40x1xf32>
    %cst_11 = arith.constant 1.280000e+02 : f32
    %10 = vector.broadcast %cst_11 : f32 to vector<40x1xf32>
    %11 = arith.divf %9, %10 : vector<40x1xf32>
    %12 = vector.broadcast %11 : vector<40x1xf32> to vector<40x128xf32>
    %13 = arith.subf %2, %12 : vector<40x128xf32>
    %14 = arith.mulf %13, %13 : vector<40x128xf32>
    %cst_12 = arith.constant dense<0.000000e+00> : vector<40xf32>
    %15 = vector.multi_reduction <add>, %14, %cst_12 [1] : vector<40x128xf32> to vector<40xf32>
    %16 = vector.shape_cast %15 : vector<40xf32> to vector<40x1xf32>
    %cst_13 = arith.constant 1.280000e+02 : f32
    %17 = vector.broadcast %cst_13 : f32 to vector<40x1xf32>
    %18 = arith.divf %16, %17 : vector<40x1xf32>
    %19 = vector.broadcast %11 : vector<40x1xf32> to vector<40x128xf32>
    %20 = arith.subf %2, %19 : vector<40x128xf32>
    %cst_14 = arith.constant 9.99999974E-6 : f32
    %21 = vector.broadcast %cst_14 : f32 to vector<40x1xf32>
    %22 = arith.addf %18, %21 : vector<40x1xf32>
    %23 = math.rsqrt %22 : vector<40x1xf32>
    %24 = vector.broadcast %23 : vector<40x1xf32> to vector<40x128xf32>
    %25 = arith.mulf %20, %24 : vector<40x128xf32>
    %26 = vector.broadcast %5 : vector<1x128xf32> to vector<40x128xf32>
    %27 = arith.mulf %25, %26 : vector<40x128xf32>
    %28 = vector.broadcast %7 : vector<1x128xf32> to vector<40x128xf32>
    %29 = arith.addf %27, %28 : vector<40x128xf32>
    %cst_15 = arith.constant 0.000000e+00 : f32
    %30 = vector.broadcast %cst_15 : f32 to vector<40x128xf32>
    %c0_16 = arith.constant 0 : index
    %c0_17 = arith.constant 0 : index
    %c0_18 = arith.constant 0 : index
    %c0_19 = arith.constant 0 : index
    %c0_20 = arith.constant 0 : index
    %31 = vector.load %arg6[%c0_16, %c0_17, %c0_18, %c0_19, %c0_20] : memref<2x3x4x128x32xf32, #tpu.memory_space<vmem>>, vector<1x1x1x128x32xf32>
    %32 = vector.shape_cast %31 : vector<1x1x1x128x32xf32> to vector<128x32xf32>
    %33 = arith.truncf %29 : vector<40x128xf32> to vector<40x128xbf16>
    %34 = arith.truncf %32 : vector<128x32xf32> to vector<128x32xbf16>
    %cst_21 = arith.constant dense<0.000000e+00> : vector<40x32xf32>
    %35 = tpu.matmul %33, %34, %cst_21 {dimension_numbers = #tpu.dot_dimension_numbers<[1], [0], [0], [1], [0, 0, 1, 1], [], []>} : vector<40x128xbf16>, vector<128x32xbf16>, vector<40x32xf32> -> vector<40x32xf32>
    %c0_22 = arith.constant 0 : index
    %c0_23 = arith.constant 0 : index
    %c0_24 = arith.constant 0 : index
    %c0_25 = arith.constant 0 : index
    %c0_26 = arith.constant 0 : index
    %36 = vector.load %arg7[%c0_22, %c0_23, %c0_24, %c0_25, %c0_26] : memref<2x3x4x1x32xf32, #tpu.memory_space<vmem>>, vector<1x1x1x1x32xf32>
    %37 = vector.shape_cast %36 : vector<1x1x1x1x32xf32> to vector<1x32xf32>
    %38 = vector.broadcast %37 : vector<1x32xf32> to vector<40x32xf32>
    %39 = arith.addf %35, %38 : vector<40x32xf32>
    %c0_27 = arith.constant 0 : index
    %c1 = arith.constant 1 : index
    %c0_28 = arith.constant 0 : index
    %c0_29 = arith.constant 0 : index
    %c0_30 = arith.constant 0 : index
    %40 = vector.load %arg6[%c0_27, %c1, %c0_28, %c0_29, %c0_30] : memref<2x3x4x128x32xf32, #tpu.memory_space<vmem>>, vector<1x1x1x128x32xf32>
    %41 = vector.shape_cast %40 : vector<1x1x1x128x32xf32> to vector<128x32xf32>
    %42 = arith.truncf %29 : vector<40x128xf32> to vector<40x128xbf16>
    %43 = arith.truncf %41 : vector<128x32xf32> to vector<128x32xbf16>
    %cst_31 = arith.constant dense<0.000000e+00> : vector<40x32xf32>
    %44 = tpu.matmul %42, %43, %cst_31 {dimension_numbers = #tpu.dot_dimension_numbers<[1], [0], [0], [1], [0, 0, 1, 1], [], []>} : vector<40x128xbf16>, vector<128x32xbf16>, vector<40x32xf32> -> vector<40x32xf32>
    %c0_32 = arith.constant 0 : index
    %c1_33 = arith.constant 1 : index
    %c0_34 = arith.constant 0 : index
    %c0_35 = arith.constant 0 : index
    %c0_36 = arith.constant 0 : index
    %45 = vector.load %arg7[%c0_32, %c1_33, %c0_34, %c0_35, %c0_36] : memref<2x3x4x1x32xf32, #tpu.memory_space<vmem>>, vector<1x1x1x1x32xf32>
    %46 = vector.shape_cast %45 : vector<1x1x1x1x32xf32> to vector<1x32xf32>
    %47 = vector.broadcast %46 : vector<1x32xf32> to vector<40x32xf32>
    %48 = arith.addf %44, %47 : vector<40x32xf32>
    %c0_37 = arith.constant 0 : index
    %c2 = arith.constant 2 : index
    %c0_38 = arith.constant 0 : index
    %c0_39 = arith.constant 0 : index
    %c0_40 = arith.constant 0 : index
    %49 = vector.load %arg6[%c0_37, %c2, %c0_38, %c0_39, %c0_40] : memref<2x3x4x128x32xf32, #tpu.memory_space<vmem>>, vector<1x1x1x128x32xf32>
    %50 = vector.shape_cast %49 : vector<1x1x1x128x32xf32> to vector<128x32xf32>
    %51 = arith.truncf %29 : vector<40x128xf32> to vector<40x128xbf16>
    %52 = arith.truncf %50 : vector<128x32xf32> to vector<128x32xbf16>
    %cst_41 = arith.constant dense<0.000000e+00> : vector<40x32xf32>
    %53 = tpu.matmul %51, %52, %cst_41 {dimension_numbers = #tpu.dot_dimension_numbers<[1], [0], [0], [1], [0, 0, 1, 1], [], []>} : vector<40x128xbf16>, vector<128x32xbf16>, vector<40x32xf32> -> vector<40x32xf32>
    %c0_42 = arith.constant 0 : index
    %c2_43 = arith.constant 2 : index
    %c0_44 = arith.constant 0 : index
    %c0_45 = arith.constant 0 : index
    %c0_46 = arith.constant 0 : index
    %54 = vector.load %arg7[%c0_42, %c2_43, %c0_44, %c0_45, %c0_46] : memref<2x3x4x1x32xf32, #tpu.memory_space<vmem>>, vector<1x1x1x1x32xf32>
    %55 = vector.shape_cast %54 : vector<1x1x1x1x32xf32> to vector<1x32xf32>
    %56 = vector.broadcast %55 : vector<1x32xf32> to vector<40x32xf32>
    %57 = arith.addf %53, %56 : vector<40x32xf32>
    %58 = tpu.transpose %48, [1, 0] : vector<40x32xf32> -> vector<32x40xf32>
    %59 = arith.truncf %39 : vector<40x32xf32> to vector<40x32xbf16>
    %60 = arith.truncf %58 : vector<32x40xf32> to vector<32x40xbf16>
    %cst_47 = arith.constant dense<0.000000e+00> : vector<40x40xf32>
    %61 = tpu.matmul %59, %60, %cst_47 {dimension_numbers = #tpu.dot_dimension_numbers<[1], [0], [0], [1], [0, 0, 1, 1], [], []>} : vector<40x32xbf16>, vector<32x40xbf16>, vector<40x40xf32> -> vector<40x40xf32>
    %cst_48 = arith.constant 0.176776692 : f32
    %62 = vector.broadcast %cst_48 : f32 to vector<40x40xf32>
    %63 = arith.mulf %61, %62 : vector<40x40xf32>
    %64 = arith.addf %63, %3 : vector<40x40xf32>
    %cst_49 = arith.constant dense<0xFF800000> : vector<40xf32>
    %65 = vector.multi_reduction <maximumf>, %64, %cst_49 [1] : vector<40x40xf32> to vector<40xf32>
    %66 = vector.shape_cast %65 : vector<40xf32> to vector<40x1xf32>
    %67 = vector.broadcast %66 : vector<40x1xf32> to vector<40x40xf32>
    %68 = arith.subf %64, %67 : vector<40x40xf32>
    %69 = math.exp %68 : vector<40x40xf32>
    %cst_50 = arith.constant dense<0.000000e+00> : vector<40xf32>
    %70 = vector.multi_reduction <add>, %69, %cst_50 [1] : vector<40x40xf32> to vector<40xf32>
    %71 = vector.shape_cast %70 : vector<40xf32> to vector<40x1xf32>
    %72 = tpu.reciprocal %71 {approx = true} : vector<40x1xf32> -> vector<40x1xf32>
    %73 = vector.broadcast %72 : vector<40x1xf32> to vector<40x40xf32>
    %74 = arith.mulf %69, %73 : vector<40x40xf32>
    %75 = arith.truncf %74 : vector<40x40xf32> to vector<40x40xbf16>
    %76 = arith.truncf %57 : vector<40x32xf32> to vector<40x32xbf16>
    %cst_51 = arith.constant dense<0.000000e+00> : vector<40x32xf32>
    %77 = tpu.matmul %75, %76, %cst_51 {dimension_numbers = #tpu.dot_dimension_numbers<[1], [0], [0], [1], [0, 0, 1, 1], [], []>} : vector<40x40xbf16>, vector<40x32xbf16>, vector<40x32xf32> -> vector<40x32xf32>
    %c0_52 = arith.constant 0 : index
    %c0_53 = arith.constant 0 : index
    %c0_54 = arith.constant 0 : index
    %c0_55 = arith.constant 0 : index
    %78 = vector.load %arg8[%c0_52, %c0_53, %c0_54, %c0_55] : memref<2x4x32x128xf32, #tpu.memory_space<vmem>>, vector<1x1x32x128xf32>
    %79 = vector.shape_cast %78 : vector<1x1x32x128xf32> to vector<32x128xf32>
    %80 = arith.truncf %77 : vector<40x32xf32> to vector<40x32xbf16>
    %81 = arith.truncf %79 : vector<32x128xf32> to vector<32x128xbf16>
    %cst_56 = arith.constant dense<0.000000e+00> : vector<40x128xf32>
    %82 = tpu.matmul %80, %81, %cst_56 {dimension_numbers = #tpu.dot_dimension_numbers<[1], [0], [0], [1], [0, 0, 1, 1], [], []>} : vector<40x32xbf16>, vector<32x128xbf16>, vector<40x128xf32> -> vector<40x128xf32>
    %83 = arith.addf %30, %82 : vector<40x128xf32>
    %c0_57 = arith.constant 0 : index
    %c0_58 = arith.constant 0 : index
    %c1_59 = arith.constant 1 : index
    %c0_60 = arith.constant 0 : index
    %c0_61 = arith.constant 0 : index
    %84 = vector.load %arg6[%c0_57, %c0_58, %c1_59, %c0_60, %c0_61] : memref<2x3x4x128x32xf32, #tpu.memory_space<vmem>>, vector<1x1x1x128x32xf32>
    %85 = vector.shape_cast %84 : vector<1x1x1x128x32xf32> to vector<128x32xf32>
    %86 = arith.truncf %29 : vector<40x128xf32> to vector<40x128xbf16>
    %87 = arith.truncf %85 : vector<128x32xf32> to vector<128x32xbf16>
    %cst_62 = arith.constant dense<0.000000e+00> : vector<40x32xf32>
    %88 = tpu.matmul %86, %87, %cst_62 {dimension_numbers = #tpu.dot_dimension_numbers<[1], [0], [0], [1], [0, 0, 1, 1], [], []>} : vector<40x128xbf16>, vector<128x32xbf16>, vector<40x32xf32> -> vector<40x32xf32>
    %c0_63 = arith.constant 0 : index
    %c0_64 = arith.constant 0 : index
    %c1_65 = arith.constant 1 : index
    %c0_66 = arith.constant 0 : index
    %c0_67 = arith.constant 0 : index
    %89 = vector.load %arg7[%c0_63, %c0_64, %c1_65, %c0_66, %c0_67] : memref<2x3x4x1x32xf32, #tpu.memory_space<vmem>>, vector<1x1x1x1x32xf32>
    %90 = vector.shape_cast %89 : vector<1x1x1x1x32xf32> to vector<1x32xf32>
    %91 = vector.broadcast %90 : vector<1x32xf32> to vector<40x32xf32>
    %92 = arith.addf %88, %91 : vector<40x32xf32>
    %c0_68 = arith.constant 0 : index
    %c1_69 = arith.constant 1 : index
    %c1_70 = arith.constant 1 : index
    %c0_71 = arith.constant 0 : index
    %c0_72 = arith.constant 0 : index
    %93 = vector.load %arg6[%c0_68, %c1_69, %c1_70, %c0_71, %c0_72] : memref<2x3x4x128x32xf32, #tpu.memory_space<vmem>>, vector<1x1x1x128x32xf32>
    %94 = vector.shape_cast %93 : vector<1x1x1x128x32xf32> to vector<128x32xf32>
    %95 = arith.truncf %29 : vector<40x128xf32> to vector<40x128xbf16>
    %96 = arith.truncf %94 : vector<128x32xf32> to vector<128x32xbf16>
    %cst_73 = arith.constant dense<0.000000e+00> : vector<40x32xf32>
    %97 = tpu.matmul %95, %96, %cst_73 {dimension_numbers = #tpu.dot_dimension_numbers<[1], [0], [0], [1], [0, 0, 1, 1], [], []>} : vector<40x128xbf16>, vector<128x32xbf16>, vector<40x32xf32> -> vector<40x32xf32>
    %c0_74 = arith.constant 0 : index
    %c1_75 = arith.constant 1 : index
    %c1_76 = arith.constant 1 : index
    %c0_77 = arith.constant 0 : index
    %c0_78 = arith.constant 0 : index
    %98 = vector.load %arg7[%c0_74, %c1_75, %c1_76, %c0_77, %c0_78] : memref<2x3x4x1x32xf32, #tpu.memory_space<vmem>>, vector<1x1x1x1x32xf32>
    %99 = vector.shape_cast %98 : vector<1x1x1x1x32xf32> to vector<1x32xf32>
    %100 = vector.broadcast %99 : vector<1x32xf32> to vector<40x32xf32>
    %101 = arith.addf %97, %100 : vector<40x32xf32>
    %c0_79 = arith.constant 0 : index
    %c2_80 = arith.constant 2 : index
    %c1_81 = arith.constant 1 : index
    %c0_82 = arith.constant 0 : index
    %c0_83 = arith.constant 0 : index
    %102 = vector.load %arg6[%c0_79, %c2_80, %c1_81, %c0_82, %c0_83] : memref<2x3x4x128x32xf32, #tpu.memory_space<vmem>>, vector<1x1x1x128x32xf32>
    %103 = vector.shape_cast %102 : vector<1x1x1x128x32xf32> to vector<128x32xf32>
    %104 = arith.truncf %29 : vector<40x128xf32> to vector<40x128xbf16>
    %105 = arith.truncf %103 : vector<128x32xf32> to vector<128x32xbf16>
    %cst_84 = arith.constant dense<0.000000e+00> : vector<40x32xf32>
    %106 = tpu.matmul %104, %105, %cst_84 {dimension_numbers = #tpu.dot_dimension_numbers<[1], [0], [0], [1], [0, 0, 1, 1], [], []>} : vector<40x128xbf16>, vector<128x32xbf16>, vector<40x32xf32> -> vector<40x32xf32>
    %c0_85 = arith.constant 0 : index
    %c2_86 = arith.constant 2 : index
    %c1_87 = arith.constant 1 : index
    %c0_88 = arith.constant 0 : index
    %c0_89 = arith.constant 0 : index
    %107 = vector.load %arg7[%c0_85, %c2_86, %c1_87, %c0_88, %c0_89] : memref<2x3x4x1x32xf32, #tpu.memory_space<vmem>>, vector<1x1x1x1x32xf32>
    %108 = vector.shape_cast %107 : vector<1x1x1x1x32xf32> to vector<1x32xf32>
    %109 = vector.broadcast %108 : vector<1x32xf32> to vector<40x32xf32>
    %110 = arith.addf %106, %109 : vector<40x32xf32>
    %111 = tpu.transpose %101, [1, 0] : vector<40x32xf32> -> vector<32x40xf32>
    %112 = arith.truncf %92 : vector<40x32xf32> to vector<40x32xbf16>
    %113 = arith.truncf %111 : vector<32x40xf32> to vector<32x40xbf16>
    %cst_90 = arith.constant dense<0.000000e+00> : vector<40x40xf32>
    %114 = tpu.matmul %112, %113, %cst_90 {dimension_numbers = #tpu.dot_dimension_numbers<[1], [0], [0], [1], [0, 0, 1, 1], [], []>} : vector<40x32xbf16>, vector<32x40xbf16>, vector<40x40xf32> -> vector<40x40xf32>
    %cst_91 = arith.constant 0.176776692 : f32
    %115 = vector.broadcast %cst_91 : f32 to vector<40x40xf32>
    %116 = arith.mulf %114, %115 : vector<40x40xf32>
    %117 = arith.addf %116, %3 : vector<40x40xf32>
    %cst_92 = arith.constant dense<0xFF800000> : vector<40xf32>
    %118 = vector.multi_reduction <maximumf>, %117, %cst_92 [1] : vector<40x40xf32> to vector<40xf32>
    %119 = vector.shape_cast %118 : vector<40xf32> to vector<40x1xf32>
    %120 = vector.broadcast %119 : vector<40x1xf32> to vector<40x40xf32>
    %121 = arith.subf %117, %120 : vector<40x40xf32>
    %122 = math.exp %121 : vector<40x40xf32>
    %cst_93 = arith.constant dense<0.000000e+00> : vector<40xf32>
    %123 = vector.multi_reduction <add>, %122, %cst_93 [1] : vector<40x40xf32> to vector<40xf32>
    %124 = vector.shape_cast %123 : vector<40xf32> to vector<40x1xf32>
    %125 = tpu.reciprocal %124 {approx = true} : vector<40x1xf32> -> vector<40x1xf32>
    %126 = vector.broadcast %125 : vector<40x1xf32> to vector<40x40xf32>
    %127 = arith.mulf %122, %126 : vector<40x40xf32>
    %128 = arith.truncf %127 : vector<40x40xf32> to vector<40x40xbf16>
    %129 = arith.truncf %110 : vector<40x32xf32> to vector<40x32xbf16>
    %cst_94 = arith.constant dense<0.000000e+00> : vector<40x32xf32>
    %130 = tpu.matmul %128, %129, %cst_94 {dimension_numbers = #tpu.dot_dimension_numbers<[1], [0], [0], [1], [0, 0, 1, 1], [], []>} : vector<40x40xbf16>, vector<40x32xbf16>, vector<40x32xf32> -> vector<40x32xf32>
    %c0_95 = arith.constant 0 : index
    %c1_96 = arith.constant 1 : index
    %c0_97 = arith.constant 0 : index
    %c0_98 = arith.constant 0 : index
    %131 = vector.load %arg8[%c0_95, %c1_96, %c0_97, %c0_98] : memref<2x4x32x128xf32, #tpu.memory_space<vmem>>, vector<1x1x32x128xf32>
    %132 = vector.shape_cast %131 : vector<1x1x32x128xf32> to vector<32x128xf32>
    %133 = arith.truncf %130 : vector<40x32xf32> to vector<40x32xbf16>
    %134 = arith.truncf %132 : vector<32x128xf32> to vector<32x128xbf16>
    %cst_99 = arith.constant dense<0.000000e+00> : vector<40x128xf32>
    %135 = tpu.matmul %133, %134, %cst_99 {dimension_numbers = #tpu.dot_dimension_numbers<[1], [0], [0], [1], [0, 0, 1, 1], [], []>} : vector<40x32xbf16>, vector<32x128xbf16>, vector<40x128xf32> -> vector<40x128xf32>
    %136 = arith.addf %83, %135 : vector<40x128xf32>
    %c0_100 = arith.constant 0 : index
    %c0_101 = arith.constant 0 : index
    %c2_102 = arith.constant 2 : index
    %c0_103 = arith.constant 0 : index
    %c0_104 = arith.constant 0 : index
    %137 = vector.load %arg6[%c0_100, %c0_101, %c2_102, %c0_103, %c0_104] : memref<2x3x4x128x32xf32, #tpu.memory_space<vmem>>, vector<1x1x1x128x32xf32>
    %138 = vector.shape_cast %137 : vector<1x1x1x128x32xf32> to vector<128x32xf32>
    %139 = arith.truncf %29 : vector<40x128xf32> to vector<40x128xbf16>
    %140 = arith.truncf %138 : vector<128x32xf32> to vector<128x32xbf16>
    %cst_105 = arith.constant dense<0.000000e+00> : vector<40x32xf32>
    %141 = tpu.matmul %139, %140, %cst_105 {dimension_numbers = #tpu.dot_dimension_numbers<[1], [0], [0], [1], [0, 0, 1, 1], [], []>} : vector<40x128xbf16>, vector<128x32xbf16>, vector<40x32xf32> -> vector<40x32xf32>
    %c0_106 = arith.constant 0 : index
    %c0_107 = arith.constant 0 : index
    %c2_108 = arith.constant 2 : index
    %c0_109 = arith.constant 0 : index
    %c0_110 = arith.constant 0 : index
    %142 = vector.load %arg7[%c0_106, %c0_107, %c2_108, %c0_109, %c0_110] : memref<2x3x4x1x32xf32, #tpu.memory_space<vmem>>, vector<1x1x1x1x32xf32>
    %143 = vector.shape_cast %142 : vector<1x1x1x1x32xf32> to vector<1x32xf32>
    %144 = vector.broadcast %143 : vector<1x32xf32> to vector<40x32xf32>
    %145 = arith.addf %141, %144 : vector<40x32xf32>
    %c0_111 = arith.constant 0 : index
    %c1_112 = arith.constant 1 : index
    %c2_113 = arith.constant 2 : index
    %c0_114 = arith.constant 0 : index
    %c0_115 = arith.constant 0 : index
    %146 = vector.load %arg6[%c0_111, %c1_112, %c2_113, %c0_114, %c0_115] : memref<2x3x4x128x32xf32, #tpu.memory_space<vmem>>, vector<1x1x1x128x32xf32>
    %147 = vector.shape_cast %146 : vector<1x1x1x128x32xf32> to vector<128x32xf32>
    %148 = arith.truncf %29 : vector<40x128xf32> to vector<40x128xbf16>
    %149 = arith.truncf %147 : vector<128x32xf32> to vector<128x32xbf16>
    %cst_116 = arith.constant dense<0.000000e+00> : vector<40x32xf32>
    %150 = tpu.matmul %148, %149, %cst_116 {dimension_numbers = #tpu.dot_dimension_numbers<[1], [0], [0], [1], [0, 0, 1, 1], [], []>} : vector<40x128xbf16>, vector<128x32xbf16>, vector<40x32xf32> -> vector<40x32xf32>
    %c0_117 = arith.constant 0 : index
    %c1_118 = arith.constant 1 : index
    %c2_119 = arith.constant 2 : index
    %c0_120 = arith.constant 0 : index
    %c0_121 = arith.constant 0 : index
    %151 = vector.load %arg7[%c0_117, %c1_118, %c2_119, %c0_120, %c0_121] : memref<2x3x4x1x32xf32, #tpu.memory_space<vmem>>, vector<1x1x1x1x32xf32>
    %152 = vector.shape_cast %151 : vector<1x1x1x1x32xf32> to vector<1x32xf32>
    %153 = vector.broadcast %152 : vector<1x32xf32> to vector<40x32xf32>
    %154 = arith.addf %150, %153 : vector<40x32xf32>
    %c0_122 = arith.constant 0 : index
    %c2_123 = arith.constant 2 : index
    %c2_124 = arith.constant 2 : index
    %c0_125 = arith.constant 0 : index
    %c0_126 = arith.constant 0 : index
    %155 = vector.load %arg6[%c0_122, %c2_123, %c2_124, %c0_125, %c0_126] : memref<2x3x4x128x32xf32, #tpu.memory_space<vmem>>, vector<1x1x1x128x32xf32>
    %156 = vector.shape_cast %155 : vector<1x1x1x128x32xf32> to vector<128x32xf32>
    %157 = arith.truncf %29 : vector<40x128xf32> to vector<40x128xbf16>
    %158 = arith.truncf %156 : vector<128x32xf32> to vector<128x32xbf16>
    %cst_127 = arith.constant dense<0.000000e+00> : vector<40x32xf32>
    %159 = tpu.matmul %157, %158, %cst_127 {dimension_numbers = #tpu.dot_dimension_numbers<[1], [0], [0], [1], [0, 0, 1, 1], [], []>} : vector<40x128xbf16>, vector<128x32xbf16>, vector<40x32xf32> -> vector<40x32xf32>
    %c0_128 = arith.constant 0 : index
    %c2_129 = arith.constant 2 : index
    %c2_130 = arith.constant 2 : index
    %c0_131 = arith.constant 0 : index
    %c0_132 = arith.constant 0 : index
    %160 = vector.load %arg7[%c0_128, %c2_129, %c2_130, %c0_131, %c0_132] : memref<2x3x4x1x32xf32, #tpu.memory_space<vmem>>, vector<1x1x1x1x32xf32>
    %161 = vector.shape_cast %160 : vector<1x1x1x1x32xf32> to vector<1x32xf32>
    %162 = vector.broadcast %161 : vector<1x32xf32> to vector<40x32xf32>
    %163 = arith.addf %159, %162 : vector<40x32xf32>
    %164 = tpu.transpose %154, [1, 0] : vector<40x32xf32> -> vector<32x40xf32>
    %165 = arith.truncf %145 : vector<40x32xf32> to vector<40x32xbf16>
    %166 = arith.truncf %164 : vector<32x40xf32> to vector<32x40xbf16>
    %cst_133 = arith.constant dense<0.000000e+00> : vector<40x40xf32>
    %167 = tpu.matmul %165, %166, %cst_133 {dimension_numbers = #tpu.dot_dimension_numbers<[1], [0], [0], [1], [0, 0, 1, 1], [], []>} : vector<40x32xbf16>, vector<32x40xbf16>, vector<40x40xf32> -> vector<40x40xf32>
    %cst_134 = arith.constant 0.176776692 : f32
    %168 = vector.broadcast %cst_134 : f32 to vector<40x40xf32>
    %169 = arith.mulf %167, %168 : vector<40x40xf32>
    %170 = arith.addf %169, %3 : vector<40x40xf32>
    %cst_135 = arith.constant dense<0xFF800000> : vector<40xf32>
    %171 = vector.multi_reduction <maximumf>, %170, %cst_135 [1] : vector<40x40xf32> to vector<40xf32>
    %172 = vector.shape_cast %171 : vector<40xf32> to vector<40x1xf32>
    %173 = vector.broadcast %172 : vector<40x1xf32> to vector<40x40xf32>
    %174 = arith.subf %170, %173 : vector<40x40xf32>
    %175 = math.exp %174 : vector<40x40xf32>
    %cst_136 = arith.constant dense<0.000000e+00> : vector<40xf32>
    %176 = vector.multi_reduction <add>, %175, %cst_136 [1] : vector<40x40xf32> to vector<40xf32>
    %177 = vector.shape_cast %176 : vector<40xf32> to vector<40x1xf32>
    %178 = tpu.reciprocal %177 {approx = true} : vector<40x1xf32> -> vector<40x1xf32>
    %179 = vector.broadcast %178 : vector<40x1xf32> to vector<40x40xf32>
    %180 = arith.mulf %175, %179 : vector<40x40xf32>
    %181 = arith.truncf %180 : vector<40x40xf32> to vector<40x40xbf16>
    %182 = arith.truncf %163 : vector<40x32xf32> to vector<40x32xbf16>
    %cst_137 = arith.constant dense<0.000000e+00> : vector<40x32xf32>
    %183 = tpu.matmul %181, %182, %cst_137 {dimension_numbers = #tpu.dot_dimension_numbers<[1], [0], [0], [1], [0, 0, 1, 1], [], []>} : vector<40x40xbf16>, vector<40x32xbf16>, vector<40x32xf32> -> vector<40x32xf32>
    %c0_138 = arith.constant 0 : index
    %c2_139 = arith.constant 2 : index
    %c0_140 = arith.constant 0 : index
    %c0_141 = arith.constant 0 : index
    %184 = vector.load %arg8[%c0_138, %c2_139, %c0_140, %c0_141] : memref<2x4x32x128xf32, #tpu.memory_space<vmem>>, vector<1x1x32x128xf32>
    %185 = vector.shape_cast %184 : vector<1x1x32x128xf32> to vector<32x128xf32>
    %186 = arith.truncf %183 : vector<40x32xf32> to vector<40x32xbf16>
    %187 = arith.truncf %185 : vector<32x128xf32> to vector<32x128xbf16>
    %cst_142 = arith.constant dense<0.000000e+00> : vector<40x128xf32>
    %188 = tpu.matmul %186, %187, %cst_142 {dimension_numbers = #tpu.dot_dimension_numbers<[1], [0], [0], [1], [0, 0, 1, 1], [], []>} : vector<40x32xbf16>, vector<32x128xbf16>, vector<40x128xf32> -> vector<40x128xf32>
    %189 = arith.addf %136, %188 : vector<40x128xf32>
    %c0_143 = arith.constant 0 : index
    %c0_144 = arith.constant 0 : index
    %c3 = arith.constant 3 : index
    %c0_145 = arith.constant 0 : index
    %c0_146 = arith.constant 0 : index
    %190 = vector.load %arg6[%c0_143, %c0_144, %c3, %c0_145, %c0_146] : memref<2x3x4x128x32xf32, #tpu.memory_space<vmem>>, vector<1x1x1x128x32xf32>
    %191 = vector.shape_cast %190 : vector<1x1x1x128x32xf32> to vector<128x32xf32>
    %192 = arith.truncf %29 : vector<40x128xf32> to vector<40x128xbf16>
    %193 = arith.truncf %191 : vector<128x32xf32> to vector<128x32xbf16>
    %cst_147 = arith.constant dense<0.000000e+00> : vector<40x32xf32>
    %194 = tpu.matmul %192, %193, %cst_147 {dimension_numbers = #tpu.dot_dimension_numbers<[1], [0], [0], [1], [0, 0, 1, 1], [], []>} : vector<40x128xbf16>, vector<128x32xbf16>, vector<40x32xf32> -> vector<40x32xf32>
    %c0_148 = arith.constant 0 : index
    %c0_149 = arith.constant 0 : index
    %c3_150 = arith.constant 3 : index
    %c0_151 = arith.constant 0 : index
    %c0_152 = arith.constant 0 : index
    %195 = vector.load %arg7[%c0_148, %c0_149, %c3_150, %c0_151, %c0_152] : memref<2x3x4x1x32xf32, #tpu.memory_space<vmem>>, vector<1x1x1x1x32xf32>
    %196 = vector.shape_cast %195 : vector<1x1x1x1x32xf32> to vector<1x32xf32>
    %197 = vector.broadcast %196 : vector<1x32xf32> to vector<40x32xf32>
    %198 = arith.addf %194, %197 : vector<40x32xf32>
    %c0_153 = arith.constant 0 : index
    %c1_154 = arith.constant 1 : index
    %c3_155 = arith.constant 3 : index
    %c0_156 = arith.constant 0 : index
    %c0_157 = arith.constant 0 : index
    %199 = vector.load %arg6[%c0_153, %c1_154, %c3_155, %c0_156, %c0_157] : memref<2x3x4x128x32xf32, #tpu.memory_space<vmem>>, vector<1x1x1x128x32xf32>
    %200 = vector.shape_cast %199 : vector<1x1x1x128x32xf32> to vector<128x32xf32>
    %201 = arith.truncf %29 : vector<40x128xf32> to vector<40x128xbf16>
    %202 = arith.truncf %200 : vector<128x32xf32> to vector<128x32xbf16>
    %cst_158 = arith.constant dense<0.000000e+00> : vector<40x32xf32>
    %203 = tpu.matmul %201, %202, %cst_158 {dimension_numbers = #tpu.dot_dimension_numbers<[1], [0], [0], [1], [0, 0, 1, 1], [], []>} : vector<40x128xbf16>, vector<128x32xbf16>, vector<40x32xf32> -> vector<40x32xf32>
    %c0_159 = arith.constant 0 : index
    %c1_160 = arith.constant 1 : index
    %c3_161 = arith.constant 3 : index
    %c0_162 = arith.constant 0 : index
    %c0_163 = arith.constant 0 : index
    %204 = vector.load %arg7[%c0_159, %c1_160, %c3_161, %c0_162, %c0_163] : memref<2x3x4x1x32xf32, #tpu.memory_space<vmem>>, vector<1x1x1x1x32xf32>
    %205 = vector.shape_cast %204 : vector<1x1x1x1x32xf32> to vector<1x32xf32>
    %206 = vector.broadcast %205 : vector<1x32xf32> to vector<40x32xf32>
    %207 = arith.addf %203, %206 : vector<40x32xf32>
    %c0_164 = arith.constant 0 : index
    %c2_165 = arith.constant 2 : index
    %c3_166 = arith.constant 3 : index
    %c0_167 = arith.constant 0 : index
    %c0_168 = arith.constant 0 : index
    %208 = vector.load %arg6[%c0_164, %c2_165, %c3_166, %c0_167, %c0_168] : memref<2x3x4x128x32xf32, #tpu.memory_space<vmem>>, vector<1x1x1x128x32xf32>
    %209 = vector.shape_cast %208 : vector<1x1x1x128x32xf32> to vector<128x32xf32>
    %210 = arith.truncf %29 : vector<40x128xf32> to vector<40x128xbf16>
    %211 = arith.truncf %209 : vector<128x32xf32> to vector<128x32xbf16>
    %cst_169 = arith.constant dense<0.000000e+00> : vector<40x32xf32>
    %212 = tpu.matmul %210, %211, %cst_169 {dimension_numbers = #tpu.dot_dimension_numbers<[1], [0], [0], [1], [0, 0, 1, 1], [], []>} : vector<40x128xbf16>, vector<128x32xbf16>, vector<40x32xf32> -> vector<40x32xf32>
    %c0_170 = arith.constant 0 : index
    %c2_171 = arith.constant 2 : index
    %c3_172 = arith.constant 3 : index
    %c0_173 = arith.constant 0 : index
    %c0_174 = arith.constant 0 : index
    %213 = vector.load %arg7[%c0_170, %c2_171, %c3_172, %c0_173, %c0_174] : memref<2x3x4x1x32xf32, #tpu.memory_space<vmem>>, vector<1x1x1x1x32xf32>
    %214 = vector.shape_cast %213 : vector<1x1x1x1x32xf32> to vector<1x32xf32>
    %215 = vector.broadcast %214 : vector<1x32xf32> to vector<40x32xf32>
    %216 = arith.addf %212, %215 : vector<40x32xf32>
    %217 = tpu.transpose %207, [1, 0] : vector<40x32xf32> -> vector<32x40xf32>
    %218 = arith.truncf %198 : vector<40x32xf32> to vector<40x32xbf16>
    %219 = arith.truncf %217 : vector<32x40xf32> to vector<32x40xbf16>
    %cst_175 = arith.constant dense<0.000000e+00> : vector<40x40xf32>
    %220 = tpu.matmul %218, %219, %cst_175 {dimension_numbers = #tpu.dot_dimension_numbers<[1], [0], [0], [1], [0, 0, 1, 1], [], []>} : vector<40x32xbf16>, vector<32x40xbf16>, vector<40x40xf32> -> vector<40x40xf32>
    %cst_176 = arith.constant 0.176776692 : f32
    %221 = vector.broadcast %cst_176 : f32 to vector<40x40xf32>
    %222 = arith.mulf %220, %221 : vector<40x40xf32>
    %223 = arith.addf %222, %3 : vector<40x40xf32>
    %cst_177 = arith.constant dense<0xFF800000> : vector<40xf32>
    %224 = vector.multi_reduction <maximumf>, %223, %cst_177 [1] : vector<40x40xf32> to vector<40xf32>
    %225 = vector.shape_cast %224 : vector<40xf32> to vector<40x1xf32>
    %226 = vector.broadcast %225 : vector<40x1xf32> to vector<40x40xf32>
    %227 = arith.subf %223, %226 : vector<40x40xf32>
    %228 = math.exp %227 : vector<40x40xf32>
    %cst_178 = arith.constant dense<0.000000e+00> : vector<40xf32>
    %229 = vector.multi_reduction <add>, %228, %cst_178 [1] : vector<40x40xf32> to vector<40xf32>
    %230 = vector.shape_cast %229 : vector<40xf32> to vector<40x1xf32>
    %231 = tpu.reciprocal %230 {approx = true} : vector<40x1xf32> -> vector<40x1xf32>
    %232 = vector.broadcast %231 : vector<40x1xf32> to vector<40x40xf32>
    %233 = arith.mulf %228, %232 : vector<40x40xf32>
    %234 = arith.truncf %233 : vector<40x40xf32> to vector<40x40xbf16>
    %235 = arith.truncf %216 : vector<40x32xf32> to vector<40x32xbf16>
    %cst_179 = arith.constant dense<0.000000e+00> : vector<40x32xf32>
    %236 = tpu.matmul %234, %235, %cst_179 {dimension_numbers = #tpu.dot_dimension_numbers<[1], [0], [0], [1], [0, 0, 1, 1], [], []>} : vector<40x40xbf16>, vector<40x32xbf16>, vector<40x32xf32> -> vector<40x32xf32>
    %c0_180 = arith.constant 0 : index
    %c3_181 = arith.constant 3 : index
    %c0_182 = arith.constant 0 : index
    %c0_183 = arith.constant 0 : index
    %237 = vector.load %arg8[%c0_180, %c3_181, %c0_182, %c0_183] : memref<2x4x32x128xf32, #tpu.memory_space<vmem>>, vector<1x1x32x128xf32>
    %238 = vector.shape_cast %237 : vector<1x1x32x128xf32> to vector<32x128xf32>
    %239 = arith.truncf %236 : vector<40x32xf32> to vector<40x32xbf16>
    %240 = arith.truncf %238 : vector<32x128xf32> to vector<32x128xbf16>
    %cst_184 = arith.constant dense<0.000000e+00> : vector<40x128xf32>
    %241 = tpu.matmul %239, %240, %cst_184 {dimension_numbers = #tpu.dot_dimension_numbers<[1], [0], [0], [1], [0, 0, 1, 1], [], []>} : vector<40x32xbf16>, vector<32x128xbf16>, vector<40x128xf32> -> vector<40x128xf32>
    %242 = arith.addf %189, %241 : vector<40x128xf32>
    %243 = arith.addf %2, %242 : vector<40x128xf32>
    %c0_185 = arith.constant 0 : index
    %c0_186 = arith.constant 0 : index
    %c0_187 = arith.constant 0 : index
    %244 = vector.load %arg9[%c0_185, %c0_186, %c0_187] : memref<2x1x128xf32, #tpu.memory_space<vmem>>, vector<1x1x128xf32>
    %245 = vector.shape_cast %244 : vector<1x1x128xf32> to vector<1x128xf32>
    %246 = vector.broadcast %245 : vector<1x128xf32> to vector<40x128xf32>
    %247 = arith.addf %243, %246 : vector<40x128xf32>
    %c0_188 = arith.constant 0 : index
    %c0_189 = arith.constant 0 : index
    %c0_190 = arith.constant 0 : index
    %248 = vector.load %arg10[%c0_188, %c0_189, %c0_190] : memref<2x1x128xf32, #tpu.memory_space<vmem>>, vector<1x1x128xf32>
    %249 = vector.shape_cast %248 : vector<1x1x128xf32> to vector<1x128xf32>
    %c0_191 = arith.constant 0 : index
    %c0_192 = arith.constant 0 : index
    %c0_193 = arith.constant 0 : index
    %250 = vector.load %arg11[%c0_191, %c0_192, %c0_193] : memref<2x1x128xf32, #tpu.memory_space<vmem>>, vector<1x1x128xf32>
    %251 = vector.shape_cast %250 : vector<1x1x128xf32> to vector<1x128xf32>
    %cst_194 = arith.constant dense<0.000000e+00> : vector<40xf32>
    %252 = vector.multi_reduction <add>, %247, %cst_194 [1] : vector<40x128xf32> to vector<40xf32>
    %253 = vector.shape_cast %252 : vector<40xf32> to vector<40x1xf32>
    %cst_195 = arith.constant 1.280000e+02 : f32
    %254 = vector.broadcast %cst_195 : f32 to vector<40x1xf32>
    %255 = arith.divf %253, %254 : vector<40x1xf32>
    %256 = vector.broadcast %255 : vector<40x1xf32> to vector<40x128xf32>
    %257 = arith.subf %247, %256 : vector<40x128xf32>
    %258 = arith.mulf %257, %257 : vector<40x128xf32>
    %cst_196 = arith.constant dense<0.000000e+00> : vector<40xf32>
    %259 = vector.multi_reduction <add>, %258, %cst_196 [1] : vector<40x128xf32> to vector<40xf32>
    %260 = vector.shape_cast %259 : vector<40xf32> to vector<40x1xf32>
    %cst_197 = arith.constant 1.280000e+02 : f32
    %261 = vector.broadcast %cst_197 : f32 to vector<40x1xf32>
    %262 = arith.divf %260, %261 : vector<40x1xf32>
    %263 = vector.broadcast %255 : vector<40x1xf32> to vector<40x128xf32>
    %264 = arith.subf %247, %263 : vector<40x128xf32>
    %cst_198 = arith.constant 9.99999974E-6 : f32
    %265 = vector.broadcast %cst_198 : f32 to vector<40x1xf32>
    %266 = arith.addf %262, %265 : vector<40x1xf32>
    %267 = math.rsqrt %266 : vector<40x1xf32>
    %268 = vector.broadcast %267 : vector<40x1xf32> to vector<40x128xf32>
    %269 = arith.mulf %264, %268 : vector<40x128xf32>
    %270 = vector.broadcast %249 : vector<1x128xf32> to vector<40x128xf32>
    %271 = arith.mulf %269, %270 : vector<40x128xf32>
    %272 = vector.broadcast %251 : vector<1x128xf32> to vector<40x128xf32>
    %273 = arith.addf %271, %272 : vector<40x128xf32>
    %c0_199 = arith.constant 0 : index
    %c0_200 = arith.constant 0 : index
    %c0_201 = arith.constant 0 : index
    %274 = vector.load %arg12[%c0_199, %c0_200, %c0_201] : memref<2x128x512xf32, #tpu.memory_space<vmem>>, vector<1x128x512xf32>
    %275 = vector.shape_cast %274 : vector<1x128x512xf32> to vector<128x512xf32>
    %276 = arith.truncf %273 : vector<40x128xf32> to vector<40x128xbf16>
    %277 = arith.truncf %275 : vector<128x512xf32> to vector<128x512xbf16>
    %cst_202 = arith.constant dense<0.000000e+00> : vector<40x512xf32>
    %278 = tpu.matmul %276, %277, %cst_202 {dimension_numbers = #tpu.dot_dimension_numbers<[1], [0], [0], [1], [0, 0, 1, 1], [], []>} : vector<40x128xbf16>, vector<128x512xbf16>, vector<40x512xf32> -> vector<40x512xf32>
    %c0_203 = arith.constant 0 : index
    %c0_204 = arith.constant 0 : index
    %c0_205 = arith.constant 0 : index
    %279 = vector.load %arg13[%c0_203, %c0_204, %c0_205] : memref<2x1x512xf32, #tpu.memory_space<vmem>>, vector<1x1x512xf32>
    %280 = vector.shape_cast %279 : vector<1x1x512xf32> to vector<1x512xf32>
    %281 = vector.broadcast %280 : vector<1x512xf32> to vector<40x512xf32>
    %282 = arith.addf %278, %281 : vector<40x512xf32>
    %cst_206 = arith.constant 1.702000e+00 : f32
    %283 = vector.broadcast %cst_206 : f32 to vector<40x512xf32>
    %284 = arith.mulf %283, %282 : vector<40x512xf32>
    %285 = arith.negf %284 : vector<40x512xf32>
    %286 = math.exp %285 : vector<40x512xf32>
    %cst_207 = arith.constant 1.000000e+00 : f32
    %287 = vector.broadcast %cst_207 : f32 to vector<40x512xf32>
    %288 = arith.addf %287, %286 : vector<40x512xf32>
    %289 = arith.divf %287, %288 : vector<40x512xf32>
    %290 = arith.mulf %282, %289 : vector<40x512xf32>
    %c0_208 = arith.constant 0 : index
    %c0_209 = arith.constant 0 : index
    %c0_210 = arith.constant 0 : index
    %291 = vector.load %arg14[%c0_208, %c0_209, %c0_210] : memref<2x512x128xf32, #tpu.memory_space<vmem>>, vector<1x512x128xf32>
    %292 = vector.shape_cast %291 : vector<1x512x128xf32> to vector<512x128xf32>
    %293 = arith.truncf %290 : vector<40x512xf32> to vector<40x512xbf16>
    %294 = arith.truncf %292 : vector<512x128xf32> to vector<512x128xbf16>
    %cst_211 = arith.constant dense<0.000000e+00> : vector<40x128xf32>
    %295 = tpu.matmul %293, %294, %cst_211 {dimension_numbers = #tpu.dot_dimension_numbers<[1], [0], [0], [1], [0, 0, 1, 1], [], []>} : vector<40x512xbf16>, vector<512x128xbf16>, vector<40x128xf32> -> vector<40x128xf32>
    %296 = arith.addf %247, %295 : vector<40x128xf32>
    %c0_212 = arith.constant 0 : index
    %c0_213 = arith.constant 0 : index
    %c0_214 = arith.constant 0 : index
    %297 = vector.load %arg15[%c0_212, %c0_213, %c0_214] : memref<2x1x128xf32, #tpu.memory_space<vmem>>, vector<1x1x128xf32>
    %298 = vector.shape_cast %297 : vector<1x1x128xf32> to vector<1x128xf32>
    %299 = vector.broadcast %298 : vector<1x128xf32> to vector<40x128xf32>
    %300 = arith.addf %296, %299 : vector<40x128xf32>
    %c1_215 = arith.constant 1 : index
    %c0_216 = arith.constant 0 : index
    %c0_217 = arith.constant 0 : index
    %301 = vector.load %arg4[%c1_215, %c0_216, %c0_217] : memref<2x1x128xf32, #tpu.memory_space<vmem>>, vector<1x1x128xf32>
    %302 = vector.shape_cast %301 : vector<1x1x128xf32> to vector<1x128xf32>
    %c1_218 = arith.constant 1 : index
    %c0_219 = arith.constant 0 : index
    %c0_220 = arith.constant 0 : index
    %303 = vector.load %arg5[%c1_218, %c0_219, %c0_220] : memref<2x1x128xf32, #tpu.memory_space<vmem>>, vector<1x1x128xf32>
    %304 = vector.shape_cast %303 : vector<1x1x128xf32> to vector<1x128xf32>
    %cst_221 = arith.constant dense<0.000000e+00> : vector<40xf32>
    %305 = vector.multi_reduction <add>, %300, %cst_221 [1] : vector<40x128xf32> to vector<40xf32>
    %306 = vector.shape_cast %305 : vector<40xf32> to vector<40x1xf32>
    %cst_222 = arith.constant 1.280000e+02 : f32
    %307 = vector.broadcast %cst_222 : f32 to vector<40x1xf32>
    %308 = arith.divf %306, %307 : vector<40x1xf32>
    %309 = vector.broadcast %308 : vector<40x1xf32> to vector<40x128xf32>
    %310 = arith.subf %300, %309 : vector<40x128xf32>
    %311 = arith.mulf %310, %310 : vector<40x128xf32>
    %cst_223 = arith.constant dense<0.000000e+00> : vector<40xf32>
    %312 = vector.multi_reduction <add>, %311, %cst_223 [1] : vector<40x128xf32> to vector<40xf32>
    %313 = vector.shape_cast %312 : vector<40xf32> to vector<40x1xf32>
    %cst_224 = arith.constant 1.280000e+02 : f32
    %314 = vector.broadcast %cst_224 : f32 to vector<40x1xf32>
    %315 = arith.divf %313, %314 : vector<40x1xf32>
    %316 = vector.broadcast %308 : vector<40x1xf32> to vector<40x128xf32>
    %317 = arith.subf %300, %316 : vector<40x128xf32>
    %cst_225 = arith.constant 9.99999974E-6 : f32
    %318 = vector.broadcast %cst_225 : f32 to vector<40x1xf32>
    %319 = arith.addf %315, %318 : vector<40x1xf32>
    %320 = math.rsqrt %319 : vector<40x1xf32>
    %321 = vector.broadcast %320 : vector<40x1xf32> to vector<40x128xf32>
    %322 = arith.mulf %317, %321 : vector<40x128xf32>
    %323 = vector.broadcast %302 : vector<1x128xf32> to vector<40x128xf32>
    %324 = arith.mulf %322, %323 : vector<40x128xf32>
    %325 = vector.broadcast %304 : vector<1x128xf32> to vector<40x128xf32>
    %326 = arith.addf %324, %325 : vector<40x128xf32>
    %cst_226 = arith.constant 0.000000e+00 : f32
    %327 = vector.broadcast %cst_226 : f32 to vector<40x128xf32>
    %c1_227 = arith.constant 1 : index
    %c0_228 = arith.constant 0 : index
    %c0_229 = arith.constant 0 : index
    %c0_230 = arith.constant 0 : index
    %c0_231 = arith.constant 0 : index
    %328 = vector.load %arg6[%c1_227, %c0_228, %c0_229, %c0_230, %c0_231] : memref<2x3x4x128x32xf32, #tpu.memory_space<vmem>>, vector<1x1x1x128x32xf32>
    %329 = vector.shape_cast %328 : vector<1x1x1x128x32xf32> to vector<128x32xf32>
    %330 = arith.truncf %326 : vector<40x128xf32> to vector<40x128xbf16>
    %331 = arith.truncf %329 : vector<128x32xf32> to vector<128x32xbf16>
    %cst_232 = arith.constant dense<0.000000e+00> : vector<40x32xf32>
    %332 = tpu.matmul %330, %331, %cst_232 {dimension_numbers = #tpu.dot_dimension_numbers<[1], [0], [0], [1], [0, 0, 1, 1], [], []>} : vector<40x128xbf16>, vector<128x32xbf16>, vector<40x32xf32> -> vector<40x32xf32>
    %c1_233 = arith.constant 1 : index
    %c0_234 = arith.constant 0 : index
    %c0_235 = arith.constant 0 : index
    %c0_236 = arith.constant 0 : index
    %c0_237 = arith.constant 0 : index
    %333 = vector.load %arg7[%c1_233, %c0_234, %c0_235, %c0_236, %c0_237] : memref<2x3x4x1x32xf32, #tpu.memory_space<vmem>>, vector<1x1x1x1x32xf32>
    %334 = vector.shape_cast %333 : vector<1x1x1x1x32xf32> to vector<1x32xf32>
    %335 = vector.broadcast %334 : vector<1x32xf32> to vector<40x32xf32>
    %336 = arith.addf %332, %335 : vector<40x32xf32>
    %c1_238 = arith.constant 1 : index
    %c1_239 = arith.constant 1 : index
    %c0_240 = arith.constant 0 : index
    %c0_241 = arith.constant 0 : index
    %c0_242 = arith.constant 0 : index
    %337 = vector.load %arg6[%c1_238, %c1_239, %c0_240, %c0_241, %c0_242] : memref<2x3x4x128x32xf32, #tpu.memory_space<vmem>>, vector<1x1x1x128x32xf32>
    %338 = vector.shape_cast %337 : vector<1x1x1x128x32xf32> to vector<128x32xf32>
    %339 = arith.truncf %326 : vector<40x128xf32> to vector<40x128xbf16>
    %340 = arith.truncf %338 : vector<128x32xf32> to vector<128x32xbf16>
    %cst_243 = arith.constant dense<0.000000e+00> : vector<40x32xf32>
    %341 = tpu.matmul %339, %340, %cst_243 {dimension_numbers = #tpu.dot_dimension_numbers<[1], [0], [0], [1], [0, 0, 1, 1], [], []>} : vector<40x128xbf16>, vector<128x32xbf16>, vector<40x32xf32> -> vector<40x32xf32>
    %c1_244 = arith.constant 1 : index
    %c1_245 = arith.constant 1 : index
    %c0_246 = arith.constant 0 : index
    %c0_247 = arith.constant 0 : index
    %c0_248 = arith.constant 0 : index
    %342 = vector.load %arg7[%c1_244, %c1_245, %c0_246, %c0_247, %c0_248] : memref<2x3x4x1x32xf32, #tpu.memory_space<vmem>>, vector<1x1x1x1x32xf32>
    %343 = vector.shape_cast %342 : vector<1x1x1x1x32xf32> to vector<1x32xf32>
    %344 = vector.broadcast %343 : vector<1x32xf32> to vector<40x32xf32>
    %345 = arith.addf %341, %344 : vector<40x32xf32>
    %c1_249 = arith.constant 1 : index
    %c2_250 = arith.constant 2 : index
    %c0_251 = arith.constant 0 : index
    %c0_252 = arith.constant 0 : index
    %c0_253 = arith.constant 0 : index
    %346 = vector.load %arg6[%c1_249, %c2_250, %c0_251, %c0_252, %c0_253] : memref<2x3x4x128x32xf32, #tpu.memory_space<vmem>>, vector<1x1x1x128x32xf32>
    %347 = vector.shape_cast %346 : vector<1x1x1x128x32xf32> to vector<128x32xf32>
    %348 = arith.truncf %326 : vector<40x128xf32> to vector<40x128xbf16>
    %349 = arith.truncf %347 : vector<128x32xf32> to vector<128x32xbf16>
    %cst_254 = arith.constant dense<0.000000e+00> : vector<40x32xf32>
    %350 = tpu.matmul %348, %349, %cst_254 {dimension_numbers = #tpu.dot_dimension_numbers<[1], [0], [0], [1], [0, 0, 1, 1], [], []>} : vector<40x128xbf16>, vector<128x32xbf16>, vector<40x32xf32> -> vector<40x32xf32>
    %c1_255 = arith.constant 1 : index
    %c2_256 = arith.constant 2 : index
    %c0_257 = arith.constant 0 : index
    %c0_258 = arith.constant 0 : index
    %c0_259 = arith.constant 0 : index
    %351 = vector.load %arg7[%c1_255, %c2_256, %c0_257, %c0_258, %c0_259] : memref<2x3x4x1x32xf32, #tpu.memory_space<vmem>>, vector<1x1x1x1x32xf32>
    %352 = vector.shape_cast %351 : vector<1x1x1x1x32xf32> to vector<1x32xf32>
    %353 = vector.broadcast %352 : vector<1x32xf32> to vector<40x32xf32>
    %354 = arith.addf %350, %353 : vector<40x32xf32>
    %355 = tpu.transpose %345, [1, 0] : vector<40x32xf32> -> vector<32x40xf32>
    %356 = arith.truncf %336 : vector<40x32xf32> to vector<40x32xbf16>
    %357 = arith.truncf %355 : vector<32x40xf32> to vector<32x40xbf16>
    %cst_260 = arith.constant dense<0.000000e+00> : vector<40x40xf32>
    %358 = tpu.matmul %356, %357, %cst_260 {dimension_numbers = #tpu.dot_dimension_numbers<[1], [0], [0], [1], [0, 0, 1, 1], [], []>} : vector<40x32xbf16>, vector<32x40xbf16>, vector<40x40xf32> -> vector<40x40xf32>
    %cst_261 = arith.constant 0.176776692 : f32
    %359 = vector.broadcast %cst_261 : f32 to vector<40x40xf32>
    %360 = arith.mulf %358, %359 : vector<40x40xf32>
    %361 = arith.addf %360, %3 : vector<40x40xf32>
    %cst_262 = arith.constant dense<0xFF800000> : vector<40xf32>
    %362 = vector.multi_reduction <maximumf>, %361, %cst_262 [1] : vector<40x40xf32> to vector<40xf32>
    %363 = vector.shape_cast %362 : vector<40xf32> to vector<40x1xf32>
    %364 = vector.broadcast %363 : vector<40x1xf32> to vector<40x40xf32>
    %365 = arith.subf %361, %364 : vector<40x40xf32>
    %366 = math.exp %365 : vector<40x40xf32>
    %cst_263 = arith.constant dense<0.000000e+00> : vector<40xf32>
    %367 = vector.multi_reduction <add>, %366, %cst_263 [1] : vector<40x40xf32> to vector<40xf32>
    %368 = vector.shape_cast %367 : vector<40xf32> to vector<40x1xf32>
    %369 = tpu.reciprocal %368 {approx = true} : vector<40x1xf32> -> vector<40x1xf32>
    %370 = vector.broadcast %369 : vector<40x1xf32> to vector<40x40xf32>
    %371 = arith.mulf %366, %370 : vector<40x40xf32>
    %372 = arith.truncf %371 : vector<40x40xf32> to vector<40x40xbf16>
    %373 = arith.truncf %354 : vector<40x32xf32> to vector<40x32xbf16>
    %cst_264 = arith.constant dense<0.000000e+00> : vector<40x32xf32>
    %374 = tpu.matmul %372, %373, %cst_264 {dimension_numbers = #tpu.dot_dimension_numbers<[1], [0], [0], [1], [0, 0, 1, 1], [], []>} : vector<40x40xbf16>, vector<40x32xbf16>, vector<40x32xf32> -> vector<40x32xf32>
    %c1_265 = arith.constant 1 : index
    %c0_266 = arith.constant 0 : index
    %c0_267 = arith.constant 0 : index
    %c0_268 = arith.constant 0 : index
    %375 = vector.load %arg8[%c1_265, %c0_266, %c0_267, %c0_268] : memref<2x4x32x128xf32, #tpu.memory_space<vmem>>, vector<1x1x32x128xf32>
    %376 = vector.shape_cast %375 : vector<1x1x32x128xf32> to vector<32x128xf32>
    %377 = arith.truncf %374 : vector<40x32xf32> to vector<40x32xbf16>
    %378 = arith.truncf %376 : vector<32x128xf32> to vector<32x128xbf16>
    %cst_269 = arith.constant dense<0.000000e+00> : vector<40x128xf32>
    %379 = tpu.matmul %377, %378, %cst_269 {dimension_numbers = #tpu.dot_dimension_numbers<[1], [0], [0], [1], [0, 0, 1, 1], [], []>} : vector<40x32xbf16>, vector<32x128xbf16>, vector<40x128xf32> -> vector<40x128xf32>
    %380 = arith.addf %327, %379 : vector<40x128xf32>
    %c1_270 = arith.constant 1 : index
    %c0_271 = arith.constant 0 : index
    %c1_272 = arith.constant 1 : index
    %c0_273 = arith.constant 0 : index
    %c0_274 = arith.constant 0 : index
    %381 = vector.load %arg6[%c1_270, %c0_271, %c1_272, %c0_273, %c0_274] : memref<2x3x4x128x32xf32, #tpu.memory_space<vmem>>, vector<1x1x1x128x32xf32>
    %382 = vector.shape_cast %381 : vector<1x1x1x128x32xf32> to vector<128x32xf32>
    %383 = arith.truncf %326 : vector<40x128xf32> to vector<40x128xbf16>
    %384 = arith.truncf %382 : vector<128x32xf32> to vector<128x32xbf16>
    %cst_275 = arith.constant dense<0.000000e+00> : vector<40x32xf32>
    %385 = tpu.matmul %383, %384, %cst_275 {dimension_numbers = #tpu.dot_dimension_numbers<[1], [0], [0], [1], [0, 0, 1, 1], [], []>} : vector<40x128xbf16>, vector<128x32xbf16>, vector<40x32xf32> -> vector<40x32xf32>
    %c1_276 = arith.constant 1 : index
    %c0_277 = arith.constant 0 : index
    %c1_278 = arith.constant 1 : index
    %c0_279 = arith.constant 0 : index
    %c0_280 = arith.constant 0 : index
    %386 = vector.load %arg7[%c1_276, %c0_277, %c1_278, %c0_279, %c0_280] : memref<2x3x4x1x32xf32, #tpu.memory_space<vmem>>, vector<1x1x1x1x32xf32>
    %387 = vector.shape_cast %386 : vector<1x1x1x1x32xf32> to vector<1x32xf32>
    %388 = vector.broadcast %387 : vector<1x32xf32> to vector<40x32xf32>
    %389 = arith.addf %385, %388 : vector<40x32xf32>
    %c1_281 = arith.constant 1 : index
    %c1_282 = arith.constant 1 : index
    %c1_283 = arith.constant 1 : index
    %c0_284 = arith.constant 0 : index
    %c0_285 = arith.constant 0 : index
    %390 = vector.load %arg6[%c1_281, %c1_282, %c1_283, %c0_284, %c0_285] : memref<2x3x4x128x32xf32, #tpu.memory_space<vmem>>, vector<1x1x1x128x32xf32>
    %391 = vector.shape_cast %390 : vector<1x1x1x128x32xf32> to vector<128x32xf32>
    %392 = arith.truncf %326 : vector<40x128xf32> to vector<40x128xbf16>
    %393 = arith.truncf %391 : vector<128x32xf32> to vector<128x32xbf16>
    %cst_286 = arith.constant dense<0.000000e+00> : vector<40x32xf32>
    %394 = tpu.matmul %392, %393, %cst_286 {dimension_numbers = #tpu.dot_dimension_numbers<[1], [0], [0], [1], [0, 0, 1, 1], [], []>} : vector<40x128xbf16>, vector<128x32xbf16>, vector<40x32xf32> -> vector<40x32xf32>
    %c1_287 = arith.constant 1 : index
    %c1_288 = arith.constant 1 : index
    %c1_289 = arith.constant 1 : index
    %c0_290 = arith.constant 0 : index
    %c0_291 = arith.constant 0 : index
    %395 = vector.load %arg7[%c1_287, %c1_288, %c1_289, %c0_290, %c0_291] : memref<2x3x4x1x32xf32, #tpu.memory_space<vmem>>, vector<1x1x1x1x32xf32>
    %396 = vector.shape_cast %395 : vector<1x1x1x1x32xf32> to vector<1x32xf32>
    %397 = vector.broadcast %396 : vector<1x32xf32> to vector<40x32xf32>
    %398 = arith.addf %394, %397 : vector<40x32xf32>
    %c1_292 = arith.constant 1 : index
    %c2_293 = arith.constant 2 : index
    %c1_294 = arith.constant 1 : index
    %c0_295 = arith.constant 0 : index
    %c0_296 = arith.constant 0 : index
    %399 = vector.load %arg6[%c1_292, %c2_293, %c1_294, %c0_295, %c0_296] : memref<2x3x4x128x32xf32, #tpu.memory_space<vmem>>, vector<1x1x1x128x32xf32>
    %400 = vector.shape_cast %399 : vector<1x1x1x128x32xf32> to vector<128x32xf32>
    %401 = arith.truncf %326 : vector<40x128xf32> to vector<40x128xbf16>
    %402 = arith.truncf %400 : vector<128x32xf32> to vector<128x32xbf16>
    %cst_297 = arith.constant dense<0.000000e+00> : vector<40x32xf32>
    %403 = tpu.matmul %401, %402, %cst_297 {dimension_numbers = #tpu.dot_dimension_numbers<[1], [0], [0], [1], [0, 0, 1, 1], [], []>} : vector<40x128xbf16>, vector<128x32xbf16>, vector<40x32xf32> -> vector<40x32xf32>
    %c1_298 = arith.constant 1 : index
    %c2_299 = arith.constant 2 : index
    %c1_300 = arith.constant 1 : index
    %c0_301 = arith.constant 0 : index
    %c0_302 = arith.constant 0 : index
    %404 = vector.load %arg7[%c1_298, %c2_299, %c1_300, %c0_301, %c0_302] : memref<2x3x4x1x32xf32, #tpu.memory_space<vmem>>, vector<1x1x1x1x32xf32>
    %405 = vector.shape_cast %404 : vector<1x1x1x1x32xf32> to vector<1x32xf32>
    %406 = vector.broadcast %405 : vector<1x32xf32> to vector<40x32xf32>
    %407 = arith.addf %403, %406 : vector<40x32xf32>
    %408 = tpu.transpose %398, [1, 0] : vector<40x32xf32> -> vector<32x40xf32>
    %409 = arith.truncf %389 : vector<40x32xf32> to vector<40x32xbf16>
    %410 = arith.truncf %408 : vector<32x40xf32> to vector<32x40xbf16>
    %cst_303 = arith.constant dense<0.000000e+00> : vector<40x40xf32>
    %411 = tpu.matmul %409, %410, %cst_303 {dimension_numbers = #tpu.dot_dimension_numbers<[1], [0], [0], [1], [0, 0, 1, 1], [], []>} : vector<40x32xbf16>, vector<32x40xbf16>, vector<40x40xf32> -> vector<40x40xf32>
    %cst_304 = arith.constant 0.176776692 : f32
    %412 = vector.broadcast %cst_304 : f32 to vector<40x40xf32>
    %413 = arith.mulf %411, %412 : vector<40x40xf32>
    %414 = arith.addf %413, %3 : vector<40x40xf32>
    %cst_305 = arith.constant dense<0xFF800000> : vector<40xf32>
    %415 = vector.multi_reduction <maximumf>, %414, %cst_305 [1] : vector<40x40xf32> to vector<40xf32>
    %416 = vector.shape_cast %415 : vector<40xf32> to vector<40x1xf32>
    %417 = vector.broadcast %416 : vector<40x1xf32> to vector<40x40xf32>
    %418 = arith.subf %414, %417 : vector<40x40xf32>
    %419 = math.exp %418 : vector<40x40xf32>
    %cst_306 = arith.constant dense<0.000000e+00> : vector<40xf32>
    %420 = vector.multi_reduction <add>, %419, %cst_306 [1] : vector<40x40xf32> to vector<40xf32>
    %421 = vector.shape_cast %420 : vector<40xf32> to vector<40x1xf32>
    %422 = tpu.reciprocal %421 {approx = true} : vector<40x1xf32> -> vector<40x1xf32>
    %423 = vector.broadcast %422 : vector<40x1xf32> to vector<40x40xf32>
    %424 = arith.mulf %419, %423 : vector<40x40xf32>
    %425 = arith.truncf %424 : vector<40x40xf32> to vector<40x40xbf16>
    %426 = arith.truncf %407 : vector<40x32xf32> to vector<40x32xbf16>
    %cst_307 = arith.constant dense<0.000000e+00> : vector<40x32xf32>
    %427 = tpu.matmul %425, %426, %cst_307 {dimension_numbers = #tpu.dot_dimension_numbers<[1], [0], [0], [1], [0, 0, 1, 1], [], []>} : vector<40x40xbf16>, vector<40x32xbf16>, vector<40x32xf32> -> vector<40x32xf32>
    %c1_308 = arith.constant 1 : index
    %c1_309 = arith.constant 1 : index
    %c0_310 = arith.constant 0 : index
    %c0_311 = arith.constant 0 : index
    %428 = vector.load %arg8[%c1_308, %c1_309, %c0_310, %c0_311] : memref<2x4x32x128xf32, #tpu.memory_space<vmem>>, vector<1x1x32x128xf32>
    %429 = vector.shape_cast %428 : vector<1x1x32x128xf32> to vector<32x128xf32>
    %430 = arith.truncf %427 : vector<40x32xf32> to vector<40x32xbf16>
    %431 = arith.truncf %429 : vector<32x128xf32> to vector<32x128xbf16>
    %cst_312 = arith.constant dense<0.000000e+00> : vector<40x128xf32>
    %432 = tpu.matmul %430, %431, %cst_312 {dimension_numbers = #tpu.dot_dimension_numbers<[1], [0], [0], [1], [0, 0, 1, 1], [], []>} : vector<40x32xbf16>, vector<32x128xbf16>, vector<40x128xf32> -> vector<40x128xf32>
    %433 = arith.addf %380, %432 : vector<40x128xf32>
    %c1_313 = arith.constant 1 : index
    %c0_314 = arith.constant 0 : index
    %c2_315 = arith.constant 2 : index
    %c0_316 = arith.constant 0 : index
    %c0_317 = arith.constant 0 : index
    %434 = vector.load %arg6[%c1_313, %c0_314, %c2_315, %c0_316, %c0_317] : memref<2x3x4x128x32xf32, #tpu.memory_space<vmem>>, vector<1x1x1x128x32xf32>
    %435 = vector.shape_cast %434 : vector<1x1x1x128x32xf32> to vector<128x32xf32>
    %436 = arith.truncf %326 : vector<40x128xf32> to vector<40x128xbf16>
    %437 = arith.truncf %435 : vector<128x32xf32> to vector<128x32xbf16>
    %cst_318 = arith.constant dense<0.000000e+00> : vector<40x32xf32>
    %438 = tpu.matmul %436, %437, %cst_318 {dimension_numbers = #tpu.dot_dimension_numbers<[1], [0], [0], [1], [0, 0, 1, 1], [], []>} : vector<40x128xbf16>, vector<128x32xbf16>, vector<40x32xf32> -> vector<40x32xf32>
    %c1_319 = arith.constant 1 : index
    %c0_320 = arith.constant 0 : index
    %c2_321 = arith.constant 2 : index
    %c0_322 = arith.constant 0 : index
    %c0_323 = arith.constant 0 : index
    %439 = vector.load %arg7[%c1_319, %c0_320, %c2_321, %c0_322, %c0_323] : memref<2x3x4x1x32xf32, #tpu.memory_space<vmem>>, vector<1x1x1x1x32xf32>
    %440 = vector.shape_cast %439 : vector<1x1x1x1x32xf32> to vector<1x32xf32>
    %441 = vector.broadcast %440 : vector<1x32xf32> to vector<40x32xf32>
    %442 = arith.addf %438, %441 : vector<40x32xf32>
    %c1_324 = arith.constant 1 : index
    %c1_325 = arith.constant 1 : index
    %c2_326 = arith.constant 2 : index
    %c0_327 = arith.constant 0 : index
    %c0_328 = arith.constant 0 : index
    %443 = vector.load %arg6[%c1_324, %c1_325, %c2_326, %c0_327, %c0_328] : memref<2x3x4x128x32xf32, #tpu.memory_space<vmem>>, vector<1x1x1x128x32xf32>
    %444 = vector.shape_cast %443 : vector<1x1x1x128x32xf32> to vector<128x32xf32>
    %445 = arith.truncf %326 : vector<40x128xf32> to vector<40x128xbf16>
    %446 = arith.truncf %444 : vector<128x32xf32> to vector<128x32xbf16>
    %cst_329 = arith.constant dense<0.000000e+00> : vector<40x32xf32>
    %447 = tpu.matmul %445, %446, %cst_329 {dimension_numbers = #tpu.dot_dimension_numbers<[1], [0], [0], [1], [0, 0, 1, 1], [], []>} : vector<40x128xbf16>, vector<128x32xbf16>, vector<40x32xf32> -> vector<40x32xf32>
    %c1_330 = arith.constant 1 : index
    %c1_331 = arith.constant 1 : index
    %c2_332 = arith.constant 2 : index
    %c0_333 = arith.constant 0 : index
    %c0_334 = arith.constant 0 : index
    %448 = vector.load %arg7[%c1_330, %c1_331, %c2_332, %c0_333, %c0_334] : memref<2x3x4x1x32xf32, #tpu.memory_space<vmem>>, vector<1x1x1x1x32xf32>
    %449 = vector.shape_cast %448 : vector<1x1x1x1x32xf32> to vector<1x32xf32>
    %450 = vector.broadcast %449 : vector<1x32xf32> to vector<40x32xf32>
    %451 = arith.addf %447, %450 : vector<40x32xf32>
    %c1_335 = arith.constant 1 : index
    %c2_336 = arith.constant 2 : index
    %c2_337 = arith.constant 2 : index
    %c0_338 = arith.constant 0 : index
    %c0_339 = arith.constant 0 : index
    %452 = vector.load %arg6[%c1_335, %c2_336, %c2_337, %c0_338, %c0_339] : memref<2x3x4x128x32xf32, #tpu.memory_space<vmem>>, vector<1x1x1x128x32xf32>
    %453 = vector.shape_cast %452 : vector<1x1x1x128x32xf32> to vector<128x32xf32>
    %454 = arith.truncf %326 : vector<40x128xf32> to vector<40x128xbf16>
    %455 = arith.truncf %453 : vector<128x32xf32> to vector<128x32xbf16>
    %cst_340 = arith.constant dense<0.000000e+00> : vector<40x32xf32>
    %456 = tpu.matmul %454, %455, %cst_340 {dimension_numbers = #tpu.dot_dimension_numbers<[1], [0], [0], [1], [0, 0, 1, 1], [], []>} : vector<40x128xbf16>, vector<128x32xbf16>, vector<40x32xf32> -> vector<40x32xf32>
    %c1_341 = arith.constant 1 : index
    %c2_342 = arith.constant 2 : index
    %c2_343 = arith.constant 2 : index
    %c0_344 = arith.constant 0 : index
    %c0_345 = arith.constant 0 : index
    %457 = vector.load %arg7[%c1_341, %c2_342, %c2_343, %c0_344, %c0_345] : memref<2x3x4x1x32xf32, #tpu.memory_space<vmem>>, vector<1x1x1x1x32xf32>
    %458 = vector.shape_cast %457 : vector<1x1x1x1x32xf32> to vector<1x32xf32>
    %459 = vector.broadcast %458 : vector<1x32xf32> to vector<40x32xf32>
    %460 = arith.addf %456, %459 : vector<40x32xf32>
    %461 = tpu.transpose %451, [1, 0] : vector<40x32xf32> -> vector<32x40xf32>
    %462 = arith.truncf %442 : vector<40x32xf32> to vector<40x32xbf16>
    %463 = arith.truncf %461 : vector<32x40xf32> to vector<32x40xbf16>
    %cst_346 = arith.constant dense<0.000000e+00> : vector<40x40xf32>
    %464 = tpu.matmul %462, %463, %cst_346 {dimension_numbers = #tpu.dot_dimension_numbers<[1], [0], [0], [1], [0, 0, 1, 1], [], []>} : vector<40x32xbf16>, vector<32x40xbf16>, vector<40x40xf32> -> vector<40x40xf32>
    %cst_347 = arith.constant 0.176776692 : f32
    %465 = vector.broadcast %cst_347 : f32 to vector<40x40xf32>
    %466 = arith.mulf %464, %465 : vector<40x40xf32>
    %467 = arith.addf %466, %3 : vector<40x40xf32>
    %cst_348 = arith.constant dense<0xFF800000> : vector<40xf32>
    %468 = vector.multi_reduction <maximumf>, %467, %cst_348 [1] : vector<40x40xf32> to vector<40xf32>
    %469 = vector.shape_cast %468 : vector<40xf32> to vector<40x1xf32>
    %470 = vector.broadcast %469 : vector<40x1xf32> to vector<40x40xf32>
    %471 = arith.subf %467, %470 : vector<40x40xf32>
    %472 = math.exp %471 : vector<40x40xf32>
    %cst_349 = arith.constant dense<0.000000e+00> : vector<40xf32>
    %473 = vector.multi_reduction <add>, %472, %cst_349 [1] : vector<40x40xf32> to vector<40xf32>
    %474 = vector.shape_cast %473 : vector<40xf32> to vector<40x1xf32>
    %475 = tpu.reciprocal %474 {approx = true} : vector<40x1xf32> -> vector<40x1xf32>
    %476 = vector.broadcast %475 : vector<40x1xf32> to vector<40x40xf32>
    %477 = arith.mulf %472, %476 : vector<40x40xf32>
    %478 = arith.truncf %477 : vector<40x40xf32> to vector<40x40xbf16>
    %479 = arith.truncf %460 : vector<40x32xf32> to vector<40x32xbf16>
    %cst_350 = arith.constant dense<0.000000e+00> : vector<40x32xf32>
    %480 = tpu.matmul %478, %479, %cst_350 {dimension_numbers = #tpu.dot_dimension_numbers<[1], [0], [0], [1], [0, 0, 1, 1], [], []>} : vector<40x40xbf16>, vector<40x32xbf16>, vector<40x32xf32> -> vector<40x32xf32>
    %c1_351 = arith.constant 1 : index
    %c2_352 = arith.constant 2 : index
    %c0_353 = arith.constant 0 : index
    %c0_354 = arith.constant 0 : index
    %481 = vector.load %arg8[%c1_351, %c2_352, %c0_353, %c0_354] : memref<2x4x32x128xf32, #tpu.memory_space<vmem>>, vector<1x1x32x128xf32>
    %482 = vector.shape_cast %481 : vector<1x1x32x128xf32> to vector<32x128xf32>
    %483 = arith.truncf %480 : vector<40x32xf32> to vector<40x32xbf16>
    %484 = arith.truncf %482 : vector<32x128xf32> to vector<32x128xbf16>
    %cst_355 = arith.constant dense<0.000000e+00> : vector<40x128xf32>
    %485 = tpu.matmul %483, %484, %cst_355 {dimension_numbers = #tpu.dot_dimension_numbers<[1], [0], [0], [1], [0, 0, 1, 1], [], []>} : vector<40x32xbf16>, vector<32x128xbf16>, vector<40x128xf32> -> vector<40x128xf32>
    %486 = arith.addf %433, %485 : vector<40x128xf32>
    %c1_356 = arith.constant 1 : index
    %c0_357 = arith.constant 0 : index
    %c3_358 = arith.constant 3 : index
    %c0_359 = arith.constant 0 : index
    %c0_360 = arith.constant 0 : index
    %487 = vector.load %arg6[%c1_356, %c0_357, %c3_358, %c0_359, %c0_360] : memref<2x3x4x128x32xf32, #tpu.memory_space<vmem>>, vector<1x1x1x128x32xf32>
    %488 = vector.shape_cast %487 : vector<1x1x1x128x32xf32> to vector<128x32xf32>
    %489 = arith.truncf %326 : vector<40x128xf32> to vector<40x128xbf16>
    %490 = arith.truncf %488 : vector<128x32xf32> to vector<128x32xbf16>
    %cst_361 = arith.constant dense<0.000000e+00> : vector<40x32xf32>
    %491 = tpu.matmul %489, %490, %cst_361 {dimension_numbers = #tpu.dot_dimension_numbers<[1], [0], [0], [1], [0, 0, 1, 1], [], []>} : vector<40x128xbf16>, vector<128x32xbf16>, vector<40x32xf32> -> vector<40x32xf32>
    %c1_362 = arith.constant 1 : index
    %c0_363 = arith.constant 0 : index
    %c3_364 = arith.constant 3 : index
    %c0_365 = arith.constant 0 : index
    %c0_366 = arith.constant 0 : index
    %492 = vector.load %arg7[%c1_362, %c0_363, %c3_364, %c0_365, %c0_366] : memref<2x3x4x1x32xf32, #tpu.memory_space<vmem>>, vector<1x1x1x1x32xf32>
    %493 = vector.shape_cast %492 : vector<1x1x1x1x32xf32> to vector<1x32xf32>
    %494 = vector.broadcast %493 : vector<1x32xf32> to vector<40x32xf32>
    %495 = arith.addf %491, %494 : vector<40x32xf32>
    %c1_367 = arith.constant 1 : index
    %c1_368 = arith.constant 1 : index
    %c3_369 = arith.constant 3 : index
    %c0_370 = arith.constant 0 : index
    %c0_371 = arith.constant 0 : index
    %496 = vector.load %arg6[%c1_367, %c1_368, %c3_369, %c0_370, %c0_371] : memref<2x3x4x128x32xf32, #tpu.memory_space<vmem>>, vector<1x1x1x128x32xf32>
    %497 = vector.shape_cast %496 : vector<1x1x1x128x32xf32> to vector<128x32xf32>
    %498 = arith.truncf %326 : vector<40x128xf32> to vector<40x128xbf16>
    %499 = arith.truncf %497 : vector<128x32xf32> to vector<128x32xbf16>
    %cst_372 = arith.constant dense<0.000000e+00> : vector<40x32xf32>
    %500 = tpu.matmul %498, %499, %cst_372 {dimension_numbers = #tpu.dot_dimension_numbers<[1], [0], [0], [1], [0, 0, 1, 1], [], []>} : vector<40x128xbf16>, vector<128x32xbf16>, vector<40x32xf32> -> vector<40x32xf32>
    %c1_373 = arith.constant 1 : index
    %c1_374 = arith.constant 1 : index
    %c3_375 = arith.constant 3 : index
    %c0_376 = arith.constant 0 : index
    %c0_377 = arith.constant 0 : index
    %501 = vector.load %arg7[%c1_373, %c1_374, %c3_375, %c0_376, %c0_377] : memref<2x3x4x1x32xf32, #tpu.memory_space<vmem>>, vector<1x1x1x1x32xf32>
    %502 = vector.shape_cast %501 : vector<1x1x1x1x32xf32> to vector<1x32xf32>
    %503 = vector.broadcast %502 : vector<1x32xf32> to vector<40x32xf32>
    %504 = arith.addf %500, %503 : vector<40x32xf32>
    %c1_378 = arith.constant 1 : index
    %c2_379 = arith.constant 2 : index
    %c3_380 = arith.constant 3 : index
    %c0_381 = arith.constant 0 : index
    %c0_382 = arith.constant 0 : index
    %505 = vector.load %arg6[%c1_378, %c2_379, %c3_380, %c0_381, %c0_382] : memref<2x3x4x128x32xf32, #tpu.memory_space<vmem>>, vector<1x1x1x128x32xf32>
    %506 = vector.shape_cast %505 : vector<1x1x1x128x32xf32> to vector<128x32xf32>
    %507 = arith.truncf %326 : vector<40x128xf32> to vector<40x128xbf16>
    %508 = arith.truncf %506 : vector<128x32xf32> to vector<128x32xbf16>
    %cst_383 = arith.constant dense<0.000000e+00> : vector<40x32xf32>
    %509 = tpu.matmul %507, %508, %cst_383 {dimension_numbers = #tpu.dot_dimension_numbers<[1], [0], [0], [1], [0, 0, 1, 1], [], []>} : vector<40x128xbf16>, vector<128x32xbf16>, vector<40x32xf32> -> vector<40x32xf32>
    %c1_384 = arith.constant 1 : index
    %c2_385 = arith.constant 2 : index
    %c3_386 = arith.constant 3 : index
    %c0_387 = arith.constant 0 : index
    %c0_388 = arith.constant 0 : index
    %510 = vector.load %arg7[%c1_384, %c2_385, %c3_386, %c0_387, %c0_388] : memref<2x3x4x1x32xf32, #tpu.memory_space<vmem>>, vector<1x1x1x1x32xf32>
    %511 = vector.shape_cast %510 : vector<1x1x1x1x32xf32> to vector<1x32xf32>
    %512 = vector.broadcast %511 : vector<1x32xf32> to vector<40x32xf32>
    %513 = arith.addf %509, %512 : vector<40x32xf32>
    %514 = tpu.transpose %504, [1, 0] : vector<40x32xf32> -> vector<32x40xf32>
    %515 = arith.truncf %495 : vector<40x32xf32> to vector<40x32xbf16>
    %516 = arith.truncf %514 : vector<32x40xf32> to vector<32x40xbf16>
    %cst_389 = arith.constant dense<0.000000e+00> : vector<40x40xf32>
    %517 = tpu.matmul %515, %516, %cst_389 {dimension_numbers = #tpu.dot_dimension_numbers<[1], [0], [0], [1], [0, 0, 1, 1], [], []>} : vector<40x32xbf16>, vector<32x40xbf16>, vector<40x40xf32> -> vector<40x40xf32>
    %cst_390 = arith.constant 0.176776692 : f32
    %518 = vector.broadcast %cst_390 : f32 to vector<40x40xf32>
    %519 = arith.mulf %517, %518 : vector<40x40xf32>
    %520 = arith.addf %519, %3 : vector<40x40xf32>
    %cst_391 = arith.constant dense<0xFF800000> : vector<40xf32>
    %521 = vector.multi_reduction <maximumf>, %520, %cst_391 [1] : vector<40x40xf32> to vector<40xf32>
    %522 = vector.shape_cast %521 : vector<40xf32> to vector<40x1xf32>
    %523 = vector.broadcast %522 : vector<40x1xf32> to vector<40x40xf32>
    %524 = arith.subf %520, %523 : vector<40x40xf32>
    %525 = math.exp %524 : vector<40x40xf32>
    %cst_392 = arith.constant dense<0.000000e+00> : vector<40xf32>
    %526 = vector.multi_reduction <add>, %525, %cst_392 [1] : vector<40x40xf32> to vector<40xf32>
    %527 = vector.shape_cast %526 : vector<40xf32> to vector<40x1xf32>
    %528 = tpu.reciprocal %527 {approx = true} : vector<40x1xf32> -> vector<40x1xf32>
    %529 = vector.broadcast %528 : vector<40x1xf32> to vector<40x40xf32>
    %530 = arith.mulf %525, %529 : vector<40x40xf32>
    %531 = arith.truncf %530 : vector<40x40xf32> to vector<40x40xbf16>
    %532 = arith.truncf %513 : vector<40x32xf32> to vector<40x32xbf16>
    %cst_393 = arith.constant dense<0.000000e+00> : vector<40x32xf32>
    %533 = tpu.matmul %531, %532, %cst_393 {dimension_numbers = #tpu.dot_dimension_numbers<[1], [0], [0], [1], [0, 0, 1, 1], [], []>} : vector<40x40xbf16>, vector<40x32xbf16>, vector<40x32xf32> -> vector<40x32xf32>
    %c1_394 = arith.constant 1 : index
    %c3_395 = arith.constant 3 : index
    %c0_396 = arith.constant 0 : index
    %c0_397 = arith.constant 0 : index
    %534 = vector.load %arg8[%c1_394, %c3_395, %c0_396, %c0_397] : memref<2x4x32x128xf32, #tpu.memory_space<vmem>>, vector<1x1x32x128xf32>
    %535 = vector.shape_cast %534 : vector<1x1x32x128xf32> to vector<32x128xf32>
    %536 = arith.truncf %533 : vector<40x32xf32> to vector<40x32xbf16>
    %537 = arith.truncf %535 : vector<32x128xf32> to vector<32x128xbf16>
    %cst_398 = arith.constant dense<0.000000e+00> : vector<40x128xf32>
    %538 = tpu.matmul %536, %537, %cst_398 {dimension_numbers = #tpu.dot_dimension_numbers<[1], [0], [0], [1], [0, 0, 1, 1], [], []>} : vector<40x32xbf16>, vector<32x128xbf16>, vector<40x128xf32> -> vector<40x128xf32>
    %539 = arith.addf %486, %538 : vector<40x128xf32>
    %540 = arith.addf %300, %539 : vector<40x128xf32>
    %c1_399 = arith.constant 1 : index
    %c0_400 = arith.constant 0 : index
    %c0_401 = arith.constant 0 : index
    %541 = vector.load %arg9[%c1_399, %c0_400, %c0_401] : memref<2x1x128xf32, #tpu.memory_space<vmem>>, vector<1x1x128xf32>
    %542 = vector.shape_cast %541 : vector<1x1x128xf32> to vector<1x128xf32>
    %543 = vector.broadcast %542 : vector<1x128xf32> to vector<40x128xf32>
    %544 = arith.addf %540, %543 : vector<40x128xf32>
    %c1_402 = arith.constant 1 : index
    %c0_403 = arith.constant 0 : index
    %c0_404 = arith.constant 0 : index
    %545 = vector.load %arg10[%c1_402, %c0_403, %c0_404] : memref<2x1x128xf32, #tpu.memory_space<vmem>>, vector<1x1x128xf32>
    %546 = vector.shape_cast %545 : vector<1x1x128xf32> to vector<1x128xf32>
    %c1_405 = arith.constant 1 : index
    %c0_406 = arith.constant 0 : index
    %c0_407 = arith.constant 0 : index
    %547 = vector.load %arg11[%c1_405, %c0_406, %c0_407] : memref<2x1x128xf32, #tpu.memory_space<vmem>>, vector<1x1x128xf32>
    %548 = vector.shape_cast %547 : vector<1x1x128xf32> to vector<1x128xf32>
    %cst_408 = arith.constant dense<0.000000e+00> : vector<40xf32>
    %549 = vector.multi_reduction <add>, %544, %cst_408 [1] : vector<40x128xf32> to vector<40xf32>
    %550 = vector.shape_cast %549 : vector<40xf32> to vector<40x1xf32>
    %cst_409 = arith.constant 1.280000e+02 : f32
    %551 = vector.broadcast %cst_409 : f32 to vector<40x1xf32>
    %552 = arith.divf %550, %551 : vector<40x1xf32>
    %553 = vector.broadcast %552 : vector<40x1xf32> to vector<40x128xf32>
    %554 = arith.subf %544, %553 : vector<40x128xf32>
    %555 = arith.mulf %554, %554 : vector<40x128xf32>
    %cst_410 = arith.constant dense<0.000000e+00> : vector<40xf32>
    %556 = vector.multi_reduction <add>, %555, %cst_410 [1] : vector<40x128xf32> to vector<40xf32>
    %557 = vector.shape_cast %556 : vector<40xf32> to vector<40x1xf32>
    %cst_411 = arith.constant 1.280000e+02 : f32
    %558 = vector.broadcast %cst_411 : f32 to vector<40x1xf32>
    %559 = arith.divf %557, %558 : vector<40x1xf32>
    %560 = vector.broadcast %552 : vector<40x1xf32> to vector<40x128xf32>
    %561 = arith.subf %544, %560 : vector<40x128xf32>
    %cst_412 = arith.constant 9.99999974E-6 : f32
    %562 = vector.broadcast %cst_412 : f32 to vector<40x1xf32>
    %563 = arith.addf %559, %562 : vector<40x1xf32>
    %564 = math.rsqrt %563 : vector<40x1xf32>
    %565 = vector.broadcast %564 : vector<40x1xf32> to vector<40x128xf32>
    %566 = arith.mulf %561, %565 : vector<40x128xf32>
    %567 = vector.broadcast %546 : vector<1x128xf32> to vector<40x128xf32>
    %568 = arith.mulf %566, %567 : vector<40x128xf32>
    %569 = vector.broadcast %548 : vector<1x128xf32> to vector<40x128xf32>
    %570 = arith.addf %568, %569 : vector<40x128xf32>
    %c1_413 = arith.constant 1 : index
    %c0_414 = arith.constant 0 : index
    %c0_415 = arith.constant 0 : index
    %571 = vector.load %arg12[%c1_413, %c0_414, %c0_415] : memref<2x128x512xf32, #tpu.memory_space<vmem>>, vector<1x128x512xf32>
    %572 = vector.shape_cast %571 : vector<1x128x512xf32> to vector<128x512xf32>
    %573 = arith.truncf %570 : vector<40x128xf32> to vector<40x128xbf16>
    %574 = arith.truncf %572 : vector<128x512xf32> to vector<128x512xbf16>
    %cst_416 = arith.constant dense<0.000000e+00> : vector<40x512xf32>
    %575 = tpu.matmul %573, %574, %cst_416 {dimension_numbers = #tpu.dot_dimension_numbers<[1], [0], [0], [1], [0, 0, 1, 1], [], []>} : vector<40x128xbf16>, vector<128x512xbf16>, vector<40x512xf32> -> vector<40x512xf32>
    %c1_417 = arith.constant 1 : index
    %c0_418 = arith.constant 0 : index
    %c0_419 = arith.constant 0 : index
    %576 = vector.load %arg13[%c1_417, %c0_418, %c0_419] : memref<2x1x512xf32, #tpu.memory_space<vmem>>, vector<1x1x512xf32>
    %577 = vector.shape_cast %576 : vector<1x1x512xf32> to vector<1x512xf32>
    %578 = vector.broadcast %577 : vector<1x512xf32> to vector<40x512xf32>
    %579 = arith.addf %575, %578 : vector<40x512xf32>
    %cst_420 = arith.constant 1.702000e+00 : f32
    %580 = vector.broadcast %cst_420 : f32 to vector<40x512xf32>
    %581 = arith.mulf %580, %579 : vector<40x512xf32>
    %582 = arith.negf %581 : vector<40x512xf32>
    %583 = math.exp %582 : vector<40x512xf32>
    %cst_421 = arith.constant 1.000000e+00 : f32
    %584 = vector.broadcast %cst_421 : f32 to vector<40x512xf32>
    %585 = arith.addf %584, %583 : vector<40x512xf32>
    %586 = arith.divf %584, %585 : vector<40x512xf32>
    %587 = arith.mulf %579, %586 : vector<40x512xf32>
    %c1_422 = arith.constant 1 : index
    %c0_423 = arith.constant 0 : index
    %c0_424 = arith.constant 0 : index
    %588 = vector.load %arg14[%c1_422, %c0_423, %c0_424] : memref<2x512x128xf32, #tpu.memory_space<vmem>>, vector<1x512x128xf32>
    %589 = vector.shape_cast %588 : vector<1x512x128xf32> to vector<512x128xf32>
    %590 = arith.truncf %587 : vector<40x512xf32> to vector<40x512xbf16>
    %591 = arith.truncf %589 : vector<512x128xf32> to vector<512x128xbf16>
    %cst_425 = arith.constant dense<0.000000e+00> : vector<40x128xf32>
    %592 = tpu.matmul %590, %591, %cst_425 {dimension_numbers = #tpu.dot_dimension_numbers<[1], [0], [0], [1], [0, 0, 1, 1], [], []>} : vector<40x512xbf16>, vector<512x128xbf16>, vector<40x128xf32> -> vector<40x128xf32>
    %593 = arith.addf %544, %592 : vector<40x128xf32>
    %c1_426 = arith.constant 1 : index
    %c0_427 = arith.constant 0 : index
    %c0_428 = arith.constant 0 : index
    %594 = vector.load %arg15[%c1_426, %c0_427, %c0_428] : memref<2x1x128xf32, #tpu.memory_space<vmem>>, vector<1x1x128xf32>
    %595 = vector.shape_cast %594 : vector<1x1x128xf32> to vector<1x128xf32>
    %596 = vector.broadcast %595 : vector<1x128xf32> to vector<40x128xf32>
    %597 = arith.addf %593, %596 : vector<40x128xf32>
    %c0_429 = arith.constant 0 : index
    %c0_430 = arith.constant 0 : index
    %598 = vector.load %arg16[%c0_429, %c0_430] : memref<1x128xf32, #tpu.memory_space<vmem>>, vector<1x128xf32>
    %c0_431 = arith.constant 0 : index
    %c0_432 = arith.constant 0 : index
    %599 = vector.load %arg17[%c0_431, %c0_432] : memref<1x128xf32, #tpu.memory_space<vmem>>, vector<1x128xf32>
    %cst_433 = arith.constant dense<0.000000e+00> : vector<40xf32>
    %600 = vector.multi_reduction <add>, %597, %cst_433 [1] : vector<40x128xf32> to vector<40xf32>
    %601 = vector.shape_cast %600 : vector<40xf32> to vector<40x1xf32>
    %cst_434 = arith.constant 1.280000e+02 : f32
    %602 = vector.broadcast %cst_434 : f32 to vector<40x1xf32>
    %603 = arith.divf %601, %602 : vector<40x1xf32>
    %604 = vector.broadcast %603 : vector<40x1xf32> to vector<40x128xf32>
    %605 = arith.subf %597, %604 : vector<40x128xf32>
    %606 = arith.mulf %605, %605 : vector<40x128xf32>
    %cst_435 = arith.constant dense<0.000000e+00> : vector<40xf32>
    %607 = vector.multi_reduction <add>, %606, %cst_435 [1] : vector<40x128xf32> to vector<40xf32>
    %608 = vector.shape_cast %607 : vector<40xf32> to vector<40x1xf32>
    %cst_436 = arith.constant 1.280000e+02 : f32
    %609 = vector.broadcast %cst_436 : f32 to vector<40x1xf32>
    %610 = arith.divf %608, %609 : vector<40x1xf32>
    %611 = vector.broadcast %603 : vector<40x1xf32> to vector<40x128xf32>
    %612 = arith.subf %597, %611 : vector<40x128xf32>
    %cst_437 = arith.constant 9.99999974E-6 : f32
    %613 = vector.broadcast %cst_437 : f32 to vector<40x1xf32>
    %614 = arith.addf %610, %613 : vector<40x1xf32>
    %615 = math.rsqrt %614 : vector<40x1xf32>
    %616 = vector.broadcast %615 : vector<40x1xf32> to vector<40x128xf32>
    %617 = arith.mulf %612, %616 : vector<40x128xf32>
    %618 = vector.broadcast %598 : vector<1x128xf32> to vector<40x128xf32>
    %619 = arith.mulf %617, %618 : vector<40x128xf32>
    %620 = vector.broadcast %599 : vector<1x128xf32> to vector<40x128xf32>
    %621 = arith.addf %619, %620 : vector<40x128xf32>
    %c0_438 = arith.constant 0 : index
    %c0_439 = arith.constant 0 : index
    %622 = vector.load %arg3[%c0_438, %c0_439] : memref<5x40xf32, #tpu.memory_space<vmem>>, vector<5x40xf32>
    %cst_440 = arith.constant dense<0.000000e+00> : vector<5x128xf32>
    %623 = tpu.matmul %622, %621, %cst_440 {dimension_numbers = #tpu.dot_dimension_numbers<[1], [0], [0], [1], [0, 0, 1, 1], [], []>} : vector<5x40xf32>, vector<40x128xf32>, vector<5x128xf32> -> vector<5x128xf32>
    %c0_441 = arith.constant 0 : index
    %c0_442 = arith.constant 0 : index
    %624 = vector.load %arg18[%c0_441, %c0_442] : memref<128x128xf32, #tpu.memory_space<vmem>>, vector<128x128xf32>
    %625 = arith.truncf %623 : vector<5x128xf32> to vector<5x128xbf16>
    %626 = arith.truncf %624 : vector<128x128xf32> to vector<128x128xbf16>
    %cst_443 = arith.constant dense<0.000000e+00> : vector<5x128xf32>
    %627 = tpu.matmul %625, %626, %cst_443 {dimension_numbers = #tpu.dot_dimension_numbers<[1], [0], [0], [1], [0, 0, 1, 1], [], []>} : vector<5x128xbf16>, vector<128x128xbf16>, vector<5x128xf32> -> vector<5x128xf32>
    %628 = arith.mulf %627, %627 : vector<5x128xf32>
    %cst_444 = arith.constant dense<0.000000e+00> : vector<5xf32>
    %629 = vector.multi_reduction <add>, %628, %cst_444 [1] : vector<5x128xf32> to vector<5xf32>
    %630 = vector.shape_cast %629 : vector<5xf32> to vector<5x1xf32>
    %cst_445 = arith.constant 9.99999996E-13 : f32
    %631 = vector.broadcast %cst_445 : f32 to vector<5x1xf32>
    %632 = arith.addf %630, %631 : vector<5x1xf32>
    %633 = math.rsqrt %632 : vector<5x1xf32>
    %634 = vector.broadcast %633 : vector<5x1xf32> to vector<5x128xf32>
    %635 = arith.mulf %627, %634 : vector<5x128xf32>
    %c0_446 = arith.constant 0 : index
    %c0_447 = arith.constant 0 : index
    %636 = vector.load %arg19[%c0_446, %c0_447] : memref<5x128xf32, #tpu.memory_space<vmem>>, vector<5x128xf32>
    tpu.vector_store %arg19[%c0_446, %c0_447], %635 {strides = array<i32>} : memref<5x128xf32, #tpu.memory_space<vmem>>, vector<5x128xf32>,
    return
  }
}

module attributes {stable_mosaic.version = 11 : i64} {
  func.func @image_logits_kernel(%arg0: memref<10x192xf32, #tpu.memory_space<vmem>>, %arg1: memref<10x128xf32, #tpu.memory_space<vmem>>, %arg2: memref<10x10xf32, #tpu.memory_space<vmem>>, %arg3: memref<192x128xf32, #tpu.memory_space<vmem>>, %arg4: memref<1x128xf32, #tpu.memory_space<vmem>>, %arg5: memref<1x128xf32, #tpu.memory_space<vmem>>, %arg6: memref<1x1x128xf32, #tpu.memory_space<vmem>>, %arg7: memref<1x1x128xf32, #tpu.memory_space<vmem>>, %arg8: memref<1x3x4x128x32xf32, #tpu.memory_space<vmem>>, %arg9: memref<1x3x4x1x32xf32, #tpu.memory_space<vmem>>, %arg10: memref<1x4x32x128xf32, #tpu.memory_space<vmem>>, %arg11: memref<1x1x128xf32, #tpu.memory_space<vmem>>, %arg12: memref<1x1x128xf32, #tpu.memory_space<vmem>>, %arg13: memref<1x1x128xf32, #tpu.memory_space<vmem>>, %arg14: memref<1x128x512xf32, #tpu.memory_space<vmem>>, %arg15: memref<1x1x512xf32, #tpu.memory_space<vmem>>, %arg16: memref<1x512x128xf32, #tpu.memory_space<vmem>>, %arg17: memref<1x1x128xf32, #tpu.memory_space<vmem>>, %arg18: memref<1x128xf32, #tpu.memory_space<vmem>>, %arg19: memref<1x128xf32, #tpu.memory_space<vmem>>, %arg20: memref<128x128xf32, #tpu.memory_space<vmem>>, %arg21: memref<5x128xf32, #tpu.memory_space<vmem>>, %arg22: memref<1x1xf32, #tpu.memory_space<vmem>>, %arg23: memref<2x5xf32, #tpu.memory_space<vmem>>, %arg24: memref<2x128xf32, #tpu.memory_space<vmem>>) attributes {dimension_semantics = [], scalar_prefetch = 0 : i64, scratch_operands = 0 : i64, tpu.core_type = #tpu.core_type<tc>} {
    %c0 = arith.constant 0 : index
    %c0_0 = arith.constant 0 : index
    %0 = vector.load %arg0[%c0, %c0_0] : memref<10x192xf32, #tpu.memory_space<vmem>>, vector<10x192xf32>
    %c0_1 = arith.constant 0 : index
    %c0_2 = arith.constant 0 : index
    %1 = vector.load %arg3[%c0_1, %c0_2] : memref<192x128xf32, #tpu.memory_space<vmem>>, vector<192x128xf32>
    %2 = arith.truncf %0 : vector<10x192xf32> to vector<10x192xbf16>
    %3 = arith.truncf %1 : vector<192x128xf32> to vector<192x128xbf16>
    %cst = arith.constant dense<0.000000e+00> : vector<10x128xf32>
    %4 = tpu.matmul %2, %3, %cst {dimension_numbers = #tpu.dot_dimension_numbers<[1], [0], [0], [1], [0, 0, 1, 1], [], []>} : vector<10x192xbf16>, vector<192x128xbf16>, vector<10x128xf32> -> vector<10x128xf32>
    %c0_3 = arith.constant 0 : index
    %c0_4 = arith.constant 0 : index
    %5 = vector.load %arg1[%c0_3, %c0_4] : memref<10x128xf32, #tpu.memory_space<vmem>>, vector<10x128xf32>
    %6 = arith.addf %4, %5 : vector<10x128xf32>
    %c0_5 = arith.constant 0 : index
    %c0_6 = arith.constant 0 : index
    %7 = vector.load %arg4[%c0_5, %c0_6] : memref<1x128xf32, #tpu.memory_space<vmem>>, vector<1x128xf32>
    %c0_7 = arith.constant 0 : index
    %c0_8 = arith.constant 0 : index
    %8 = vector.load %arg5[%c0_7, %c0_8] : memref<1x128xf32, #tpu.memory_space<vmem>>, vector<1x128xf32>
    %cst_9 = arith.constant dense<0.000000e+00> : vector<10xf32>
    %9 = vector.multi_reduction <add>, %6, %cst_9 [1] : vector<10x128xf32> to vector<10xf32>
    %10 = vector.shape_cast %9 : vector<10xf32> to vector<10x1xf32>
    %cst_10 = arith.constant 1.280000e+02 : f32
    %11 = vector.broadcast %cst_10 : f32 to vector<10x1xf32>
    %12 = arith.divf %10, %11 : vector<10x1xf32>
    %13 = vector.broadcast %12 : vector<10x1xf32> to vector<10x128xf32>
    %14 = arith.subf %6, %13 : vector<10x128xf32>
    %15 = arith.mulf %14, %14 : vector<10x128xf32>
    %cst_11 = arith.constant dense<0.000000e+00> : vector<10xf32>
    %16 = vector.multi_reduction <add>, %15, %cst_11 [1] : vector<10x128xf32> to vector<10xf32>
    %17 = vector.shape_cast %16 : vector<10xf32> to vector<10x1xf32>
    %cst_12 = arith.constant 1.280000e+02 : f32
    %18 = vector.broadcast %cst_12 : f32 to vector<10x1xf32>
    %19 = arith.divf %17, %18 : vector<10x1xf32>
    %20 = vector.broadcast %12 : vector<10x1xf32> to vector<10x128xf32>
    %21 = arith.subf %6, %20 : vector<10x128xf32>
    %cst_13 = arith.constant 9.99999974E-6 : f32
    %22 = vector.broadcast %cst_13 : f32 to vector<10x1xf32>
    %23 = arith.addf %19, %22 : vector<10x1xf32>
    %24 = math.rsqrt %23 : vector<10x1xf32>
    %25 = vector.broadcast %24 : vector<10x1xf32> to vector<10x128xf32>
    %26 = arith.mulf %21, %25 : vector<10x128xf32>
    %27 = vector.broadcast %7 : vector<1x128xf32> to vector<10x128xf32>
    %28 = arith.mulf %26, %27 : vector<10x128xf32>
    %29 = vector.broadcast %8 : vector<1x128xf32> to vector<10x128xf32>
    %30 = arith.addf %28, %29 : vector<10x128xf32>
    %c0_14 = arith.constant 0 : index
    %c0_15 = arith.constant 0 : index
    %31 = vector.load %arg2[%c0_14, %c0_15] : memref<10x10xf32, #tpu.memory_space<vmem>>, vector<10x10xf32>
    %c0_16 = arith.constant 0 : index
    %c0_17 = arith.constant 0 : index
    %c0_18 = arith.constant 0 : index
    %32 = vector.load %arg6[%c0_16, %c0_17, %c0_18] : memref<1x1x128xf32, #tpu.memory_space<vmem>>, vector<1x1x128xf32>
    %33 = vector.shape_cast %32 : vector<1x1x128xf32> to vector<1x128xf32>
    %c0_19 = arith.constant 0 : index
    %c0_20 = arith.constant 0 : index
    %c0_21 = arith.constant 0 : index
    %34 = vector.load %arg7[%c0_19, %c0_20, %c0_21] : memref<1x1x128xf32, #tpu.memory_space<vmem>>, vector<1x1x128xf32>
    %35 = vector.shape_cast %34 : vector<1x1x128xf32> to vector<1x128xf32>
    %cst_22 = arith.constant dense<0.000000e+00> : vector<10xf32>
    %36 = vector.multi_reduction <add>, %30, %cst_22 [1] : vector<10x128xf32> to vector<10xf32>
    %37 = vector.shape_cast %36 : vector<10xf32> to vector<10x1xf32>
    %cst_23 = arith.constant 1.280000e+02 : f32
    %38 = vector.broadcast %cst_23 : f32 to vector<10x1xf32>
    %39 = arith.divf %37, %38 : vector<10x1xf32>
    %40 = vector.broadcast %39 : vector<10x1xf32> to vector<10x128xf32>
    %41 = arith.subf %30, %40 : vector<10x128xf32>
    %42 = arith.mulf %41, %41 : vector<10x128xf32>
    %cst_24 = arith.constant dense<0.000000e+00> : vector<10xf32>
    %43 = vector.multi_reduction <add>, %42, %cst_24 [1] : vector<10x128xf32> to vector<10xf32>
    %44 = vector.shape_cast %43 : vector<10xf32> to vector<10x1xf32>
    %cst_25 = arith.constant 1.280000e+02 : f32
    %45 = vector.broadcast %cst_25 : f32 to vector<10x1xf32>
    %46 = arith.divf %44, %45 : vector<10x1xf32>
    %47 = vector.broadcast %39 : vector<10x1xf32> to vector<10x128xf32>
    %48 = arith.subf %30, %47 : vector<10x128xf32>
    %cst_26 = arith.constant 9.99999974E-6 : f32
    %49 = vector.broadcast %cst_26 : f32 to vector<10x1xf32>
    %50 = arith.addf %46, %49 : vector<10x1xf32>
    %51 = math.rsqrt %50 : vector<10x1xf32>
    %52 = vector.broadcast %51 : vector<10x1xf32> to vector<10x128xf32>
    %53 = arith.mulf %48, %52 : vector<10x128xf32>
    %54 = vector.broadcast %33 : vector<1x128xf32> to vector<10x128xf32>
    %55 = arith.mulf %53, %54 : vector<10x128xf32>
    %56 = vector.broadcast %35 : vector<1x128xf32> to vector<10x128xf32>
    %57 = arith.addf %55, %56 : vector<10x128xf32>
    %cst_27 = arith.constant 0.000000e+00 : f32
    %58 = vector.broadcast %cst_27 : f32 to vector<10x128xf32>
    %c0_28 = arith.constant 0 : index
    %c0_29 = arith.constant 0 : index
    %c0_30 = arith.constant 0 : index
    %c0_31 = arith.constant 0 : index
    %c0_32 = arith.constant 0 : index
    %59 = vector.load %arg8[%c0_28, %c0_29, %c0_30, %c0_31, %c0_32] : memref<1x3x4x128x32xf32, #tpu.memory_space<vmem>>, vector<1x1x1x128x32xf32>
    %60 = vector.shape_cast %59 : vector<1x1x1x128x32xf32> to vector<128x32xf32>
    %61 = arith.truncf %57 : vector<10x128xf32> to vector<10x128xbf16>
    %62 = arith.truncf %60 : vector<128x32xf32> to vector<128x32xbf16>
    %cst_33 = arith.constant dense<0.000000e+00> : vector<10x32xf32>
    %63 = tpu.matmul %61, %62, %cst_33 {dimension_numbers = #tpu.dot_dimension_numbers<[1], [0], [0], [1], [0, 0, 1, 1], [], []>} : vector<10x128xbf16>, vector<128x32xbf16>, vector<10x32xf32> -> vector<10x32xf32>
    %c0_34 = arith.constant 0 : index
    %c0_35 = arith.constant 0 : index
    %c0_36 = arith.constant 0 : index
    %c0_37 = arith.constant 0 : index
    %c0_38 = arith.constant 0 : index
    %64 = vector.load %arg9[%c0_34, %c0_35, %c0_36, %c0_37, %c0_38] : memref<1x3x4x1x32xf32, #tpu.memory_space<vmem>>, vector<1x1x1x1x32xf32>
    %65 = vector.shape_cast %64 : vector<1x1x1x1x32xf32> to vector<1x32xf32>
    %66 = vector.broadcast %65 : vector<1x32xf32> to vector<10x32xf32>
    %67 = arith.addf %63, %66 : vector<10x32xf32>
    %c0_39 = arith.constant 0 : index
    %c1 = arith.constant 1 : index
    %c0_40 = arith.constant 0 : index
    %c0_41 = arith.constant 0 : index
    %c0_42 = arith.constant 0 : index
    %68 = vector.load %arg8[%c0_39, %c1, %c0_40, %c0_41, %c0_42] : memref<1x3x4x128x32xf32, #tpu.memory_space<vmem>>, vector<1x1x1x128x32xf32>
    %69 = vector.shape_cast %68 : vector<1x1x1x128x32xf32> to vector<128x32xf32>
    %70 = arith.truncf %57 : vector<10x128xf32> to vector<10x128xbf16>
    %71 = arith.truncf %69 : vector<128x32xf32> to vector<128x32xbf16>
    %cst_43 = arith.constant dense<0.000000e+00> : vector<10x32xf32>
    %72 = tpu.matmul %70, %71, %cst_43 {dimension_numbers = #tpu.dot_dimension_numbers<[1], [0], [0], [1], [0, 0, 1, 1], [], []>} : vector<10x128xbf16>, vector<128x32xbf16>, vector<10x32xf32> -> vector<10x32xf32>
    %c0_44 = arith.constant 0 : index
    %c1_45 = arith.constant 1 : index
    %c0_46 = arith.constant 0 : index
    %c0_47 = arith.constant 0 : index
    %c0_48 = arith.constant 0 : index
    %73 = vector.load %arg9[%c0_44, %c1_45, %c0_46, %c0_47, %c0_48] : memref<1x3x4x1x32xf32, #tpu.memory_space<vmem>>, vector<1x1x1x1x32xf32>
    %74 = vector.shape_cast %73 : vector<1x1x1x1x32xf32> to vector<1x32xf32>
    %75 = vector.broadcast %74 : vector<1x32xf32> to vector<10x32xf32>
    %76 = arith.addf %72, %75 : vector<10x32xf32>
    %c0_49 = arith.constant 0 : index
    %c2 = arith.constant 2 : index
    %c0_50 = arith.constant 0 : index
    %c0_51 = arith.constant 0 : index
    %c0_52 = arith.constant 0 : index
    %77 = vector.load %arg8[%c0_49, %c2, %c0_50, %c0_51, %c0_52] : memref<1x3x4x128x32xf32, #tpu.memory_space<vmem>>, vector<1x1x1x128x32xf32>
    %78 = vector.shape_cast %77 : vector<1x1x1x128x32xf32> to vector<128x32xf32>
    %79 = arith.truncf %57 : vector<10x128xf32> to vector<10x128xbf16>
    %80 = arith.truncf %78 : vector<128x32xf32> to vector<128x32xbf16>
    %cst_53 = arith.constant dense<0.000000e+00> : vector<10x32xf32>
    %81 = tpu.matmul %79, %80, %cst_53 {dimension_numbers = #tpu.dot_dimension_numbers<[1], [0], [0], [1], [0, 0, 1, 1], [], []>} : vector<10x128xbf16>, vector<128x32xbf16>, vector<10x32xf32> -> vector<10x32xf32>
    %c0_54 = arith.constant 0 : index
    %c2_55 = arith.constant 2 : index
    %c0_56 = arith.constant 0 : index
    %c0_57 = arith.constant 0 : index
    %c0_58 = arith.constant 0 : index
    %82 = vector.load %arg9[%c0_54, %c2_55, %c0_56, %c0_57, %c0_58] : memref<1x3x4x1x32xf32, #tpu.memory_space<vmem>>, vector<1x1x1x1x32xf32>
    %83 = vector.shape_cast %82 : vector<1x1x1x1x32xf32> to vector<1x32xf32>
    %84 = vector.broadcast %83 : vector<1x32xf32> to vector<10x32xf32>
    %85 = arith.addf %81, %84 : vector<10x32xf32>
    %86 = tpu.transpose %76, [1, 0] : vector<10x32xf32> -> vector<32x10xf32>
    %87 = arith.truncf %67 : vector<10x32xf32> to vector<10x32xbf16>
    %88 = arith.truncf %86 : vector<32x10xf32> to vector<32x10xbf16>
    %cst_59 = arith.constant dense<0.000000e+00> : vector<10x10xf32>
    %89 = tpu.matmul %87, %88, %cst_59 {dimension_numbers = #tpu.dot_dimension_numbers<[1], [0], [0], [1], [0, 0, 1, 1], [], []>} : vector<10x32xbf16>, vector<32x10xbf16>, vector<10x10xf32> -> vector<10x10xf32>
    %cst_60 = arith.constant 0.176776692 : f32
    %90 = vector.broadcast %cst_60 : f32 to vector<10x10xf32>
    %91 = arith.mulf %89, %90 : vector<10x10xf32>
    %92 = arith.addf %91, %31 : vector<10x10xf32>
    %cst_61 = arith.constant dense<0xFF800000> : vector<10xf32>
    %93 = vector.multi_reduction <maximumf>, %92, %cst_61 [1] : vector<10x10xf32> to vector<10xf32>
    %94 = vector.shape_cast %93 : vector<10xf32> to vector<10x1xf32>
    %95 = vector.broadcast %94 : vector<10x1xf32> to vector<10x10xf32>
    %96 = arith.subf %92, %95 : vector<10x10xf32>
    %97 = math.exp %96 : vector<10x10xf32>
    %cst_62 = arith.constant dense<0.000000e+00> : vector<10xf32>
    %98 = vector.multi_reduction <add>, %97, %cst_62 [1] : vector<10x10xf32> to vector<10xf32>
    %99 = vector.shape_cast %98 : vector<10xf32> to vector<10x1xf32>
    %100 = tpu.reciprocal %99 {approx = true} : vector<10x1xf32> -> vector<10x1xf32>
    %101 = vector.broadcast %100 : vector<10x1xf32> to vector<10x10xf32>
    %102 = arith.mulf %97, %101 : vector<10x10xf32>
    %103 = arith.truncf %102 : vector<10x10xf32> to vector<10x10xbf16>
    %104 = arith.truncf %85 : vector<10x32xf32> to vector<10x32xbf16>
    %cst_63 = arith.constant dense<0.000000e+00> : vector<10x32xf32>
    %105 = tpu.matmul %103, %104, %cst_63 {dimension_numbers = #tpu.dot_dimension_numbers<[1], [0], [0], [1], [0, 0, 1, 1], [], []>} : vector<10x10xbf16>, vector<10x32xbf16>, vector<10x32xf32> -> vector<10x32xf32>
    %c0_64 = arith.constant 0 : index
    %c0_65 = arith.constant 0 : index
    %c0_66 = arith.constant 0 : index
    %c0_67 = arith.constant 0 : index
    %106 = vector.load %arg10[%c0_64, %c0_65, %c0_66, %c0_67] : memref<1x4x32x128xf32, #tpu.memory_space<vmem>>, vector<1x1x32x128xf32>
    %107 = vector.shape_cast %106 : vector<1x1x32x128xf32> to vector<32x128xf32>
    %108 = arith.truncf %105 : vector<10x32xf32> to vector<10x32xbf16>
    %109 = arith.truncf %107 : vector<32x128xf32> to vector<32x128xbf16>
    %cst_68 = arith.constant dense<0.000000e+00> : vector<10x128xf32>
    %110 = tpu.matmul %108, %109, %cst_68 {dimension_numbers = #tpu.dot_dimension_numbers<[1], [0], [0], [1], [0, 0, 1, 1], [], []>} : vector<10x32xbf16>, vector<32x128xbf16>, vector<10x128xf32> -> vector<10x128xf32>
    %111 = arith.addf %58, %110 : vector<10x128xf32>
    %c0_69 = arith.constant 0 : index
    %c0_70 = arith.constant 0 : index
    %c1_71 = arith.constant 1 : index
    %c0_72 = arith.constant 0 : index
    %c0_73 = arith.constant 0 : index
    %112 = vector.load %arg8[%c0_69, %c0_70, %c1_71, %c0_72, %c0_73] : memref<1x3x4x128x32xf32, #tpu.memory_space<vmem>>, vector<1x1x1x128x32xf32>
    %113 = vector.shape_cast %112 : vector<1x1x1x128x32xf32> to vector<128x32xf32>
    %114 = arith.truncf %57 : vector<10x128xf32> to vector<10x128xbf16>
    %115 = arith.truncf %113 : vector<128x32xf32> to vector<128x32xbf16>
    %cst_74 = arith.constant dense<0.000000e+00> : vector<10x32xf32>
    %116 = tpu.matmul %114, %115, %cst_74 {dimension_numbers = #tpu.dot_dimension_numbers<[1], [0], [0], [1], [0, 0, 1, 1], [], []>} : vector<10x128xbf16>, vector<128x32xbf16>, vector<10x32xf32> -> vector<10x32xf32>
    %c0_75 = arith.constant 0 : index
    %c0_76 = arith.constant 0 : index
    %c1_77 = arith.constant 1 : index
    %c0_78 = arith.constant 0 : index
    %c0_79 = arith.constant 0 : index
    %117 = vector.load %arg9[%c0_75, %c0_76, %c1_77, %c0_78, %c0_79] : memref<1x3x4x1x32xf32, #tpu.memory_space<vmem>>, vector<1x1x1x1x32xf32>
    %118 = vector.shape_cast %117 : vector<1x1x1x1x32xf32> to vector<1x32xf32>
    %119 = vector.broadcast %118 : vector<1x32xf32> to vector<10x32xf32>
    %120 = arith.addf %116, %119 : vector<10x32xf32>
    %c0_80 = arith.constant 0 : index
    %c1_81 = arith.constant 1 : index
    %c1_82 = arith.constant 1 : index
    %c0_83 = arith.constant 0 : index
    %c0_84 = arith.constant 0 : index
    %121 = vector.load %arg8[%c0_80, %c1_81, %c1_82, %c0_83, %c0_84] : memref<1x3x4x128x32xf32, #tpu.memory_space<vmem>>, vector<1x1x1x128x32xf32>
    %122 = vector.shape_cast %121 : vector<1x1x1x128x32xf32> to vector<128x32xf32>
    %123 = arith.truncf %57 : vector<10x128xf32> to vector<10x128xbf16>
    %124 = arith.truncf %122 : vector<128x32xf32> to vector<128x32xbf16>
    %cst_85 = arith.constant dense<0.000000e+00> : vector<10x32xf32>
    %125 = tpu.matmul %123, %124, %cst_85 {dimension_numbers = #tpu.dot_dimension_numbers<[1], [0], [0], [1], [0, 0, 1, 1], [], []>} : vector<10x128xbf16>, vector<128x32xbf16>, vector<10x32xf32> -> vector<10x32xf32>
    %c0_86 = arith.constant 0 : index
    %c1_87 = arith.constant 1 : index
    %c1_88 = arith.constant 1 : index
    %c0_89 = arith.constant 0 : index
    %c0_90 = arith.constant 0 : index
    %126 = vector.load %arg9[%c0_86, %c1_87, %c1_88, %c0_89, %c0_90] : memref<1x3x4x1x32xf32, #tpu.memory_space<vmem>>, vector<1x1x1x1x32xf32>
    %127 = vector.shape_cast %126 : vector<1x1x1x1x32xf32> to vector<1x32xf32>
    %128 = vector.broadcast %127 : vector<1x32xf32> to vector<10x32xf32>
    %129 = arith.addf %125, %128 : vector<10x32xf32>
    %c0_91 = arith.constant 0 : index
    %c2_92 = arith.constant 2 : index
    %c1_93 = arith.constant 1 : index
    %c0_94 = arith.constant 0 : index
    %c0_95 = arith.constant 0 : index
    %130 = vector.load %arg8[%c0_91, %c2_92, %c1_93, %c0_94, %c0_95] : memref<1x3x4x128x32xf32, #tpu.memory_space<vmem>>, vector<1x1x1x128x32xf32>
    %131 = vector.shape_cast %130 : vector<1x1x1x128x32xf32> to vector<128x32xf32>
    %132 = arith.truncf %57 : vector<10x128xf32> to vector<10x128xbf16>
    %133 = arith.truncf %131 : vector<128x32xf32> to vector<128x32xbf16>
    %cst_96 = arith.constant dense<0.000000e+00> : vector<10x32xf32>
    %134 = tpu.matmul %132, %133, %cst_96 {dimension_numbers = #tpu.dot_dimension_numbers<[1], [0], [0], [1], [0, 0, 1, 1], [], []>} : vector<10x128xbf16>, vector<128x32xbf16>, vector<10x32xf32> -> vector<10x32xf32>
    %c0_97 = arith.constant 0 : index
    %c2_98 = arith.constant 2 : index
    %c1_99 = arith.constant 1 : index
    %c0_100 = arith.constant 0 : index
    %c0_101 = arith.constant 0 : index
    %135 = vector.load %arg9[%c0_97, %c2_98, %c1_99, %c0_100, %c0_101] : memref<1x3x4x1x32xf32, #tpu.memory_space<vmem>>, vector<1x1x1x1x32xf32>
    %136 = vector.shape_cast %135 : vector<1x1x1x1x32xf32> to vector<1x32xf32>
    %137 = vector.broadcast %136 : vector<1x32xf32> to vector<10x32xf32>
    %138 = arith.addf %134, %137 : vector<10x32xf32>
    %139 = tpu.transpose %129, [1, 0] : vector<10x32xf32> -> vector<32x10xf32>
    %140 = arith.truncf %120 : vector<10x32xf32> to vector<10x32xbf16>
    %141 = arith.truncf %139 : vector<32x10xf32> to vector<32x10xbf16>
    %cst_102 = arith.constant dense<0.000000e+00> : vector<10x10xf32>
    %142 = tpu.matmul %140, %141, %cst_102 {dimension_numbers = #tpu.dot_dimension_numbers<[1], [0], [0], [1], [0, 0, 1, 1], [], []>} : vector<10x32xbf16>, vector<32x10xbf16>, vector<10x10xf32> -> vector<10x10xf32>
    %cst_103 = arith.constant 0.176776692 : f32
    %143 = vector.broadcast %cst_103 : f32 to vector<10x10xf32>
    %144 = arith.mulf %142, %143 : vector<10x10xf32>
    %145 = arith.addf %144, %31 : vector<10x10xf32>
    %cst_104 = arith.constant dense<0xFF800000> : vector<10xf32>
    %146 = vector.multi_reduction <maximumf>, %145, %cst_104 [1] : vector<10x10xf32> to vector<10xf32>
    %147 = vector.shape_cast %146 : vector<10xf32> to vector<10x1xf32>
    %148 = vector.broadcast %147 : vector<10x1xf32> to vector<10x10xf32>
    %149 = arith.subf %145, %148 : vector<10x10xf32>
    %150 = math.exp %149 : vector<10x10xf32>
    %cst_105 = arith.constant dense<0.000000e+00> : vector<10xf32>
    %151 = vector.multi_reduction <add>, %150, %cst_105 [1] : vector<10x10xf32> to vector<10xf32>
    %152 = vector.shape_cast %151 : vector<10xf32> to vector<10x1xf32>
    %153 = tpu.reciprocal %152 {approx = true} : vector<10x1xf32> -> vector<10x1xf32>
    %154 = vector.broadcast %153 : vector<10x1xf32> to vector<10x10xf32>
    %155 = arith.mulf %150, %154 : vector<10x10xf32>
    %156 = arith.truncf %155 : vector<10x10xf32> to vector<10x10xbf16>
    %157 = arith.truncf %138 : vector<10x32xf32> to vector<10x32xbf16>
    %cst_106 = arith.constant dense<0.000000e+00> : vector<10x32xf32>
    %158 = tpu.matmul %156, %157, %cst_106 {dimension_numbers = #tpu.dot_dimension_numbers<[1], [0], [0], [1], [0, 0, 1, 1], [], []>} : vector<10x10xbf16>, vector<10x32xbf16>, vector<10x32xf32> -> vector<10x32xf32>
    %c0_107 = arith.constant 0 : index
    %c1_108 = arith.constant 1 : index
    %c0_109 = arith.constant 0 : index
    %c0_110 = arith.constant 0 : index
    %159 = vector.load %arg10[%c0_107, %c1_108, %c0_109, %c0_110] : memref<1x4x32x128xf32, #tpu.memory_space<vmem>>, vector<1x1x32x128xf32>
    %160 = vector.shape_cast %159 : vector<1x1x32x128xf32> to vector<32x128xf32>
    %161 = arith.truncf %158 : vector<10x32xf32> to vector<10x32xbf16>
    %162 = arith.truncf %160 : vector<32x128xf32> to vector<32x128xbf16>
    %cst_111 = arith.constant dense<0.000000e+00> : vector<10x128xf32>
    %163 = tpu.matmul %161, %162, %cst_111 {dimension_numbers = #tpu.dot_dimension_numbers<[1], [0], [0], [1], [0, 0, 1, 1], [], []>} : vector<10x32xbf16>, vector<32x128xbf16>, vector<10x128xf32> -> vector<10x128xf32>
    %164 = arith.addf %111, %163 : vector<10x128xf32>
    %c0_112 = arith.constant 0 : index
    %c0_113 = arith.constant 0 : index
    %c2_114 = arith.constant 2 : index
    %c0_115 = arith.constant 0 : index
    %c0_116 = arith.constant 0 : index
    %165 = vector.load %arg8[%c0_112, %c0_113, %c2_114, %c0_115, %c0_116] : memref<1x3x4x128x32xf32, #tpu.memory_space<vmem>>, vector<1x1x1x128x32xf32>
    %166 = vector.shape_cast %165 : vector<1x1x1x128x32xf32> to vector<128x32xf32>
    %167 = arith.truncf %57 : vector<10x128xf32> to vector<10x128xbf16>
    %168 = arith.truncf %166 : vector<128x32xf32> to vector<128x32xbf16>
    %cst_117 = arith.constant dense<0.000000e+00> : vector<10x32xf32>
    %169 = tpu.matmul %167, %168, %cst_117 {dimension_numbers = #tpu.dot_dimension_numbers<[1], [0], [0], [1], [0, 0, 1, 1], [], []>} : vector<10x128xbf16>, vector<128x32xbf16>, vector<10x32xf32> -> vector<10x32xf32>
    %c0_118 = arith.constant 0 : index
    %c0_119 = arith.constant 0 : index
    %c2_120 = arith.constant 2 : index
    %c0_121 = arith.constant 0 : index
    %c0_122 = arith.constant 0 : index
    %170 = vector.load %arg9[%c0_118, %c0_119, %c2_120, %c0_121, %c0_122] : memref<1x3x4x1x32xf32, #tpu.memory_space<vmem>>, vector<1x1x1x1x32xf32>
    %171 = vector.shape_cast %170 : vector<1x1x1x1x32xf32> to vector<1x32xf32>
    %172 = vector.broadcast %171 : vector<1x32xf32> to vector<10x32xf32>
    %173 = arith.addf %169, %172 : vector<10x32xf32>
    %c0_123 = arith.constant 0 : index
    %c1_124 = arith.constant 1 : index
    %c2_125 = arith.constant 2 : index
    %c0_126 = arith.constant 0 : index
    %c0_127 = arith.constant 0 : index
    %174 = vector.load %arg8[%c0_123, %c1_124, %c2_125, %c0_126, %c0_127] : memref<1x3x4x128x32xf32, #tpu.memory_space<vmem>>, vector<1x1x1x128x32xf32>
    %175 = vector.shape_cast %174 : vector<1x1x1x128x32xf32> to vector<128x32xf32>
    %176 = arith.truncf %57 : vector<10x128xf32> to vector<10x128xbf16>
    %177 = arith.truncf %175 : vector<128x32xf32> to vector<128x32xbf16>
    %cst_128 = arith.constant dense<0.000000e+00> : vector<10x32xf32>
    %178 = tpu.matmul %176, %177, %cst_128 {dimension_numbers = #tpu.dot_dimension_numbers<[1], [0], [0], [1], [0, 0, 1, 1], [], []>} : vector<10x128xbf16>, vector<128x32xbf16>, vector<10x32xf32> -> vector<10x32xf32>
    %c0_129 = arith.constant 0 : index
    %c1_130 = arith.constant 1 : index
    %c2_131 = arith.constant 2 : index
    %c0_132 = arith.constant 0 : index
    %c0_133 = arith.constant 0 : index
    %179 = vector.load %arg9[%c0_129, %c1_130, %c2_131, %c0_132, %c0_133] : memref<1x3x4x1x32xf32, #tpu.memory_space<vmem>>, vector<1x1x1x1x32xf32>
    %180 = vector.shape_cast %179 : vector<1x1x1x1x32xf32> to vector<1x32xf32>
    %181 = vector.broadcast %180 : vector<1x32xf32> to vector<10x32xf32>
    %182 = arith.addf %178, %181 : vector<10x32xf32>
    %c0_134 = arith.constant 0 : index
    %c2_135 = arith.constant 2 : index
    %c2_136 = arith.constant 2 : index
    %c0_137 = arith.constant 0 : index
    %c0_138 = arith.constant 0 : index
    %183 = vector.load %arg8[%c0_134, %c2_135, %c2_136, %c0_137, %c0_138] : memref<1x3x4x128x32xf32, #tpu.memory_space<vmem>>, vector<1x1x1x128x32xf32>
    %184 = vector.shape_cast %183 : vector<1x1x1x128x32xf32> to vector<128x32xf32>
    %185 = arith.truncf %57 : vector<10x128xf32> to vector<10x128xbf16>
    %186 = arith.truncf %184 : vector<128x32xf32> to vector<128x32xbf16>
    %cst_139 = arith.constant dense<0.000000e+00> : vector<10x32xf32>
    %187 = tpu.matmul %185, %186, %cst_139 {dimension_numbers = #tpu.dot_dimension_numbers<[1], [0], [0], [1], [0, 0, 1, 1], [], []>} : vector<10x128xbf16>, vector<128x32xbf16>, vector<10x32xf32> -> vector<10x32xf32>
    %c0_140 = arith.constant 0 : index
    %c2_141 = arith.constant 2 : index
    %c2_142 = arith.constant 2 : index
    %c0_143 = arith.constant 0 : index
    %c0_144 = arith.constant 0 : index
    %188 = vector.load %arg9[%c0_140, %c2_141, %c2_142, %c0_143, %c0_144] : memref<1x3x4x1x32xf32, #tpu.memory_space<vmem>>, vector<1x1x1x1x32xf32>
    %189 = vector.shape_cast %188 : vector<1x1x1x1x32xf32> to vector<1x32xf32>
    %190 = vector.broadcast %189 : vector<1x32xf32> to vector<10x32xf32>
    %191 = arith.addf %187, %190 : vector<10x32xf32>
    %192 = tpu.transpose %182, [1, 0] : vector<10x32xf32> -> vector<32x10xf32>
    %193 = arith.truncf %173 : vector<10x32xf32> to vector<10x32xbf16>
    %194 = arith.truncf %192 : vector<32x10xf32> to vector<32x10xbf16>
    %cst_145 = arith.constant dense<0.000000e+00> : vector<10x10xf32>
    %195 = tpu.matmul %193, %194, %cst_145 {dimension_numbers = #tpu.dot_dimension_numbers<[1], [0], [0], [1], [0, 0, 1, 1], [], []>} : vector<10x32xbf16>, vector<32x10xbf16>, vector<10x10xf32> -> vector<10x10xf32>
    %cst_146 = arith.constant 0.176776692 : f32
    %196 = vector.broadcast %cst_146 : f32 to vector<10x10xf32>
    %197 = arith.mulf %195, %196 : vector<10x10xf32>
    %198 = arith.addf %197, %31 : vector<10x10xf32>
    %cst_147 = arith.constant dense<0xFF800000> : vector<10xf32>
    %199 = vector.multi_reduction <maximumf>, %198, %cst_147 [1] : vector<10x10xf32> to vector<10xf32>
    %200 = vector.shape_cast %199 : vector<10xf32> to vector<10x1xf32>
    %201 = vector.broadcast %200 : vector<10x1xf32> to vector<10x10xf32>
    %202 = arith.subf %198, %201 : vector<10x10xf32>
    %203 = math.exp %202 : vector<10x10xf32>
    %cst_148 = arith.constant dense<0.000000e+00> : vector<10xf32>
    %204 = vector.multi_reduction <add>, %203, %cst_148 [1] : vector<10x10xf32> to vector<10xf32>
    %205 = vector.shape_cast %204 : vector<10xf32> to vector<10x1xf32>
    %206 = tpu.reciprocal %205 {approx = true} : vector<10x1xf32> -> vector<10x1xf32>
    %207 = vector.broadcast %206 : vector<10x1xf32> to vector<10x10xf32>
    %208 = arith.mulf %203, %207 : vector<10x10xf32>
    %209 = arith.truncf %208 : vector<10x10xf32> to vector<10x10xbf16>
    %210 = arith.truncf %191 : vector<10x32xf32> to vector<10x32xbf16>
    %cst_149 = arith.constant dense<0.000000e+00> : vector<10x32xf32>
    %211 = tpu.matmul %209, %210, %cst_149 {dimension_numbers = #tpu.dot_dimension_numbers<[1], [0], [0], [1], [0, 0, 1, 1], [], []>} : vector<10x10xbf16>, vector<10x32xbf16>, vector<10x32xf32> -> vector<10x32xf32>
    %c0_150 = arith.constant 0 : index
    %c2_151 = arith.constant 2 : index
    %c0_152 = arith.constant 0 : index
    %c0_153 = arith.constant 0 : index
    %212 = vector.load %arg10[%c0_150, %c2_151, %c0_152, %c0_153] : memref<1x4x32x128xf32, #tpu.memory_space<vmem>>, vector<1x1x32x128xf32>
    %213 = vector.shape_cast %212 : vector<1x1x32x128xf32> to vector<32x128xf32>
    %214 = arith.truncf %211 : vector<10x32xf32> to vector<10x32xbf16>
    %215 = arith.truncf %213 : vector<32x128xf32> to vector<32x128xbf16>
    %cst_154 = arith.constant dense<0.000000e+00> : vector<10x128xf32>
    %216 = tpu.matmul %214, %215, %cst_154 {dimension_numbers = #tpu.dot_dimension_numbers<[1], [0], [0], [1], [0, 0, 1, 1], [], []>} : vector<10x32xbf16>, vector<32x128xbf16>, vector<10x128xf32> -> vector<10x128xf32>
    %217 = arith.addf %164, %216 : vector<10x128xf32>
    %c0_155 = arith.constant 0 : index
    %c0_156 = arith.constant 0 : index
    %c3 = arith.constant 3 : index
    %c0_157 = arith.constant 0 : index
    %c0_158 = arith.constant 0 : index
    %218 = vector.load %arg8[%c0_155, %c0_156, %c3, %c0_157, %c0_158] : memref<1x3x4x128x32xf32, #tpu.memory_space<vmem>>, vector<1x1x1x128x32xf32>
    %219 = vector.shape_cast %218 : vector<1x1x1x128x32xf32> to vector<128x32xf32>
    %220 = arith.truncf %57 : vector<10x128xf32> to vector<10x128xbf16>
    %221 = arith.truncf %219 : vector<128x32xf32> to vector<128x32xbf16>
    %cst_159 = arith.constant dense<0.000000e+00> : vector<10x32xf32>
    %222 = tpu.matmul %220, %221, %cst_159 {dimension_numbers = #tpu.dot_dimension_numbers<[1], [0], [0], [1], [0, 0, 1, 1], [], []>} : vector<10x128xbf16>, vector<128x32xbf16>, vector<10x32xf32> -> vector<10x32xf32>
    %c0_160 = arith.constant 0 : index
    %c0_161 = arith.constant 0 : index
    %c3_162 = arith.constant 3 : index
    %c0_163 = arith.constant 0 : index
    %c0_164 = arith.constant 0 : index
    %223 = vector.load %arg9[%c0_160, %c0_161, %c3_162, %c0_163, %c0_164] : memref<1x3x4x1x32xf32, #tpu.memory_space<vmem>>, vector<1x1x1x1x32xf32>
    %224 = vector.shape_cast %223 : vector<1x1x1x1x32xf32> to vector<1x32xf32>
    %225 = vector.broadcast %224 : vector<1x32xf32> to vector<10x32xf32>
    %226 = arith.addf %222, %225 : vector<10x32xf32>
    %c0_165 = arith.constant 0 : index
    %c1_166 = arith.constant 1 : index
    %c3_167 = arith.constant 3 : index
    %c0_168 = arith.constant 0 : index
    %c0_169 = arith.constant 0 : index
    %227 = vector.load %arg8[%c0_165, %c1_166, %c3_167, %c0_168, %c0_169] : memref<1x3x4x128x32xf32, #tpu.memory_space<vmem>>, vector<1x1x1x128x32xf32>
    %228 = vector.shape_cast %227 : vector<1x1x1x128x32xf32> to vector<128x32xf32>
    %229 = arith.truncf %57 : vector<10x128xf32> to vector<10x128xbf16>
    %230 = arith.truncf %228 : vector<128x32xf32> to vector<128x32xbf16>
    %cst_170 = arith.constant dense<0.000000e+00> : vector<10x32xf32>
    %231 = tpu.matmul %229, %230, %cst_170 {dimension_numbers = #tpu.dot_dimension_numbers<[1], [0], [0], [1], [0, 0, 1, 1], [], []>} : vector<10x128xbf16>, vector<128x32xbf16>, vector<10x32xf32> -> vector<10x32xf32>
    %c0_171 = arith.constant 0 : index
    %c1_172 = arith.constant 1 : index
    %c3_173 = arith.constant 3 : index
    %c0_174 = arith.constant 0 : index
    %c0_175 = arith.constant 0 : index
    %232 = vector.load %arg9[%c0_171, %c1_172, %c3_173, %c0_174, %c0_175] : memref<1x3x4x1x32xf32, #tpu.memory_space<vmem>>, vector<1x1x1x1x32xf32>
    %233 = vector.shape_cast %232 : vector<1x1x1x1x32xf32> to vector<1x32xf32>
    %234 = vector.broadcast %233 : vector<1x32xf32> to vector<10x32xf32>
    %235 = arith.addf %231, %234 : vector<10x32xf32>
    %c0_176 = arith.constant 0 : index
    %c2_177 = arith.constant 2 : index
    %c3_178 = arith.constant 3 : index
    %c0_179 = arith.constant 0 : index
    %c0_180 = arith.constant 0 : index
    %236 = vector.load %arg8[%c0_176, %c2_177, %c3_178, %c0_179, %c0_180] : memref<1x3x4x128x32xf32, #tpu.memory_space<vmem>>, vector<1x1x1x128x32xf32>
    %237 = vector.shape_cast %236 : vector<1x1x1x128x32xf32> to vector<128x32xf32>
    %238 = arith.truncf %57 : vector<10x128xf32> to vector<10x128xbf16>
    %239 = arith.truncf %237 : vector<128x32xf32> to vector<128x32xbf16>
    %cst_181 = arith.constant dense<0.000000e+00> : vector<10x32xf32>
    %240 = tpu.matmul %238, %239, %cst_181 {dimension_numbers = #tpu.dot_dimension_numbers<[1], [0], [0], [1], [0, 0, 1, 1], [], []>} : vector<10x128xbf16>, vector<128x32xbf16>, vector<10x32xf32> -> vector<10x32xf32>
    %c0_182 = arith.constant 0 : index
    %c2_183 = arith.constant 2 : index
    %c3_184 = arith.constant 3 : index
    %c0_185 = arith.constant 0 : index
    %c0_186 = arith.constant 0 : index
    %241 = vector.load %arg9[%c0_182, %c2_183, %c3_184, %c0_185, %c0_186] : memref<1x3x4x1x32xf32, #tpu.memory_space<vmem>>, vector<1x1x1x1x32xf32>
    %242 = vector.shape_cast %241 : vector<1x1x1x1x32xf32> to vector<1x32xf32>
    %243 = vector.broadcast %242 : vector<1x32xf32> to vector<10x32xf32>
    %244 = arith.addf %240, %243 : vector<10x32xf32>
    %245 = tpu.transpose %235, [1, 0] : vector<10x32xf32> -> vector<32x10xf32>
    %246 = arith.truncf %226 : vector<10x32xf32> to vector<10x32xbf16>
    %247 = arith.truncf %245 : vector<32x10xf32> to vector<32x10xbf16>
    %cst_187 = arith.constant dense<0.000000e+00> : vector<10x10xf32>
    %248 = tpu.matmul %246, %247, %cst_187 {dimension_numbers = #tpu.dot_dimension_numbers<[1], [0], [0], [1], [0, 0, 1, 1], [], []>} : vector<10x32xbf16>, vector<32x10xbf16>, vector<10x10xf32> -> vector<10x10xf32>
    %cst_188 = arith.constant 0.176776692 : f32
    %249 = vector.broadcast %cst_188 : f32 to vector<10x10xf32>
    %250 = arith.mulf %248, %249 : vector<10x10xf32>
    %251 = arith.addf %250, %31 : vector<10x10xf32>
    %cst_189 = arith.constant dense<0xFF800000> : vector<10xf32>
    %252 = vector.multi_reduction <maximumf>, %251, %cst_189 [1] : vector<10x10xf32> to vector<10xf32>
    %253 = vector.shape_cast %252 : vector<10xf32> to vector<10x1xf32>
    %254 = vector.broadcast %253 : vector<10x1xf32> to vector<10x10xf32>
    %255 = arith.subf %251, %254 : vector<10x10xf32>
    %256 = math.exp %255 : vector<10x10xf32>
    %cst_190 = arith.constant dense<0.000000e+00> : vector<10xf32>
    %257 = vector.multi_reduction <add>, %256, %cst_190 [1] : vector<10x10xf32> to vector<10xf32>
    %258 = vector.shape_cast %257 : vector<10xf32> to vector<10x1xf32>
    %259 = tpu.reciprocal %258 {approx = true} : vector<10x1xf32> -> vector<10x1xf32>
    %260 = vector.broadcast %259 : vector<10x1xf32> to vector<10x10xf32>
    %261 = arith.mulf %256, %260 : vector<10x10xf32>
    %262 = arith.truncf %261 : vector<10x10xf32> to vector<10x10xbf16>
    %263 = arith.truncf %244 : vector<10x32xf32> to vector<10x32xbf16>
    %cst_191 = arith.constant dense<0.000000e+00> : vector<10x32xf32>
    %264 = tpu.matmul %262, %263, %cst_191 {dimension_numbers = #tpu.dot_dimension_numbers<[1], [0], [0], [1], [0, 0, 1, 1], [], []>} : vector<10x10xbf16>, vector<10x32xbf16>, vector<10x32xf32> -> vector<10x32xf32>
    %c0_192 = arith.constant 0 : index
    %c3_193 = arith.constant 3 : index
    %c0_194 = arith.constant 0 : index
    %c0_195 = arith.constant 0 : index
    %265 = vector.load %arg10[%c0_192, %c3_193, %c0_194, %c0_195] : memref<1x4x32x128xf32, #tpu.memory_space<vmem>>, vector<1x1x32x128xf32>
    %266 = vector.shape_cast %265 : vector<1x1x32x128xf32> to vector<32x128xf32>
    %267 = arith.truncf %264 : vector<10x32xf32> to vector<10x32xbf16>
    %268 = arith.truncf %266 : vector<32x128xf32> to vector<32x128xbf16>
    %cst_196 = arith.constant dense<0.000000e+00> : vector<10x128xf32>
    %269 = tpu.matmul %267, %268, %cst_196 {dimension_numbers = #tpu.dot_dimension_numbers<[1], [0], [0], [1], [0, 0, 1, 1], [], []>} : vector<10x32xbf16>, vector<32x128xbf16>, vector<10x128xf32> -> vector<10x128xf32>
    %270 = arith.addf %217, %269 : vector<10x128xf32>
    %271 = arith.addf %30, %270 : vector<10x128xf32>
    %c0_197 = arith.constant 0 : index
    %c0_198 = arith.constant 0 : index
    %c0_199 = arith.constant 0 : index
    %272 = vector.load %arg11[%c0_197, %c0_198, %c0_199] : memref<1x1x128xf32, #tpu.memory_space<vmem>>, vector<1x1x128xf32>
    %273 = vector.shape_cast %272 : vector<1x1x128xf32> to vector<1x128xf32>
    %274 = vector.broadcast %273 : vector<1x128xf32> to vector<10x128xf32>
    %275 = arith.addf %271, %274 : vector<10x128xf32>
    %c0_200 = arith.constant 0 : index
    %c0_201 = arith.constant 0 : index
    %c0_202 = arith.constant 0 : index
    %276 = vector.load %arg12[%c0_200, %c0_201, %c0_202] : memref<1x1x128xf32, #tpu.memory_space<vmem>>, vector<1x1x128xf32>
    %277 = vector.shape_cast %276 : vector<1x1x128xf32> to vector<1x128xf32>
    %c0_203 = arith.constant 0 : index
    %c0_204 = arith.constant 0 : index
    %c0_205 = arith.constant 0 : index
    %278 = vector.load %arg13[%c0_203, %c0_204, %c0_205] : memref<1x1x128xf32, #tpu.memory_space<vmem>>, vector<1x1x128xf32>
    %279 = vector.shape_cast %278 : vector<1x1x128xf32> to vector<1x128xf32>
    %cst_206 = arith.constant dense<0.000000e+00> : vector<10xf32>
    %280 = vector.multi_reduction <add>, %275, %cst_206 [1] : vector<10x128xf32> to vector<10xf32>
    %281 = vector.shape_cast %280 : vector<10xf32> to vector<10x1xf32>
    %cst_207 = arith.constant 1.280000e+02 : f32
    %282 = vector.broadcast %cst_207 : f32 to vector<10x1xf32>
    %283 = arith.divf %281, %282 : vector<10x1xf32>
    %284 = vector.broadcast %283 : vector<10x1xf32> to vector<10x128xf32>
    %285 = arith.subf %275, %284 : vector<10x128xf32>
    %286 = arith.mulf %285, %285 : vector<10x128xf32>
    %cst_208 = arith.constant dense<0.000000e+00> : vector<10xf32>
    %287 = vector.multi_reduction <add>, %286, %cst_208 [1] : vector<10x128xf32> to vector<10xf32>
    %288 = vector.shape_cast %287 : vector<10xf32> to vector<10x1xf32>
    %cst_209 = arith.constant 1.280000e+02 : f32
    %289 = vector.broadcast %cst_209 : f32 to vector<10x1xf32>
    %290 = arith.divf %288, %289 : vector<10x1xf32>
    %291 = vector.broadcast %283 : vector<10x1xf32> to vector<10x128xf32>
    %292 = arith.subf %275, %291 : vector<10x128xf32>
    %cst_210 = arith.constant 9.99999974E-6 : f32
    %293 = vector.broadcast %cst_210 : f32 to vector<10x1xf32>
    %294 = arith.addf %290, %293 : vector<10x1xf32>
    %295 = math.rsqrt %294 : vector<10x1xf32>
    %296 = vector.broadcast %295 : vector<10x1xf32> to vector<10x128xf32>
    %297 = arith.mulf %292, %296 : vector<10x128xf32>
    %298 = vector.broadcast %277 : vector<1x128xf32> to vector<10x128xf32>
    %299 = arith.mulf %297, %298 : vector<10x128xf32>
    %300 = vector.broadcast %279 : vector<1x128xf32> to vector<10x128xf32>
    %301 = arith.addf %299, %300 : vector<10x128xf32>
    %c0_211 = arith.constant 0 : index
    %c0_212 = arith.constant 0 : index
    %c0_213 = arith.constant 0 : index
    %302 = vector.load %arg14[%c0_211, %c0_212, %c0_213] : memref<1x128x512xf32, #tpu.memory_space<vmem>>, vector<1x128x512xf32>
    %303 = vector.shape_cast %302 : vector<1x128x512xf32> to vector<128x512xf32>
    %304 = arith.truncf %301 : vector<10x128xf32> to vector<10x128xbf16>
    %305 = arith.truncf %303 : vector<128x512xf32> to vector<128x512xbf16>
    %cst_214 = arith.constant dense<0.000000e+00> : vector<10x512xf32>
    %306 = tpu.matmul %304, %305, %cst_214 {dimension_numbers = #tpu.dot_dimension_numbers<[1], [0], [0], [1], [0, 0, 1, 1], [], []>} : vector<10x128xbf16>, vector<128x512xbf16>, vector<10x512xf32> -> vector<10x512xf32>
    %c0_215 = arith.constant 0 : index
    %c0_216 = arith.constant 0 : index
    %c0_217 = arith.constant 0 : index
    %307 = vector.load %arg15[%c0_215, %c0_216, %c0_217] : memref<1x1x512xf32, #tpu.memory_space<vmem>>, vector<1x1x512xf32>
    %308 = vector.shape_cast %307 : vector<1x1x512xf32> to vector<1x512xf32>
    %309 = vector.broadcast %308 : vector<1x512xf32> to vector<10x512xf32>
    %310 = arith.addf %306, %309 : vector<10x512xf32>
    %cst_218 = arith.constant 1.702000e+00 : f32
    %311 = vector.broadcast %cst_218 : f32 to vector<10x512xf32>
    %312 = arith.mulf %311, %310 : vector<10x512xf32>
    %313 = arith.negf %312 : vector<10x512xf32>
    %314 = math.exp %313 : vector<10x512xf32>
    %cst_219 = arith.constant 1.000000e+00 : f32
    %315 = vector.broadcast %cst_219 : f32 to vector<10x512xf32>
    %316 = arith.addf %315, %314 : vector<10x512xf32>
    %317 = arith.divf %315, %316 : vector<10x512xf32>
    %318 = arith.mulf %310, %317 : vector<10x512xf32>
    %c0_220 = arith.constant 0 : index
    %c0_221 = arith.constant 0 : index
    %c0_222 = arith.constant 0 : index
    %319 = vector.load %arg16[%c0_220, %c0_221, %c0_222] : memref<1x512x128xf32, #tpu.memory_space<vmem>>, vector<1x512x128xf32>
    %320 = vector.shape_cast %319 : vector<1x512x128xf32> to vector<512x128xf32>
    %321 = arith.truncf %318 : vector<10x512xf32> to vector<10x512xbf16>
    %322 = arith.truncf %320 : vector<512x128xf32> to vector<512x128xbf16>
    %cst_223 = arith.constant dense<0.000000e+00> : vector<10x128xf32>
    %323 = tpu.matmul %321, %322, %cst_223 {dimension_numbers = #tpu.dot_dimension_numbers<[1], [0], [0], [1], [0, 0, 1, 1], [], []>} : vector<10x512xbf16>, vector<512x128xbf16>, vector<10x128xf32> -> vector<10x128xf32>
    %324 = arith.addf %275, %323 : vector<10x128xf32>
    %c0_224 = arith.constant 0 : index
    %c0_225 = arith.constant 0 : index
    %c0_226 = arith.constant 0 : index
    %325 = vector.load %arg17[%c0_224, %c0_225, %c0_226] : memref<1x1x128xf32, #tpu.memory_space<vmem>>, vector<1x1x128xf32>
    %326 = vector.shape_cast %325 : vector<1x1x128xf32> to vector<1x128xf32>
    %327 = vector.broadcast %326 : vector<1x128xf32> to vector<10x128xf32>
    %328 = arith.addf %324, %327 : vector<10x128xf32>
    %329 = tpu.iota {dimensions = array<i32: 0>} : vector<2x10xi32>
    %330 = tpu.iota {dimensions = array<i32: 1>} : vector<2x10xi32>
    %c5_i32 = arith.constant 5 : i32
    %331 = vector.broadcast %c5_i32 : i32 to vector<2x10xi32>
    %332 = arith.muli %329, %331 : vector<2x10xi32>
    %333 = arith.cmpi eq, %330, %332 : vector<2x10xi32>
    %334 = arith.extui %333 : vector<2x10xi1> to vector<2x10xi32>
    %335 = arith.sitofp %334 : vector<2x10xi32> to vector<2x10xf32>
    %cst_227 = arith.constant dense<0.000000e+00> : vector<2x128xf32>
    %336 = tpu.matmul %335, %328, %cst_227 {dimension_numbers = #tpu.dot_dimension_numbers<[1], [0], [0], [1], [0, 0, 1, 1], [], []>} : vector<2x10xf32>, vector<10x128xf32>, vector<2x128xf32> -> vector<2x128xf32>
    %c0_228 = arith.constant 0 : index
    %c0_229 = arith.constant 0 : index
    %337 = vector.load %arg18[%c0_228, %c0_229] : memref<1x128xf32, #tpu.memory_space<vmem>>, vector<1x128xf32>
    %c0_230 = arith.constant 0 : index
    %c0_231 = arith.constant 0 : index
    %338 = vector.load %arg19[%c0_230, %c0_231] : memref<1x128xf32, #tpu.memory_space<vmem>>, vector<1x128xf32>
    %cst_232 = arith.constant dense<0.000000e+00> : vector<2xf32>
    %339 = vector.multi_reduction <add>, %336, %cst_232 [1] : vector<2x128xf32> to vector<2xf32>
    %340 = vector.shape_cast %339 : vector<2xf32> to vector<2x1xf32>
    %cst_233 = arith.constant 1.280000e+02 : f32
    %341 = vector.broadcast %cst_233 : f32 to vector<2x1xf32>
    %342 = arith.divf %340, %341 : vector<2x1xf32>
    %343 = vector.broadcast %342 : vector<2x1xf32> to vector<2x128xf32>
    %344 = arith.subf %336, %343 : vector<2x128xf32>
    %345 = arith.mulf %344, %344 : vector<2x128xf32>
    %cst_234 = arith.constant dense<0.000000e+00> : vector<2xf32>
    %346 = vector.multi_reduction <add>, %345, %cst_234 [1] : vector<2x128xf32> to vector<2xf32>
    %347 = vector.shape_cast %346 : vector<2xf32> to vector<2x1xf32>
    %cst_235 = arith.constant 1.280000e+02 : f32
    %348 = vector.broadcast %cst_235 : f32 to vector<2x1xf32>
    %349 = arith.divf %347, %348 : vector<2x1xf32>
    %350 = vector.broadcast %342 : vector<2x1xf32> to vector<2x128xf32>
    %351 = arith.subf %336, %350 : vector<2x128xf32>
    %cst_236 = arith.constant 9.99999974E-6 : f32
    %352 = vector.broadcast %cst_236 : f32 to vector<2x1xf32>
    %353 = arith.addf %349, %352 : vector<2x1xf32>
    %354 = math.rsqrt %353 : vector<2x1xf32>
    %355 = vector.broadcast %354 : vector<2x1xf32> to vector<2x128xf32>
    %356 = arith.mulf %351, %355 : vector<2x128xf32>
    %357 = vector.broadcast %337 : vector<1x128xf32> to vector<2x128xf32>
    %358 = arith.mulf %356, %357 : vector<2x128xf32>
    %359 = vector.broadcast %338 : vector<1x128xf32> to vector<2x128xf32>
    %360 = arith.addf %358, %359 : vector<2x128xf32>
    %c0_237 = arith.constant 0 : index
    %c0_238 = arith.constant 0 : index
    %361 = vector.load %arg20[%c0_237, %c0_238] : memref<128x128xf32, #tpu.memory_space<vmem>>, vector<128x128xf32>
    %362 = arith.truncf %360 : vector<2x128xf32> to vector<2x128xbf16>
    %363 = arith.truncf %361 : vector<128x128xf32> to vector<128x128xbf16>
    %cst_239 = arith.constant dense<0.000000e+00> : vector<2x128xf32>
    %364 = tpu.matmul %362, %363, %cst_239 {dimension_numbers = #tpu.dot_dimension_numbers<[1], [0], [0], [1], [0, 0, 1, 1], [], []>} : vector<2x128xbf16>, vector<128x128xbf16>, vector<2x128xf32> -> vector<2x128xf32>
    %365 = arith.mulf %364, %364 : vector<2x128xf32>
    %cst_240 = arith.constant dense<0.000000e+00> : vector<2xf32>
    %366 = vector.multi_reduction <add>, %365, %cst_240 [1] : vector<2x128xf32> to vector<2xf32>
    %367 = vector.shape_cast %366 : vector<2xf32> to vector<2x1xf32>
    %cst_241 = arith.constant 9.99999996E-13 : f32
    %368 = vector.broadcast %cst_241 : f32 to vector<2x1xf32>
    %369 = arith.addf %367, %368 : vector<2x1xf32>
    %370 = math.rsqrt %369 : vector<2x1xf32>
    %371 = vector.broadcast %370 : vector<2x1xf32> to vector<2x128xf32>
    %372 = arith.mulf %364, %371 : vector<2x128xf32>
    %c0_242 = arith.constant 0 : index
    %c0_243 = arith.constant 0 : index
    %373 = vector.load %arg21[%c0_242, %c0_243] : memref<5x128xf32, #tpu.memory_space<vmem>>, vector<5x128xf32>
    %c0_244 = arith.constant 0 : index
    %c0_245 = arith.constant 0 : index
    %374 = vector.load %arg22[%c0_244, %c0_245] : memref<1x1xf32, #tpu.memory_space<vmem>>, vector<1x1xf32>
    %375 = vector.extract %374[0, 0] : f32 from vector<1x1xf32>
    %376 = math.exp %375 : f32
    %377 = tpu.transpose %373, [1, 0] : vector<5x128xf32> -> vector<128x5xf32>
    %cst_246 = arith.constant dense<0.000000e+00> : vector<2x5xf32>
    %378 = tpu.matmul %372, %377, %cst_246 {dimension_numbers = #tpu.dot_dimension_numbers<[1], [0], [0], [1], [0, 0, 1, 1], [], []>} : vector<2x128xf32>, vector<128x5xf32>, vector<2x5xf32> -> vector<2x5xf32>
    %379 = vector.broadcast %376 : f32 to vector<2x5xf32>
    %380 = arith.mulf %379, %378 : vector<2x5xf32>
    %c0_247 = arith.constant 0 : index
    %c0_248 = arith.constant 0 : index
    %381 = vector.load %arg23[%c0_247, %c0_248] : memref<2x5xf32, #tpu.memory_space<vmem>>, vector<2x5xf32>
    tpu.vector_store %arg23[%c0_247, %c0_248], %380 {strides = array<i32>} : memref<2x5xf32, #tpu.memory_space<vmem>>, vector<2x5xf32>,
    %c0_249 = arith.constant 0 : index
    %c0_250 = arith.constant 0 : index
    %382 = vector.load %arg24[%c0_249, %c0_250] : memref<2x128xf32, #tpu.memory_space<vmem>>, vector<2x128xf32>
    tpu.vector_store %arg24[%c0_249, %c0_250], %372 {strides = array<i32>} : memref<2x128xf32, #tpu.memory_space<vmem>>, vector<2x128xf32>,
    return
  }
}

</mosaic_0001>

<llo_original>
// kernel: tile.19
$region0: #{tile.19}
  %s0 = inlined_call_operand.vmem [shape: f32[2,5,128], index: 0, kind: input, shape index: {}]
  %s1 = inlined_call_operand.vmem [shape: f32[10,128], index: 1, kind: output, shape index: {}]
  %v2 = vld [vmem:[%s0] sm:$0x1f]
  %3 = vst [vmem:[%s1] sm:$0x1f] %v2
  %s4 = scalar_lea.vmem %s0, 8
  %v5 = vld [vmem:[%s4] sm:$0x1f]
  %s6 = scalar_lea.vmem %s1, 5
  %7 = vst [vmem:[%s6] sm:$0x1f] %v5

// kernel: ordinalclip_forward.3
$region0: #{ordinalclip_forward.3}
  #allocation0 [shape = 'u32[]', space=smem, size = 0x4, offset = 0x4, fixed_abs, tag = 'smem constant byte address 0x4 - core index']
  #allocation1 [shape = 'u32[72,128]{1,0:T(1,128)}', space=vmem, size = 0x9000, scoped, tag = 'internal scratch']
  #allocation2 [shape = 'f32[1,1]{1,0:T(1,128)S(1)}', space=vmem, size = 0x200, scoped, tag = 'scoped memory for ordinalclip_forward.3']
  %s0 = inlined_call_operand.vmem [shape: f32[10,192], index: 0, kind: input, shape index: {}]
  %s1 = inlined_call_operand.vmem [shape: f32[10,128], index: 1, kind: input, shape index: {}]
  %s2 = inlined_call_operand.vmem [shape: f32[10,10], index: 2, kind: input, shape index: {}]
  %s3 = inlined_call_operand.vmem [shape: f32[192,128], index: 3, kind: input, shape index: {}]
  %s4 = inlined_call_operand.vmem [shape: f32[1,128], index: 4, kind: input, shape index: {}]
  %s5 = inlined_call_operand.vmem [shape: f32[1,128], index: 5, kind: input, shape index: {}]
  %s6 = inlined_call_operand.vmem [shape: f32[1,1,128], index: 6, kind: input, shape index: {}]
  %s7 = inlined_call_operand.vmem [shape: f32[1,1,128], index: 7, kind: input, shape index: {}]
  %s8 = inlined_call_operand.vmem [shape: f32[1,3,4,128,32], index: 8, kind: input, shape index: {}]
  %s9 = inlined_call_operand.vmem [shape: f32[1,3,4,1,32], index: 9, kind: input, shape index: {}]
  %s10 = inlined_call_operand.vmem [shape: f32[1,4,32,128], index: 10, kind: input, shape index: {}]
  %s11 = inlined_call_operand.vmem [shape: f32[1,1,128], index: 11, kind: input, shape index: {}]
  %s12 = inlined_call_operand.vmem [shape: f32[1,1,128], index: 12, kind: input, shape index: {}]
  %s13 = inlined_call_operand.vmem [shape: f32[1,1,128], index: 13, kind: input, shape index: {}]
  %s14 = inlined_call_operand.vmem [shape: f32[1,128,512], index: 14, kind: input, shape index: {}]
  %s15 = inlined_call_operand.vmem [shape: f32[1,1,512], index: 15, kind: input, shape index: {}]
  %s16 = inlined_call_operand.vmem [shape: f32[1,512,128], index: 16, kind: input, shape index: {}]
  %s17 = inlined_call_operand.vmem [shape: f32[1,1,128], index: 17, kind: input, shape index: {}]
  %s18 = inlined_call_operand.vmem [shape: f32[1,128], index: 18, kind: input, shape index: {}]
  %s19 = inlined_call_operand.vmem [shape: f32[1,128], index: 19, kind: input, shape index: {}]
  %s20 = inlined_call_operand.vmem [shape: f32[128,128], index: 20, kind: input, shape index: {}]
  %s21 = inlined_call_operand.vmem [shape: f32[5,128], index: 21, kind: input, shape index: {}]
  %s22 = inlined_call_operand.<no memory space> [shape: f32[1,1], index: 22, kind: input, shape index: {}]
  %s23 = inlined_call_operand.hbm [shape: f32[2,5], index: 23, kind: output, shape index: {0}]
  %s24 = inlined_call_operand.hbm [shape: f32[2,128], index: 24, kind: output, shape index: {1}]
  %25 = xla_tuple %s23, %s24
  %s26 = sld [smem:[#allocation0]]
  $region110: #{ordinalclip_forward.3} parent=0
    _
  %s28 = ssub.s32 1, %s26
  %s29 = scalar_select 0, %s28, %s26
  %v30 = vstv %s22
  %31 = vst [vmem:[#allocation2] sm:$0x1] %v30
  $region1: #{ordinalclip_forward.3} parent=0
    #allocation3 [shape = 'u8[1024]{0}', space=vmem, size = 0x400, scoped, tag = 'output window, operand 0, single buffered']
    #allocation4 [shape = 's32[1]{0}', space=sflag, size = 0x4, scoped, tag = 'scoped memory for ordinalclip_forward.3']
    #allocation5 [shape = 'u8[1024]{0}', space=vmem, size = 0x400, scoped, tag = 'output window, operand 1, single buffered']
    #allocation6 [shape = 's32[1]{0}', space=sflag, size = 0x4, scoped, tag = 'scoped memory for ordinalclip_forward.3']
    %32 = vsyncpa [#allocation4], 0
    %33 = vsyncpa [#allocation6], 0
    // Predicated region
    $region2: #{ordinalclip_forward.3} parent=1 // pred_check
      _
    $region3: #{ordinalclip_forward.3} parent=1 // pred_check_branch
      %35 = sbr.rel (0) target = $region5
    $region4: #{ordinalclip_forward.3} parent=1 // pred_region
      _
    $region5: #{ordinalclip_forward.3} parent=1 // pred_fallthru
      _
    // Predicated region
    $region6: #{ordinalclip_forward.3} parent=1 // pred_check
      _
    $region7: #{ordinalclip_forward.3} parent=1 // pred_check_branch
      %37 = sbr.rel (0) target = $region9
    $region8: #{ordinalclip_forward.3} parent=1 // pred_region
      _
    $region9: #{ordinalclip_forward.3} parent=1 // pred_fallthru
      _
    // Predicated region
    $region10: #{ordinalclip_forward.3} parent=1 // pred_check
      _
    $region11: #{ordinalclip_forward.3} parent=1 // pred_check_branch
      %39 = sbr.rel (0) target = $region13
    $region12: #{ordinalclip_forward.3} parent=1 // pred_region
      _
    $region13: #{ordinalclip_forward.3} parent=1 // pred_fallthru
      _
    // Predicated region
    $region14: #{ordinalclip_forward.3} parent=1 // pred_check
      _
    $region15: #{ordinalclip_forward.3} parent=1 // pred_check_branch
      %41 = sbr.rel (0) target = $region17
    $region16: #{ordinalclip_forward.3} parent=1 // pred_region
      _
    $region17: #{ordinalclip_forward.3} parent=1 // pred_fallthru
      _
    // Predicated region
    $region18: #{ordinalclip_forward.3} parent=1 // pred_check
      _
    $region19: #{ordinalclip_forward.3} parent=1 // pred_check_branch
      %43 = sbr.rel (0) target = $region21
    $region20: #{ordinalclip_forward.3} parent=1 // pred_region
      _
    $region21: #{ordinalclip_forward.3} parent=1 // pred_fallthru
      _
    // Predicated region
    $region22: #{ordinalclip_forward.3} parent=1 // pred_check
      _
    $region23: #{ordinalclip_forward.3} parent=1 // pred_check_branch
      %45 = sbr.rel (0) target = $region25
    $region24: #{ordinalclip_forward.3} parent=1 // pred_region
      _
    $region25: #{ordinalclip_forward.3} parent=1 // pred_fallthru
      _
    // Predicated region
    $region26: #{ordinalclip_forward.3} parent=1 // pred_check
      _
    $region27: #{ordinalclip_forward.3} parent=1 // pred_check_branch
      %47 = sbr.rel (0) target = $region29
    $region28: #{ordinalclip_forward.3} parent=1 // pred_region
      _
    $region29: #{ordinalclip_forward.3} parent=1 // pred_fallthru
      _
    // Predicated region
    $region30: #{ordinalclip_forward.3} parent=1 // pred_check
      _
    $region31: #{ordinalclip_forward.3} parent=1 // pred_check_branch
      %49 = sbr.rel (0) target = $region33
    $region32: #{ordinalclip_forward.3} parent=1 // pred_region
      _
    $region33: #{ordinalclip_forward.3} parent=1 // pred_fallthru
      _
    // Predicated region
    $region34: #{ordinalclip_forward.3} parent=1 // pred_check
      _
    $region35: #{ordinalclip_forward.3} parent=1 // pred_check_branch
      %51 = sbr.rel (0) target = $region37
    $region36: #{ordinalclip_forward.3} parent=1 // pred_region
      _
    $region37: #{ordinalclip_forward.3} parent=1 // pred_fallthru
      _
    // Predicated region
    $region38: #{ordinalclip_forward.3} parent=1 // pred_check
      _
    $region39: #{ordinalclip_forward.3} parent=1 // pred_check_branch
      %53 = sbr.rel (0) target = $region41
    $region40: #{ordinalclip_forward.3} parent=1 // pred_region
      _
    $region41: #{ordinalclip_forward.3} parent=1 // pred_fallthru
      _
    // Predicated region
    $region42: #{ordinalclip_forward.3} parent=1 // pred_check
      _
    $region43: #{ordinalclip_forward.3} parent=1 // pred_check_branch
      %55 = sbr.rel (0) target = $region45
    $region44: #{ordinalclip_forward.3} parent=1 // pred_region
      _
    $region45: #{ordinalclip_forward.3} parent=1 // pred_fallthru
      _
    // Predicated region
    $region46: #{ordinalclip_forward.3} parent=1 // pred_check
      _
    $region47: #{ordinalclip_forward.3} parent=1 // pred_check_branch
      %57 = sbr.rel (0) target = $region49
    $region48: #{ordinalclip_forward.3} parent=1 // pred_region
      _
    $region49: #{ordinalclip_forward.3} parent=1 // pred_fallthru
      _
    // Predicated region
    $region50: #{ordinalclip_forward.3} parent=1 // pred_check
      _
    $region51: #{ordinalclip_forward.3} parent=1 // pred_check_branch
      %59 = sbr.rel (0) target = $region53
    $region52: #{ordinalclip_forward.3} parent=1 // pred_region
      _
    $region53: #{ordinalclip_forward.3} parent=1 // pred_fallthru
      _
    // Predicated region
    $region54: #{ordinalclip_forward.3} parent=1 // pred_check
      _
    $region55: #{ordinalclip_forward.3} parent=1 // pred_check_branch
      %61 = sbr.rel (0) target = $region57
    $region56: #{ordinalclip_forward.3} parent=1 // pred_region
      _
    $region57: #{ordinalclip_forward.3} parent=1 // pred_fallthru
      _
    // Predicated region
    $region58: #{ordinalclip_forward.3} parent=1 // pred_check
      _
    $region59: #{ordinalclip_forward.3} parent=1 // pred_check_branch
      %63 = sbr.rel (0) target = $region61
    $region60: #{ordinalclip_forward.3} parent=1 // pred_region
      _
    $region61: #{ordinalclip_forward.3} parent=1 // pred_fallthru
      _
    // Predicated region
    $region62: #{ordinalclip_forward.3} parent=1 // pred_check
      _
    $region63: #{ordinalclip_forward.3} parent=1 // pred_check_branch
      %65 = sbr.rel (0) target = $region65
    $region64: #{ordinalclip_forward.3} parent=1 // pred_region
      _
    $region65: #{ordinalclip_forward.3} parent=1 // pred_fallthru
      _
    // Predicated region
    $region66: #{ordinalclip_forward.3} parent=1 // pred_check
      _
    $region67: #{ordinalclip_forward.3} parent=1 // pred_check_branch
      %67 = sbr.rel (0) target = $region69
    $region68: #{ordinalclip_forward.3} parent=1 // pred_region
      _
    $region69: #{ordinalclip_forward.3} parent=1 // pred_fallthru
      _
    // Predicated region
    $region70: #{ordinalclip_forward.3} parent=1 // pred_check
      _
    $region71: #{ordinalclip_forward.3} parent=1 // pred_check_branch
      %69 = sbr.rel (0) target = $region73
    $region72: #{ordinalclip_forward.3} parent=1 // pred_region
      _
    $region73: #{ordinalclip_forward.3} parent=1 // pred_fallthru
      _
    // Predicated region
    $region74: #{ordinalclip_forward.3} parent=1 // pred_check
      _
    $region75: #{ordinalclip_forward.3} parent=1 // pred_check_branch
      %71 = sbr.rel (0) target = $region77
    $region76: #{ordinalclip_forward.3} parent=1 // pred_region
      _
    $region77: #{ordinalclip_forward.3} parent=1 // pred_fallthru
      _
    // Predicated region
    $region78: #{ordinalclip_forward.3} parent=1 // pred_check
      _
    $region79: #{ordinalclip_forward.3} parent=1 // pred_check_branch
      %73 = sbr.rel (0) target = $region81
    $region80: #{ordinalclip_forward.3} parent=1 // pred_region
      _
    $region81: #{ordinalclip_forward.3} parent=1 // pred_fallthru
      _
    // Predicated region
    $region82: #{ordinalclip_forward.3} parent=1 // pred_check
      _
    $region83: #{ordinalclip_forward.3} parent=1 // pred_check_branch
      %75 = sbr.rel (0) target = $region85
    $region84: #{ordinalclip_forward.3} parent=1 // pred_region
      _
    $region85: #{ordinalclip_forward.3} parent=1 // pred_fallthru
      _
    // Predicated region
    $region86: #{ordinalclip_forward.3} parent=1 // pred_check
      _
    $region87: #{ordinalclip_forward.3} parent=1 // pred_check_branch
      %77 = sbr.rel (0) target = $region89
    $region88: #{ordinalclip_forward.3} parent=1 // pred_region
      _
    $region89: #{ordinalclip_forward.3} parent=1 // pred_fallthru
      _
    // Predicated region
    $region90: #{ordinalclip_forward.3} parent=1 // pred_check
      _
    $region91: #{ordinalclip_forward.3} parent=1 // pred_check_branch
      %79 = sbr.rel (0) target = $region93
    $region92: #{ordinalclip_forward.3} parent=1 // pred_region
      _
    $region93: #{ordinalclip_forward.3} parent=1 // pred_fallthru
      _
    %v81 = vld [vmem:[%s0] sm:$0xff]
    %v82 = vld [vmem:[%s0 + $0x8] sm:$0xff]
    %v83 = vld [vmem:[%s0 + $0x10] sm:$0x3]
    %v84 = vld [vmem:[%s0 + $0x18] sm:$0x3]
    %v85 = vld [vmem:[%s3] sm:$0xff]
    %v86 = vld [vmem:[%s3 + $0x8] sm:$0xff]
    %v87 = vld [vmem:[%s3 + $0x10] sm:$0xff]
    %v88 = vld [vmem:[%s3 + $0x18] sm:$0xff]
    %v89 = vld [vmem:[%s3 + $0x20] sm:$0xff]
    %v90 = vld [vmem:[%s3 + $0x28] sm:$0xff]
    %v91 = vld [vmem:[%s3 + $0x30] sm:$0xff]
    %v92 = vld [vmem:[%s3 + $0x38] sm:$0xff]
    %v93 = vld [vmem:[%s3 + $0x40] sm:$0xff]
    %v94 = vld [vmem:[%s3 + $0x48] sm:$0xff]
    %v95 = vld [vmem:[%s3 + $0x50] sm:$0xff]
    %v96 = vld [vmem:[%s3 + $0x58] sm:$0xff]
    %v97 = vld [vmem:[%s3 + $0x60] sm:$0xff]
    %v98 = vld [vmem:[%s3 + $0x68] sm:$0xff]
    %v99 = vld [vmem:[%s3 + $0x70] sm:$0xff]
    %v100 = vld [vmem:[%s3 + $0x78] sm:$0xff]
    %v101 = vld [vmem:[%s3 + $0x80] sm:$0xff]
    %v102 = vld [vmem:[%s3 + $0x88] sm:$0xff]
    %v103 = vld [vmem:[%s3 + $0x90] sm:$0xff]
    %v104 = vld [vmem:[%s3 + $0x98] sm:$0xff]
    %v105 = vld [vmem:[%s3 + $0xa0] sm:$0xff]
    %v106 = vld [vmem:[%s3 + $0xa8] sm:$0xff]
    %v107 = vld [vmem:[%s3 + $0xb0] sm:$0xff]
    %v108 = vld [vmem:[%s3 + $0xb8] sm:$0xff]
    %v109 = vpack.c.bf16 %v83, %v81
    %v110 = vpack.c.bf16 %v84, %v82
    %v111 = vpack.c.bf16 %v86, %v85
    %v112 = vpack.c.bf16 %v88, %v87
    %v113 = vpack.c.bf16 %v90, %v89
    %v114 = vpack.c.bf16 %v92, %v91
    %v115 = vpack.c.bf16 %v94, %v93
    %v116 = vpack.c.bf16 %v96, %v95
    %v117 = vpack.c.bf16 %v98, %v97
    %v118 = vpack.c.bf16 %v100, %v99
    %v119 = vpack.c.bf16 %v102, %v101
    %v120 = vpack.c.bf16 %v104, %v103
    %v121 = vpack.c.bf16 %v106, %v105
    %v122 = vpack.c.bf16 %v108, %v107
    %v123 = vld [vmem:[%s1] sm:$0xff]
    %v124 = vld [vmem:[%s1 + $0x8] sm:$0x3]
    %vm125 = vcmask 523264
    %v127 = vsel %vm125, %v110, 0
    %129 = vmatpush.bf16.msra.mxu0 %v118
    %130 = vmatpush.bf16.msra.mxu0 %v117
    %131 = vmatpush.bf16.msra.mxu0 %v116
    %132 = vmatpush.bf16.msra.mxu0 %v115
    %133 = vmatpush.bf16.msra.mxu0 %v114
    %134 = vmatpush.bf16.msra.mxu0 %v113
    %135 = vmatpush.bf16.msra.mxu0 %v112
    %136 = vmatpush.bf16.msra.mxu0 %v111
    %137 = vmatmul.bf16.gmra.mxu0 %v109
    %v138 = vpop.f32.mrf.mxu0
    %v139 = vadd.f32 %v123, %v138
    %v140 = vpop.f32.mrf.mxu0
    %v141 = vadd.f32 %v124, %v140
    %142 = vdwg.mxu0
    %143 = vmatpush.bf16.msra.mxu0 0
    %144 = vmatpush.bf16.msra.mxu0 0
    %145 = vmatpush.bf16.msra.mxu0 0
    %146 = vmatpush.bf16.msra.mxu0 0
    %147 = vmatpush.bf16.msra.mxu0 %v122
    %148 = vmatpush.bf16.msra.mxu0 %v121
    %149 = vmatpush.bf16.msra.mxu0 %v120
    %150 = vmatpush.bf16.msra.mxu0 %v119
    %151 = vmatmul.bf16.gmra.mxu0 %v127
    %v152 = vpop.f32.mrf.mxu0
    %v153 = vadd.f32 %v139, %v152
    %v154 = vpop.f32.mrf.mxu0
    %v155 = vadd.f32 %v141, %v154
    %156 = vdwg.mxu0
    %v157 = vld [vmem:[%s4] sm:$0x1]
    %v158 = vld [vmem:[%s5] sm:$0x1]
    %159 = vadd.xlane.f32.xlu0 %v153
    %v160 = vpop.xlane.xlu0 %159
    %vm161 = vcmask 1041408
    %v162 = vsel %vm161, %v155, 0.0
    %163 = vadd.xlane.f32.xlu0 %v162
    %v164 = vpop.xlane.xlu0 %163
    %v165 = vrcp.pop 128.0
    %v166 = vmul.f32 128.0, %v165
    %v167 = vsub.f32 1.0, %v166
    %v168 = vmul.f32 %v165, %v167
    %v169 = vadd.f32 %v165, %v168
    %vm170 = vweird.f32 %v165
    %v171 = vsel %vm170, %v165, %v169
    %v172 = vmul.f32 %v160, %v171
    %v173 = vmul.f32 %v164, %v171
    %v174 = vsub.f32 %v153, %v172
    %v175 = vsub.f32 %v155, %v173
    %v176 = vmul.f32 %v174, %v174
    %v177 = vmul.f32 %v175, %v175
    %178 = vadd.xlane.f32.xlu0 %v176
    %v179 = vpop.xlane.xlu0 %178
    %v180 = vsel %vm161, %v177, 0.0
    %181 = vadd.xlane.f32.xlu0 %v180
    %v182 = vpop.xlane.xlu0 %181
    %v183 = vmul.f32 %v179, %v171
    %v184 = vmul.f32 %v182, %v171
    %v185 = vadd.f32 %v183, 1e-05
    %v186 = vadd.f32 %v184, 1e-05
    %v187 = vrsqrt.pop %v185
    %v188 = vmul.f32 %v187, %v185
    %v189 = vmul.f32 %v188, %v187
    %v190 = vmul.f32 0.5, %v189
    %v191 = vsub.f32 1.5, %v190
    %v192 = vmul.f32 %v187, %v191
    %vm193 = vweird.f32 %v185
    %vm194 = vweird.f32 %v187
    %vm195 = vmor %vm193, %vm194
    %v196 = vsel %vm195, %v187, %v192
    %v197 = vrsqrt.pop %v186
    %v198 = vmul.f32 %v197, %v186
    %v199 = vmul.f32 %v198, %v197
    %v200 = vmul.f32 0.5, %v199
    %v201 = vsub.f32 1.5, %v200
    %v202 = vmul.f32 %v197, %v201
    %vm203 = vweird.f32 %v186
    %vm204 = vweird.f32 %v197
    %vm205 = vmor %vm203, %vm204
    %v206 = vsel %vm205, %v197, %v202
    %v207 = vmul.f32 %v174, %v196
    %v208 = vmul.f32 %v175, %v206
    %v210 = vperm.slane %v157, 0
    %v212 = vmul.f32 %v207, %v210
    %v213 = vmul.f32 %v208, %v210
    %v215 = vperm.slane %v158, 0
    %v217 = vadd.f32 %v212, %v215
    %v218 = vadd.f32 %v213, %v215
    %v219 = vld [vmem:[%s2] sm:$0xff]
    %v220 = vld [vmem:[%s2 + $0x8] sm:$0x3]
    %v221 = vld [vmem:[%s6] sm:$0x1]
    %v222 = vld [vmem:[%s7] sm:$0x1]
    %223 = vadd.xlane.f32.xlu0 %v217
    %v224 = vpop.xlane.xlu0 %223
    %v225 = vsel %vm161, %v218, 0.0
    %226 = vadd.xlane.f32.xlu0 %v225
    %v227 = vpop.xlane.xlu0 %226
    %v228 = vmul.f32 %v224, %v171
    %v229 = vmul.f32 %v227, %v171
    %v230 = vsub.f32 %v217, %v228
    %v231 = vsub.f32 %v218, %v229
    %v232 = vmul.f32 %v230, %v230
    %v233 = vmul.f32 %v231, %v231
    %234 = vadd.xlane.f32.xlu0 %v232
    %v235 = vpop.xlane.xlu0 %234
    %v236 = vsel %vm161, %v233, 0.0
    %237 = vadd.xlane.f32.xlu0 %v236
    %v238 = vpop.xlane.xlu0 %237
    %v239 = vmul.f32 %v235, %v171
    %v240 = vmul.f32 %v238, %v171
    %v241 = vadd.f32 %v239, 1e-05
    %v242 = vadd.f32 %v240, 1e-05
    %v243 = vrsqrt.pop %v241
    %v244 = vmul.f32 %v243, %v241
    %v245 = vmul.f32 %v244, %v243
    %v246 = vmul.f32 0.5, %v245
    %v247 = vsub.f32 1.5, %v246
    %v248 = vmul.f32 %v243, %v247
    %vm249 = vweird.f32 %v241
    %vm250 = vweird.f32 %v243
    %vm251 = vmor %vm249, %vm250
    %v252 = vsel %vm251, %v243, %v248
    %v253 = vrsqrt.pop %v242
    %v254 = vmul.f32 %v253, %v242
    %v255 = vmul.f32 %v254, %v253
    %v256 = vmul.f32 0.5, %v255
    %v257 = vsub.f32 1.5, %v256
    %v258 = vmul.f32 %v253, %v257
    %vm259 = vweird.f32 %v242
    %vm260 = vweird.f32 %v253
    %vm261 = vmor %vm259, %vm260
    %v262 = vsel %vm261, %v253, %v258
    %v263 = vmul.f32 %v230, %v252
    %v264 = vmul.f32 %v231, %v262
    %v266 = vperm.slane %v221, 0
    %v268 = vmul.f32 %v263, %v266
    %v269 = vmul.f32 %v264, %v266
    %v271 = vperm.slane %v222, 0
    %v273 = vadd.f32 %v268, %v271
    %v274 = vadd.f32 %v269, %v271
    %v275 = vld [vmem:[%s8] sm:$0xff]
    %v276 = vld [vmem:[%s8 + $0x8] sm:$0xff]
    %v277 = vld [vmem:[%s8 + $0x10] sm:$0xff]
    %v278 = vld [vmem:[%s8 + $0x18] sm:$0xff]
    %v279 = vld [vmem:[%s8 + $0x20] sm:$0xff]
    %v280 = vld [vmem:[%s8 + $0x28] sm:$0xff]
    %v281 = vld [vmem:[%s8 + $0x30] sm:$0xff]
    %v282 = vld [vmem:[%s8 + $0x38] sm:$0xff]
    %v283 = vld [vmem:[%s8 + $0x40] sm:$0xff]
    %v284 = vld [vmem:[%s8 + $0x48] sm:$0xff]
    %v285 = vld [vmem:[%s8 + $0x50] sm:$0xff]
    %v286 = vld [vmem:[%s8 + $0x58] sm:$0xff]
    %v287 = vld [vmem:[%s8 + $0x60] sm:$0xff]
    %v288 = vld [vmem:[%s8 + $0x68] sm:$0xff]
    %v289 = vld [vmem:[%s8 + $0x70] sm:$0xff]
    %v290 = vld [vmem:[%s8 + $0x78] sm:$0xff]
    %v291 = vpack.c.bf16 %v274, %v273
    %v292 = vpack.c.bf16 %v276, %v275
    %v293 = vpack.c.bf16 %v278, %v277
    %v294 = vpack.c.bf16 %v280, %v279
    %v295 = vpack.c.bf16 %v282, %v281
    %v296 = vpack.c.bf16 %v284, %v283
    %v297 = vpack.c.bf16 %v286, %v285
    %v298 = vpack.c.bf16 %v288, %v287
    %v299 = vpack.c.bf16 %v290, %v289
    %v300 = vld [vmem:[%s9] sm:$0x1]
    %v302 = vperm.slane %v300, 0
    %304 = vmatpush.bf16.msra.mxu0 %v299
    %305 = vmatpush.bf16.msra.mxu0 %v298
    %306 = vmatpush.bf16.msra.mxu0 %v297
    %307 = vmatpush.bf16.msra.mxu0 %v296
    %308 = vmatpush.bf16.msra.mxu0 %v295
    %309 = vmatpush.bf16.msra.mxu0 %v294
    %310 = vmatpush.bf16.msra.mxu0 %v293
    %311 = vmatpush.bf16.msra.mxu0 %v292
    %312 = vmatmul.bf16.gmra.mxu0 %v291
    %v313 = vpop.f32.mrf.mxu0
    %v314 = vadd.f32 %v302, %v313
    %v315 = vpop.f32.mrf.mxu0
    %v316 = vadd.f32 %v302, %v315
    %317 = vdwg.mxu0
    %s318 = scalar_lea.vmem %s8, 512
    %v319 = vld [vmem:[%s318] sm:$0xff]
    %v320 = vld [vmem:[%s318 + $0x8] sm:$0xff]
    %v321 = vld [vmem:[%s318 + $0x10] sm:$0xff]
    %v322 = vld [vmem:[%s318 + $0x18] sm:$0xff]
    %v323 = vld [vmem:[%s318 + $0x20] sm:$0xff]
    %v324 = vld [vmem:[%s318 + $0x28] sm:$0xff]
    %v325 = vld [vmem:[%s318 + $0x30] sm:$0xff]
    %v326 = vld [vmem:[%s318 + $0x38] sm:$0xff]
    %v327 = vld [vmem:[%s318 + $0x40] sm:$0xff]
    %v328 = vld [vmem:[%s318 + $0x48] sm:$0xff]
    %v329 = vld [vmem:[%s318 + $0x50] sm:$0xff]
    %v330 = vld [vmem:[%s318 + $0x58] sm:$0xff]
    %v331 = vld [vmem:[%s318 + $0x60] sm:$0xff]
    %v332 = vld [vmem:[%s318 + $0x68] sm:$0xff]
    %v333 = vld [vmem:[%s318 + $0x70] sm:$0xff]
    %v334 = vld [vmem:[%s318 + $0x78] sm:$0xff]
    %v335 = vpack.c.bf16 %v320, %v319
    %v336 = vpack.c.bf16 %v322, %v321
    %v337 = vpack.c.bf16 %v324, %v323
    %v338 = vpack.c.bf16 %v326, %v325
    %v339 = vpack.c.bf16 %v328, %v327
    %v340 = vpack.c.bf16 %v330, %v329
    %v341 = vpack.c.bf16 %v332, %v331
    %v342 = vpack.c.bf16 %v334, %v333
    %s343 = scalar_lea.vmem %s9, 4
    %v344 = vld [vmem:[%s343] sm:$0x1]
    %v346 = vperm.slane %v344, 0
    %348 = vmatpush.bf16.msra.mxu0 %v342
    %349 = vmatpush.bf16.msra.mxu0 %v341
    %350 = vmatpush.bf16.msra.mxu0 %v340
    %351 = vmatpush.bf16.msra.mxu0 %v339
    %352 = vmatpush.bf16.msra.mxu0 %v338
    %353 = vmatpush.bf16.msra.mxu0 %v337
    %354 = vmatpush.bf16.msra.mxu0 %v336
    %355 = vmatpush.bf16.msra.mxu0 %v335
    %356 = vmatmul.bf16.gmra.mxu0 %v291
    %v357 = vpop.f32.mrf.mxu0
    %v358 = vadd.f32 %v346, %v357
    %v359 = vpop.f32.mrf.mxu0
    %v360 = vadd.f32 %v346, %v359
    %361 = vdwg.mxu0
    %s362 = scalar_lea.vmem %s8, 1024
    %v363 = vld [vmem:[%s362] sm:$0xff]
    %v364 = vld [vmem:[%s362 + $0x8] sm:$0xff]
    %v365 = vld [vmem:[%s362 + $0x10] sm:$0xff]
    %v366 = vld [vmem:[%s362 + $0x18] sm:$0xff]
    %v367 = vld [vmem:[%s362 + $0x20] sm:$0xff]
    %v368 = vld [vmem:[%s362 + $0x28] sm:$0xff]
    %v369 = vld [vmem:[%s362 + $0x30] sm:$0xff]
    %v370 = vld [vmem:[%s362 + $0x38] sm:$0xff]
    %v371 = vld [vmem:[%s362 + $0x40] sm:$0xff]
    %v372 = vld [vmem:[%s362 + $0x48] sm:$0xff]
    %v373 = vld [vmem:[%s362 + $0x50] sm:$0xff]
    %v374 = vld [vmem:[%s362 + $0x58] sm:$0xff]
    %v375 = vld [vmem:[%s362 + $0x60] sm:$0xff]
    %v376 = vld [vmem:[%s362 + $0x68] sm:$0xff]
    %v377 = vld [vmem:[%s362 + $0x70] sm:$0xff]
    %v378 = vld [vmem:[%s362 + $0x78] sm:$0xff]
    %v379 = vpack.c.bf16 %v364, %v363
    %v380 = vpack.c.bf16 %v366, %v365
    %v381 = vpack.c.bf16 %v368, %v367
    %v382 = vpack.c.bf16 %v370, %v369
    %v383 = vpack.c.bf16 %v372, %v371
    %v384 = vpack.c.bf16 %v374, %v373
    %v385 = vpack.c.bf16 %v376, %v375
    %v386 = vpack.c.bf16 %v378, %v377
    %s387 = scalar_lea.vmem %s9, 8
    %v388 = vld [vmem:[%s387] sm:$0x1]
    %v390 = vperm.slane %v388, 0
    %392 = vmatpush.bf16.msra.mxu0 %v386
    %393 = vmatpush.bf16.msra.mxu0 %v385
    %394 = vmatpush.bf16.msra.mxu0 %v384
    %395 = vmatpush.bf16.msra.mxu0 %v383
    %396 = vmatpush.bf16.msra.mxu0 %v382
    %397 = vmatpush.bf16.msra.mxu0 %v381
    %398 = vmatpush.bf16.msra.mxu0 %v380
    %399 = vmatpush.bf16.msra.mxu0 %v379
    %400 = vmatmul.bf16.gmra.mxu0 %v291
    %v401 = vpop.f32.mrf.mxu0
    %v402 = vadd.f32 %v390, %v401
    %v403 = vpop.f32.mrf.mxu0
    %v404 = vadd.f32 %v390, %v403
    %405 = vdwg.mxu0
    %406 = vxpose.xlu0.b32.start [1/16] %v358, 128
    %407 = vxpose.xlu0.b32.cont [2/16] %v360, 128
    %408 = vxpose.xlu0.b32.cont [3/16] 0.0, 128
    %409 = vxpose.xlu0.b32.cont [4/16] 0.0, 128
    %410 = vxpose.xlu0.b32.cont [5/16] 0.0, 128
    %411 = vxpose.xlu0.b32.cont [6/16] 0.0, 128
    %412 = vxpose.xlu0.b32.cont [7/16] 0.0, 128
    %413 = vxpose.xlu0.b32.cont [8/16] 0.0, 128
    %414 = vxpose.xlu0.b32.cont [9/16] 0.0, 128
    %415 = vxpose.xlu0.b32.cont [10/16] 0.0, 128
    %416 = vxpose.xlu0.b32.cont [11/16] 0.0, 128
    %417 = vxpose.xlu0.b32.cont [12/16] 0.0, 128
    %418 = vxpose.xlu0.b32.cont [13/16] 0.0, 128
    %419 = vxpose.xlu0.b32.cont [14/16] 0.0, 128
    %420 = vxpose.xlu0.b32.cont [15/16] 0.0, 128
    %421 = vxpose.xlu0.b32.end [16/16] 0.0, 128
    %v422 = vpop.trf.xlu0
    %v423 = vpop.trf.xlu0
    %v424 = vpop.trf.xlu0
    %v425 = vpop.trf.xlu0
    %v426 = vpop.trf.xlu0
    %v427 = vpop.trf.xlu0
    %v428 = vpop.trf.xlu0
    %v429 = vpop.trf.xlu0
    %v430 = vpop.trf.xlu0
    %v431 = vpop.trf.xlu0
    %v432 = vpop.trf.xlu0
    %v433 = vpop.trf.xlu0
    %v434 = vpop.trf.xlu0
    %v435 = vpop.trf.xlu0
    %v436 = vpop.trf.xlu0
    %v437 = vpop.trf.xlu0
    %v438 = vpack.c.bf16 %v316, %v314
    %v439 = vpack.c.bf16 %v423, %v422
    %v440 = vpack.c.bf16 %v425, %v424
    %vm441 = vcmask 261120
    %v443 = vsel %vm441, %v438, 0
    %445 = vmatpush.bf16.msra.mxu0 0
    %446 = vmatpush.bf16.msra.mxu0 0
    %447 = vmatpush.bf16.msra.mxu0 0
    %448 = vmatpush.bf16.msra.mxu0 0
    %449 = vmatpush.bf16.msra.mxu0 0
    %450 = vmatpush.bf16.msra.mxu0 0
    %451 = vmatpush.bf16.msra.mxu0 %v440
    %452 = vmatpush.bf16.msra.mxu0 %v439
    %453 = vmatmul.bf16.gmra.mxu0 %v443
    %v454 = vpop.f32.mrf.mxu0
    %v455 = vadd.f32 0.0, %v454
    %v456 = vpop.f32.mrf.mxu0
    %v457 = vadd.f32 0.0, %v456
    %458 = vdwg.mxu0
    %v459 = vmul.f32 %v455, 0.17677669
    %v460 = vmul.f32 %v457, 0.17677669
    %v461 = vadd.f32 %v459, %v219
    %v462 = vadd.f32 %v460, %v220
    %vm463 = vcmask 80896
    %v464 = vsel %vm463, %v461, -inf
    %465 = vmax.xlane.f32.xlu0 %v464
    %v466 = vpop.xlane.xlu0 %465
    %vm467 = vcmask 74752
    %v468 = vsel %vm467, %v462, -inf
    %469 = vmax.xlane.f32.xlu0 %v468
    %v470 = vpop.xlane.xlu0 %469
    %v471 = vsub.f32 %v461, %v466
    %v472 = vsub.f32 %v462, %v470
    %v473 = vmul.f32 %v471, 1.442695
    %v474 = vpow.pop %v473
    %v475 = vmul.f32 %v472, 1.442695
    %v476 = vpow.pop %v475
    %v477 = vsel %vm463, %v474, 0.0
    %478 = vadd.xlane.f32.xlu0 %v477
    %v479 = vpop.xlane.xlu0 %478
    %v480 = vsel %vm467, %v476, 0.0
    %481 = vadd.xlane.f32.xlu0 %v480
    %v482 = vpop.xlane.xlu0 %481
    %v483 = vrcp.pop %v479
    %v484 = vrcp.pop %v482
    %v485 = vmul.f32 %v474, %v483
    %v486 = vmul.f32 %v476, %v484
    %v487 = vpack.c.bf16 %v486, %v485
    %v488 = vpack.c.bf16 %v404, %v402
    %v490 = vsel %vm463, %v487, 0
    %vm492 = vcmask 1044480
    %v494 = vsel %vm492, %v488, 0
    %496 = vmatpush.bf16.msra.mxu0 0
    %497 = vmatpush.bf16.msra.mxu0 0
    %498 = vmatpush.bf16.msra.mxu0 0
    %499 = vmatpush.bf16.msra.mxu0 0
    %500 = vmatpush.bf16.msra.mxu0 0
    %501 = vmatpush.bf16.msra.mxu0 0
    %502 = vmatpush.bf16.msra.mxu0 0
    %503 = vmatpush.bf16.msra.mxu0 %v494
    %504 = vmatmul.bf16.gmra.mxu0 %v490
    %v505 = vpop.f32.mrf.mxu0
    %v506 = vadd.f32 0.0, %v505
    %v507 = vpop.f32.mrf.mxu0
    %v508 = vadd.f32 0.0, %v507
    %509 = vdwg.mxu0
    %v510 = vld [vmem:[%s10] sm:$0xff]
    %v511 = vld [vmem:[%s10 + $0x8] sm:$0xff]
    %v512 = vld [vmem:[%s10 + $0x10] sm:$0xff]
    %v513 = vld [vmem:[%s10 + $0x18] sm:$0xff]
    %v514 = vpack.c.bf16 %v508, %v506
    %v515 = vpack.c.bf16 %v511, %v510
    %v516 = vpack.c.bf16 %v513, %v512
    %s517 = scalar_lea.vmem %s8, 128
    %v518 = vld [vmem:[%s517] sm:$0xff]
    %v519 = vld [vmem:[%s517 + $0x8] sm:$0xff]
    %v520 = vld [vmem:[%s517 + $0x10] sm:$0xff]
    %v521 = vld [vmem:[%s517 + $0x18] sm:$0xff]
    %v522 = vld [vmem:[%s517 + $0x20] sm:$0xff]
    %v523 = vld [vmem:[%s517 + $0x28] sm:$0xff]
    %v524 = vld [vmem:[%s517 + $0x30] sm:$0xff]
    %v525 = vld [vmem:[%s517 + $0x38] sm:$0xff]
    %v526 = vld [vmem:[%s517 + $0x40] sm:$0xff]
    %v527 = vld [vmem:[%s517 + $0x48] sm:$0xff]
    %v528 = vld [vmem:[%s517 + $0x50] sm:$0xff]
    %v529 = vld [vmem:[%s517 + $0x58] sm:$0xff]
    %v530 = vld [vmem:[%s517 + $0x60] sm:$0xff]
    %v531 = vld [vmem:[%s517 + $0x68] sm:$0xff]
    %v532 = vld [vmem:[%s517 + $0x70] sm:$0xff]
    %v533 = vld [vmem:[%s517 + $0x78] sm:$0xff]
    %v534 = vpack.c.bf16 %v519, %v518
    %v535 = vpack.c.bf16 %v521, %v520
    %v536 = vpack.c.bf16 %v523, %v522
    %v537 = vpack.c.bf16 %v525, %v524
    %v538 = vpack.c.bf16 %v527, %v526
    %v539 = vpack.c.bf16 %v529, %v528
    %v540 = vpack.c.bf16 %v531, %v530
    %v541 = vpack.c.bf16 %v533, %v532
    %s542 = scalar_lea.vmem %s9, 1
    %v543 = vld [vmem:[%s542] sm:$0x1]
    %v545 = vperm.slane %v543, 0
    %547 = vmatpush.bf16.msra.mxu0 %v541
    %548 = vmatpush.bf16.msra.mxu0 %v540
    %549 = vmatpush.bf16.msra.mxu0 %v539
    %550 = vmatpush.bf16.msra.mxu0 %v538
    %551 = vmatpush.bf16.msra.mxu0 %v537
    %552 = vmatpush.bf16.msra.mxu0 %v536
    %553 = vmatpush.bf16.msra.mxu0 %v535
    %554 = vmatpush.bf16.msra.mxu0 %v534
    %555 = vmatmul.bf16.gmra.mxu0 %v291
    %v556 = vpop.f32.mrf.mxu0
    %v557 = vadd.f32 %v545, %v556
    %v558 = vpop.f32.mrf.mxu0
    %v559 = vadd.f32 %v545, %v558
    %560 = vdwg.mxu0
    %s561 = scalar_lea.vmem %s8, 640
    %v562 = vld [vmem:[%s561] sm:$0xff]
    %v563 = vld [vmem:[%s561 + $0x8] sm:$0xff]
    %v564 = vld [vmem:[%s561 + $0x10] sm:$0xff]
    %v565 = vld [vmem:[%s561 + $0x18] sm:$0xff]
    %v566 = vld [vmem:[%s561 + $0x20] sm:$0xff]
    %v567 = vld [vmem:[%s561 + $0x28] sm:$0xff]
    %v568 = vld [vmem:[%s561 + $0x30] sm:$0xff]
    %v569 = vld [vmem:[%s561 + $0x38] sm:$0xff]
    %v570 = vld [vmem:[%s561 + $0x40] sm:$0xff]
    %v571 = vld [vmem:[%s561 + $0x48] sm:$0xff]
    %v572 = vld [vmem:[%s561 + $0x50] sm:$0xff]
    %v573 = vld [vmem:[%s561 + $0x58] sm:$0xff]
    %v574 = vld [vmem:[%s561 + $0x60] sm:$0xff]
    %v575 = vld [vmem:[%s561 + $0x68] sm:$0xff]
    %v576 = vld [vmem:[%s561 + $0x70] sm:$0xff]
    %v577 = vld [vmem:[%s561 + $0x78] sm:$0xff]
    %v578 = vpack.c.bf16 %v563, %v562
    %v579 = vpack.c.bf16 %v565, %v564
    %v580 = vpack.c.bf16 %v567, %v566
    %v581 = vpack.c.bf16 %v569, %v568
    %v582 = vpack.c.bf16 %v571, %v570
    %v583 = vpack.c.bf16 %v573, %v572
    %v584 = vpack.c.bf16 %v575, %v574
    %v585 = vpack.c.bf16 %v577, %v576
    %s586 = scalar_lea.vmem %s9, 5
    %v587 = vld [vmem:[%s586] sm:$0x1]
    %v589 = vperm.slane %v587, 0
    %591 = vmatpush.bf16.msra.mxu0 %v585
    %592 = vmatpush.bf16.msra.mxu0 %v584
    %593 = vmatpush.bf16.msra.mxu0 %v583
    %594 = vmatpush.bf16.msra.mxu0 %v582
    %595 = vmatpush.bf16.msra.mxu0 %v581
    %596 = vmatpush.bf16.msra.mxu0 %v580
    %597 = vmatpush.bf16.msra.mxu0 %v579
    %598 = vmatpush.bf16.msra.mxu0 %v578
    %599 = vmatmul.bf16.gmra.mxu0 %v291
    %v600 = vpop.f32.mrf.mxu0
    %v601 = vadd.f32 %v589, %v600
    %v602 = vpop.f32.mrf.mxu0
    %v603 = vadd.f32 %v589, %v602
    %604 = vdwg.mxu0
    %s605 = scalar_lea.vmem %s8, 1152
    %v606 = vld [vmem:[%s605] sm:$0xff]
    %v607 = vld [vmem:[%s605 + $0x8] sm:$0xff]
    %v608 = vld [vmem:[%s605 + $0x10] sm:$0xff]
    %v609 = vld [vmem:[%s605 + $0x18] sm:$0xff]
    %v610 = vld [vmem:[%s605 + $0x20] sm:$0xff]
    %v611 = vld [vmem:[%s605 + $0x28] sm:$0xff]
    %v612 = vld [vmem:[%s605 + $0x30] sm:$0xff]
    %v613 = vld [vmem:[%s605 + $0x38] sm:$0xff]
    %v614 = vld [vmem:[%s605 + $0x40] sm:$0xff]
    %v615 = vld [vmem:[%s605 + $0x48] sm:$0xff]
    %v616 = vld [vmem:[%s605 + $0x50] sm:$0xff]
    %v617 = vld [vmem:[%s605 + $0x58] sm:$0xff]
    %v618 = vld [vmem:[%s605 + $0x60] sm:$0xff]
    %v619 = vld [vmem:[%s605 + $0x68] sm:$0xff]
    %v620 = vld [vmem:[%s605 + $0x70] sm:$0xff]
    %v621 = vld [vmem:[%s605 + $0x78] sm:$0xff]
    %v622 = vpack.c.bf16 %v607, %v606
    %v623 = vpack.c.bf16 %v609, %v608
    %v624 = vpack.c.bf16 %v611, %v610
    %v625 = vpack.c.bf16 %v613, %v612
    %v626 = vpack.c.bf16 %v615, %v614
    %v627 = vpack.c.bf16 %v617, %v616
    %v628 = vpack.c.bf16 %v619, %v618
    %v629 = vpack.c.bf16 %v621, %v620
    %s630 = scalar_lea.vmem %s9, 9
    %v631 = vld [vmem:[%s630] sm:$0x1]
    %v633 = vperm.slane %v631, 0
    %635 = vmatpush.bf16.msra.mxu0 %v629
    %636 = vmatpush.bf16.msra.mxu0 %v628
    %637 = vmatpush.bf16.msra.mxu0 %v627
    %638 = vmatpush.bf16.msra.mxu0 %v626
    %639 = vmatpush.bf16.msra.mxu0 %v625
    %640 = vmatpush.bf16.msra.mxu0 %v624
    %641 = vmatpush.bf16.msra.mxu0 %v623
    %642 = vmatpush.bf16.msra.mxu0 %v622
    %643 = vmatmul.bf16.gmra.mxu0 %v291
    %v644 = vpop.f32.mrf.mxu0
    %v645 = vadd.f32 %v633, %v644
    %v646 = vpop.f32.mrf.mxu0
    %v647 = vadd.f32 %v633, %v646
    %648 = vdwg.mxu0
    %649 = vxpose.xlu0.b32.start [1/16] %v601, 128
    %650 = vxpose.xlu0.b32.cont [2/16] %v603, 128
    %651 = vxpose.xlu0.b32.cont [3/16] 0.0, 128
    %652 = vxpose.xlu0.b32.cont [4/16] 0.0, 128
    %653 = vxpose.xlu0.b32.cont [5/16] 0.0, 128
    %654 = vxpose.xlu0.b32.cont [6/16] 0.0, 128
    %655 = vxpose.xlu0.b32.cont [7/16] 0.0, 128
    %656 = vxpose.xlu0.b32.cont [8/16] 0.0, 128
    %657 = vxpose.xlu0.b32.cont [9/16] 0.0, 128
    %658 = vxpose.xlu0.b32.cont [10/16] 0.0, 128
    %659 = vxpose.xlu0.b32.cont [11/16] 0.0, 128
    %660 = vxpose.xlu0.b32.cont [12/16] 0.0, 128
    %661 = vxpose.xlu0.b32.cont [13/16] 0.0, 128
    %662 = vxpose.xlu0.b32.cont [14/16] 0.0, 128
    %663 = vxpose.xlu0.b32.cont [15/16] 0.0, 128
    %664 = vxpose.xlu0.b32.end [16/16] 0.0, 128
    %v665 = vpop.trf.xlu0
    %v666 = vpop.trf.xlu0
    %v667 = vpop.trf.xlu0
    %v668 = vpop.trf.xlu0
    %v669 = vpop.trf.xlu0
    %v670 = vpop.trf.xlu0
    %v671 = vpop.trf.xlu0
    %v672 = vpop.trf.xlu0
    %v673 = vpop.trf.xlu0
    %v674 = vpop.trf.xlu0
    %v675 = vpop.trf.xlu0
    %v676 = vpop.trf.xlu0
    %v677 = vpop.trf.xlu0
    %v678 = vpop.trf.xlu0
    %v679 = vpop.trf.xlu0
    %v680 = vpop.trf.xlu0
    %v681 = vpack.c.bf16 %v559, %v557
    %v682 = vpack.c.bf16 %v666, %v665
    %v683 = vpack.c.bf16 %v668, %v667
    %v685 = vsel %vm441, %v681, 0
    %687 = vmatpush.bf16.msra.mxu0 0
    %688 = vmatpush.bf16.msra.mxu0 0
    %689 = vmatpush.bf16.msra.mxu0 0
    %690 = vmatpush.bf16.msra.mxu0 0
    %691 = vmatpush.bf16.msra.mxu0 0
    %692 = vmatpush.bf16.msra.mxu0 0
    %693 = vmatpush.bf16.msra.mxu0 %v683
    %694 = vmatpush.bf16.msra.mxu0 %v682
    %695 = vmatmul.bf16.gmra.mxu0 %v685
    %v696 = vpop.f32.mrf.mxu0
    %v697 = vadd.f32 0.0, %v696
    %v698 = vpop.f32.mrf.mxu0
    %v699 = vadd.f32 0.0, %v698
    %700 = vdwg.mxu0
    %v701 = vmul.f32 %v697, 0.17677669
    %v702 = vmul.f32 %v699, 0.17677669
    %v703 = vadd.f32 %v701, %v219
    %v704 = vadd.f32 %v702, %v220
    %v705 = vsel %vm463, %v703, -inf
    %706 = vmax.xlane.f32.xlu0 %v705
    %v707 = vpop.xlane.xlu0 %706
    %v708 = vsel %vm467, %v704, -inf
    %709 = vmax.xlane.f32.xlu0 %v708
    %v710 = vpop.xlane.xlu0 %709
    %v711 = vsub.f32 %v703, %v707
    %v712 = vsub.f32 %v704, %v710
    %v713 = vmul.f32 %v711, 1.442695
    %v714 = vpow.pop %v713
    %v715 = vmul.f32 %v712, 1.442695
    %v716 = vpow.pop %v715
    %v717 = vsel %vm463, %v714, 0.0
    %718 = vadd.xlane.f32.xlu0 %v717
    %v719 = vpop.xlane.xlu0 %718
    %v720 = vsel %vm467, %v716, 0.0
    %721 = vadd.xlane.f32.xlu0 %v720
    %v722 = vpop.xlane.xlu0 %721
    %v723 = vrcp.pop %v719
    %v724 = vrcp.pop %v722
    %v725 = vmul.f32 %v714, %v723
    %v726 = vmul.f32 %v716, %v724
    %v727 = vpack.c.bf16 %v726, %v725
    %v728 = vpack.c.bf16 %v647, %v645
    %v730 = vsel %vm463, %v727, 0
    %v733 = vsel %vm492, %v728, 0
    %735 = vmatpush.bf16.msra.mxu0 0
    %736 = vmatpush.bf16.msra.mxu0 0
    %737 = vmatpush.bf16.msra.mxu0 0
    %738 = vmatpush.bf16.msra.mxu0 0
    %739 = vmatpush.bf16.msra.mxu0 0
    %740 = vmatpush.bf16.msra.mxu0 0
    %741 = vmatpush.bf16.msra.mxu0 0
    %742 = vmatpush.bf16.msra.mxu0 %v733
    %743 = vmatmul.bf16.gmra.mxu0 %v730
    %v744 = vpop.f32.mrf.mxu0
    %v745 = vadd.f32 0.0, %v744
    %v746 = vpop.f32.mrf.mxu0
    %v747 = vadd.f32 0.0, %v746
    %748 = vdwg.mxu0
    %s749 = scalar_lea.vmem %s10, 32
    %v750 = vld [vmem:[%s749] sm:$0xff]
    %v751 = vld [vmem:[%s749 + $0x8] sm:$0xff]
    %v752 = vld [vmem:[%s749 + $0x10] sm:$0xff]
    %v753 = vld [vmem:[%s749 + $0x18] sm:$0xff]
    %v754 = vpack.c.bf16 %v747, %v745
    %v755 = vpack.c.bf16 %v751, %v750
    %v756 = vpack.c.bf16 %v753, %v752
    %v758 = vsel %vm441, %v754, 0
    %760 = vmatpush.bf16.msra.mxu0 0
    %761 = vmatpush.bf16.msra.mxu0 0
    %762 = vmatpush.bf16.msra.mxu0 0
    %763 = vmatpush.bf16.msra.mxu0 0
    %764 = vmatpush.bf16.msra.mxu0 0
    %765 = vmatpush.bf16.msra.mxu0 0
    %766 = vmatpush.bf16.msra.mxu0 %v756
    %767 = vmatpush.bf16.msra.mxu0 %v755
    %768 = vmatmul.bf16.gmra.mxu0 %v758
    %v769 = vpop.f32.mrf.mxu0
    %v770 = vadd.f32 0.0, %v769
    %v771 = vpop.f32.mrf.mxu0
    %v772 = vadd.f32 0.0, %v771
    %773 = vdwg.mxu0
    %v775 = vsel %vm441, %v514, 0
    %777 = vmatpush.bf16.msra.mxu0 0
    %778 = vmatpush.bf16.msra.mxu0 0
    %779 = vmatpush.bf16.msra.mxu0 0
    %780 = vmatpush.bf16.msra.mxu0 0
    %781 = vmatpush.bf16.msra.mxu0 0
    %782 = vmatpush.bf16.msra.mxu0 0
    %783 = vmatpush.bf16.msra.mxu0 %v516
    %784 = vmatpush.bf16.msra.mxu0 %v515
    %785 = vmatmul.bf16.gmra.mxu0 %v775
    %v786 = vpop.f32.mrf.mxu0
    %v787 = vadd.f32 %v770, %v786
    %v788 = vpop.f32.mrf.mxu0
    %v789 = vadd.f32 %v772, %v788
    %790 = vdwg.mxu0
    %s791 = scalar_lea.vmem %s8, 256
    %v792 = vld [vmem:[%s791] sm:$0xff]
    %v793 = vld [vmem:[%s791 + $0x8] sm:$0xff]
    %v794 = vld [vmem:[%s791 + $0x10] sm:$0xff]
    %v795 = vld [vmem:[%s791 + $0x18] sm:$0xff]
    %v796 = vld [vmem:[%s791 + $0x20] sm:$0xff]
    %v797 = vld [vmem:[%s791 + $0x28] sm:$0xff]
    %v798 = vld [vmem:[%s791 + $0x30] sm:$0xff]
    %v799 = vld [vmem:[%s791 + $0x38] sm:$0xff]
    %v800 = vld [vmem:[%s791 + $0x40] sm:$0xff]
    %v801 = vld [vmem:[%s791 + $0x48] sm:$0xff]
    %v802 = vld [vmem:[%s791 + $0x50] sm:$0xff]
    %v803 = vld [vmem:[%s791 + $0x58] sm:$0xff]
    %v804 = vld [vmem:[%s791 + $0x60] sm:$0xff]
    %v805 = vld [vmem:[%s791 + $0x68] sm:$0xff]
    %v806 = vld [vmem:[%s791 + $0x70] sm:$0xff]
    %v807 = vld [vmem:[%s791 + $0x78] sm:$0xff]
    %v808 = vpack.c.bf16 %v793, %v792
    %v809 = vpack.c.bf16 %v795, %v794
    %v810 = vpack.c.bf16 %v797, %v796
    %v811 = vpack.c.bf16 %v799, %v798
    %v812 = vpack.c.bf16 %v801, %v800
    %v813 = vpack.c.bf16 %v803, %v802
    %v814 = vpack.c.bf16 %v805, %v804
    %v815 = vpack.c.bf16 %v807, %v806
    %s816 = scalar_lea.vmem %s9, 2
    %v817 = vld [vmem:[%s816] sm:$0x1]
    %v819 = vperm.slane %v817, 0
    %821 = vmatpush.bf16.msra.mxu0 %v815
    %822 = vmatpush.bf16.msra.mxu0 %v814
    %823 = vmatpush.bf16.msra.mxu0 %v813
    %824 = vmatpush.bf16.msra.mxu0 %v812
    %825 = vmatpush.bf16.msra.mxu0 %v811
    %826 = vmatpush.bf16.msra.mxu0 %v810
    %827 = vmatpush.bf16.msra.mxu0 %v809
    %828 = vmatpush.bf16.msra.mxu0 %v808
    %829 = vmatmul.bf16.gmra.mxu0 %v291
    %v830 = vpop.f32.mrf.mxu0
    %v831 = vadd.f32 %v819, %v830
    %v832 = vpop.f32.mrf.mxu0
    %v833 = vadd.f32 %v819, %v832
    %834 = vdwg.mxu0
    %s835 = scalar_lea.vmem %s8, 768
    %v836 = vld [vmem:[%s835] sm:$0xff]
    %v837 = vld [vmem:[%s835 + $0x8] sm:$0xff]
    %v838 = vld [vmem:[%s835 + $0x10] sm:$0xff]
    %v839 = vld [vmem:[%s835 + $0x18] sm:$0xff]
    %v840 = vld [vmem:[%s835 + $0x20] sm:$0xff]
    %v841 = vld [vmem:[%s835 + $0x28] sm:$0xff]
    %v842 = vld [vmem:[%s835 + $0x30] sm:$0xff]
    %v843 = vld [vmem:[%s835 + $0x38] sm:$0xff]
    %v844 = vld [vmem:[%s835 + $0x40] sm:$0xff]
    %v845 = vld [vmem:[%s835 + $0x48] sm:$0xff]
    %v846 = vld [vmem:[%s835 + $0x50] sm:$0xff]
    %v847 = vld [vmem:[%s835 + $0x58] sm:$0xff]
    %v848 = vld [vmem:[%s835 + $0x60] sm:$0xff]
    %v849 = vld [vmem:[%s835 + $0x68] sm:$0xff]
    %v850 = vld [vmem:[%s835 + $0x70] sm:$0xff]
    %v851 = vld [vmem:[%s835 + $0x78] sm:$0xff]
    %v852 = vpack.c.bf16 %v837, %v836
    %v853 = vpack.c.bf16 %v839, %v838
    %v854 = vpack.c.bf16 %v841, %v840
    %v855 = vpack.c.bf16 %v843, %v842
    %v856 = vpack.c.bf16 %v845, %v844
    %v857 = vpack.c.bf16 %v847, %v846
    %v858 = vpack.c.bf16 %v849, %v848
    %v859 = vpack.c.bf16 %v851, %v850
    %s860 = scalar_lea.vmem %s9, 6
    %v861 = vld [vmem:[%s860] sm:$0x1]
    %v863 = vperm.slane %v861, 0
    %865 = vmatpush.bf16.msra.mxu0 %v859
    %866 = vmatpush.bf16.msra.mxu0 %v858
    %867 = vmatpush.bf16.msra.mxu0 %v857
    %868 = vmatpush.bf16.msra.mxu0 %v856
    %869 = vmatpush.bf16.msra.mxu0 %v855
    %870 = vmatpush.bf16.msra.mxu0 %v854
    %871 = vmatpush.bf16.msra.mxu0 %v853
    %872 = vmatpush.bf16.msra.mxu0 %v852
    %873 = vmatmul.bf16.gmra.mxu0 %v291
    %v874 = vpop.f32.mrf.mxu0
    %v875 = vadd.f32 %v863, %v874
    %v876 = vpop.f32.mrf.mxu0
    %v877 = vadd.f32 %v863, %v876
    %878 = vdwg.mxu0
    %s879 = scalar_lea.vmem %s8, 1280
    %v880 = vld [vmem:[%s879] sm:$0xff]
    %v881 = vld [vmem:[%s879 + $0x8] sm:$0xff]
    %v882 = vld [vmem:[%s879 + $0x10] sm:$0xff]
    %v883 = vld [vmem:[%s879 + $0x18] sm:$0xff]
    %v884 = vld [vmem:[%s879 + $0x20] sm:$0xff]
    %v885 = vld [vmem:[%s879 + $0x28] sm:$0xff]
    %v886 = vld [vmem:[%s879 + $0x30] sm:$0xff]
    %v887 = vld [vmem:[%s879 + $0x38] sm:$0xff]
    %v888 = vld [vmem:[%s879 + $0x40] sm:$0xff]
    %v889 = vld [vmem:[%s879 + $0x48] sm:$0xff]
    %v890 = vld [vmem:[%s879 + $0x50] sm:$0xff]
    %v891 = vld [vmem:[%s879 + $0x58] sm:$0xff]
    %v892 = vld [vmem:[%s879 + $0x60] sm:$0xff]
    %v893 = vld [vmem:[%s879 + $0x68] sm:$0xff]
    %v894 = vld [vmem:[%s879 + $0x70] sm:$0xff]
    %v895 = vld [vmem:[%s879 + $0x78] sm:$0xff]
    %v896 = vpack.c.bf16 %v881, %v880
    %v897 = vpack.c.bf16 %v883, %v882
    %v898 = vpack.c.bf16 %v885, %v884
    %v899 = vpack.c.bf16 %v887, %v886
    %v900 = vpack.c.bf16 %v889, %v888
    %v901 = vpack.c.bf16 %v891, %v890
    %v902 = vpack.c.bf16 %v893, %v892
    %v903 = vpack.c.bf16 %v895, %v894
    %s904 = scalar_lea.vmem %s9, 10
    %v905 = vld [vmem:[%s904] sm:$0x1]
    %v907 = vperm.slane %v905, 0
    %909 = vmatpush.bf16.msra.mxu0 %v903
    %910 = vmatpush.bf16.msra.mxu0 %v902
    %911 = vmatpush.bf16.msra.mxu0 %v901
    %912 = vmatpush.bf16.msra.mxu0 %v900
    %913 = vmatpush.bf16.msra.mxu0 %v899
    %914 = vmatpush.bf16.msra.mxu0 %v898
    %915 = vmatpush.bf16.msra.mxu0 %v897
    %916 = vmatpush.bf16.msra.mxu0 %v896
    %917 = vmatmul.bf16.gmra.mxu0 %v291
    %v918 = vpop.f32.mrf.mxu0
    %v919 = vadd.f32 %v907, %v918
    %v920 = vpop.f32.mrf.mxu0
    %v921 = vadd.f32 %v907, %v920
    %922 = vdwg.mxu0
    %923 = vxpose.xlu0.b32.start [1/16] %v875, 128
    %924 = vxpose.xlu0.b32.cont [2/16] %v877, 128
    %925 = vxpose.xlu0.b32.cont [3/16] 0.0, 128
    %926 = vxpose.xlu0.b32.cont [4/16] 0.0, 128
    %927 = vxpose.xlu0.b32.cont [5/16] 0.0, 128
    %928 = vxpose.xlu0.b32.cont [6/16] 0.0, 128
    %929 = vxpose.xlu0.b32.cont [7/16] 0.0, 128
    %930 = vxpose.xlu0.b32.cont [8/16] 0.0, 128
    %931 = vxpose.xlu0.b32.cont [9/16] 0.0, 128
    %932 = vxpose.xlu0.b32.cont [10/16] 0.0, 128
    %933 = vxpose.xlu0.b32.cont [11/16] 0.0, 128
    %934 = vxpose.xlu0.b32.cont [12/16] 0.0, 128
    %935 = vxpose.xlu0.b32.cont [13/16] 0.0, 128
    %936 = vxpose.xlu0.b32.cont [14/16] 0.0, 128
    %937 = vxpose.xlu0.b32.cont [15/16] 0.0, 128
    %938 = vxpose.xlu0.b32.end [16/16] 0.0, 128
    %v939 = vpop.trf.xlu0
    %v940 = vpop.trf.xlu0
    %v941 = vpop.trf.xlu0
    %v942 = vpop.trf.xlu0
    %v943 = vpop.trf.xlu0
    %v944 = vpop.trf.xlu0
    %v945 = vpop.trf.xlu0
    %v946 = vpop.trf.xlu0
    %v947 = vpop.trf.xlu0
    %v948 = vpop.trf.xlu0
    %v949 = vpop.trf.xlu0
    %v950 = vpop.trf.xlu0
    %v951 = vpop.trf.xlu0
    %v952 = vpop.trf.xlu0
    %v953 = vpop.trf.xlu0
    %v954 = vpop.trf.xlu0
    %v955 = vpack.c.bf16 %v833, %v831
    %v956 = vpack.c.bf16 %v940, %v939
    %v957 = vpack.c.bf16 %v942, %v941
    %v959 = vsel %vm441, %v955, 0
    %961 = vmatpush.bf16.msra.mxu0 0
    %962 = vmatpush.bf16.msra.mxu0 0
    %963 = vmatpush.bf16.msra.mxu0 0
    %964 = vmatpush.bf16.msra.mxu0 0
    %965 = vmatpush.bf16.msra.mxu0 0
    %966 = vmatpush.bf16.msra.mxu0 0
    %967 = vmatpush.bf16.msra.mxu0 %v957
    %968 = vmatpush.bf16.msra.mxu0 %v956
    %969 = vmatmul.bf16.gmra.mxu0 %v959
    %v970 = vpop.f32.mrf.mxu0
    %v971 = vadd.f32 0.0, %v970
    %v972 = vpop.f32.mrf.mxu0
    %v973 = vadd.f32 0.0, %v972
    %974 = vdwg.mxu0
    %v975 = vmul.f32 %v971, 0.17677669
    %v976 = vmul.f32 %v973, 0.17677669
    %v977 = vadd.f32 %v975, %v219
    %v978 = vadd.f32 %v976, %v220
    %v979 = vsel %vm463, %v977, -inf
    %980 = vmax.xlane.f32.xlu0 %v979
    %v981 = vpop.xlane.xlu0 %980
    %v982 = vsel %vm467, %v978, -inf
    %983 = vmax.xlane.f32.xlu0 %v982
    %v984 = vpop.xlane.xlu0 %983
    %v985 = vsub.f32 %v977, %v981
    %v986 = vsub.f32 %v978, %v984
    %v987 = vmul.f32 %v985, 1.442695
    %v988 = vpow.pop %v987
    %v989 = vmul.f32 %v986, 1.442695
    %v990 = vpow.pop %v989
    %v991 = vsel %vm463, %v988, 0.0
    %992 = vadd.xlane.f32.xlu0 %v991
    %v993 = vpop.xlane.xlu0 %992
    %v994 = vsel %vm467, %v990, 0.0
    %995 = vadd.xlane.f32.xlu0 %v994
    %v996 = vpop.xlane.xlu0 %995
    %v997 = vrcp.pop %v993
    %v998 = vrcp.pop %v996
    %v999 = vmul.f32 %v988, %v997
    %v1000 = vmul.f32 %v990, %v998
    %v1001 = vpack.c.bf16 %v1000, %v999
    %v1002 = vpack.c.bf16 %v921, %v919
    %v1004 = vsel %vm463, %v1001, 0
    %v1007 = vsel %vm492, %v1002, 0
    %1009 = vmatpush.bf16.msra.mxu0 0
    %1010 = vmatpush.bf16.msra.mxu0 0
    %1011 = vmatpush.bf16.msra.mxu0 0
    %1012 = vmatpush.bf16.msra.mxu0 0
    %1013 = vmatpush.bf16.msra.mxu0 0
    %1014 = vmatpush.bf16.msra.mxu0 0
    %1015 = vmatpush.bf16.msra.mxu0 0
    %1016 = vmatpush.bf16.msra.mxu0 %v1007
    %1017 = vmatmul.bf16.gmra.mxu0 %v1004
    %v1018 = vpop.f32.mrf.mxu0
    %v1019 = vadd.f32 0.0, %v1018
    %v1020 = vpop.f32.mrf.mxu0
    %v1021 = vadd.f32 0.0, %v1020
    %1022 = vdwg.mxu0
    %s1023 = scalar_lea.vmem %s10, 64
    %v1024 = vld [vmem:[%s1023] sm:$0xff]
    %v1025 = vld [vmem:[%s1023 + $0x8] sm:$0xff]
    %v1026 = vld [vmem:[%s1023 + $0x10] sm:$0xff]
    %v1027 = vld [vmem:[%s1023 + $0x18] sm:$0xff]
    %v1028 = vpack.c.bf16 %v1021, %v1019
    %v1029 = vpack.c.bf16 %v1025, %v1024
    %v1030 = vpack.c.bf16 %v1027, %v1026
    %v1032 = vsel %vm441, %v1028, 0
    %1034 = vmatpush.bf16.msra.mxu0 0
    %1035 = vmatpush.bf16.msra.mxu0 0
    %1036 = vmatpush.bf16.msra.mxu0 0
    %1037 = vmatpush.bf16.msra.mxu0 0
    %1038 = vmatpush.bf16.msra.mxu0 0
    %1039 = vmatpush.bf16.msra.mxu0 0
    %1040 = vmatpush.bf16.msra.mxu0 %v1030
    %1041 = vmatpush.bf16.msra.mxu0 %v1029
    %1042 = vmatmul.bf16.gmra.mxu0 %v1032
    %v1043 = vpop.f32.mrf.mxu0
    %v1044 = vadd.f32 0.0, %v1043
    %v1045 = vpop.f32.mrf.mxu0
    %v1046 = vadd.f32 0.0, %v1045
    %1047 = vdwg.mxu0
    %v1048 = vadd.f32 %v787, %v1044
    %v1049 = vadd.f32 %v789, %v1046
    %s1050 = scalar_lea.vmem %s8, 384
    %v1051 = vld [vmem:[%s1050] sm:$0xff]
    %v1052 = vld [vmem:[%s1050 + $0x8] sm:$0xff]
    %v1053 = vld [vmem:[%s1050 + $0x10] sm:$0xff]
    %v1054 = vld [vmem:[%s1050 + $0x18] sm:$0xff]
    %v1055 = vld [vmem:[%s1050 + $0x20] sm:$0xff]
    %v1056 = vld [vmem:[%s1050 + $0x28] sm:$0xff]
    %v1057 = vld [vmem:[%s1050 + $0x30] sm:$0xff]
    %v1058 = vld [vmem:[%s1050 + $0x38] sm:$0xff]
    %v1059 = vld [vmem:[%s1050 + $0x40] sm:$0xff]
    %v1060 = vld [vmem:[%s1050 + $0x48] sm:$0xff]
    %v1061 = vld [vmem:[%s1050 + $0x50] sm:$0xff]
    %v1062 = vld [vmem:[%s1050 + $0x58] sm:$0xff]
    %v1063 = vld [vmem:[%s1050 + $0x60] sm:$0xff]
    %v1064 = vld [vmem:[%s1050 + $0x68] sm:$0xff]
    %v1065 = vld [vmem:[%s1050 + $0x70] sm:$0xff]
    %v1066 = vld [vmem:[%s1050 + $0x78] sm:$0xff]
    %v1067 = vpack.c.bf16 %v1052, %v1051
    %v1068 = vpack.c.bf16 %v1054, %v1053
    %v1069 = vpack.c.bf16 %v1056, %v1055
    %v1070 = vpack.c.bf16 %v1058, %v1057
    %v1071 = vpack.c.bf16 %v1060, %v1059
    %v1072 = vpack.c.bf16 %v1062, %v1061
    %v1073 = vpack.c.bf16 %v1064, %v1063
    %v1074 = vpack.c.bf16 %v1066, %v1065
    %s1075 = scalar_lea.vmem %s9, 3
    %v1076 = vld [vmem:[%s1075] sm:$0x1]
    %v1078 = vperm.slane %v1076, 0
    %1080 = vmatpush.bf16.msra.mxu0 %v1074
    %1081 = vmatpush.bf16.msra.mxu0 %v1073
    %1082 = vmatpush.bf16.msra.mxu0 %v1072
    %1083 = vmatpush.bf16.msra.mxu0 %v1071
    %1084 = vmatpush.bf16.msra.mxu0 %v1070
    %1085 = vmatpush.bf16.msra.mxu0 %v1069
    %1086 = vmatpush.bf16.msra.mxu0 %v1068
    %1087 = vmatpush.bf16.msra.mxu0 %v1067
    %1088 = vmatmul.bf16.gmra.mxu0 %v291
    %v1089 = vpop.f32.mrf.mxu0
    %v1090 = vadd.f32 %v1078, %v1089
    %v1091 = vpop.f32.mrf.mxu0
    %v1092 = vadd.f32 %v1078, %v1091
    %1093 = vdwg.mxu0
    %s1094 = scalar_lea.vmem %s8, 896
    %v1095 = vld [vmem:[%s1094] sm:$0xff]
    %v1096 = vld [vmem:[%s1094 + $0x8] sm:$0xff]
    %v1097 = vld [vmem:[%s1094 + $0x10] sm:$0xff]
    %v1098 = vld [vmem:[%s1094 + $0x18] sm:$0xff]
    %v1099 = vld [vmem:[%s1094 + $0x20] sm:$0xff]
    %v1100 = vld [vmem:[%s1094 + $0x28] sm:$0xff]
    %v1101 = vld [vmem:[%s1094 + $0x30] sm:$0xff]
    %v1102 = vld [vmem:[%s1094 + $0x38] sm:$0xff]
    %v1103 = vld [vmem:[%s1094 + $0x40] sm:$0xff]
    %v1104 = vld [vmem:[%s1094 + $0x48] sm:$0xff]
    %v1105 = vld [vmem:[%s1094 + $0x50] sm:$0xff]
    %v1106 = vld [vmem:[%s1094 + $0x58] sm:$0xff]
    %v1107 = vld [vmem:[%s1094 + $0x60] sm:$0xff]
    %v1108 = vld [vmem:[%s1094 + $0x68] sm:$0xff]
    %v1109 = vld [vmem:[%s1094 + $0x70] sm:$0xff]
    %v1110 = vld [vmem:[%s1094 + $0x78] sm:$0xff]
    %v1111 = vpack.c.bf16 %v1096, %v1095
    %v1112 = vpack.c.bf16 %v1098, %v1097
    %v1113 = vpack.c.bf16 %v1100, %v1099
    %v1114 = vpack.c.bf16 %v1102, %v1101
    %v1115 = vpack.c.bf16 %v1104, %v1103
    %v1116 = vpack.c.bf16 %v1106, %v1105
    %v1117 = vpack.c.bf16 %v1108, %v1107
    %v1118 = vpack.c.bf16 %v1110, %v1109
    %s1119 = scalar_lea.vmem %s9, 7
    %v1120 = vld [vmem:[%s1119] sm:$0x1]
    %v1122 = vperm.slane %v1120, 0
    %1124 = vmatpush.bf16.msra.mxu0 %v1118
    %1125 = vmatpush.bf16.msra.mxu0 %v1117
    %1126 = vmatpush.bf16.msra.mxu0 %v1116
    %1127 = vmatpush.bf16.msra.mxu0 %v1115
    %1128 = vmatpush.bf16.msra.mxu0 %v1114
    %1129 = vmatpush.bf16.msra.mxu0 %v1113
    %1130 = vmatpush.bf16.msra.mxu0 %v1112
    %1131 = vmatpush.bf16.msra.mxu0 %v1111
    %1132 = vmatmul.bf16.gmra.mxu0 %v291
    %v1133 = vpop.f32.mrf.mxu0
    %v1134 = vadd.f32 %v1122, %v1133
    %v1135 = vpop.f32.mrf.mxu0
    %v1136 = vadd.f32 %v1122, %v1135
    %1137 = vdwg.mxu0
    %s1138 = scalar_lea.vmem %s8, 1408
    %v1139 = vld [vmem:[%s1138] sm:$0xff]
    %v1140 = vld [vmem:[%s1138 + $0x8] sm:$0xff]
    %v1141 = vld [vmem:[%s1138 + $0x10] sm:$0xff]
    %v1142 = vld [vmem:[%s1138 + $0x18] sm:$0xff]
    %v1143 = vld [vmem:[%s1138 + $0x20] sm:$0xff]
    %v1144 = vld [vmem:[%s1138 + $0x28] sm:$0xff]
    %v1145 = vld [vmem:[%s1138 + $0x30] sm:$0xff]
    %v1146 = vld [vmem:[%s1138 + $0x38] sm:$0xff]
    %v1147 = vld [vmem:[%s1138 + $0x40] sm:$0xff]
    %v1148 = vld [vmem:[%s1138 + $0x48] sm:$0xff]
    %v1149 = vld [vmem:[%s1138 + $0x50] sm:$0xff]
    %v1150 = vld [vmem:[%s1138 + $0x58] sm:$0xff]
    %v1151 = vld [vmem:[%s1138 + $0x60] sm:$0xff]
    %v1152 = vld [vmem:[%s1138 + $0x68] sm:$0xff]
    %v1153 = vld [vmem:[%s1138 + $0x70] sm:$0xff]
    %v1154 = vld [vmem:[%s1138 + $0x78] sm:$0xff]
    %v1155 = vpack.c.bf16 %v1140, %v1139
    %v1156 = vpack.c.bf16 %v1142, %v1141
    %v1157 = vpack.c.bf16 %v1144, %v1143
    %v1158 = vpack.c.bf16 %v1146, %v1145
    %v1159 = vpack.c.bf16 %v1148, %v1147
    %v1160 = vpack.c.bf16 %v1150, %v1149
    %v1161 = vpack.c.bf16 %v1152, %v1151
    %v1162 = vpack.c.bf16 %v1154, %v1153
    %s1163 = scalar_lea.vmem %s9, 11
    %v1164 = vld [vmem:[%s1163] sm:$0x1]
    %v1166 = vperm.slane %v1164, 0
    %1168 = vmatpush.bf16.msra.mxu0 %v1162
    %1169 = vmatpush.bf16.msra.mxu0 %v1161
    %1170 = vmatpush.bf16.msra.mxu0 %v1160
    %1171 = vmatpush.bf16.msra.mxu0 %v1159
    %1172 = vmatpush.bf16.msra.mxu0 %v1158
    %1173 = vmatpush.bf16.msra.mxu0 %v1157
    %1174 = vmatpush.bf16.msra.mxu0 %v1156
    %1175 = vmatpush.bf16.msra.mxu0 %v1155
    %1176 = vmatmul.bf16.gmra.mxu0 %v291
    %v1177 = vpop.f32.mrf.mxu0
    %v1178 = vadd.f32 %v1166, %v1177
    %v1179 = vpop.f32.mrf.mxu0
    %v1180 = vadd.f32 %v1166, %v1179
    %1181 = vdwg.mxu0
    %1182 = vxpose.xlu0.b32.start [1/16] %v1134, 128
    %1183 = vxpose.xlu0.b32.cont [2/16] %v1136, 128
    %1184 = vxpose.xlu0.b32.cont [3/16] 0.0, 128
    %1185 = vxpose.xlu0.b32.cont [4/16] 0.0, 128
    %1186 = vxpose.xlu0.b32.cont [5/16] 0.0, 128
    %1187 = vxpose.xlu0.b32.cont [6/16] 0.0, 128
    %1188 = vxpose.xlu0.b32.cont [7/16] 0.0, 128
    %1189 = vxpose.xlu0.b32.cont [8/16] 0.0, 128
    %1190 = vxpose.xlu0.b32.cont [9/16] 0.0, 128
    %1191 = vxpose.xlu0.b32.cont [10/16] 0.0, 128
    %1192 = vxpose.xlu0.b32.cont [11/16] 0.0, 128
    %1193 = vxpose.xlu0.b32.cont [12/16] 0.0, 128
    %1194 = vxpose.xlu0.b32.cont [13/16] 0.0, 128
    %1195 = vxpose.xlu0.b32.cont [14/16] 0.0, 128
    %1196 = vxpose.xlu0.b32.cont [15/16] 0.0, 128
    %1197 = vxpose.xlu0.b32.end [16/16] 0.0, 128
    %v1198 = vpop.trf.xlu0
    %v1199 = vpop.trf.xlu0
    %v1200 = vpop.trf.xlu0
    %v1201 = vpop.trf.xlu0
    %v1202 = vpop.trf.xlu0
    %v1203 = vpop.trf.xlu0
    %v1204 = vpop.trf.xlu0
    %v1205 = vpop.trf.xlu0
    %v1206 = vpop.trf.xlu0
    %v1207 = vpop.trf.xlu0
    %v1208 = vpop.trf.xlu0
    %v1209 = vpop.trf.xlu0
    %v1210 = vpop.trf.xlu0
    %v1211 = vpop.trf.xlu0
    %v1212 = vpop.trf.xlu0
    %v1213 = vpop.trf.xlu0
    %v1214 = vpack.c.bf16 %v1092, %v1090
    %v1215 = vpack.c.bf16 %v1199, %v1198
    %v1216 = vpack.c.bf16 %v1201, %v1200
    %v1218 = vsel %vm441, %v1214, 0
    %1220 = vmatpush.bf16.msra.mxu0 0
    %1221 = vmatpush.bf16.msra.mxu0 0
    %1222 = vmatpush.bf16.msra.mxu0 0
    %1223 = vmatpush.bf16.msra.mxu0 0
    %1224 = vmatpush.bf16.msra.mxu0 0
    %1225 = vmatpush.bf16.msra.mxu0 0
    %1226 = vmatpush.bf16.msra.mxu0 %v1216
    %1227 = vmatpush.bf16.msra.mxu0 %v1215
    %1228 = vmatmul.bf16.gmra.mxu0 %v1218
    %v1229 = vpop.f32.mrf.mxu0
    %v1230 = vadd.f32 0.0, %v1229
    %v1231 = vpop.f32.mrf.mxu0
    %v1232 = vadd.f32 0.0, %v1231
    %1233 = vdwg.mxu0
    %v1234 = vmul.f32 %v1230, 0.17677669
    %v1235 = vmul.f32 %v1232, 0.17677669
    %v1236 = vadd.f32 %v1234, %v219
    %v1237 = vadd.f32 %v1235, %v220
    %v1238 = vsel %vm463, %v1236, -inf
    %1239 = vmax.xlane.f32.xlu0 %v1238
    %v1240 = vpop.xlane.xlu0 %1239
    %v1241 = vsel %vm467, %v1237, -inf
    %1242 = vmax.xlane.f32.xlu0 %v1241
    %v1243 = vpop.xlane.xlu0 %1242
    %v1244 = vsub.f32 %v1236, %v1240
    %v1245 = vsub.f32 %v1237, %v1243
    %v1246 = vmul.f32 %v1244, 1.442695
    %v1247 = vpow.pop %v1246
    %v1248 = vmul.f32 %v1245, 1.442695
    %v1249 = vpow.pop %v1248
    %v1250 = vsel %vm463, %v1247, 0.0
    %1251 = vadd.xlane.f32.xlu0 %v1250
    %v1252 = vpop.xlane.xlu0 %1251
    %v1253 = vsel %vm467, %v1249, 0.0
    %1254 = vadd.xlane.f32.xlu0 %v1253
    %v1255 = vpop.xlane.xlu0 %1254
    %v1256 = vrcp.pop %v1252
    %v1257 = vrcp.pop %v1255
    %v1258 = vmul.f32 %v1247, %v1256
    %v1259 = vmul.f32 %v1249, %v1257
    %v1260 = vpack.c.bf16 %v1259, %v1258
    %v1261 = vpack.c.bf16 %v1180, %v1178
    %v1263 = vsel %vm463, %v1260, 0
    %v1266 = vsel %vm492, %v1261, 0
    %1268 = vmatpush.bf16.msra.mxu0 0
    %1269 = vmatpush.bf16.msra.mxu0 0
    %1270 = vmatpush.bf16.msra.mxu0 0
    %1271 = vmatpush.bf16.msra.mxu0 0
    %1272 = vmatpush.bf16.msra.mxu0 0
    %1273 = vmatpush.bf16.msra.mxu0 0
    %1274 = vmatpush.bf16.msra.mxu0 0
    %1275 = vmatpush.bf16.msra.mxu0 %v1266
    %1276 = vmatmul.bf16.gmra.mxu0 %v1263
    %v1277 = vpop.f32.mrf.mxu0
    %v1278 = vadd.f32 0.0, %v1277
    %v1279 = vpop.f32.mrf.mxu0
    %v1280 = vadd.f32 0.0, %v1279
    %1281 = vdwg.mxu0
    %s1282 = scalar_lea.vmem %s10, 96
    %v1283 = vld [vmem:[%s1282] sm:$0xff]
    %v1284 = vld [vmem:[%s1282 + $0x8] sm:$0xff]
    %v1285 = vld [vmem:[%s1282 + $0x10] sm:$0xff]
    %v1286 = vld [vmem:[%s1282 + $0x18] sm:$0xff]
    %v1287 = vpack.c.bf16 %v1280, %v1278
    %v1288 = vpack.c.bf16 %v1284, %v1283
    %v1289 = vpack.c.bf16 %v1286, %v1285
    %v1291 = vsel %vm441, %v1287, 0
    %1293 = vmatpush.bf16.msra.mxu0 0
    %1294 = vmatpush.bf16.msra.mxu0 0
    %1295 = vmatpush.bf16.msra.mxu0 0
    %1296 = vmatpush.bf16.msra.mxu0 0
    %1297 = vmatpush.bf16.msra.mxu0 0
    %1298 = vmatpush.bf16.msra.mxu0 0
    %1299 = vmatpush.bf16.msra.mxu0 %v1289
    %1300 = vmatpush.bf16.msra.mxu0 %v1288
    %1301 = vmatmul.bf16.gmra.mxu0 %v1291
    %v1302 = vpop.f32.mrf.mxu0
    %v1303 = vadd.f32 0.0, %v1302
    %v1304 = vpop.f32.mrf.mxu0
    %v1305 = vadd.f32 0.0, %v1304
    %1306 = vdwg.mxu0
    %v1307 = vadd.f32 %v1048, %v1303
    %v1308 = vadd.f32 %v1049, %v1305
    %v1309 = vadd.f32 %v217, %v1307
    %v1310 = vadd.f32 %v218, %v1308
    %v1311 = vld [vmem:[%s11] sm:$0x1]
    %v1313 = vperm.slane %v1311, 0
    %v1315 = vadd.f32 %v1309, %v1313
    %v1316 = vadd.f32 %v1310, %v1313
    %v1317 = vld [vmem:[%s12] sm:$0x1]
    %v1318 = vld [vmem:[%s13] sm:$0x1]
    %1319 = vadd.xlane.f32.xlu0 %v1315
    %v1320 = vpop.xlane.xlu0 %1319
    %v1321 = vsel %vm161, %v1316, 0.0
    %1322 = vadd.xlane.f32.xlu0 %v1321
    %v1323 = vpop.xlane.xlu0 %1322
    %v1324 = vmul.f32 %v1320, %v171
    %v1325 = vmul.f32 %v1323, %v171
    %v1326 = vsub.f32 %v1315, %v1324
    %v1327 = vsub.f32 %v1316, %v1325
    %v1328 = vmul.f32 %v1326, %v1326
    %v1329 = vmul.f32 %v1327, %v1327
    %1330 = vadd.xlane.f32.xlu0 %v1328
    %v1331 = vpop.xlane.xlu0 %1330
    %v1332 = vsel %vm161, %v1329, 0.0
    %1333 = vadd.xlane.f32.xlu0 %v1332
    %v1334 = vpop.xlane.xlu0 %1333
    %v1335 = vmul.f32 %v1331, %v171
    %v1336 = vmul.f32 %v1334, %v171
    %v1337 = vadd.f32 %v1335, 1e-05
    %v1338 = vadd.f32 %v1336, 1e-05
    %v1339 = vrsqrt.pop %v1337
    %v1340 = vmul.f32 %v1339, %v1337
    %v1341 = vmul.f32 %v1340, %v1339
    %v1342 = vmul.f32 0.5, %v1341
    %v1343 = vsub.f32 1.5, %v1342
    %v1344 = vmul.f32 %v1339, %v1343
    %vm1345 = vweird.f32 %v1337
    %vm1346 = vweird.f32 %v1339
    %vm1347 = vmor %vm1345, %vm1346
    %v1348 = vsel %vm1347, %v1339, %v1344
    %v1349 = vrsqrt.pop %v1338
    %v1350 = vmul.f32 %v1349, %v1338
    %v1351 = vmul.f32 %v1350, %v1349
    %v1352 = vmul.f32 0.5, %v1351
    %v1353 = vsub.f32 1.5, %v1352
    %v1354 = vmul.f32 %v1349, %v1353
    %vm1355 = vweird.f32 %v1338
    %vm1356 = vweird.f32 %v1349
    %vm1357 = vmor %vm1355, %vm1356
    %v1358 = vsel %vm1357, %v1349, %v1354
    %v1359 = vmul.f32 %v1326, %v1348
    %v1360 = vmul.f32 %v1327, %v1358
    %v1362 = vperm.slane %v1317, 0
    %v1364 = vmul.f32 %v1359, %v1362
    %v1365 = vmul.f32 %v1360, %v1362
    %v1367 = vperm.slane %v1318, 0
    %v1369 = vadd.f32 %v1364, %v1367
    %v1370 = vadd.f32 %v1365, %v1367
    %v1371 = vld [vmem:[%s14] sm:$0xff]
    %v1372 = vld [vmem:[%s14 + $0x8] sm:$0xff]
    %v1373 = vld [vmem:[%s14 + $0x10] sm:$0xff]
    %v1374 = vld [vmem:[%s14 + $0x18] sm:$0xff]
    %v1375 = vld [vmem:[%s14 + $0x20] sm:$0xff]
    %v1376 = vld [vmem:[%s14 + $0x28] sm:$0xff]
    %v1377 = vld [vmem:[%s14 + $0x30] sm:$0xff]
    %v1378 = vld [vmem:[%s14 + $0x38] sm:$0xff]
    %v1379 = vld [vmem:[%s14 + $0x40] sm:$0xff]
    %v1380 = vld [vmem:[%s14 + $0x48] sm:$0xff]
    %v1381 = vld [vmem:[%s14 + $0x50] sm:$0xff]
    %v1382 = vld [vmem:[%s14 + $0x58] sm:$0xff]
    %v1383 = vld [vmem:[%s14 + $0x60] sm:$0xff]
    %v1384 = vld [vmem:[%s14 + $0x68] sm:$0xff]
    %v1385 = vld [vmem:[%s14 + $0x70] sm:$0xff]
    %v1386 = vld [vmem:[%s14 + $0x78] sm:$0xff]
    %v1387 = vld [vmem:[%s14 + $0x80] sm:$0xff]
    %v1388 = vld [vmem:[%s14 + $0x88] sm:$0xff]
    %v1389 = vld [vmem:[%s14 + $0x90] sm:$0xff]
    %v1390 = vld [vmem:[%s14 + $0x98] sm:$0xff]
    %v1391 = vld [vmem:[%s14 + $0xa0] sm:$0xff]
    %v1392 = vld [vmem:[%s14 + $0xa8] sm:$0xff]
    %v1393 = vld [vmem:[%s14 + $0xb0] sm:$0xff]
    %v1394 = vld [vmem:[%s14 + $0xb8] sm:$0xff]
    %v1395 = vld [vmem:[%s14 + $0xc0] sm:$0xff]
    %v1396 = vld [vmem:[%s14 + $0xc8] sm:$0xff]
    %v1397 = vld [vmem:[%s14 + $0xd0] sm:$0xff]
    %v1398 = vld [vmem:[%s14 + $0xd8] sm:$0xff]
    %v1399 = vld [vmem:[%s14 + $0xe0] sm:$0xff]
    %v1400 = vld [vmem:[%s14 + $0xe8] sm:$0xff]
    %v1401 = vld [vmem:[%s14 + $0xf0] sm:$0xff]
    %v1402 = vld [vmem:[%s14 + $0xf8] sm:$0xff]
    %v1403 = vld [vmem:[%s14 + $0x100] sm:$0xff]
    %v1404 = vld [vmem:[%s14 + $0x108] sm:$0xff]
    %v1405 = vld [vmem:[%s14 + $0x110] sm:$0xff]
    %v1406 = vld [vmem:[%s14 + $0x118] sm:$0xff]
    %v1407 = vld [vmem:[%s14 + $0x120] sm:$0xff]
    %v1408 = vld [vmem:[%s14 + $0x128] sm:$0xff]
    %v1409 = vld [vmem:[%s14 + $0x130] sm:$0xff]
    %v1410 = vld [vmem:[%s14 + $0x138] sm:$0xff]
    %v1411 = vld [vmem:[%s14 + $0x140] sm:$0xff]
    %v1412 = vld [vmem:[%s14 + $0x148] sm:$0xff]
    %v1413 = vld [vmem:[%s14 + $0x150] sm:$0xff]
    %v1414 = vld [vmem:[%s14 + $0x158] sm:$0xff]
    %v1415 = vld [vmem:[%s14 + $0x160] sm:$0xff]
    %v1416 = vld [vmem:[%s14 + $0x168] sm:$0xff]
    %v1417 = vld [vmem:[%s14 + $0x170] sm:$0xff]
    %v1418 = vld [vmem:[%s14 + $0x178] sm:$0xff]
    %v1419 = vld [vmem:[%s14 + $0x180] sm:$0xff]
    %v1420 = vld [vmem:[%s14 + $0x188] sm:$0xff]
    %v1421 = vld [vmem:[%s14 + $0x190] sm:$0xff]
    %v1422 = vld [vmem:[%s14 + $0x198] sm:$0xff]
    %v1423 = vld [vmem:[%s14 + $0x1a0] sm:$0xff]
    %v1424 = vld [vmem:[%s14 + $0x1a8] sm:$0xff]
    %v1425 = vld [vmem:[%s14 + $0x1b0] sm:$0xff]
    %v1426 = vld [vmem:[%s14 + $0x1b8] sm:$0xff]
    %v1427 = vld [vmem:[%s14 + $0x1c0] sm:$0xff]
    %v1428 = vld [vmem:[%s14 + $0x1c8] sm:$0xff]
    %v1429 = vld [vmem:[%s14 + $0x1d0] sm:$0xff]
    %v1430 = vld [vmem:[%s14 + $0x1d8] sm:$0xff]
    %v1431 = vld [vmem:[%s14 + $0x1e0] sm:$0xff]
    %v1432 = vld [vmem:[%s14 + $0x1e8] sm:$0xff]
    %v1433 = vld [vmem:[%s14 + $0x1f0] sm:$0xff]
    %v1434 = vld [vmem:[%s14 + $0x1f8] sm:$0xff]
    %v1435 = vpack.c.bf16 %v1370, %v1369
    %v1436 = vpack.c.bf16 %v1375, %v1371
    %v1437 = vpack.c.bf16 %v1376, %v1372
    %v1438 = vpack.c.bf16 %v1377, %v1373
    %v1439 = vpack.c.bf16 %v1378, %v1374
    %v1440 = vpack.c.bf16 %v1383, %v1379
    %v1441 = vpack.c.bf16 %v1384, %v1380
    %v1442 = vpack.c.bf16 %v1385, %v1381
    %v1443 = vpack.c.bf16 %v1386, %v1382
    %v1444 = vpack.c.bf16 %v1391, %v1387
    %v1445 = vpack.c.bf16 %v1392, %v1388
    %v1446 = vpack.c.bf16 %v1393, %v1389
    %v1447 = vpack.c.bf16 %v1394, %v1390
    %v1448 = vpack.c.bf16 %v1399, %v1395
    %v1449 = vpack.c.bf16 %v1400, %v1396
    %v1450 = vpack.c.bf16 %v1401, %v1397
    %v1451 = vpack.c.bf16 %v1402, %v1398
    %v1452 = vpack.c.bf16 %v1407, %v1403
    %v1453 = vpack.c.bf16 %v1408, %v1404
    %v1454 = vpack.c.bf16 %v1409, %v1405
    %v1455 = vpack.c.bf16 %v1410, %v1406
    %v1456 = vpack.c.bf16 %v1415, %v1411
    %v1457 = vpack.c.bf16 %v1416, %v1412
    %v1458 = vpack.c.bf16 %v1417, %v1413
    %v1459 = vpack.c.bf16 %v1418, %v1414
    %v1460 = vpack.c.bf16 %v1423, %v1419
    %v1461 = vpack.c.bf16 %v1424, %v1420
    %v1462 = vpack.c.bf16 %v1425, %v1421
    %v1463 = vpack.c.bf16 %v1426, %v1422
    %v1464 = vpack.c.bf16 %v1431, %v1427
    %v1465 = vpack.c.bf16 %v1432, %v1428
    %v1466 = vpack.c.bf16 %v1433, %v1429
    %v1467 = vpack.c.bf16 %v1434, %v1430
    %v1468 = vld [vmem:[%s15] sm:$0xf]
    %v1470 = vperm.slane %v1468, 0
    %v1471 = vperm.slane %v1468, 1
    %v1472 = vperm.slane %v1468, 2
    %v1473 = vperm.slane %v1468, 3
    %1478 = vmatpush.bf16.msra.mxu0 %v1464
    %1479 = vmatpush.bf16.msra.mxu0 %v1460
    %1480 = vmatpush.bf16.msra.mxu0 %v1456
    %1481 = vmatpush.bf16.msra.mxu0 %v1452
    %1482 = vmatpush.bf16.msra.mxu0 %v1448
    %1483 = vmatpush.bf16.msra.mxu0 %v1444
    %1484 = vmatpush.bf16.msra.mxu0 %v1440
    %1485 = vmatpush.bf16.msra.mxu0 %v1436
    %1486 = vmatmul.bf16.gmra.mxu0 %v1435
    %v1487 = vpop.f32.mrf.mxu0
    %v1488 = vadd.f32 %v1470, %v1487
    %v1489 = vpop.f32.mrf.mxu0
    %v1490 = vadd.f32 %v1470, %v1489
    %1491 = vdwg.mxu0
    %1492 = vmatpush.bf16.msra.mxu0 %v1465
    %1493 = vmatpush.bf16.msra.mxu0 %v1461
    %1494 = vmatpush.bf16.msra.mxu0 %v1457
    %1495 = vmatpush.bf16.msra.mxu0 %v1453
    %1496 = vmatpush.bf16.msra.mxu0 %v1449
    %1497 = vmatpush.bf16.msra.mxu0 %v1445
    %1498 = vmatpush.bf16.msra.mxu0 %v1441
    %1499 = vmatpush.bf16.msra.mxu0 %v1437
    %1500 = vmatmul.bf16.gmra.mxu0 %v1435
    %v1501 = vpop.f32.mrf.mxu0
    %v1502 = vadd.f32 %v1471, %v1501
    %v1503 = vpop.f32.mrf.mxu0
    %v1504 = vadd.f32 %v1471, %v1503
    %1505 = vdwg.mxu0
    %1506 = vmatpush.bf16.msra.mxu0 %v1466
    %1507 = vmatpush.bf16.msra.mxu0 %v1462
    %1508 = vmatpush.bf16.msra.mxu0 %v1458
    %1509 = vmatpush.bf16.msra.mxu0 %v1454
    %1510 = vmatpush.bf16.msra.mxu0 %v1450
    %1511 = vmatpush.bf16.msra.mxu0 %v1446
    %1512 = vmatpush.bf16.msra.mxu0 %v1442
    %1513 = vmatpush.bf16.msra.mxu0 %v1438
    %1514 = vmatmul.bf16.gmra.mxu0 %v1435
    %v1515 = vpop.f32.mrf.mxu0
    %v1516 = vadd.f32 %v1472, %v1515
    %v1517 = vpop.f32.mrf.mxu0
    %v1518 = vadd.f32 %v1472, %v1517
    %1519 = vdwg.mxu0
    %1520 = vmatpush.bf16.msra.mxu0 %v1467
    %1521 = vmatpush.bf16.msra.mxu0 %v1463
    %1522 = vmatpush.bf16.msra.mxu0 %v1459
    %1523 = vmatpush.bf16.msra.mxu0 %v1455
    %1524 = vmatpush.bf16.msra.mxu0 %v1451
    %1525 = vmatpush.bf16.msra.mxu0 %v1447
    %1526 = vmatpush.bf16.msra.mxu0 %v1443
    %1527 = vmatpush.bf16.msra.mxu0 %v1439
    %1528 = vmatmul.bf16.gmra.mxu0 %v1435
    %v1529 = vpop.f32.mrf.mxu0
    %v1530 = vadd.f32 %v1473, %v1529
    %v1531 = vpop.f32.mrf.mxu0
    %v1532 = vadd.f32 %v1473, %v1531
    %1533 = vdwg.mxu0
    %v1534 = vmul.f32 %v1488, 1.702
    %v1535 = vmul.f32 %v1502, 1.702
    %v1536 = vmul.f32 %v1516, 1.702
    %v1537 = vmul.f32 %v1530, 1.702
    %v1538 = vmul.f32 %v1490, 1.702
    %v1539 = vmul.f32 %v1504, 1.702
    %v1540 = vmul.f32 %v1518, 1.702
    %v1541 = vmul.f32 %v1532, 1.702
    %v1542 = vxor.u32 %v1534, 2147483648
    %v1543 = vxor.u32 %v1535, 2147483648
    %v1544 = vxor.u32 %v1536, 2147483648
    %v1545 = vxor.u32 %v1537, 2147483648
    %v1546 = vxor.u32 %v1538, 2147483648
    %v1547 = vxor.u32 %v1539, 2147483648
    %v1548 = vxor.u32 %v1540, 2147483648
    %v1549 = vxor.u32 %v1541, 2147483648
    %v1550 = vmul.f32 %v1542, 1.442695
    %v1551 = vpow.pop %v1550
    %v1552 = vmul.f32 %v1543, 1.442695
    %v1553 = vpow.pop %v1552
    %v1554 = vmul.f32 %v1544, 1.442695
    %v1555 = vpow.pop %v1554
    %v1556 = vmul.f32 %v1545, 1.442695
    %v1557 = vpow.pop %v1556
    %v1558 = vmul.f32 %v1546, 1.442695
    %v1559 = vpow.pop %v1558
    %v1560 = vmul.f32 %v1547, 1.442695
    %v1561 = vpow.pop %v1560
    %v1562 = vmul.f32 %v1548, 1.442695
    %v1563 = vpow.pop %v1562
    %v1564 = vmul.f32 %v1549, 1.442695
    %v1565 = vpow.pop %v1564
    %v1566 = vadd.f32 %v1551, 1.0
    %v1567 = vadd.f32 %v1553, 1.0
    %v1568 = vadd.f32 %v1555, 1.0
    %v1569 = vadd.f32 %v1557, 1.0
    %v1570 = vadd.f32 %v1559, 1.0
    %v1571 = vadd.f32 %v1561, 1.0
    %v1572 = vadd.f32 %v1563, 1.0
    %v1573 = vadd.f32 %v1565, 1.0
    %v1574 = vrcp.pop %v1566
    %v1575 = vmul.f32 %v1566, %v1574
    %v1576 = vsub.f32 1.0, %v1575
    %v1577 = vmul.f32 %v1574, %v1576
    %v1578 = vadd.f32 %v1574, %v1577
    %vm1579 = vweird.f32 %v1566
    %vm1580 = vweird.f32 %v1574
    %vm1581 = vmor %vm1579, %vm1580
    %v1582 = vsel %vm1581, %v1574, %v1578
    %v1583 = vand.u32 2147483647, %v1566
    %vm1584 = vcmp.eq.f32.partialorder %v1583, 8.507059e+37
    %v1585 = vand.u32 %v1566, 2147483648
    %v1586 = vor.u32 1.1754944e-38, %v1585
    %v1587 = vsel %vm1584, %v1586, %v1582
    %v1588 = vmul.f32 1.0, %v1587
    %v1589 = vrcp.pop %v1567
    %v1590 = vmul.f32 %v1567, %v1589
    %v1591 = vsub.f32 1.0, %v1590
    %v1592 = vmul.f32 %v1589, %v1591
    %v1593 = vadd.f32 %v1589, %v1592
    %vm1594 = vweird.f32 %v1567
    %vm1595 = vweird.f32 %v1589
    %vm1596 = vmor %vm1594, %vm1595
    %v1597 = vsel %vm1596, %v1589, %v1593
    %v1598 = vand.u32 2147483647, %v1567
    %vm1599 = vcmp.eq.f32.partialorder %v1598, 8.507059e+37
    %v1600 = vand.u32 %v1567, 2147483648
    %v1601 = vor.u32 1.1754944e-38, %v1600
    %v1602 = vsel %vm1599, %v1601, %v1597
    %v1603 = vmul.f32 1.0, %v1602
    %v1604 = vrcp.pop %v1568
    %v1605 = vmul.f32 %v1568, %v1604
    %v1606 = vsub.f32 1.0, %v1605
    %v1607 = vmul.f32 %v1604, %v1606
    %v1608 = vadd.f32 %v1604, %v1607
    %vm1609 = vweird.f32 %v1568
    %vm1610 = vweird.f32 %v1604
    %vm1611 = vmor %vm1609, %vm1610
    %v1612 = vsel %vm1611, %v1604, %v1608
    %v1613 = vand.u32 2147483647, %v1568
    %vm1614 = vcmp.eq.f32.partialorder %v1613, 8.507059e+37
    %v1615 = vand.u32 %v1568, 2147483648
    %v1616 = vor.u32 1.1754944e-38, %v1615
    %v1617 = vsel %vm1614, %v1616, %v1612
    %v1618 = vmul.f32 1.0, %v1617
    %v1619 = vrcp.pop %v1569
    %v1620 = vmul.f32 %v1569, %v1619
    %v1621 = vsub.f32 1.0, %v1620
    %v1622 = vmul.f32 %v1619, %v1621
    %v1623 = vadd.f32 %v1619, %v1622
    %vm1624 = vweird.f32 %v1569
    %vm1625 = vweird.f32 %v1619
    %vm1626 = vmor %vm1624, %vm1625
    %v1627 = vsel %vm1626, %v1619, %v1623
    %v1628 = vand.u32 2147483647, %v1569
    %vm1629 = vcmp.eq.f32.partialorder %v1628, 8.507059e+37
    %v1630 = vand.u32 %v1569, 2147483648
    %v1631 = vor.u32 1.1754944e-38, %v1630
    %v1632 = vsel %vm1629, %v1631, %v1627
    %v1633 = vmul.f32 1.0, %v1632
    %v1634 = vrcp.pop %v1570
    %v1635 = vmul.f32 %v1570, %v1634
    %v1636 = vsub.f32 1.0, %v1635
    %v1637 = vmul.f32 %v1634, %v1636
    %v1638 = vadd.f32 %v1634, %v1637
    %vm1639 = vweird.f32 %v1570
    %vm1640 = vweird.f32 %v1634
    %vm1641 = vmor %vm1639, %vm1640
    %v1642 = vsel %vm1641, %v1634, %v1638
    %v1643 = vand.u32 2147483647, %v1570
    %vm1644 = vcmp.eq.f32.partialorder %v1643, 8.507059e+37
    %v1645 = vand.u32 %v1570, 2147483648
    %v1646 = vor.u32 1.1754944e-38, %v1645
    %v1647 = vsel %vm1644, %v1646, %v1642
    %v1648 = vmul.f32 1.0, %v1647
    %v1649 = vrcp.pop %v1571
    %v1650 = vmul.f32 %v1571, %v1649
    %v1651 = vsub.f32 1.0, %v1650
    %v1652 = vmul.f32 %v1649, %v1651
    %v1653 = vadd.f32 %v1649, %v1652
    %vm1654 = vweird.f32 %v1571
    %vm1655 = vweird.f32 %v1649
    %vm1656 = vmor %vm1654, %vm1655
    %v1657 = vsel %vm1656, %v1649, %v1653
    %v1658 = vand.u32 2147483647, %v1571
    %vm1659 = vcmp.eq.f32.partialorder %v1658, 8.507059e+37
    %v1660 = vand.u32 %v1571, 2147483648
    %v1661 = vor.u32 1.1754944e-38, %v1660
    %v1662 = vsel %vm1659, %v1661, %v1657
    %v1663 = vmul.f32 1.0, %v1662
    %v1664 = vrcp.pop %v1572
    %v1665 = vmul.f32 %v1572, %v1664
    %v1666 = vsub.f32 1.0, %v1665
    %v1667 = vmul.f32 %v1664, %v1666
    %v1668 = vadd.f32 %v1664, %v1667
    %vm1669 = vweird.f32 %v1572
    %vm1670 = vweird.f32 %v1664
    %vm1671 = vmor %vm1669, %vm1670
    %v1672 = vsel %vm1671, %v1664, %v1668
    %v1673 = vand.u32 2147483647, %v1572
    %vm1674 = vcmp.eq.f32.partialorder %v1673, 8.507059e+37
    %v1675 = vand.u32 %v1572, 2147483648
    %v1676 = vor.u32 1.1754944e-38, %v1675
    %v1677 = vsel %vm1674, %v1676, %v1672
    %v1678 = vmul.f32 1.0, %v1677
    %v1679 = vrcp.pop %v1573
    %v1680 = vmul.f32 %v1573, %v1679
    %v1681 = vsub.f32 1.0, %v1680
    %v1682 = vmul.f32 %v1679, %v1681
    %v1683 = vadd.f32 %v1679, %v1682
    %vm1684 = vweird.f32 %v1573
    %vm1685 = vweird.f32 %v1679
    %vm1686 = vmor %vm1684, %vm1685
    %v1687 = vsel %vm1686, %v1679, %v1683
    %v1688 = vand.u32 2147483647, %v1573
    %vm1689 = vcmp.eq.f32.partialorder %v1688, 8.507059e+37
    %v1690 = vand.u32 %v1573, 2147483648
    %v1691 = vor.u32 1.1754944e-38, %v1690
    %v1692 = vsel %vm1689, %v1691, %v1687
    %v1693 = vmul.f32 1.0, %v1692
    %v1694 = vmul.f32 %v1488, %v1588
    %v1695 = vmul.f32 %v1502, %v1603
    %v1696 = vmul.f32 %v1516, %v1618
    %v1697 = vmul.f32 %v1530, %v1633
    %v1698 = vmul.f32 %v1490, %v1648
    %v1699 = vmul.f32 %v1504, %v1663
    %v1700 = vmul.f32 %v1518, %v1678
    %v1701 = vmul.f32 %v1532, %v1693
    %v1702 = vld [vmem:[%s16] sm:$0xff]
    %v1703 = vld [vmem:[%s16 + $0x8] sm:$0xff]
    %v1704 = vld [vmem:[%s16 + $0x10] sm:$0xff]
    %v1705 = vld [vmem:[%s16 + $0x18] sm:$0xff]
    %v1706 = vld [vmem:[%s16 + $0x20] sm:$0xff]
    %v1707 = vld [vmem:[%s16 + $0x28] sm:$0xff]
    %v1708 = vld [vmem:[%s16 + $0x30] sm:$0xff]
    %v1709 = vld [vmem:[%s16 + $0x38] sm:$0xff]
    %v1710 = vld [vmem:[%s16 + $0x40] sm:$0xff]
    %v1711 = vld [vmem:[%s16 + $0x48] sm:$0xff]
    %v1712 = vld [vmem:[%s16 + $0x50] sm:$0xff]
    %v1713 = vld [vmem:[%s16 + $0x58] sm:$0xff]
    %v1714 = vld [vmem:[%s16 + $0x60] sm:$0xff]
    %v1715 = vld [vmem:[%s16 + $0x68] sm:$0xff]
    %v1716 = vld [vmem:[%s16 + $0x70] sm:$0xff]
    %v1717 = vld [vmem:[%s16 + $0x78] sm:$0xff]
    %v1718 = vld [vmem:[%s16 + $0x80] sm:$0xff]
    %v1719 = vld [vmem:[%s16 + $0x88] sm:$0xff]
    %v1720 = vld [vmem:[%s16 + $0x90] sm:$0xff]
    %v1721 = vld [vmem:[%s16 + $0x98] sm:$0xff]
    %v1722 = vld [vmem:[%s16 + $0xa0] sm:$0xff]
    %v1723 = vld [vmem:[%s16 + $0xa8] sm:$0xff]
    %v1724 = vld [vmem:[%s16 + $0xb0] sm:$0xff]
    %v1725 = vld [vmem:[%s16 + $0xb8] sm:$0xff]
    %v1726 = vld [vmem:[%s16 + $0xc0] sm:$0xff]
    %v1727 = vld [vmem:[%s16 + $0xc8] sm:$0xff]
    %v1728 = vld [vmem:[%s16 + $0xd0] sm:$0xff]
    %v1729 = vld [vmem:[%s16 + $0xd8] sm:$0xff]
    %v1730 = vld [vmem:[%s16 + $0xe0] sm:$0xff]
    %v1731 = vld [vmem:[%s16 + $0xe8] sm:$0xff]
    %v1732 = vld [vmem:[%s16 + $0xf0] sm:$0xff]
    %v1733 = vld [vmem:[%s16 + $0xf8] sm:$0xff]
    %v1734 = vld [vmem:[%s16 + $0x100] sm:$0xff]
    %v1735 = vld [vmem:[%s16 + $0x108] sm:$0xff]
    %v1736 = vld [vmem:[%s16 + $0x110] sm:$0xff]
    %v1737 = vld [vmem:[%s16 + $0x118] sm:$0xff]
    %v1738 = vld [vmem:[%s16 + $0x120] sm:$0xff]
    %v1739 = vld [vmem:[%s16 + $0x128] sm:$0xff]
    %v1740 = vld [vmem:[%s16 + $0x130] sm:$0xff]
    %v1741 = vld [vmem:[%s16 + $0x138] sm:$0xff]
    %v1742 = vld [vmem:[%s16 + $0x140] sm:$0xff]
    %v1743 = vld [vmem:[%s16 + $0x148] sm:$0xff]
    %v1744 = vld [vmem:[%s16 + $0x150] sm:$0xff]
    %v1745 = vld [vmem:[%s16 + $0x158] sm:$0xff]
    %v1746 = vld [vmem:[%s16 + $0x160] sm:$0xff]
    %v1747 = vld [vmem:[%s16 + $0x168] sm:$0xff]
    %v1748 = vld [vmem:[%s16 + $0x170] sm:$0xff]
    %v1749 = vld [vmem:[%s16 + $0x178] sm:$0xff]
    %v1750 = vld [vmem:[%s16 + $0x180] sm:$0xff]
    %v1751 = vld [vmem:[%s16 + $0x188] sm:$0xff]
    %v1752 = vld [vmem:[%s16 + $0x190] sm:$0xff]
    %v1753 = vld [vmem:[%s16 + $0x198] sm:$0xff]
    %v1754 = vld [vmem:[%s16 + $0x1a0] sm:$0xff]
    %v1755 = vld [vmem:[%s16 + $0x1a8] sm:$0xff]
    %v1756 = vld [vmem:[%s16 + $0x1b0] sm:$0xff]
    %v1757 = vld [vmem:[%s16 + $0x1b8] sm:$0xff]
    %v1758 = vld [vmem:[%s16 + $0x1c0] sm:$0xff]
    %v1759 = vld [vmem:[%s16 + $0x1c8] sm:$0xff]
    %v1760 = vld [vmem:[%s16 + $0x1d0] sm:$0xff]
    %v1761 = vld [vmem:[%s16 + $0x1d8] sm:$0xff]
    %v1762 = vld [vmem:[%s16 + $0x1e0] sm:$0xff]
    %v1763 = vld [vmem:[%s16 + $0x1e8] sm:$0xff]
    %v1764 = vld [vmem:[%s16 + $0x1f0] sm:$0xff]
    %v1765 = vld [vmem:[%s16 + $0x1f8] sm:$0xff]
    %v1766 = vpack.c.bf16 %v1698, %v1694
    %v1767 = vpack.c.bf16 %v1699, %v1695
    %v1768 = vpack.c.bf16 %v1700, %v1696
    %v1769 = vpack.c.bf16 %v1701, %v1697
    %v1770 = vpack.c.bf16 %v1703, %v1702
    %v1771 = vpack.c.bf16 %v1705, %v1704
    %v1772 = vpack.c.bf16 %v1707, %v1706
    %v1773 = vpack.c.bf16 %v1709, %v1708
    %v1774 = vpack.c.bf16 %v1711, %v1710
    %v1775 = vpack.c.bf16 %v1713, %v1712
    %v1776 = vpack.c.bf16 %v1715, %v1714
    %v1777 = vpack.c.bf16 %v1717, %v1716
    %v1778 = vpack.c.bf16 %v1719, %v1718
    %v1779 = vpack.c.bf16 %v1721, %v1720
    %v1780 = vpack.c.bf16 %v1723, %v1722
    %v1781 = vpack.c.bf16 %v1725, %v1724
    %v1782 = vpack.c.bf16 %v1727, %v1726
    %v1783 = vpack.c.bf16 %v1729, %v1728
    %v1784 = vpack.c.bf16 %v1731, %v1730
    %v1785 = vpack.c.bf16 %v1733, %v1732
    %v1786 = vpack.c.bf16 %v1735, %v1734
    %v1787 = vpack.c.bf16 %v1737, %v1736
    %v1788 = vpack.c.bf16 %v1739, %v1738
    %v1789 = vpack.c.bf16 %v1741, %v1740
    %v1790 = vpack.c.bf16 %v1743, %v1742
    %v1791 = vpack.c.bf16 %v1745, %v1744
    %v1792 = vpack.c.bf16 %v1747, %v1746
    %v1793 = vpack.c.bf16 %v1749, %v1748
    %v1794 = vpack.c.bf16 %v1751, %v1750
    %v1795 = vpack.c.bf16 %v1753, %v1752
    %v1796 = vpack.c.bf16 %v1755, %v1754
    %v1797 = vpack.c.bf16 %v1757, %v1756
    %v1798 = vpack.c.bf16 %v1759, %v1758
    %v1799 = vpack.c.bf16 %v1761, %v1760
    %v1800 = vpack.c.bf16 %v1763, %v1762
    %v1801 = vpack.c.bf16 %v1765, %v1764
    %1802 = vmatpush.bf16.msra.mxu0 %v1777
    %1803 = vmatpush.bf16.msra.mxu0 %v1776
    %1804 = vmatpush.bf16.msra.mxu0 %v1775
    %1805 = vmatpush.bf16.msra.mxu0 %v1774
    %1806 = vmatpush.bf16.msra.mxu0 %v1773
    %1807 = vmatpush.bf16.msra.mxu0 %v1772
    %1808 = vmatpush.bf16.msra.mxu0 %v1771
    %1809 = vmatpush.bf16.msra.mxu0 %v1770
    %1810 = vmatmul.bf16.gmra.mxu0 %v1766
    %v1811 = vpop.f32.mrf.mxu0
    %v1812 = vadd.f32 0.0, %v1811
    %v1813 = vpop.f32.mrf.mxu0
    %v1814 = vadd.f32 0.0, %v1813
    %1815 = vdwg.mxu0
    %1816 = vmatpush.bf16.msra.mxu0 %v1785
    %1817 = vmatpush.bf16.msra.mxu0 %v1784
    %1818 = vmatpush.bf16.msra.mxu0 %v1783
    %1819 = vmatpush.bf16.msra.mxu0 %v1782
    %1820 = vmatpush.bf16.msra.mxu0 %v1781
    %1821 = vmatpush.bf16.msra.mxu0 %v1780
    %1822 = vmatpush.bf16.msra.mxu0 %v1779
    %1823 = vmatpush.bf16.msra.mxu0 %v1778
    %1824 = vmatmul.bf16.gmra.mxu0 %v1767
    %v1825 = vpop.f32.mrf.mxu0
    %v1826 = vadd.f32 %v1812, %v1825
    %v1827 = vpop.f32.mrf.mxu0
    %v1828 = vadd.f32 %v1814, %v1827
    %1829 = vdwg.mxu0
    %1830 = vmatpush.bf16.msra.mxu0 %v1793
    %1831 = vmatpush.bf16.msra.mxu0 %v1792
    %1832 = vmatpush.bf16.msra.mxu0 %v1791
    %1833 = vmatpush.bf16.msra.mxu0 %v1790
    %1834 = vmatpush.bf16.msra.mxu0 %v1789
    %1835 = vmatpush.bf16.msra.mxu0 %v1788
    %1836 = vmatpush.bf16.msra.mxu0 %v1787
    %1837 = vmatpush.bf16.msra.mxu0 %v1786
    %1838 = vmatmul.bf16.gmra.mxu0 %v1768
    %v1839 = vpop.f32.mrf.mxu0
    %v1840 = vadd.f32 %v1826, %v1839
    %v1841 = vpop.f32.mrf.mxu0
    %v1842 = vadd.f32 %v1828, %v1841
    %1843 = vdwg.mxu0
    %1844 = vmatpush.bf16.msra.mxu0 %v1801
    %1845 = vmatpush.bf16.msra.mxu0 %v1800
    %1846 = vmatpush.bf16.msra.mxu0 %v1799
    %1847 = vmatpush.bf16.msra.mxu0 %v1798
    %1848 = vmatpush.bf16.msra.mxu0 %v1797
    %1849 = vmatpush.bf16.msra.mxu0 %v1796
    %1850 = vmatpush.bf16.msra.mxu0 %v1795
    %1851 = vmatpush.bf16.msra.mxu0 %v1794
    %1852 = vmatmul.bf16.gmra.mxu0 %v1769
    %v1853 = vpop.f32.mrf.mxu0
    %v1854 = vadd.f32 %v1840, %v1853
    %v1855 = vpop.f32.mrf.mxu0
    %v1856 = vadd.f32 %v1842, %v1855
    %1857 = vdwg.mxu0
    %v1858 = vadd.f32 %v1315, %v1854
    %v1859 = vadd.f32 %v1316, %v1856
    %v1860 = vld [vmem:[%s17] sm:$0x1]
    %v1862 = vperm.slane %v1860, 0
    %v1864 = vadd.f32 %v1858, %v1862
    %v1865 = vadd.f32 %v1859, %v1862
    %v1866 = vlaneseq
    %v1867 = vshrl.u32 %v1866, 7
    %v1868 = vlaneseq
    %v1869 = vand.u32 %v1868, 127
    %v1870 = vmul.u32 %v1867, 5
    %vm1871 = vcmp.eq.s32.totalorder %v1869, %v1870
    %v1872 = vsel %vm1871, 1, 0
    %v1873 = vcvt.s32.f32 %v1872
    %v1875 = vsel %vm463, %v1873, 0
    %v1878 = vsel %vm161, %v1865, 0
    %1880 = vmatpush.msra.mxu0 0.0
    %1881 = vmatpush.msra.mxu0 0.0
    %1882 = vmatpush.msra.mxu0 0.0
    %1883 = vmatpush.msra.mxu0 0.0
    %1884 = vmatpush.msra.mxu0 0.0
    %1885 = vmatpush.msra.mxu0 0.0
    %1886 = vmatpush.msra.mxu0 0.0
    %1887 = vmatpush.msra.mxu0 0.0
    %1888 = vmatpush.msra.mxu0 0.0
    %1889 = vmatpush.msra.mxu0 0.0
    %1890 = vmatpush.msra.mxu0 0.0
    %1891 = vmatpush.msra.mxu0 0.0
    %1892 = vmatpush.msra.mxu0 0.0
    %1893 = vmatpush.msra.mxu0 0.0
    %1894 = vmatpush.msra.mxu0 %v1878
    %1895 = vmatpush.msra.mxu0 %v1864
    %1896 = vmatmul.f32.gmra.mxu0 %v1875
    %v1897 = vpop.f32.mrf.mxu0
    %v1898 = vadd.f32 0.0, %v1897
    %1899 = vdwg.mxu0
    %v1900 = vld [vmem:[%s18] sm:$0x1]
    %v1901 = vld [vmem:[%s19] sm:$0x1]
    %v1902 = vsel %vm161, %v1898, 0.0
    %1903 = vadd.xlane.f32.xlu0 %v1902
    %v1904 = vpop.xlane.xlu0 %1903
    %v1905 = vmul.f32 %v1904, %v171
    %v1906 = vsub.f32 %v1898, %v1905
    %v1907 = vmul.f32 %v1906, %v1906
    %v1908 = vsel %vm161, %v1907, 0.0
    %1909 = vadd.xlane.f32.xlu0 %v1908
    %v1910 = vpop.xlane.xlu0 %1909
    %v1911 = vmul.f32 %v1910, %v171
    %v1912 = vadd.f32 %v1911, 1e-05
    %v1913 = vrsqrt.pop %v1912
    %v1914 = vmul.f32 %v1913, %v1912
    %v1915 = vmul.f32 %v1914, %v1913
    %v1916 = vmul.f32 0.5, %v1915
    %v1917 = vsub.f32 1.5, %v1916
    %v1918 = vmul.f32 %v1913, %v1917
    %vm1919 = vweird.f32 %v1912
    %vm1920 = vweird.f32 %v1913
    %vm1921 = vmor %vm1919, %vm1920
    %v1922 = vsel %vm1921, %v1913, %v1918
    %v1923 = vmul.f32 %v1906, %v1922
    %v1925 = vperm.slane %v1900, 0
    %v1927 = vmul.f32 %v1923, %v1925
    %v1929 = vperm.slane %v1901, 0
    %v1931 = vadd.f32 %v1927, %v1929
    %v1932 = vld [vmem:[%s20] sm:$0xff]
    %v1933 = vld [vmem:[%s20 + $0x8] sm:$0xff]
    %v1934 = vld [vmem:[%s20 + $0x10] sm:$0xff]
    %v1935 = vld [vmem:[%s20 + $0x18] sm:$0xff]
    %v1936 = vld [vmem:[%s20 + $0x20] sm:$0xff]
    %v1937 = vld [vmem:[%s20 + $0x28] sm:$0xff]
    %v1938 = vld [vmem:[%s20 + $0x30] sm:$0xff]
    %v1939 = vld [vmem:[%s20 + $0x38] sm:$0xff]
    %v1940 = vld [vmem:[%s20 + $0x40] sm:$0xff]
    %v1941 = vld [vmem:[%s20 + $0x48] sm:$0xff]
    %v1942 = vld [vmem:[%s20 + $0x50] sm:$0xff]
    %v1943 = vld [vmem:[%s20 + $0x58] sm:$0xff]
    %v1944 = vld [vmem:[%s20 + $0x60] sm:$0xff]
    %v1945 = vld [vmem:[%s20 + $0x68] sm:$0xff]
    %v1946 = vld [vmem:[%s20 + $0x70] sm:$0xff]
    %v1947 = vld [vmem:[%s20 + $0x78] sm:$0xff]
    %v1948 = vpack.c.bf16 %v1931, %v1931
    %v1949 = vpack.c.bf16 %v1933, %v1932
    %v1950 = vpack.c.bf16 %v1935, %v1934
    %v1951 = vpack.c.bf16 %v1937, %v1936
    %v1952 = vpack.c.bf16 %v1939, %v1938
    %v1953 = vpack.c.bf16 %v1941, %v1940
    %v1954 = vpack.c.bf16 %v1943, %v1942
    %v1955 = vpack.c.bf16 %v1945, %v1944
    %v1956 = vpack.c.bf16 %v1947, %v1946
    %1957 = vmatpush.bf16.msra.mxu0 %v1956
    %1958 = vmatpush.bf16.msra.mxu0 %v1955
    %1959 = vmatpush.bf16.msra.mxu0 %v1954
    %1960 = vmatpush.bf16.msra.mxu0 %v1953
    %1961 = vmatpush.bf16.msra.mxu0 %v1952
    %1962 = vmatpush.bf16.msra.mxu0 %v1951
    %1963 = vmatpush.bf16.msra.mxu0 %v1950
    %1964 = vmatpush.bf16.msra.mxu0 %v1949
    %1965 = vmatmul.bf16.gmra.mxu0 %v1948
    %v1966 = vpop.f32.mrf.mxu0
    %v1967 = vadd.f32 0.0, %v1966
    %v1968 = vpop.f32.mrf.mxu0
    %1969 = vdwg.mxu0
    %v1970 = vmul.f32 %v1967, %v1967
    %v1971 = vsel %vm161, %v1970, 0.0
    %1972 = vadd.xlane.f32.xlu0 %v1971
    %v1973 = vpop.xlane.xlu0 %1972
    %v1974 = vadd.f32 %v1973, 1e-12
    %v1975 = vrsqrt.pop %v1974
    %v1976 = vmul.f32 %v1975, %v1974
    %v1977 = vmul.f32 %v1976, %v1975
    %v1978 = vmul.f32 0.5, %v1977
    %v1979 = vsub.f32 1.5, %v1978
    %v1980 = vmul.f32 %v1975, %v1979
    %vm1981 = vweird.f32 %v1974
    %vm1982 = vweird.f32 %v1975
    %vm1983 = vmor %vm1981, %vm1982
    %v1984 = vsel %vm1983, %v1975, %v1980
    %v1985 = vmul.f32 %v1967, %v1984
    %v1986 = vld [vmem:[%s21] sm:$0x1f]
    %v1987 = vld [vmem:[#allocation2] sm:$0x1]
    %s1988 = vtos %v1987
    %v1989 = vstv %s1988
    %v1990 = vmul.f32 %v1989, 1.442695
    %v1991 = vpow.pop %v1990
    %s1992 = vtos %v1991
    %1993 = vmatpush.xpose.msra.mxu0 0.0
    %1994 = vmatpush.xpose.msra.mxu0 0.0
    %1995 = vmatpush.xpose.msra.mxu0 0.0
    %1996 = vmatpush.xpose.msra.mxu0 0.0
    %1997 = vmatpush.xpose.msra.mxu0 0.0
    %1998 = vmatpush.xpose.msra.mxu0 0.0
    %1999 = vmatpush.xpose.msra.mxu0 0.0
    %2000 = vmatpush.xpose.msra.mxu0 0.0
    %2001 = vmatpush.xpose.msra.mxu0 0.0
    %2002 = vmatpush.xpose.msra.mxu0 0.0
    %2003 = vmatpush.xpose.msra.mxu0 0.0
    %2004 = vmatpush.xpose.msra.mxu0 0.0
    %2005 = vmatpush.xpose.msra.mxu0 0.0
    %2006 = vmatpush.xpose.msra.mxu0 0.0
    %2007 = vmatpush.xpose.msra.mxu0 0.0
    %2008 = vmatpush.xpose.msra.mxu0 %v1986
    %2009 = vmatmul.f32.gmra.mxu0 %v1985
    %v2010 = vpop.f32.mrf.mxu0
    %v2011 = vadd.f32 0.0, %v2010
    %2012 = vdwg.mxu0
    %v2013 = vstv %s1992
    %v2014 = vmul.f32 %v2013, %v2011
    %vm2015 = vcmask 33792
    %2016 = vst.msk [vmem:[#allocation3] sm:$0x3] %vm2015, %v2014
    %2017 = vst [vmem:[#allocation5] sm:$0x3] %v1985
    // Predicated region
    $region94: #{ordinalclip_forward.3} parent=1 // pred_check
      _
    $region95: #{ordinalclip_forward.3} parent=1 // pred_check_branch
      %2019 = sbr.rel (0) target = $region97
    $region96: #{ordinalclip_forward.3} parent=1 // pred_region
      %2021 = vsyncadd [#allocation4], 0
      %s2023 = sshll.u32 [#allocation3], 4
      %s2024 = int_to_ptr.vmem [resolvable:$true] %s2023
      %s2025 = sshll.u32 %s23, 4
      %s2026 = int_to_ptr.hbm [resolvable:$true] %s2025
      %2028 = dma.vmem_to_hbm [thread:$0]  %s2024, 32, %s2026, [#allocation4]
    $region97: #{ordinalclip_forward.3} parent=1 // pred_fallthru
      _
    // Predicated region
    $region98: #{ordinalclip_forward.3} parent=1 // pred_check
      _
    $region99: #{ordinalclip_forward.3} parent=1 // pred_check_branch
      %2030 = sbr.rel (0) target = $region101
    $region100: #{ordinalclip_forward.3} parent=1 // pred_region
      %2032 = vsyncadd [#allocation6], 0
      %s2034 = sshll.u32 [#allocation5], 4
      %s2035 = int_to_ptr.vmem [resolvable:$true] %s2034
      %s2036 = sshll.u32 %s24, 4
      %s2037 = int_to_ptr.hbm [resolvable:$true] %s2036
      %2039 = dma.vmem_to_hbm [thread:$0]  %s2035, 32, %s2037, [#allocation6]
    $region101: #{ordinalclip_forward.3} parent=1 // pred_fallthru
      _
    // Predicated region
    $region102: #{ordinalclip_forward.3} parent=1 // pred_check
      _
    $region103: #{ordinalclip_forward.3} parent=1 // pred_check_branch
      %2041 = sbr.rel (0) target = $region105
    $region104: #{ordinalclip_forward.3} parent=1 // pred_region
      %2043 = dma.done [#allocation4], 32
    $region105: #{ordinalclip_forward.3} parent=1 // pred_fallthru
      _
    // Predicated region
    $region106: #{ordinalclip_forward.3} parent=1 // pred_check
      _
    $region107: #{ordinalclip_forward.3} parent=1 // pred_check_branch
      %2045 = sbr.rel (0) target = $region109
    $region108: #{ordinalclip_forward.3} parent=1 // pred_region
      %2047 = dma.done [#allocation6], 32
    $region109: #{ordinalclip_forward.3} parent=1 // pred_fallthru
      _
    %2048 = vsyncpa [#allocation4], 1
    %2049 = vsyncpa [#allocation6], 1

// kernel: ordinalclip_forward.2
$region0: #{ordinalclip_forward.2}
  #allocation0 [shape = 'u32[]', space=smem, size = 0x4, offset = 0x4, fixed_abs, tag = 'smem constant byte address 0x4 - core index']
  #allocation1 [shape = 'u32[72,128]{1,0:T(1,128)}', space=vmem, size = 0x9000, scoped, tag = 'internal scratch']
  %s0 = inlined_call_operand.vmem [shape: f32[40,128], index: 0, kind: input, shape index: {}]
  %s1 = inlined_call_operand.vmem [shape: f32[40,128], index: 1, kind: input, shape index: {}]
  %s2 = inlined_call_operand.vmem [shape: f32[40,40], index: 2, kind: input, shape index: {}]
  %s3 = inlined_call_operand.vmem [shape: f32[5,40], index: 3, kind: input, shape index: {}]
  %s4 = inlined_call_operand.vmem [shape: f32[2,1,128], index: 4, kind: input, shape index: {}]
  %s5 = inlined_call_operand.vmem [shape: f32[2,1,128], index: 5, kind: input, shape index: {}]
  %s6 = inlined_call_operand.vmem [shape: f32[2,3,4,128,32], index: 6, kind: input, shape index: {}]
  %s7 = inlined_call_operand.vmem [shape: f32[2,3,4,1,32], index: 7, kind: input, shape index: {}]
  %s8 = inlined_call_operand.vmem [shape: f32[2,4,32,128], index: 8, kind: input, shape index: {}]
  %s9 = inlined_call_operand.vmem [shape: f32[2,1,128], index: 9, kind: input, shape index: {}]
  %s10 = inlined_call_operand.vmem [shape: f32[2,1,128], index: 10, kind: input, shape index: {}]
  %s11 = inlined_call_operand.vmem [shape: f32[2,1,128], index: 11, kind: input, shape index: {}]
  %s12 = inlined_call_operand.vmem [shape: f32[2,128,512], index: 12, kind: input, shape index: {}]
  %s13 = inlined_call_operand.vmem [shape: f32[2,1,512], index: 13, kind: input, shape index: {}]
  %s14 = inlined_call_operand.vmem [shape: f32[2,512,128], index: 14, kind: input, shape index: {}]
  %s15 = inlined_call_operand.vmem [shape: f32[2,1,128], index: 15, kind: input, shape index: {}]
  %s16 = inlined_call_operand.vmem [shape: f32[1,128], index: 16, kind: input, shape index: {}]
  %s17 = inlined_call_operand.vmem [shape: f32[1,128], index: 17, kind: input, shape index: {}]
  %s18 = inlined_call_operand.vmem [shape: f32[128,128], index: 18, kind: input, shape index: {}]
  %s19 = inlined_call_operand.vmem [shape: f32[5,128], index: 19, kind: output, shape index: {}]
  %s20 = sld [smem:[#allocation0]]
  $region86: #{ordinalclip_forward.2} parent=0
    _
  %s22 = ssub.s32 1, %s20
  %s23 = scalar_select 0, %s22, %s20
  // Predicated region
  $region2: #{ordinalclip_forward.2} parent=0 // pred_check
    _
  $region3: #{ordinalclip_forward.2} parent=0 // pred_check_branch
    %25 = sbr.rel (0) target = $region5
  $region4: #{ordinalclip_forward.2} parent=0 // pred_region
    _
  $region5: #{ordinalclip_forward.2} parent=0 // pred_fallthru
    _
  // Predicated region
  $region6: #{ordinalclip_forward.2} parent=0 // pred_check
    _
  $region7: #{ordinalclip_forward.2} parent=0 // pred_check_branch
    %27 = sbr.rel (0) target = $region9
  $region8: #{ordinalclip_forward.2} parent=0 // pred_region
    _
  $region9: #{ordinalclip_forward.2} parent=0 // pred_fallthru
    _
  // Predicated region
  $region10: #{ordinalclip_forward.2} parent=0 // pred_check
    _
  $region11: #{ordinalclip_forward.2} parent=0 // pred_check_branch
    %29 = sbr.rel (0) target = $region13
  $region12: #{ordinalclip_forward.2} parent=0 // pred_region
    _
  $region13: #{ordinalclip_forward.2} parent=0 // pred_fallthru
    _
  // Predicated region
  $region14: #{ordinalclip_forward.2} parent=0 // pred_check
    _
  $region15: #{ordinalclip_forward.2} parent=0 // pred_check_branch
    %31 = sbr.rel (0) target = $region17
  $region16: #{ordinalclip_forward.2} parent=0 // pred_region
    _
  $region17: #{ordinalclip_forward.2} parent=0 // pred_fallthru
    _
  // Predicated region
  $region18: #{ordinalclip_forward.2} parent=0 // pred_check
    _
  $region19: #{ordinalclip_forward.2} parent=0 // pred_check_branch
    %33 = sbr.rel (0) target = $region21
  $region20: #{ordinalclip_forward.2} parent=0 // pred_region
    _
  $region21: #{ordinalclip_forward.2} parent=0 // pred_fallthru
    _
  // Predicated region
  $region22: #{ordinalclip_forward.2} parent=0 // pred_check
    _
  $region23: #{ordinalclip_forward.2} parent=0 // pred_check_branch
    %35 = sbr.rel (0) target = $region25
  $region24: #{ordinalclip_forward.2} parent=0 // pred_region
    _
  $region25: #{ordinalclip_forward.2} parent=0 // pred_fallthru
    _
  // Predicated region
  $region26: #{ordinalclip_forward.2} parent=0 // pred_check
    _
  $region27: #{ordinalclip_forward.2} parent=0 // pred_check_branch
    %37 = sbr.rel (0) target = $region29
  $region28: #{ordinalclip_forward.2} parent=0 // pred_region
    _
  $region29: #{ordinalclip_forward.2} parent=0 // pred_fallthru
    _
  // Predicated region
  $region30: #{ordinalclip_forward.2} parent=0 // pred_check
    _
  $region31: #{ordinalclip_forward.2} parent=0 // pred_check_branch
    %39 = sbr.rel (0) target = $region33
  $region32: #{ordinalclip_forward.2} parent=0 // pred_region
    _
  $region33: #{ordinalclip_forward.2} parent=0 // pred_fallthru
    _
  // Predicated region
  $region34: #{ordinalclip_forward.2} parent=0 // pred_check
    _
  $region35: #{ordinalclip_forward.2} parent=0 // pred_check_branch
    %41 = sbr.rel (0) target = $region37
  $region36: #{ordinalclip_forward.2} parent=0 // pred_region
    _
  $region37: #{ordinalclip_forward.2} parent=0 // pred_fallthru
    _
  // Predicated region
  $region38: #{ordinalclip_forward.2} parent=0 // pred_check
    _
  $region39: #{ordinalclip_forward.2} parent=0 // pred_check_branch
    %43 = sbr.rel (0) target = $region41
  $region40: #{ordinalclip_forward.2} parent=0 // pred_region
    _
  $region41: #{ordinalclip_forward.2} parent=0 // pred_fallthru
    _
  // Predicated region
  $region42: #{ordinalclip_forward.2} parent=0 // pred_check
    _
  $region43: #{ordinalclip_forward.2} parent=0 // pred_check_branch
    %45 = sbr.rel (0) target = $region45
  $region44: #{ordinalclip_forward.2} parent=0 // pred_region
    _
  $region45: #{ordinalclip_forward.2} parent=0 // pred_fallthru
    _
  // Predicated region
  $region46: #{ordinalclip_forward.2} parent=0 // pred_check
    _
  $region47: #{ordinalclip_forward.2} parent=0 // pred_check_branch
    %47 = sbr.rel (0) target = $region49
  $region48: #{ordinalclip_forward.2} parent=0 // pred_region
    _
  $region49: #{ordinalclip_forward.2} parent=0 // pred_fallthru
    _
  // Predicated region
  $region50: #{ordinalclip_forward.2} parent=0 // pred_check
    _
  $region51: #{ordinalclip_forward.2} parent=0 // pred_check_branch
    %49 = sbr.rel (0) target = $region53
  $region52: #{ordinalclip_forward.2} parent=0 // pred_region
    _
  $region53: #{ordinalclip_forward.2} parent=0 // pred_fallthru
    _
  // Predicated region
  $region54: #{ordinalclip_forward.2} parent=0 // pred_check
    _
  $region55: #{ordinalclip_forward.2} parent=0 // pred_check_branch
    %51 = sbr.rel (0) target = $region57
  $region56: #{ordinalclip_forward.2} parent=0 // pred_region
    _
  $region57: #{ordinalclip_forward.2} parent=0 // pred_fallthru
    _
  // Predicated region
  $region58: #{ordinalclip_forward.2} parent=0 // pred_check
    _
  $region59: #{ordinalclip_forward.2} parent=0 // pred_check_branch
    %53 = sbr.rel (0) target = $region61
  $region60: #{ordinalclip_forward.2} parent=0 // pred_region
    _
  $region61: #{ordinalclip_forward.2} parent=0 // pred_fallthru
    _
  // Predicated region
  $region62: #{ordinalclip_forward.2} parent=0 // pred_check
    _
  $region63: #{ordinalclip_forward.2} parent=0 // pred_check_branch
    %55 = sbr.rel (0) target = $region65
  $region64: #{ordinalclip_forward.2} parent=0 // pred_region
    _
  $region65: #{ordinalclip_forward.2} parent=0 // pred_fallthru
    _
  // Predicated region
  $region66: #{ordinalclip_forward.2} parent=0 // pred_check
    _
  $region67: #{ordinalclip_forward.2} parent=0 // pred_check_branch
    %57 = sbr.rel (0) target = $region69
  $region68: #{ordinalclip_forward.2} parent=0 // pred_region
    _
  $region69: #{ordinalclip_forward.2} parent=0 // pred_fallthru
    _
  // Predicated region
  $region70: #{ordinalclip_forward.2} parent=0 // pred_check
    _
  $region71: #{ordinalclip_forward.2} parent=0 // pred_check_branch
    %59 = sbr.rel (0) target = $region73
  $region72: #{ordinalclip_forward.2} parent=0 // pred_region
    _
  $region73: #{ordinalclip_forward.2} parent=0 // pred_fallthru
    _
  // Predicated region
  $region74: #{ordinalclip_forward.2} parent=0 // pred_check
    _
  $region75: #{ordinalclip_forward.2} parent=0 // pred_check_branch
    %61 = sbr.rel (0) target = $region77
  $region76: #{ordinalclip_forward.2} parent=0 // pred_region
    _
  $region77: #{ordinalclip_forward.2} parent=0 // pred_fallthru
    _
  %v63 = vld [vmem:[%s0] sm:$0xff]
  %v64 = vld [vmem:[%s0 + $0x8] sm:$0xff]
  %v65 = vld [vmem:[%s0 + $0x10] sm:$0xff]
  %v66 = vld [vmem:[%s0 + $0x18] sm:$0xff]
  %v67 = vld [vmem:[%s0 + $0x20] sm:$0xff]
  %v68 = vld [vmem:[%s1] sm:$0xff]
  %v69 = vld [vmem:[%s1 + $0x8] sm:$0xff]
  %v70 = vld [vmem:[%s1 + $0x10] sm:$0xff]
  %v71 = vld [vmem:[%s1 + $0x18] sm:$0xff]
  %v72 = vld [vmem:[%s1 + $0x20] sm:$0xff]
  %v73 = vadd.f32 %v63, %v68
  %v74 = vadd.f32 %v64, %v69
  %v75 = vadd.f32 %v65, %v70
  %v76 = vadd.f32 %v66, %v71
  %v77 = vadd.f32 %v67, %v72
  %v78 = vld [vmem:[%s2] sm:$0xff]
  %v79 = vld [vmem:[%s2 + $0x8] sm:$0xff]
  %v80 = vld [vmem:[%s2 + $0x10] sm:$0xff]
  %v81 = vld [vmem:[%s2 + $0x18] sm:$0xff]
  %v82 = vld [vmem:[%s2 + $0x20] sm:$0xff]
  %v83 = vld [vmem:[%s4] sm:$0x1]
  %v84 = vld [vmem:[%s5] sm:$0x1]
  %85 = vadd.xlane.f32.xlu0 %v73
  %v86 = vpop.xlane.xlu0 %85
  %87 = vadd.xlane.f32.xlu0 %v74
  %v88 = vpop.xlane.xlu0 %87
  %89 = vadd.xlane.f32.xlu0 %v75
  %v90 = vpop.xlane.xlu0 %89
  %91 = vadd.xlane.f32.xlu0 %v76
  %v92 = vpop.xlane.xlu0 %91
  %93 = vadd.xlane.f32.xlu0 %v77
  %v94 = vpop.xlane.xlu0 %93
  %v95 = vrcp.pop 128.0
  %v96 = vmul.f32 128.0, %v95
  %v97 = vsub.f32 1.0, %v96
  %v98 = vmul.f32 %v95, %v97
  %v99 = vadd.f32 %v95, %v98
  %vm100 = vweird.f32 %v95
  %v101 = vsel %vm100, %v95, %v99
  %v102 = vmul.f32 %v86, %v101
  %v103 = vmul.f32 %v88, %v101
  %v104 = vmul.f32 %v90, %v101
  %v105 = vmul.f32 %v92, %v101
  %v106 = vmul.f32 %v94, %v101
  %v107 = vsub.f32 %v73, %v102
  %v108 = vsub.f32 %v74, %v103
  %v109 = vsub.f32 %v75, %v104
  %v110 = vsub.f32 %v76, %v105
  %v111 = vsub.f32 %v77, %v106
  %v112 = vmul.f32 %v107, %v107
  %v113 = vmul.f32 %v108, %v108
  %v114 = vmul.f32 %v109, %v109
  %v115 = vmul.f32 %v110, %v110
  %v116 = vmul.f32 %v111, %v111
  %117 = vadd.xlane.f32.xlu0 %v112
  %v118 = vpop.xlane.xlu0 %117
  %119 = vadd.xlane.f32.xlu0 %v113
  %v120 = vpop.xlane.xlu0 %119
  %121 = vadd.xlane.f32.xlu0 %v114
  %v122 = vpop.xlane.xlu0 %121
  %123 = vadd.xlane.f32.xlu0 %v115
  %v124 = vpop.xlane.xlu0 %123
  %125 = vadd.xlane.f32.xlu0 %v116
  %v126 = vpop.xlane.xlu0 %125
  %v127 = vmul.f32 %v118, %v101
  %v128 = vmul.f32 %v120, %v101
  %v129 = vmul.f32 %v122, %v101
  %v130 = vmul.f32 %v124, %v101
  %v131 = vmul.f32 %v126, %v101
  %v132 = vadd.f32 %v127, 1e-05
  %v133 = vadd.f32 %v128, 1e-05
  %v134 = vadd.f32 %v129, 1e-05
  %v135 = vadd.f32 %v130, 1e-05
  %v136 = vadd.f32 %v131, 1e-05
  %v137 = vrsqrt.pop %v132
  %v138 = vmul.f32 %v137, %v132
  %v139 = vmul.f32 %v138, %v137
  %v140 = vmul.f32 0.5, %v139
  %v141 = vsub.f32 1.5, %v140
  %v142 = vmul.f32 %v137, %v141
  %vm143 = vweird.f32 %v132
  %vm144 = vweird.f32 %v137
  %vm145 = vmor %vm143, %vm144
  %v146 = vsel %vm145, %v137, %v142
  %v147 = vrsqrt.pop %v133
  %v148 = vmul.f32 %v147, %v133
  %v149 = vmul.f32 %v148, %v147
  %v150 = vmul.f32 0.5, %v149
  %v151 = vsub.f32 1.5, %v150
  %v152 = vmul.f32 %v147, %v151
  %vm153 = vweird.f32 %v133
  %vm154 = vweird.f32 %v147
  %vm155 = vmor %vm153, %vm154
  %v156 = vsel %vm155, %v147, %v152
  %v157 = vrsqrt.pop %v134
  %v158 = vmul.f32 %v157, %v134
  %v159 = vmul.f32 %v158, %v157
  %v160 = vmul.f32 0.5, %v159
  %v161 = vsub.f32 1.5, %v160
  %v162 = vmul.f32 %v157, %v161
  %vm163 = vweird.f32 %v134
  %vm164 = vweird.f32 %v157
  %vm165 = vmor %vm163, %vm164
  %v166 = vsel %vm165, %v157, %v162
  %v167 = vrsqrt.pop %v135
  %v168 = vmul.f32 %v167, %v135
  %v169 = vmul.f32 %v168, %v167
  %v170 = vmul.f32 0.5, %v169
  %v171 = vsub.f32 1.5, %v170
  %v172 = vmul.f32 %v167, %v171
  %vm173 = vweird.f32 %v135
  %vm174 = vweird.f32 %v167
  %vm175 = vmor %vm173, %vm174
  %v176 = vsel %vm175, %v167, %v172
  %v177 = vrsqrt.pop %v136
  %v178 = vmul.f32 %v177, %v136
  %v179 = vmul.f32 %v178, %v177
  %v180 = vmul.f32 0.5, %v179
  %v181 = vsub.f32 1.5, %v180
  %v182 = vmul.f32 %v177, %v181
  %vm183 = vweird.f32 %v136
  %vm184 = vweird.f32 %v177
  %vm185 = vmor %vm183, %vm184
  %v186 = vsel %vm185, %v177, %v182
  %v187 = vmul.f32 %v107, %v146
  %v188 = vmul.f32 %v108, %v156
  %v189 = vmul.f32 %v109, %v166
  %v190 = vmul.f32 %v110, %v176
  %v191 = vmul.f32 %v111, %v186
  %v193 = vperm.slane %v83, 0
  %v195 = vmul.f32 %v187, %v193
  %v196 = vmul.f32 %v188, %v193
  %v197 = vmul.f32 %v189, %v193
  %v198 = vmul.f32 %v190, %v193
  %v199 = vmul.f32 %v191, %v193
  %v201 = vperm.slane %v84, 0
  %v203 = vadd.f32 %v195, %v201
  %v204 = vadd.f32 %v196, %v201
  %v205 = vadd.f32 %v197, %v201
  %v206 = vadd.f32 %v198, %v201
  %v207 = vadd.f32 %v199, %v201
  %v208 = vld [vmem:[%s6] sm:$0xff]
  %v209 = vld [vmem:[%s6 + $0x8] sm:$0xff]
  %v210 = vld [vmem:[%s6 + $0x10] sm:$0xff]
  %v211 = vld [vmem:[%s6 + $0x18] sm:$0xff]
  %v212 = vld [vmem:[%s6 + $0x20] sm:$0xff]
  %v213 = vld [vmem:[%s6 + $0x28] sm:$0xff]
  %v214 = vld [vmem:[%s6 + $0x30] sm:$0xff]
  %v215 = vld [vmem:[%s6 + $0x38] sm:$0xff]
  %v216 = vld [vmem:[%s6 + $0x40] sm:$0xff]
  %v217 = vld [vmem:[%s6 + $0x48] sm:$0xff]
  %v218 = vld [vmem:[%s6 + $0x50] sm:$0xff]
  %v219 = vld [vmem:[%s6 + $0x58] sm:$0xff]
  %v220 = vld [vmem:[%s6 + $0x60] sm:$0xff]
  %v221 = vld [vmem:[%s6 + $0x68] sm:$0xff]
  %v222 = vld [vmem:[%s6 + $0x70] sm:$0xff]
  %v223 = vld [vmem:[%s6 + $0x78] sm:$0xff]
  %v224 = vpack.c.bf16 %v204, %v203
  %v225 = vpack.c.bf16 %v206, %v205
  %v226 = vpack.c.bf16 %v207, %v207
  %v227 = vpack.c.bf16 %v209, %v208
  %v228 = vpack.c.bf16 %v211, %v210
  %v229 = vpack.c.bf16 %v213, %v212
  %v230 = vpack.c.bf16 %v215, %v214
  %v231 = vpack.c.bf16 %v217, %v216
  %v232 = vpack.c.bf16 %v219, %v218
  %v233 = vpack.c.bf16 %v221, %v220
  %v234 = vpack.c.bf16 %v223, %v222
  %v235 = vld [vmem:[%s7] sm:$0x1]
  %v237 = vperm.slane %v235, 0
  %239 = vmatpush.bf16.msra.mxu0 %v234
  %240 = vmatpush.bf16.msra.mxu0 %v233
  %241 = vmatpush.bf16.msra.mxu0 %v232
  %242 = vmatpush.bf16.msra.mxu0 %v231
  %243 = vmatpush.bf16.msra.mxu0 %v230
  %244 = vmatpush.bf16.msra.mxu0 %v229
  %245 = vmatpush.bf16.msra.mxu0 %v228
  %246 = vmatpush.bf16.msra.mxu0 %v227
  %247 = vmatmul.bf16.gmra.mxu0 %v224
  %v248 = vpop.f32.mrf.mxu0
  %v249 = vadd.f32 %v237, %v248
  %v250 = vpop.f32.mrf.mxu0
  %v251 = vadd.f32 %v237, %v250
  %252 = vmatmul.bf16.gmra.mxu0 %v225
  %v253 = vpop.f32.mrf.mxu0
  %v254 = vadd.f32 %v237, %v253
  %v255 = vpop.f32.mrf.mxu0
  %v256 = vadd.f32 %v237, %v255
  %257 = vmatmul.bf16.gmra.mxu0 %v226
  %v258 = vpop.f32.mrf.mxu0
  %v259 = vadd.f32 %v237, %v258
  %v260 = vpop.f32.mrf.mxu0
  %261 = vdwg.mxu0
  %s262 = scalar_lea.vmem %s6, 512
  %v263 = vld [vmem:[%s262] sm:$0xff]
  %v264 = vld [vmem:[%s262 + $0x8] sm:$0xff]
  %v265 = vld [vmem:[%s262 + $0x10] sm:$0xff]
  %v266 = vld [vmem:[%s262 + $0x18] sm:$0xff]
  %v267 = vld [vmem:[%s262 + $0x20] sm:$0xff]
  %v268 = vld [vmem:[%s262 + $0x28] sm:$0xff]
  %v269 = vld [vmem:[%s262 + $0x30] sm:$0xff]
  %v270 = vld [vmem:[%s262 + $0x38] sm:$0xff]
  %v271 = vld [vmem:[%s262 + $0x40] sm:$0xff]
  %v272 = vld [vmem:[%s262 + $0x48] sm:$0xff]
  %v273 = vld [vmem:[%s262 + $0x50] sm:$0xff]
  %v274 = vld [vmem:[%s262 + $0x58] sm:$0xff]
  %v275 = vld [vmem:[%s262 + $0x60] sm:$0xff]
  %v276 = vld [vmem:[%s262 + $0x68] sm:$0xff]
  %v277 = vld [vmem:[%s262 + $0x70] sm:$0xff]
  %v278 = vld [vmem:[%s262 + $0x78] sm:$0xff]
  %v279 = vpack.c.bf16 %v264, %v263
  %v280 = vpack.c.bf16 %v266, %v265
  %v281 = vpack.c.bf16 %v268, %v267
  %v282 = vpack.c.bf16 %v270, %v269
  %v283 = vpack.c.bf16 %v272, %v271
  %v284 = vpack.c.bf16 %v274, %v273
  %v285 = vpack.c.bf16 %v276, %v275
  %v286 = vpack.c.bf16 %v278, %v277
  %s287 = scalar_lea.vmem %s7, 4
  %v288 = vld [vmem:[%s287] sm:$0x1]
  %v290 = vperm.slane %v288, 0
  %292 = vmatpush.bf16.msra.mxu0 %v286
  %293 = vmatpush.bf16.msra.mxu0 %v285
  %294 = vmatpush.bf16.msra.mxu0 %v284
  %295 = vmatpush.bf16.msra.mxu0 %v283
  %296 = vmatpush.bf16.msra.mxu0 %v282
  %297 = vmatpush.bf16.msra.mxu0 %v281
  %298 = vmatpush.bf16.msra.mxu0 %v280
  %299 = vmatpush.bf16.msra.mxu0 %v279
  %300 = vmatmul.bf16.gmra.mxu0 %v224
  %v301 = vpop.f32.mrf.mxu0
  %v302 = vadd.f32 %v290, %v301
  %v303 = vpop.f32.mrf.mxu0
  %v304 = vadd.f32 %v290, %v303
  %305 = vmatmul.bf16.gmra.mxu0 %v225
  %v306 = vpop.f32.mrf.mxu0
  %v307 = vadd.f32 %v290, %v306
  %v308 = vpop.f32.mrf.mxu0
  %v309 = vadd.f32 %v290, %v308
  %310 = vmatmul.bf16.gmra.mxu0 %v226
  %v311 = vpop.f32.mrf.mxu0
  %v312 = vadd.f32 %v290, %v311
  %v313 = vpop.f32.mrf.mxu0
  %314 = vdwg.mxu0
  %s315 = scalar_lea.vmem %s6, 1024
  %v316 = vld [vmem:[%s315] sm:$0xff]
  %v317 = vld [vmem:[%s315 + $0x8] sm:$0xff]
  %v318 = vld [vmem:[%s315 + $0x10] sm:$0xff]
  %v319 = vld [vmem:[%s315 + $0x18] sm:$0xff]
  %v320 = vld [vmem:[%s315 + $0x20] sm:$0xff]
  %v321 = vld [vmem:[%s315 + $0x28] sm:$0xff]
  %v322 = vld [vmem:[%s315 + $0x30] sm:$0xff]
  %v323 = vld [vmem:[%s315 + $0x38] sm:$0xff]
  %v324 = vld [vmem:[%s315 + $0x40] sm:$0xff]
  %v325 = vld [vmem:[%s315 + $0x48] sm:$0xff]
  %v326 = vld [vmem:[%s315 + $0x50] sm:$0xff]
  %v327 = vld [vmem:[%s315 + $0x58] sm:$0xff]
  %v328 = vld [vmem:[%s315 + $0x60] sm:$0xff]
  %v329 = vld [vmem:[%s315 + $0x68] sm:$0xff]
  %v330 = vld [vmem:[%s315 + $0x70] sm:$0xff]
  %v331 = vld [vmem:[%s315 + $0x78] sm:$0xff]
  %v332 = vpack.c.bf16 %v317, %v316
  %v333 = vpack.c.bf16 %v319, %v318
  %v334 = vpack.c.bf16 %v321, %v320
  %v335 = vpack.c.bf16 %v323, %v322
  %v336 = vpack.c.bf16 %v325, %v324
  %v337 = vpack.c.bf16 %v327, %v326
  %v338 = vpack.c.bf16 %v329, %v328
  %v339 = vpack.c.bf16 %v331, %v330
  %s340 = scalar_lea.vmem %s7, 8
  %v341 = vld [vmem:[%s340] sm:$0x1]
  %v343 = vperm.slane %v341, 0
  %345 = vmatpush.bf16.msra.mxu0 %v339
  %346 = vmatpush.bf16.msra.mxu0 %v338
  %347 = vmatpush.bf16.msra.mxu0 %v337
  %348 = vmatpush.bf16.msra.mxu0 %v336
  %349 = vmatpush.bf16.msra.mxu0 %v335
  %350 = vmatpush.bf16.msra.mxu0 %v334
  %351 = vmatpush.bf16.msra.mxu0 %v333
  %352 = vmatpush.bf16.msra.mxu0 %v332
  %353 = vmatmul.bf16.gmra.mxu0 %v224
  %v354 = vpop.f32.mrf.mxu0
  %v355 = vadd.f32 %v343, %v354
  %v356 = vpop.f32.mrf.mxu0
  %v357 = vadd.f32 %v343, %v356
  %358 = vmatmul.bf16.gmra.mxu0 %v225
  %v359 = vpop.f32.mrf.mxu0
  %v360 = vadd.f32 %v343, %v359
  %v361 = vpop.f32.mrf.mxu0
  %v362 = vadd.f32 %v343, %v361
  %363 = vmatmul.bf16.gmra.mxu0 %v226
  %v364 = vpop.f32.mrf.mxu0
  %v365 = vadd.f32 %v343, %v364
  %v366 = vpop.f32.mrf.mxu0
  %367 = vdwg.mxu0
  %368 = vxpose.xlu0.b32.start [1/16] %v302, 128
  %369 = vxpose.xlu0.b32.cont [2/16] %v304, 128
  %370 = vxpose.xlu0.b32.cont [3/16] %v307, 128
  %371 = vxpose.xlu0.b32.cont [4/16] %v309, 128
  %372 = vxpose.xlu0.b32.cont [5/16] %v312, 128
  %373 = vxpose.xlu0.b32.cont [6/16] 0.0, 128
  %374 = vxpose.xlu0.b32.cont [7/16] 0.0, 128
  %375 = vxpose.xlu0.b32.cont [8/16] 0.0, 128
  %376 = vxpose.xlu0.b32.cont [9/16] 0.0, 128
  %377 = vxpose.xlu0.b32.cont [10/16] 0.0, 128
  %378 = vxpose.xlu0.b32.cont [11/16] 0.0, 128
  %379 = vxpose.xlu0.b32.cont [12/16] 0.0, 128
  %380 = vxpose.xlu0.b32.cont [13/16] 0.0, 128
  %381 = vxpose.xlu0.b32.cont [14/16] 0.0, 128
  %382 = vxpose.xlu0.b32.cont [15/16] 0.0, 128
  %383 = vxpose.xlu0.b32.end [16/16] 0.0, 128
  %v384 = vpop.trf.xlu0
  %v385 = vpop.trf.xlu0
  %v386 = vpop.trf.xlu0
  %v387 = vpop.trf.xlu0
  %v388 = vpop.trf.xlu0
  %v389 = vpop.trf.xlu0
  %v390 = vpop.trf.xlu0
  %v391 = vpop.trf.xlu0
  %v392 = vpop.trf.xlu0
  %v393 = vpop.trf.xlu0
  %v394 = vpop.trf.xlu0
  %v395 = vpop.trf.xlu0
  %v396 = vpop.trf.xlu0
  %v397 = vpop.trf.xlu0
  %v398 = vpop.trf.xlu0
  %v399 = vpop.trf.xlu0
  %v400 = vpack.c.bf16 %v251, %v249
  %v401 = vpack.c.bf16 %v256, %v254
  %v402 = vpack.c.bf16 %v259, %v259
  %v403 = vpack.c.bf16 %v385, %v384
  %v404 = vpack.c.bf16 %v387, %v386
  %vm405 = vcmask 261120
  %v407 = vsel %vm405, %v400, 0
  %v410 = vsel %vm405, %v401, 0
  %v413 = vsel %vm405, %v402, 0
  %415 = vmatpush.bf16.msra.mxu0 0
  %416 = vmatpush.bf16.msra.mxu0 0
  %417 = vmatpush.bf16.msra.mxu0 0
  %418 = vmatpush.bf16.msra.mxu0 0
  %419 = vmatpush.bf16.msra.mxu0 0
  %420 = vmatpush.bf16.msra.mxu0 0
  %421 = vmatpush.bf16.msra.mxu0 %v404
  %422 = vmatpush.bf16.msra.mxu0 %v403
  %423 = vmatmul.bf16.gmra.mxu0 %v407
  %v424 = vpop.f32.mrf.mxu0
  %v425 = vadd.f32 0.0, %v424
  %v426 = vpop.f32.mrf.mxu0
  %v427 = vadd.f32 0.0, %v426
  %428 = vmatmul.bf16.gmra.mxu0 %v410
  %v429 = vpop.f32.mrf.mxu0
  %v430 = vadd.f32 0.0, %v429
  %v431 = vpop.f32.mrf.mxu0
  %v432 = vadd.f32 0.0, %v431
  %433 = vmatmul.bf16.gmra.mxu0 %v413
  %v434 = vpop.f32.mrf.mxu0
  %v435 = vadd.f32 0.0, %v434
  %v436 = vpop.f32.mrf.mxu0
  %437 = vdwg.mxu0
  %v438 = vmul.f32 %v425, 0.17677669
  %v439 = vmul.f32 %v427, 0.17677669
  %v440 = vmul.f32 %v430, 0.17677669
  %v441 = vmul.f32 %v432, 0.17677669
  %v442 = vmul.f32 %v435, 0.17677669
  %v443 = vadd.f32 %v438, %v78
  %v444 = vadd.f32 %v439, %v79
  %v445 = vadd.f32 %v440, %v80
  %v446 = vadd.f32 %v441, %v81
  %v447 = vadd.f32 %v442, %v82
  %vm448 = vcmask 326656
  %v449 = vsel %vm448, %v443, -inf
  %450 = vmax.xlane.f32.xlu0 %v449
  %v451 = vpop.xlane.xlu0 %450
  %v452 = vsel %vm448, %v444, -inf
  %453 = vmax.xlane.f32.xlu0 %v452
  %v454 = vpop.xlane.xlu0 %453
  %v455 = vsel %vm448, %v445, -inf
  %456 = vmax.xlane.f32.xlu0 %v455
  %v457 = vpop.xlane.xlu0 %456
  %v458 = vsel %vm448, %v446, -inf
  %459 = vmax.xlane.f32.xlu0 %v458
  %v460 = vpop.xlane.xlu0 %459
  %v461 = vsel %vm448, %v447, -inf
  %462 = vmax.xlane.f32.xlu0 %v461
  %v463 = vpop.xlane.xlu0 %462
  %v464 = vsub.f32 %v443, %v451
  %v465 = vsub.f32 %v444, %v454
  %v466 = vsub.f32 %v445, %v457
  %v467 = vsub.f32 %v446, %v460
  %v468 = vsub.f32 %v447, %v463
  %v469 = vmul.f32 %v464, 1.442695
  %v470 = vpow.pop %v469
  %v471 = vmul.f32 %v465, 1.442695
  %v472 = vpow.pop %v471
  %v473 = vmul.f32 %v466, 1.442695
  %v474 = vpow.pop %v473
  %v475 = vmul.f32 %v467, 1.442695
  %v476 = vpow.pop %v475
  %v477 = vmul.f32 %v468, 1.442695
  %v478 = vpow.pop %v477
  %v479 = vsel %vm448, %v470, 0.0
  %480 = vadd.xlane.f32.xlu0 %v479
  %v481 = vpop.xlane.xlu0 %480
  %v482 = vsel %vm448, %v472, 0.0
  %483 = vadd.xlane.f32.xlu0 %v482
  %v484 = vpop.xlane.xlu0 %483
  %v485 = vsel %vm448, %v474, 0.0
  %486 = vadd.xlane.f32.xlu0 %v485
  %v487 = vpop.xlane.xlu0 %486
  %v488 = vsel %vm448, %v476, 0.0
  %489 = vadd.xlane.f32.xlu0 %v488
  %v490 = vpop.xlane.xlu0 %489
  %v491 = vsel %vm448, %v478, 0.0
  %492 = vadd.xlane.f32.xlu0 %v491
  %v493 = vpop.xlane.xlu0 %492
  %v494 = vrcp.pop %v481
  %v495 = vrcp.pop %v484
  %v496 = vrcp.pop %v487
  %v497 = vrcp.pop %v490
  %v498 = vrcp.pop %v493
  %v499 = vmul.f32 %v470, %v494
  %v500 = vmul.f32 %v472, %v495
  %v501 = vmul.f32 %v474, %v496
  %v502 = vmul.f32 %v476, %v497
  %v503 = vmul.f32 %v478, %v498
  %v504 = vpack.c.bf16 %v500, %v499
  %v505 = vpack.c.bf16 %v502, %v501
  %v506 = vpack.c.bf16 %v503, %v503
  %v507 = vpack.c.bf16 %v357, %v355
  %v508 = vpack.c.bf16 %v362, %v360
  %v509 = vpack.c.bf16 %v365, %v365
  %v511 = vsel %vm448, %v504, 0
  %v514 = vsel %vm448, %v505, 0
  %v517 = vsel %vm448, %v506, 0
  %vm519 = vcmask 1043456
  %v521 = vsel %vm519, %v509, 0
  %523 = vmatpush.bf16.msra.mxu0 0
  %524 = vmatpush.bf16.msra.mxu0 0
  %525 = vmatpush.bf16.msra.mxu0 0
  %526 = vmatpush.bf16.msra.mxu0 0
  %527 = vmatpush.bf16.msra.mxu0 0
  %528 = vmatpush.bf16.msra.mxu0 %v521
  %529 = vmatpush.bf16.msra.mxu0 %v508
  %530 = vmatpush.bf16.msra.mxu0 %v507
  %531 = vmatmul.bf16.gmra.mxu0 %v511
  %v532 = vpop.f32.mrf.mxu0
  %v533 = vadd.f32 0.0, %v532
  %v534 = vpop.f32.mrf.mxu0
  %v535 = vadd.f32 0.0, %v534
  %536 = vmatmul.bf16.gmra.mxu0 %v514
  %v537 = vpop.f32.mrf.mxu0
  %v538 = vadd.f32 0.0, %v537
  %v539 = vpop.f32.mrf.mxu0
  %v540 = vadd.f32 0.0, %v539
  %541 = vmatmul.bf16.gmra.mxu0 %v517
  %v542 = vpop.f32.mrf.mxu0
  %v543 = vadd.f32 0.0, %v542
  %v544 = vpop.f32.mrf.mxu0
  %545 = vdwg.mxu0
  %v546 = vld [vmem:[%s8] sm:$0xff]
  %v547 = vld [vmem:[%s8 + $0x8] sm:$0xff]
  %v548 = vld [vmem:[%s8 + $0x10] sm:$0xff]
  %v549 = vld [vmem:[%s8 + $0x18] sm:$0xff]
  %v550 = vpack.c.bf16 %v535, %v533
  %v551 = vpack.c.bf16 %v540, %v538
  %v552 = vpack.c.bf16 %v543, %v543
  %v553 = vpack.c.bf16 %v547, %v546
  %v554 = vpack.c.bf16 %v549, %v548
  %s555 = scalar_lea.vmem %s6, 128
  %v556 = vld [vmem:[%s555] sm:$0xff]
  %v557 = vld [vmem:[%s555 + $0x8] sm:$0xff]
  %v558 = vld [vmem:[%s555 + $0x10] sm:$0xff]
  %v559 = vld [vmem:[%s555 + $0x18] sm:$0xff]
  %v560 = vld [vmem:[%s555 + $0x20] sm:$0xff]
  %v561 = vld [vmem:[%s555 + $0x28] sm:$0xff]
  %v562 = vld [vmem:[%s555 + $0x30] sm:$0xff]
  %v563 = vld [vmem:[%s555 + $0x38] sm:$0xff]
  %v564 = vld [vmem:[%s555 + $0x40] sm:$0xff]
  %v565 = vld [vmem:[%s555 + $0x48] sm:$0xff]
  %v566 = vld [vmem:[%s555 + $0x50] sm:$0xff]
  %v567 = vld [vmem:[%s555 + $0x58] sm:$0xff]
  %v568 = vld [vmem:[%s555 + $0x60] sm:$0xff]
  %v569 = vld [vmem:[%s555 + $0x68] sm:$0xff]
  %v570 = vld [vmem:[%s555 + $0x70] sm:$0xff]
  %v571 = vld [vmem:[%s555 + $0x78] sm:$0xff]
  %v572 = vpack.c.bf16 %v557, %v556
  %v573 = vpack.c.bf16 %v559, %v558
  %v574 = vpack.c.bf16 %v561, %v560
  %v575 = vpack.c.bf16 %v563, %v562
  %v576 = vpack.c.bf16 %v565, %v564
  %v577 = vpack.c.bf16 %v567, %v566
  %v578 = vpack.c.bf16 %v569, %v568
  %v579 = vpack.c.bf16 %v571, %v570
  %s580 = scalar_lea.vmem %s7, 1
  %v581 = vld [vmem:[%s580] sm:$0x1]
  %v583 = vperm.slane %v581, 0
  %585 = vmatpush.bf16.msra.mxu0 %v579
  %586 = vmatpush.bf16.msra.mxu0 %v578
  %587 = vmatpush.bf16.msra.mxu0 %v577
  %588 = vmatpush.bf16.msra.mxu0 %v576
  %589 = vmatpush.bf16.msra.mxu0 %v575
  %590 = vmatpush.bf16.msra.mxu0 %v574
  %591 = vmatpush.bf16.msra.mxu0 %v573
  %592 = vmatpush.bf16.msra.mxu0 %v572
  %593 = vmatmul.bf16.gmra.mxu0 %v224
  %v594 = vpop.f32.mrf.mxu0
  %v595 = vadd.f32 %v583, %v594
  %v596 = vpop.f32.mrf.mxu0
  %v597 = vadd.f32 %v583, %v596
  %598 = vmatmul.bf16.gmra.mxu0 %v225
  %v599 = vpop.f32.mrf.mxu0
  %v600 = vadd.f32 %v583, %v599
  %v601 = vpop.f32.mrf.mxu0
  %v602 = vadd.f32 %v583, %v601
  %603 = vmatmul.bf16.gmra.mxu0 %v226
  %v604 = vpop.f32.mrf.mxu0
  %v605 = vadd.f32 %v583, %v604
  %v606 = vpop.f32.mrf.mxu0
  %607 = vdwg.mxu0
  %s608 = scalar_lea.vmem %s6, 640
  %v609 = vld [vmem:[%s608] sm:$0xff]
  %v610 = vld [vmem:[%s608 + $0x8] sm:$0xff]
  %v611 = vld [vmem:[%s608 + $0x10] sm:$0xff]
  %v612 = vld [vmem:[%s608 + $0x18] sm:$0xff]
  %v613 = vld [vmem:[%s608 + $0x20] sm:$0xff]
  %v614 = vld [vmem:[%s608 + $0x28] sm:$0xff]
  %v615 = vld [vmem:[%s608 + $0x30] sm:$0xff]
  %v616 = vld [vmem:[%s608 + $0x38] sm:$0xff]
  %v617 = vld [vmem:[%s608 + $0x40] sm:$0xff]
  %v618 = vld [vmem:[%s608 + $0x48] sm:$0xff]
  %v619 = vld [vmem:[%s608 + $0x50] sm:$0xff]
  %v620 = vld [vmem:[%s608 + $0x58] sm:$0xff]
  %v621 = vld [vmem:[%s608 + $0x60] sm:$0xff]
  %v622 = vld [vmem:[%s608 + $0x68] sm:$0xff]
  %v623 = vld [vmem:[%s608 + $0x70] sm:$0xff]
  %v624 = vld [vmem:[%s608 + $0x78] sm:$0xff]
  %v625 = vpack.c.bf16 %v610, %v609
  %v626 = vpack.c.bf16 %v612, %v611
  %v627 = vpack.c.bf16 %v614, %v613
  %v628 = vpack.c.bf16 %v616, %v615
  %v629 = vpack.c.bf16 %v618, %v617
  %v630 = vpack.c.bf16 %v620, %v619
  %v631 = vpack.c.bf16 %v622, %v621
  %v632 = vpack.c.bf16 %v624, %v623
  %s633 = scalar_lea.vmem %s7, 5
  %v634 = vld [vmem:[%s633] sm:$0x1]
  %v636 = vperm.slane %v634, 0
  %638 = vmatpush.bf16.msra.mxu0 %v632
  %639 = vmatpush.bf16.msra.mxu0 %v631
  %640 = vmatpush.bf16.msra.mxu0 %v630
  %641 = vmatpush.bf16.msra.mxu0 %v629
  %642 = vmatpush.bf16.msra.mxu0 %v628
  %643 = vmatpush.bf16.msra.mxu0 %v627
  %644 = vmatpush.bf16.msra.mxu0 %v626
  %645 = vmatpush.bf16.msra.mxu0 %v625
  %646 = vmatmul.bf16.gmra.mxu0 %v224
  %v647 = vpop.f32.mrf.mxu0
  %v648 = vadd.f32 %v636, %v647
  %v649 = vpop.f32.mrf.mxu0
  %v650 = vadd.f32 %v636, %v649
  %651 = vmatmul.bf16.gmra.mxu0 %v225
  %v652 = vpop.f32.mrf.mxu0
  %v653 = vadd.f32 %v636, %v652
  %v654 = vpop.f32.mrf.mxu0
  %v655 = vadd.f32 %v636, %v654
  %656 = vmatmul.bf16.gmra.mxu0 %v226
  %v657 = vpop.f32.mrf.mxu0
  %v658 = vadd.f32 %v636, %v657
  %v659 = vpop.f32.mrf.mxu0
  %660 = vdwg.mxu0
  %s661 = scalar_lea.vmem %s6, 1152
  %v662 = vld [vmem:[%s661] sm:$0xff]
  %v663 = vld [vmem:[%s661 + $0x8] sm:$0xff]
  %v664 = vld [vmem:[%s661 + $0x10] sm:$0xff]
  %v665 = vld [vmem:[%s661 + $0x18] sm:$0xff]
  %v666 = vld [vmem:[%s661 + $0x20] sm:$0xff]
  %v667 = vld [vmem:[%s661 + $0x28] sm:$0xff]
  %v668 = vld [vmem:[%s661 + $0x30] sm:$0xff]
  %v669 = vld [vmem:[%s661 + $0x38] sm:$0xff]
  %v670 = vld [vmem:[%s661 + $0x40] sm:$0xff]
  %v671 = vld [vmem:[%s661 + $0x48] sm:$0xff]
  %v672 = vld [vmem:[%s661 + $0x50] sm:$0xff]
  %v673 = vld [vmem:[%s661 + $0x58] sm:$0xff]
  %v674 = vld [vmem:[%s661 + $0x60] sm:$0xff]
  %v675 = vld [vmem:[%s661 + $0x68] sm:$0xff]
  %v676 = vld [vmem:[%s661 + $0x70] sm:$0xff]
  %v677 = vld [vmem:[%s661 + $0x78] sm:$0xff]
  %v678 = vpack.c.bf16 %v663, %v662
  %v679 = vpack.c.bf16 %v665, %v664
  %v680 = vpack.c.bf16 %v667, %v666
  %v681 = vpack.c.bf16 %v669, %v668
  %v682 = vpack.c.bf16 %v671, %v670
  %v683 = vpack.c.bf16 %v673, %v672
  %v684 = vpack.c.bf16 %v675, %v674
  %v685 = vpack.c.bf16 %v677, %v676
  %s686 = scalar_lea.vmem %s7, 9
  %v687 = vld [vmem:[%s686] sm:$0x1]
  %v689 = vperm.slane %v687, 0
  %691 = vmatpush.bf16.msra.mxu0 %v685
  %692 = vmatpush.bf16.msra.mxu0 %v684
  %693 = vmatpush.bf16.msra.mxu0 %v683
  %694 = vmatpush.bf16.msra.mxu0 %v682
  %695 = vmatpush.bf16.msra.mxu0 %v681
  %696 = vmatpush.bf16.msra.mxu0 %v680
  %697 = vmatpush.bf16.msra.mxu0 %v679
  %698 = vmatpush.bf16.msra.mxu0 %v678
  %699 = vmatmul.bf16.gmra.mxu0 %v224
  %v700 = vpop.f32.mrf.mxu0
  %v701 = vadd.f32 %v689, %v700
  %v702 = vpop.f32.mrf.mxu0
  %v703 = vadd.f32 %v689, %v702
  %704 = vmatmul.bf16.gmra.mxu0 %v225
  %v705 = vpop.f32.mrf.mxu0
  %v706 = vadd.f32 %v689, %v705
  %v707 = vpop.f32.mrf.mxu0
  %v708 = vadd.f32 %v689, %v707
  %709 = vmatmul.bf16.gmra.mxu0 %v226
  %v710 = vpop.f32.mrf.mxu0
  %v711 = vadd.f32 %v689, %v710
  %v712 = vpop.f32.mrf.mxu0
  %713 = vdwg.mxu0
  %714 = vxpose.xlu0.b32.start [1/16] %v648, 128
  %715 = vxpose.xlu0.b32.cont [2/16] %v650, 128
  %716 = vxpose.xlu0.b32.cont [3/16] %v653, 128
  %717 = vxpose.xlu0.b32.cont [4/16] %v655, 128
  %718 = vxpose.xlu0.b32.cont [5/16] %v658, 128
  %719 = vxpose.xlu0.b32.cont [6/16] 0.0, 128
  %720 = vxpose.xlu0.b32.cont [7/16] 0.0, 128
  %721 = vxpose.xlu0.b32.cont [8/16] 0.0, 128
  %722 = vxpose.xlu0.b32.cont [9/16] 0.0, 128
  %723 = vxpose.xlu0.b32.cont [10/16] 0.0, 128
  %724 = vxpose.xlu0.b32.cont [11/16] 0.0, 128
  %725 = vxpose.xlu0.b32.cont [12/16] 0.0, 128
  %726 = vxpose.xlu0.b32.cont [13/16] 0.0, 128
  %727 = vxpose.xlu0.b32.cont [14/16] 0.0, 128
  %728 = vxpose.xlu0.b32.cont [15/16] 0.0, 128
  %729 = vxpose.xlu0.b32.end [16/16] 0.0, 128
  %v730 = vpop.trf.xlu0
  %v731 = vpop.trf.xlu0
  %v732 = vpop.trf.xlu0
  %v733 = vpop.trf.xlu0
  %v734 = vpop.trf.xlu0
  %v735 = vpop.trf.xlu0
  %v736 = vpop.trf.xlu0
  %v737 = vpop.trf.xlu0
  %v738 = vpop.trf.xlu0
  %v739 = vpop.trf.xlu0
  %v740 = vpop.trf.xlu0
  %v741 = vpop.trf.xlu0
  %v742 = vpop.trf.xlu0
  %v743 = vpop.trf.xlu0
  %v744 = vpop.trf.xlu0
  %v745 = vpop.trf.xlu0
  %v746 = vpack.c.bf16 %v597, %v595
  %v747 = vpack.c.bf16 %v602, %v600
  %v748 = vpack.c.bf16 %v605, %v605
  %v749 = vpack.c.bf16 %v731, %v730
  %v750 = vpack.c.bf16 %v733, %v732
  %v752 = vsel %vm405, %v746, 0
  %v755 = vsel %vm405, %v747, 0
  %v758 = vsel %vm405, %v748, 0
  %760 = vmatpush.bf16.msra.mxu0 0
  %761 = vmatpush.bf16.msra.mxu0 0
  %762 = vmatpush.bf16.msra.mxu0 0
  %763 = vmatpush.bf16.msra.mxu0 0
  %764 = vmatpush.bf16.msra.mxu0 0
  %765 = vmatpush.bf16.msra.mxu0 0
  %766 = vmatpush.bf16.msra.mxu0 %v750
  %767 = vmatpush.bf16.msra.mxu0 %v749
  %768 = vmatmul.bf16.gmra.mxu0 %v752
  %v769 = vpop.f32.mrf.mxu0
  %v770 = vadd.f32 0.0, %v769
  %v771 = vpop.f32.mrf.mxu0
  %v772 = vadd.f32 0.0, %v771
  %773 = vmatmul.bf16.gmra.mxu0 %v755
  %v774 = vpop.f32.mrf.mxu0
  %v775 = vadd.f32 0.0, %v774
  %v776 = vpop.f32.mrf.mxu0
  %v777 = vadd.f32 0.0, %v776
  %778 = vmatmul.bf16.gmra.mxu0 %v758
  %v779 = vpop.f32.mrf.mxu0
  %v780 = vadd.f32 0.0, %v779
  %v781 = vpop.f32.mrf.mxu0
  %782 = vdwg.mxu0
  %v783 = vmul.f32 %v770, 0.17677669
  %v784 = vmul.f32 %v772, 0.17677669
  %v785 = vmul.f32 %v775, 0.17677669
  %v786 = vmul.f32 %v777, 0.17677669
  %v787 = vmul.f32 %v780, 0.17677669
  %v788 = vadd.f32 %v783, %v78
  %v789 = vadd.f32 %v784, %v79
  %v790 = vadd.f32 %v785, %v80
  %v791 = vadd.f32 %v786, %v81
  %v792 = vadd.f32 %v787, %v82
  %v793 = vsel %vm448, %v788, -inf
  %794 = vmax.xlane.f32.xlu0 %v793
  %v795 = vpop.xlane.xlu0 %794
  %v796 = vsel %vm448, %v789, -inf
  %797 = vmax.xlane.f32.xlu0 %v796
  %v798 = vpop.xlane.xlu0 %797
  %v799 = vsel %vm448, %v790, -inf
  %800 = vmax.xlane.f32.xlu0 %v799
  %v801 = vpop.xlane.xlu0 %800
  %v802 = vsel %vm448, %v791, -inf
  %803 = vmax.xlane.f32.xlu0 %v802
  %v804 = vpop.xlane.xlu0 %803
  %v805 = vsel %vm448, %v792, -inf
  %806 = vmax.xlane.f32.xlu0 %v805
  %v807 = vpop.xlane.xlu0 %806
  %v808 = vsub.f32 %v788, %v795
  %v809 = vsub.f32 %v789, %v798
  %v810 = vsub.f32 %v790, %v801
  %v811 = vsub.f32 %v791, %v804
  %v812 = vsub.f32 %v792, %v807
  %v813 = vmul.f32 %v808, 1.442695
  %v814 = vpow.pop %v813
  %v815 = vmul.f32 %v809, 1.442695
  %v816 = vpow.pop %v815
  %v817 = vmul.f32 %v810, 1.442695
  %v818 = vpow.pop %v817
  %v819 = vmul.f32 %v811, 1.442695
  %v820 = vpow.pop %v819
  %v821 = vmul.f32 %v812, 1.442695
  %v822 = vpow.pop %v821
  %v823 = vsel %vm448, %v814, 0.0
  %824 = vadd.xlane.f32.xlu0 %v823
  %v825 = vpop.xlane.xlu0 %824
  %v826 = vsel %vm448, %v816, 0.0
  %827 = vadd.xlane.f32.xlu0 %v826
  %v828 = vpop.xlane.xlu0 %827
  %v829 = vsel %vm448, %v818, 0.0
  %830 = vadd.xlane.f32.xlu0 %v829
  %v831 = vpop.xlane.xlu0 %830
  %v832 = vsel %vm448, %v820, 0.0
  %833 = vadd.xlane.f32.xlu0 %v832
  %v834 = vpop.xlane.xlu0 %833
  %v835 = vsel %vm448, %v822, 0.0
  %836 = vadd.xlane.f32.xlu0 %v835
  %v837 = vpop.xlane.xlu0 %836
  %v838 = vrcp.pop %v825
  %v839 = vrcp.pop %v828
  %v840 = vrcp.pop %v831
  %v841 = vrcp.pop %v834
  %v842 = vrcp.pop %v837
  %v843 = vmul.f32 %v814, %v838
  %v844 = vmul.f32 %v816, %v839
  %v845 = vmul.f32 %v818, %v840
  %v846 = vmul.f32 %v820, %v841
  %v847 = vmul.f32 %v822, %v842
  %v848 = vpack.c.bf16 %v844, %v843
  %v849 = vpack.c.bf16 %v846, %v845
  %v850 = vpack.c.bf16 %v847, %v847
  %v851 = vpack.c.bf16 %v703, %v701
  %v852 = vpack.c.bf16 %v708, %v706
  %v853 = vpack.c.bf16 %v711, %v711
  %v855 = vsel %vm448, %v848, 0
  %v858 = vsel %vm448, %v849, 0
  %v861 = vsel %vm448, %v850, 0
  %v864 = vsel %vm519, %v853, 0
  %866 = vmatpush.bf16.msra.mxu0 0
  %867 = vmatpush.bf16.msra.mxu0 0
  %868 = vmatpush.bf16.msra.mxu0 0
  %869 = vmatpush.bf16.msra.mxu0 0
  %870 = vmatpush.bf16.msra.mxu0 0
  %871 = vmatpush.bf16.msra.mxu0 %v864
  %872 = vmatpush.bf16.msra.mxu0 %v852
  %873 = vmatpush.bf16.msra.mxu0 %v851
  %874 = vmatmul.bf16.gmra.mxu0 %v855
  %v875 = vpop.f32.mrf.mxu0
  %v876 = vadd.f32 0.0, %v875
  %v877 = vpop.f32.mrf.mxu0
  %v878 = vadd.f32 0.0, %v877
  %879 = vmatmul.bf16.gmra.mxu0 %v858
  %v880 = vpop.f32.mrf.mxu0
  %v881 = vadd.f32 0.0, %v880
  %v882 = vpop.f32.mrf.mxu0
  %v883 = vadd.f32 0.0, %v882
  %884 = vmatmul.bf16.gmra.mxu0 %v861
  %v885 = vpop.f32.mrf.mxu0
  %v886 = vadd.f32 0.0, %v885
  %v887 = vpop.f32.mrf.mxu0
  %888 = vdwg.mxu0
  %s889 = scalar_lea.vmem %s8, 32
  %v890 = vld [vmem:[%s889] sm:$0xff]
  %v891 = vld [vmem:[%s889 + $0x8] sm:$0xff]
  %v892 = vld [vmem:[%s889 + $0x10] sm:$0xff]
  %v893 = vld [vmem:[%s889 + $0x18] sm:$0xff]
  %v894 = vpack.c.bf16 %v878, %v876
  %v895 = vpack.c.bf16 %v883, %v881
  %v896 = vpack.c.bf16 %v886, %v886
  %v897 = vpack.c.bf16 %v891, %v890
  %v898 = vpack.c.bf16 %v893, %v892
  %v900 = vsel %vm405, %v894, 0
  %v903 = vsel %vm405, %v895, 0
  %v906 = vsel %vm405, %v896, 0
  %908 = vmatpush.bf16.msra.mxu0 0
  %909 = vmatpush.bf16.msra.mxu0 0
  %910 = vmatpush.bf16.msra.mxu0 0
  %911 = vmatpush.bf16.msra.mxu0 0
  %912 = vmatpush.bf16.msra.mxu0 0
  %913 = vmatpush.bf16.msra.mxu0 0
  %914 = vmatpush.bf16.msra.mxu0 %v898
  %915 = vmatpush.bf16.msra.mxu0 %v897
  %916 = vmatmul.bf16.gmra.mxu0 %v900
  %v917 = vpop.f32.mrf.mxu0
  %v918 = vadd.f32 0.0, %v917
  %v919 = vpop.f32.mrf.mxu0
  %v920 = vadd.f32 0.0, %v919
  %921 = vmatmul.bf16.gmra.mxu0 %v903
  %v922 = vpop.f32.mrf.mxu0
  %v923 = vadd.f32 0.0, %v922
  %v924 = vpop.f32.mrf.mxu0
  %v925 = vadd.f32 0.0, %v924
  %926 = vmatmul.bf16.gmra.mxu0 %v906
  %v927 = vpop.f32.mrf.mxu0
  %v928 = vadd.f32 0.0, %v927
  %v929 = vpop.f32.mrf.mxu0
  %930 = vdwg.mxu0
  %v932 = vsel %vm405, %v550, 0
  %v935 = vsel %vm405, %v551, 0
  %v938 = vsel %vm405, %v552, 0
  %940 = vmatpush.bf16.msra.mxu0 0
  %941 = vmatpush.bf16.msra.mxu0 0
  %942 = vmatpush.bf16.msra.mxu0 0
  %943 = vmatpush.bf16.msra.mxu0 0
  %944 = vmatpush.bf16.msra.mxu0 0
  %945 = vmatpush.bf16.msra.mxu0 0
  %946 = vmatpush.bf16.msra.mxu0 %v554
  %947 = vmatpush.bf16.msra.mxu0 %v553
  %948 = vmatmul.bf16.gmra.mxu0 %v932
  %v949 = vpop.f32.mrf.mxu0
  %v950 = vadd.f32 %v918, %v949
  %v951 = vpop.f32.mrf.mxu0
  %v952 = vadd.f32 %v920, %v951
  %953 = vmatmul.bf16.gmra.mxu0 %v935
  %v954 = vpop.f32.mrf.mxu0
  %v955 = vadd.f32 %v923, %v954
  %v956 = vpop.f32.mrf.mxu0
  %v957 = vadd.f32 %v925, %v956
  %958 = vmatmul.bf16.gmra.mxu0 %v938
  %v959 = vpop.f32.mrf.mxu0
  %v960 = vadd.f32 %v928, %v959
  %v961 = vpop.f32.mrf.mxu0
  %962 = vdwg.mxu0
  %s963 = scalar_lea.vmem %s6, 256
  %v964 = vld [vmem:[%s963] sm:$0xff]
  %v965 = vld [vmem:[%s963 + $0x8] sm:$0xff]
  %v966 = vld [vmem:[%s963 + $0x10] sm:$0xff]
  %v967 = vld [vmem:[%s963 + $0x18] sm:$0xff]
  %v968 = vld [vmem:[%s963 + $0x20] sm:$0xff]
  %v969 = vld [vmem:[%s963 + $0x28] sm:$0xff]
  %v970 = vld [vmem:[%s963 + $0x30] sm:$0xff]
  %v971 = vld [vmem:[%s963 + $0x38] sm:$0xff]
  %v972 = vld [vmem:[%s963 + $0x40] sm:$0xff]
  %v973 = vld [vmem:[%s963 + $0x48] sm:$0xff]
  %v974 = vld [vmem:[%s963 + $0x50] sm:$0xff]
  %v975 = vld [vmem:[%s963 + $0x58] sm:$0xff]
  %v976 = vld [vmem:[%s963 + $0x60] sm:$0xff]
  %v977 = vld [vmem:[%s963 + $0x68] sm:$0xff]
  %v978 = vld [vmem:[%s963 + $0x70] sm:$0xff]
  %v979 = vld [vmem:[%s963 + $0x78] sm:$0xff]
  %v980 = vpack.c.bf16 %v965, %v964
  %v981 = vpack.c.bf16 %v967, %v966
  %v982 = vpack.c.bf16 %v969, %v968
  %v983 = vpack.c.bf16 %v971, %v970
  %v984 = vpack.c.bf16 %v973, %v972
  %v985 = vpack.c.bf16 %v975, %v974
  %v986 = vpack.c.bf16 %v977, %v976
  %v987 = vpack.c.bf16 %v979, %v978
  %s988 = scalar_lea.vmem %s7, 2
  %v989 = vld [vmem:[%s988] sm:$0x1]
  %v991 = vperm.slane %v989, 0
  %993 = vmatpush.bf16.msra.mxu0 %v987
  %994 = vmatpush.bf16.msra.mxu0 %v986
  %995 = vmatpush.bf16.msra.mxu0 %v985
  %996 = vmatpush.bf16.msra.mxu0 %v984
  %997 = vmatpush.bf16.msra.mxu0 %v983
  %998 = vmatpush.bf16.msra.mxu0 %v982
  %999 = vmatpush.bf16.msra.mxu0 %v981
  %1000 = vmatpush.bf16.msra.mxu0 %v980
  %1001 = vmatmul.bf16.gmra.mxu0 %v224
  %v1002 = vpop.f32.mrf.mxu0
  %v1003 = vadd.f32 %v991, %v1002
  %v1004 = vpop.f32.mrf.mxu0
  %v1005 = vadd.f32 %v991, %v1004
  %1006 = vmatmul.bf16.gmra.mxu0 %v225
  %v1007 = vpop.f32.mrf.mxu0
  %v1008 = vadd.f32 %v991, %v1007
  %v1009 = vpop.f32.mrf.mxu0
  %v1010 = vadd.f32 %v991, %v1009
  %1011 = vmatmul.bf16.gmra.mxu0 %v226
  %v1012 = vpop.f32.mrf.mxu0
  %v1013 = vadd.f32 %v991, %v1012
  %v1014 = vpop.f32.mrf.mxu0
  %1015 = vdwg.mxu0
  %s1016 = scalar_lea.vmem %s6, 768
  %v1017 = vld [vmem:[%s1016] sm:$0xff]
  %v1018 = vld [vmem:[%s1016 + $0x8] sm:$0xff]
  %v1019 = vld [vmem:[%s1016 + $0x10] sm:$0xff]
  %v1020 = vld [vmem:[%s1016 + $0x18] sm:$0xff]
  %v1021 = vld [vmem:[%s1016 + $0x20] sm:$0xff]
  %v1022 = vld [vmem:[%s1016 + $0x28] sm:$0xff]
  %v1023 = vld [vmem:[%s1016 + $0x30] sm:$0xff]
  %v1024 = vld [vmem:[%s1016 + $0x38] sm:$0xff]
  %v1025 = vld [vmem:[%s1016 + $0x40] sm:$0xff]
  %v1026 = vld [vmem:[%s1016 + $0x48] sm:$0xff]
  %v1027 = vld [vmem:[%s1016 + $0x50] sm:$0xff]
  %v1028 = vld [vmem:[%s1016 + $0x58] sm:$0xff]
  %v1029 = vld [vmem:[%s1016 + $0x60] sm:$0xff]
  %v1030 = vld [vmem:[%s1016 + $0x68] sm:$0xff]
  %v1031 = vld [vmem:[%s1016 + $0x70] sm:$0xff]
  %v1032 = vld [vmem:[%s1016 + $0x78] sm:$0xff]
  %v1033 = vpack.c.bf16 %v1018, %v1017
  %v1034 = vpack.c.bf16 %v1020, %v1019
  %v1035 = vpack.c.bf16 %v1022, %v1021
  %v1036 = vpack.c.bf16 %v1024, %v1023
  %v1037 = vpack.c.bf16 %v1026, %v1025
  %v1038 = vpack.c.bf16 %v1028, %v1027
  %v1039 = vpack.c.bf16 %v1030, %v1029
  %v1040 = vpack.c.bf16 %v1032, %v1031
  %s1041 = scalar_lea.vmem %s7, 6
  %v1042 = vld [vmem:[%s1041] sm:$0x1]
  %v1044 = vperm.slane %v1042, 0
  %1046 = vmatpush.bf16.msra.mxu0 %v1040
  %1047 = vmatpush.bf16.msra.mxu0 %v1039
  %1048 = vmatpush.bf16.msra.mxu0 %v1038
  %1049 = vmatpush.bf16.msra.mxu0 %v1037
  %1050 = vmatpush.bf16.msra.mxu0 %v1036
  %1051 = vmatpush.bf16.msra.mxu0 %v1035
  %1052 = vmatpush.bf16.msra.mxu0 %v1034
  %1053 = vmatpush.bf16.msra.mxu0 %v1033
  %1054 = vmatmul.bf16.gmra.mxu0 %v224
  %v1055 = vpop.f32.mrf.mxu0
  %v1056 = vadd.f32 %v1044, %v1055
  %v1057 = vpop.f32.mrf.mxu0
  %v1058 = vadd.f32 %v1044, %v1057
  %1059 = vmatmul.bf16.gmra.mxu0 %v225
  %v1060 = vpop.f32.mrf.mxu0
  %v1061 = vadd.f32 %v1044, %v1060
  %v1062 = vpop.f32.mrf.mxu0
  %v1063 = vadd.f32 %v1044, %v1062
  %1064 = vmatmul.bf16.gmra.mxu0 %v226
  %v1065 = vpop.f32.mrf.mxu0
  %v1066 = vadd.f32 %v1044, %v1065
  %v1067 = vpop.f32.mrf.mxu0
  %1068 = vdwg.mxu0
  %s1069 = scalar_lea.vmem %s6, 1280
  %v1070 = vld [vmem:[%s1069] sm:$0xff]
  %v1071 = vld [vmem:[%s1069 + $0x8] sm:$0xff]
  %v1072 = vld [vmem:[%s1069 + $0x10] sm:$0xff]
  %v1073 = vld [vmem:[%s1069 + $0x18] sm:$0xff]
  %v1074 = vld [vmem:[%s1069 + $0x20] sm:$0xff]
  %v1075 = vld [vmem:[%s1069 + $0x28] sm:$0xff]
  %v1076 = vld [vmem:[%s1069 + $0x30] sm:$0xff]
  %v1077 = vld [vmem:[%s1069 + $0x38] sm:$0xff]
  %v1078 = vld [vmem:[%s1069 + $0x40] sm:$0xff]
  %v1079 = vld [vmem:[%s1069 + $0x48] sm:$0xff]
  %v1080 = vld [vmem:[%s1069 + $0x50] sm:$0xff]
  %v1081 = vld [vmem:[%s1069 + $0x58] sm:$0xff]
  %v1082 = vld [vmem:[%s1069 + $0x60] sm:$0xff]
  %v1083 = vld [vmem:[%s1069 + $0x68] sm:$0xff]
  %v1084 = vld [vmem:[%s1069 + $0x70] sm:$0xff]
  %v1085 = vld [vmem:[%s1069 + $0x78] sm:$0xff]
  %v1086 = vpack.c.bf16 %v1071, %v1070
  %v1087 = vpack.c.bf16 %v1073, %v1072
  %v1088 = vpack.c.bf16 %v1075, %v1074
  %v1089 = vpack.c.bf16 %v1077, %v1076
  %v1090 = vpack.c.bf16 %v1079, %v1078
  %v1091 = vpack.c.bf16 %v1081, %v1080
  %v1092 = vpack.c.bf16 %v1083, %v1082
  %v1093 = vpack.c.bf16 %v1085, %v1084
  %s1094 = scalar_lea.vmem %s7, 10
  %v1095 = vld [vmem:[%s1094] sm:$0x1]
  %v1097 = vperm.slane %v1095, 0
  %1099 = vmatpush.bf16.msra.mxu0 %v1093
  %1100 = vmatpush.bf16.msra.mxu0 %v1092
  %1101 = vmatpush.bf16.msra.mxu0 %v1091
  %1102 = vmatpush.bf16.msra.mxu0 %v1090
  %1103 = vmatpush.bf16.msra.mxu0 %v1089
  %1104 = vmatpush.bf16.msra.mxu0 %v1088
  %1105 = vmatpush.bf16.msra.mxu0 %v1087
  %1106 = vmatpush.bf16.msra.mxu0 %v1086
  %1107 = vmatmul.bf16.gmra.mxu0 %v224
  %v1108 = vpop.f32.mrf.mxu0
  %v1109 = vadd.f32 %v1097, %v1108
  %v1110 = vpop.f32.mrf.mxu0
  %v1111 = vadd.f32 %v1097, %v1110
  %1112 = vmatmul.bf16.gmra.mxu0 %v225
  %v1113 = vpop.f32.mrf.mxu0
  %v1114 = vadd.f32 %v1097, %v1113
  %v1115 = vpop.f32.mrf.mxu0
  %v1116 = vadd.f32 %v1097, %v1115
  %1117 = vmatmul.bf16.gmra.mxu0 %v226
  %v1118 = vpop.f32.mrf.mxu0
  %v1119 = vadd.f32 %v1097, %v1118
  %v1120 = vpop.f32.mrf.mxu0
  %1121 = vdwg.mxu0
  %1122 = vxpose.xlu0.b32.start [1/16] %v1056, 128
  %1123 = vxpose.xlu0.b32.cont [2/16] %v1058, 128
  %1124 = vxpose.xlu0.b32.cont [3/16] %v1061, 128
  %1125 = vxpose.xlu0.b32.cont [4/16] %v1063, 128
  %1126 = vxpose.xlu0.b32.cont [5/16] %v1066, 128
  %1127 = vxpose.xlu0.b32.cont [6/16] 0.0, 128
  %1128 = vxpose.xlu0.b32.cont [7/16] 0.0, 128
  %1129 = vxpose.xlu0.b32.cont [8/16] 0.0, 128
  %1130 = vxpose.xlu0.b32.cont [9/16] 0.0, 128
  %1131 = vxpose.xlu0.b32.cont [10/16] 0.0, 128
  %1132 = vxpose.xlu0.b32.cont [11/16] 0.0, 128
  %1133 = vxpose.xlu0.b32.cont [12/16] 0.0, 128
  %1134 = vxpose.xlu0.b32.cont [13/16] 0.0, 128
  %1135 = vxpose.xlu0.b32.cont [14/16] 0.0, 128
  %1136 = vxpose.xlu0.b32.cont [15/16] 0.0, 128
  %1137 = vxpose.xlu0.b32.end [16/16] 0.0, 128
  %v1138 = vpop.trf.xlu0
  %v1139 = vpop.trf.xlu0
  %v1140 = vpop.trf.xlu0
  %v1141 = vpop.trf.xlu0
  %v1142 = vpop.trf.xlu0
  %v1143 = vpop.trf.xlu0
  %v1144 = vpop.trf.xlu0
  %v1145 = vpop.trf.xlu0
  %v1146 = vpop.trf.xlu0
  %v1147 = vpop.trf.xlu0
  %v1148 = vpop.trf.xlu0
  %v1149 = vpop.trf.xlu0
  %v1150 = vpop.trf.xlu0
  %v1151 = vpop.trf.xlu0
  %v1152 = vpop.trf.xlu0
  %v1153 = vpop.trf.xlu0
  %v1154 = vpack.c.bf16 %v1005, %v1003
  %v1155 = vpack.c.bf16 %v1010, %v1008
  %v1156 = vpack.c.bf16 %v1013, %v1013
  %v1157 = vpack.c.bf16 %v1139, %v1138
  %v1158 = vpack.c.bf16 %v1141, %v1140
  %v1160 = vsel %vm405, %v1154, 0
  %v1163 = vsel %vm405, %v1155, 0
  %v1166 = vsel %vm405, %v1156, 0
  %1168 = vmatpush.bf16.msra.mxu0 0
  %1169 = vmatpush.bf16.msra.mxu0 0
  %1170 = vmatpush.bf16.msra.mxu0 0
  %1171 = vmatpush.bf16.msra.mxu0 0
  %1172 = vmatpush.bf16.msra.mxu0 0
  %1173 = vmatpush.bf16.msra.mxu0 0
  %1174 = vmatpush.bf16.msra.mxu0 %v1158
  %1175 = vmatpush.bf16.msra.mxu0 %v1157
  %1176 = vmatmul.bf16.gmra.mxu0 %v1160
  %v1177 = vpop.f32.mrf.mxu0
  %v1178 = vadd.f32 0.0, %v1177
  %v1179 = vpop.f32.mrf.mxu0
  %v1180 = vadd.f32 0.0, %v1179
  %1181 = vmatmul.bf16.gmra.mxu0 %v1163
  %v1182 = vpop.f32.mrf.mxu0
  %v1183 = vadd.f32 0.0, %v1182
  %v1184 = vpop.f32.mrf.mxu0
  %v1185 = vadd.f32 0.0, %v1184
  %1186 = vmatmul.bf16.gmra.mxu0 %v1166
  %v1187 = vpop.f32.mrf.mxu0
  %v1188 = vadd.f32 0.0, %v1187
  %v1189 = vpop.f32.mrf.mxu0
  %1190 = vdwg.mxu0
  %v1191 = vmul.f32 %v1178, 0.17677669
  %v1192 = vmul.f32 %v1180, 0.17677669
  %v1193 = vmul.f32 %v1183, 0.17677669
  %v1194 = vmul.f32 %v1185, 0.17677669
  %v1195 = vmul.f32 %v1188, 0.17677669
  %v1196 = vadd.f32 %v1191, %v78
  %v1197 = vadd.f32 %v1192, %v79
  %v1198 = vadd.f32 %v1193, %v80
  %v1199 = vadd.f32 %v1194, %v81
  %v1200 = vadd.f32 %v1195, %v82
  %v1201 = vsel %vm448, %v1196, -inf
  %1202 = vmax.xlane.f32.xlu0 %v1201
  %v1203 = vpop.xlane.xlu0 %1202
  %v1204 = vsel %vm448, %v1197, -inf
  %1205 = vmax.xlane.f32.xlu0 %v1204
  %v1206 = vpop.xlane.xlu0 %1205
  %v1207 = vsel %vm448, %v1198, -inf
  %1208 = vmax.xlane.f32.xlu0 %v1207
  %v1209 = vpop.xlane.xlu0 %1208
  %v1210 = vsel %vm448, %v1199, -inf
  %1211 = vmax.xlane.f32.xlu0 %v1210
  %v1212 = vpop.xlane.xlu0 %1211
  %v1213 = vsel %vm448, %v1200, -inf
  %1214 = vmax.xlane.f32.xlu0 %v1213
  %v1215 = vpop.xlane.xlu0 %1214
  %v1216 = vsub.f32 %v1196, %v1203
  %v1217 = vsub.f32 %v1197, %v1206
  %v1218 = vsub.f32 %v1198, %v1209
  %v1219 = vsub.f32 %v1199, %v1212
  %v1220 = vsub.f32 %v1200, %v1215
  %v1221 = vmul.f32 %v1216, 1.442695
  %v1222 = vpow.pop %v1221
  %v1223 = vmul.f32 %v1217, 1.442695
  %v1224 = vpow.pop %v1223
  %v1225 = vmul.f32 %v1218, 1.442695
  %v1226 = vpow.pop %v1225
  %v1227 = vmul.f32 %v1219, 1.442695
  %v1228 = vpow.pop %v1227
  %v1229 = vmul.f32 %v1220, 1.442695
  %v1230 = vpow.pop %v1229
  %v1231 = vsel %vm448, %v1222, 0.0
  %1232 = vadd.xlane.f32.xlu0 %v1231
  %v1233 = vpop.xlane.xlu0 %1232
  %v1234 = vsel %vm448, %v1224, 0.0
  %1235 = vadd.xlane.f32.xlu0 %v1234
  %v1236 = vpop.xlane.xlu0 %1235
  %v1237 = vsel %vm448, %v1226, 0.0
  %1238 = vadd.xlane.f32.xlu0 %v1237
  %v1239 = vpop.xlane.xlu0 %1238
  %v1240 = vsel %vm448, %v1228, 0.0
  %1241 = vadd.xlane.f32.xlu0 %v1240
  %v1242 = vpop.xlane.xlu0 %1241
  %v1243 = vsel %vm448, %v1230, 0.0
  %1244 = vadd.xlane.f32.xlu0 %v1243
  %v1245 = vpop.xlane.xlu0 %1244
  %v1246 = vrcp.pop %v1233
  %v1247 = vrcp.pop %v1236
  %v1248 = vrcp.pop %v1239
  %v1249 = vrcp.pop %v1242
  %v1250 = vrcp.pop %v1245
  %v1251 = vmul.f32 %v1222, %v1246
  %v1252 = vmul.f32 %v1224, %v1247
  %v1253 = vmul.f32 %v1226, %v1248
  %v1254 = vmul.f32 %v1228, %v1249
  %v1255 = vmul.f32 %v1230, %v1250
  %v1256 = vpack.c.bf16 %v1252, %v1251
  %v1257 = vpack.c.bf16 %v1254, %v1253
  %v1258 = vpack.c.bf16 %v1255, %v1255
  %v1259 = vpack.c.bf16 %v1111, %v1109
  %v1260 = vpack.c.bf16 %v1116, %v1114
  %v1261 = vpack.c.bf16 %v1119, %v1119
  %v1263 = vsel %vm448, %v1256, 0
  %v1266 = vsel %vm448, %v1257, 0
  %v1269 = vsel %vm448, %v1258, 0
  %v1272 = vsel %vm519, %v1261, 0
  %1274 = vmatpush.bf16.msra.mxu0 0
  %1275 = vmatpush.bf16.msra.mxu0 0
  %1276 = vmatpush.bf16.msra.mxu0 0
  %1277 = vmatpush.bf16.msra.mxu0 0
  %1278 = vmatpush.bf16.msra.mxu0 0
  %1279 = vmatpush.bf16.msra.mxu0 %v1272
  %1280 = vmatpush.bf16.msra.mxu0 %v1260
  %1281 = vmatpush.bf16.msra.mxu0 %v1259
  %1282 = vmatmul.bf16.gmra.mxu0 %v1263
  %v1283 = vpop.f32.mrf.mxu0
  %v1284 = vadd.f32 0.0, %v1283
  %v1285 = vpop.f32.mrf.mxu0
  %v1286 = vadd.f32 0.0, %v1285
  %1287 = vmatmul.bf16.gmra.mxu0 %v1266
  %v1288 = vpop.f32.mrf.mxu0
  %v1289 = vadd.f32 0.0, %v1288
  %v1290 = vpop.f32.mrf.mxu0
  %v1291 = vadd.f32 0.0, %v1290
  %1292 = vmatmul.bf16.gmra.mxu0 %v1269
  %v1293 = vpop.f32.mrf.mxu0
  %v1294 = vadd.f32 0.0, %v1293
  %v1295 = vpop.f32.mrf.mxu0
  %1296 = vdwg.mxu0
  %s1297 = scalar_lea.vmem %s8, 64
  %v1298 = vld [vmem:[%s1297] sm:$0xff]
  %v1299 = vld [vmem:[%s1297 + $0x8] sm:$0xff]
  %v1300 = vld [vmem:[%s1297 + $0x10] sm:$0xff]
  %v1301 = vld [vmem:[%s1297 + $0x18] sm:$0xff]
  %v1302 = vpack.c.bf16 %v1286, %v1284
  %v1303 = vpack.c.bf16 %v1291, %v1289
  %v1304 = vpack.c.bf16 %v1294, %v1294
  %v1305 = vpack.c.bf16 %v1299, %v1298
  %v1306 = vpack.c.bf16 %v1301, %v1300
  %v1308 = vsel %vm405, %v1302, 0
  %v1311 = vsel %vm405, %v1303, 0
  %v1314 = vsel %vm405, %v1304, 0
  %1316 = vmatpush.bf16.msra.mxu0 0
  %1317 = vmatpush.bf16.msra.mxu0 0
  %1318 = vmatpush.bf16.msra.mxu0 0
  %1319 = vmatpush.bf16.msra.mxu0 0
  %1320 = vmatpush.bf16.msra.mxu0 0
  %1321 = vmatpush.bf16.msra.mxu0 0
  %1322 = vmatpush.bf16.msra.mxu0 %v1306
  %1323 = vmatpush.bf16.msra.mxu0 %v1305
  %1324 = vmatmul.bf16.gmra.mxu0 %v1308
  %v1325 = vpop.f32.mrf.mxu0
  %v1326 = vadd.f32 0.0, %v1325
  %v1327 = vpop.f32.mrf.mxu0
  %v1328 = vadd.f32 0.0, %v1327
  %1329 = vmatmul.bf16.gmra.mxu0 %v1311
  %v1330 = vpop.f32.mrf.mxu0
  %v1331 = vadd.f32 0.0, %v1330
  %v1332 = vpop.f32.mrf.mxu0
  %v1333 = vadd.f32 0.0, %v1332
  %1334 = vmatmul.bf16.gmra.mxu0 %v1314
  %v1335 = vpop.f32.mrf.mxu0
  %v1336 = vadd.f32 0.0, %v1335
  %v1337 = vpop.f32.mrf.mxu0
  %1338 = vdwg.mxu0
  %v1339 = vadd.f32 %v950, %v1326
  %v1340 = vadd.f32 %v952, %v1328
  %v1341 = vadd.f32 %v955, %v1331
  %v1342 = vadd.f32 %v957, %v1333
  %v1343 = vadd.f32 %v960, %v1336
  %s1344 = scalar_lea.vmem %s6, 384
  %v1345 = vld [vmem:[%s1344] sm:$0xff]
  %v1346 = vld [vmem:[%s1344 + $0x8] sm:$0xff]
  %v1347 = vld [vmem:[%s1344 + $0x10] sm:$0xff]
  %v1348 = vld [vmem:[%s1344 + $0x18] sm:$0xff]
  %v1349 = vld [vmem:[%s1344 + $0x20] sm:$0xff]
  %v1350 = vld [vmem:[%s1344 + $0x28] sm:$0xff]
  %v1351 = vld [vmem:[%s1344 + $0x30] sm:$0xff]
  %v1352 = vld [vmem:[%s1344 + $0x38] sm:$0xff]
  %v1353 = vld [vmem:[%s1344 + $0x40] sm:$0xff]
  %v1354 = vld [vmem:[%s1344 + $0x48] sm:$0xff]
  %v1355 = vld [vmem:[%s1344 + $0x50] sm:$0xff]
  %v1356 = vld [vmem:[%s1344 + $0x58] sm:$0xff]
  %v1357 = vld [vmem:[%s1344 + $0x60] sm:$0xff]
  %v1358 = vld [vmem:[%s1344 + $0x68] sm:$0xff]
  %v1359 = vld [vmem:[%s1344 + $0x70] sm:$0xff]
  %v1360 = vld [vmem:[%s1344 + $0x78] sm:$0xff]
  %v1361 = vpack.c.bf16 %v1346, %v1345
  %v1362 = vpack.c.bf16 %v1348, %v1347
  %v1363 = vpack.c.bf16 %v1350, %v1349
  %v1364 = vpack.c.bf16 %v1352, %v1351
  %v1365 = vpack.c.bf16 %v1354, %v1353
  %v1366 = vpack.c.bf16 %v1356, %v1355
  %v1367 = vpack.c.bf16 %v1358, %v1357
  %v1368 = vpack.c.bf16 %v1360, %v1359
  %s1369 = scalar_lea.vmem %s7, 3
  %v1370 = vld [vmem:[%s1369] sm:$0x1]
  %v1372 = vperm.slane %v1370, 0
  %1374 = vmatpush.bf16.msra.mxu0 %v1368
  %1375 = vmatpush.bf16.msra.mxu0 %v1367
  %1376 = vmatpush.bf16.msra.mxu0 %v1366
  %1377 = vmatpush.bf16.msra.mxu0 %v1365
  %1378 = vmatpush.bf16.msra.mxu0 %v1364
  %1379 = vmatpush.bf16.msra.mxu0 %v1363
  %1380 = vmatpush.bf16.msra.mxu0 %v1362
  %1381 = vmatpush.bf16.msra.mxu0 %v1361
  %1382 = vmatmul.bf16.gmra.mxu0 %v224
  %v1383 = vpop.f32.mrf.mxu0
  %v1384 = vadd.f32 %v1372, %v1383
  %v1385 = vpop.f32.mrf.mxu0
  %v1386 = vadd.f32 %v1372, %v1385
  %1387 = vmatmul.bf16.gmra.mxu0 %v225
  %v1388 = vpop.f32.mrf.mxu0
  %v1389 = vadd.f32 %v1372, %v1388
  %v1390 = vpop.f32.mrf.mxu0
  %v1391 = vadd.f32 %v1372, %v1390
  %1392 = vmatmul.bf16.gmra.mxu0 %v226
  %v1393 = vpop.f32.mrf.mxu0
  %v1394 = vadd.f32 %v1372, %v1393
  %v1395 = vpop.f32.mrf.mxu0
  %1396 = vdwg.mxu0
  %s1397 = scalar_lea.vmem %s6, 896
  %v1398 = vld [vmem:[%s1397] sm:$0xff]
  %v1399 = vld [vmem:[%s1397 + $0x8] sm:$0xff]
  %v1400 = vld [vmem:[%s1397 + $0x10] sm:$0xff]
  %v1401 = vld [vmem:[%s1397 + $0x18] sm:$0xff]
  %v1402 = vld [vmem:[%s1397 + $0x20] sm:$0xff]
  %v1403 = vld [vmem:[%s1397 + $0x28] sm:$0xff]
  %v1404 = vld [vmem:[%s1397 + $0x30] sm:$0xff]
  %v1405 = vld [vmem:[%s1397 + $0x38] sm:$0xff]
  %v1406 = vld [vmem:[%s1397 + $0x40] sm:$0xff]
  %v1407 = vld [vmem:[%s1397 + $0x48] sm:$0xff]
  %v1408 = vld [vmem:[%s1397 + $0x50] sm:$0xff]
  %v1409 = vld [vmem:[%s1397 + $0x58] sm:$0xff]
  %v1410 = vld [vmem:[%s1397 + $0x60] sm:$0xff]
  %v1411 = vld [vmem:[%s1397 + $0x68] sm:$0xff]
  %v1412 = vld [vmem:[%s1397 + $0x70] sm:$0xff]
  %v1413 = vld [vmem:[%s1397 + $0x78] sm:$0xff]
  %v1414 = vpack.c.bf16 %v1399, %v1398
  %v1415 = vpack.c.bf16 %v1401, %v1400
  %v1416 = vpack.c.bf16 %v1403, %v1402
  %v1417 = vpack.c.bf16 %v1405, %v1404
  %v1418 = vpack.c.bf16 %v1407, %v1406
  %v1419 = vpack.c.bf16 %v1409, %v1408
  %v1420 = vpack.c.bf16 %v1411, %v1410
  %v1421 = vpack.c.bf16 %v1413, %v1412
  %s1422 = scalar_lea.vmem %s7, 7
  %v1423 = vld [vmem:[%s1422] sm:$0x1]
  %v1425 = vperm.slane %v1423, 0
  %1427 = vmatpush.bf16.msra.mxu0 %v1421
  %1428 = vmatpush.bf16.msra.mxu0 %v1420
  %1429 = vmatpush.bf16.msra.mxu0 %v1419
  %1430 = vmatpush.bf16.msra.mxu0 %v1418
  %1431 = vmatpush.bf16.msra.mxu0 %v1417
  %1432 = vmatpush.bf16.msra.mxu0 %v1416
  %1433 = vmatpush.bf16.msra.mxu0 %v1415
  %1434 = vmatpush.bf16.msra.mxu0 %v1414
  %1435 = vmatmul.bf16.gmra.mxu0 %v224
  %v1436 = vpop.f32.mrf.mxu0
  %v1437 = vadd.f32 %v1425, %v1436
  %v1438 = vpop.f32.mrf.mxu0
  %v1439 = vadd.f32 %v1425, %v1438
  %1440 = vmatmul.bf16.gmra.mxu0 %v225
  %v1441 = vpop.f32.mrf.mxu0
  %v1442 = vadd.f32 %v1425, %v1441
  %v1443 = vpop.f32.mrf.mxu0
  %v1444 = vadd.f32 %v1425, %v1443
  %1445 = vmatmul.bf16.gmra.mxu0 %v226
  %v1446 = vpop.f32.mrf.mxu0
  %v1447 = vadd.f32 %v1425, %v1446
  %v1448 = vpop.f32.mrf.mxu0
  %1449 = vdwg.mxu0
  %s1450 = scalar_lea.vmem %s6, 1408
  %v1451 = vld [vmem:[%s1450] sm:$0xff]
  %v1452 = vld [vmem:[%s1450 + $0x8] sm:$0xff]
  %v1453 = vld [vmem:[%s1450 + $0x10] sm:$0xff]
  %v1454 = vld [vmem:[%s1450 + $0x18] sm:$0xff]
  %v1455 = vld [vmem:[%s1450 + $0x20] sm:$0xff]
  %v1456 = vld [vmem:[%s1450 + $0x28] sm:$0xff]
  %v1457 = vld [vmem:[%s1450 + $0x30] sm:$0xff]
  %v1458 = vld [vmem:[%s1450 + $0x38] sm:$0xff]
  %v1459 = vld [vmem:[%s1450 + $0x40] sm:$0xff]
  %v1460 = vld [vmem:[%s1450 + $0x48] sm:$0xff]
  %v1461 = vld [vmem:[%s1450 + $0x50] sm:$0xff]
  %v1462 = vld [vmem:[%s1450 + $0x58] sm:$0xff]
  %v1463 = vld [vmem:[%s1450 + $0x60] sm:$0xff]
  %v1464 = vld [vmem:[%s1450 + $0x68] sm:$0xff]
  %v1465 = vld [vmem:[%s1450 + $0x70] sm:$0xff]
  %v1466 = vld [vmem:[%s1450 + $0x78] sm:$0xff]
  %v1467 = vpack.c.bf16 %v1452, %v1451
  %v1468 = vpack.c.bf16 %v1454, %v1453
  %v1469 = vpack.c.bf16 %v1456, %v1455
  %v1470 = vpack.c.bf16 %v1458, %v1457
  %v1471 = vpack.c.bf16 %v1460, %v1459
  %v1472 = vpack.c.bf16 %v1462, %v1461
  %v1473 = vpack.c.bf16 %v1464, %v1463
  %v1474 = vpack.c.bf16 %v1466, %v1465
  %s1475 = scalar_lea.vmem %s7, 11
  %v1476 = vld [vmem:[%s1475] sm:$0x1]
  %v1478 = vperm.slane %v1476, 0
  %1480 = vmatpush.bf16.msra.mxu0 %v1474
  %1481 = vmatpush.bf16.msra.mxu0 %v1473
  %1482 = vmatpush.bf16.msra.mxu0 %v1472
  %1483 = vmatpush.bf16.msra.mxu0 %v1471
  %1484 = vmatpush.bf16.msra.mxu0 %v1470
  %1485 = vmatpush.bf16.msra.mxu0 %v1469
  %1486 = vmatpush.bf16.msra.mxu0 %v1468
  %1487 = vmatpush.bf16.msra.mxu0 %v1467
  %1488 = vmatmul.bf16.gmra.mxu0 %v224
  %v1489 = vpop.f32.mrf.mxu0
  %v1490 = vadd.f32 %v1478, %v1489
  %v1491 = vpop.f32.mrf.mxu0
  %v1492 = vadd.f32 %v1478, %v1491
  %1493 = vmatmul.bf16.gmra.mxu0 %v225
  %v1494 = vpop.f32.mrf.mxu0
  %v1495 = vadd.f32 %v1478, %v1494
  %v1496 = vpop.f32.mrf.mxu0
  %v1497 = vadd.f32 %v1478, %v1496
  %1498 = vmatmul.bf16.gmra.mxu0 %v226
  %v1499 = vpop.f32.mrf.mxu0
  %v1500 = vadd.f32 %v1478, %v1499
  %v1501 = vpop.f32.mrf.mxu0
  %1502 = vdwg.mxu0
  %1503 = vxpose.xlu0.b32.start [1/16] %v1437, 128
  %1504 = vxpose.xlu0.b32.cont [2/16] %v1439, 128
  %1505 = vxpose.xlu0.b32.cont [3/16] %v1442, 128
  %1506 = vxpose.xlu0.b32.cont [4/16] %v1444, 128
  %1507 = vxpose.xlu0.b32.cont [5/16] %v1447, 128
  %1508 = vxpose.xlu0.b32.cont [6/16] 0.0, 128
  %1509 = vxpose.xlu0.b32.cont [7/16] 0.0, 128
  %1510 = vxpose.xlu0.b32.cont [8/16] 0.0, 128
  %1511 = vxpose.xlu0.b32.cont [9/16] 0.0, 128
  %1512 = vxpose.xlu0.b32.cont [10/16] 0.0, 128
  %1513 = vxpose.xlu0.b32.cont [11/16] 0.0, 128
  %1514 = vxpose.xlu0.b32.cont [12/16] 0.0, 128
  %1515 = vxpose.xlu0.b32.cont [13/16] 0.0, 128
  %1516 = vxpose.xlu0.b32.cont [14/16] 0.0, 128
  %1517 = vxpose.xlu0.b32.cont [15/16] 0.0, 128
  %1518 = vxpose.xlu0.b32.end [16/16] 0.0, 128
  %v1519 = vpop.trf.xlu0
  %v1520 = vpop.trf.xlu0
  %v1521 = vpop.trf.xlu0
  %v1522 = vpop.trf.xlu0
  %v1523 = vpop.trf.xlu0
  %v1524 = vpop.trf.xlu0
  %v1525 = vpop.trf.xlu0
  %v1526 = vpop.trf.xlu0
  %v1527 = vpop.trf.xlu0
  %v1528 = vpop.trf.xlu0
  %v1529 = vpop.trf.xlu0
  %v1530 = vpop.trf.xlu0
  %v1531 = vpop.trf.xlu0
  %v1532 = vpop.trf.xlu0
  %v1533 = vpop.trf.xlu0
  %v1534 = vpop.trf.xlu0
  %v1535 = vpack.c.bf16 %v1386, %v1384
  %v1536 = vpack.c.bf16 %v1391, %v1389
  %v1537 = vpack.c.bf16 %v1394, %v1394
  %v1538 = vpack.c.bf16 %v1520, %v1519
  %v1539 = vpack.c.bf16 %v1522, %v1521
  %v1541 = vsel %vm405, %v1535, 0
  %v1544 = vsel %vm405, %v1536, 0
  %v1547 = vsel %vm405, %v1537, 0
  %1549 = vmatpush.bf16.msra.mxu0 0
  %1550 = vmatpush.bf16.msra.mxu0 0
  %1551 = vmatpush.bf16.msra.mxu0 0
  %1552 = vmatpush.bf16.msra.mxu0 0
  %1553 = vmatpush.bf16.msra.mxu0 0
  %1554 = vmatpush.bf16.msra.mxu0 0
  %1555 = vmatpush.bf16.msra.mxu0 %v1539
  %1556 = vmatpush.bf16.msra.mxu0 %v1538
  %1557 = vmatmul.bf16.gmra.mxu0 %v1541
  %v1558 = vpop.f32.mrf.mxu0
  %v1559 = vadd.f32 0.0, %v1558
  %v1560 = vpop.f32.mrf.mxu0
  %v1561 = vadd.f32 0.0, %v1560
  %1562 = vmatmul.bf16.gmra.mxu0 %v1544
  %v1563 = vpop.f32.mrf.mxu0
  %v1564 = vadd.f32 0.0, %v1563
  %v1565 = vpop.f32.mrf.mxu0
  %v1566 = vadd.f32 0.0, %v1565
  %1567 = vmatmul.bf16.gmra.mxu0 %v1547
  %v1568 = vpop.f32.mrf.mxu0
  %v1569 = vadd.f32 0.0, %v1568
  %v1570 = vpop.f32.mrf.mxu0
  %1571 = vdwg.mxu0
  %v1572 = vmul.f32 %v1559, 0.17677669
  %v1573 = vmul.f32 %v1561, 0.17677669
  %v1574 = vmul.f32 %v1564, 0.17677669
  %v1575 = vmul.f32 %v1566, 0.17677669
  %v1576 = vmul.f32 %v1569, 0.17677669
  %v1577 = vadd.f32 %v1572, %v78
  %v1578 = vadd.f32 %v1573, %v79
  %v1579 = vadd.f32 %v1574, %v80
  %v1580 = vadd.f32 %v1575, %v81
  %v1581 = vadd.f32 %v1576, %v82
  %v1582 = vsel %vm448, %v1577, -inf
  %1583 = vmax.xlane.f32.xlu0 %v1582
  %v1584 = vpop.xlane.xlu0 %1583
  %v1585 = vsel %vm448, %v1578, -inf
  %1586 = vmax.xlane.f32.xlu0 %v1585
  %v1587 = vpop.xlane.xlu0 %1586
  %v1588 = vsel %vm448, %v1579, -inf
  %1589 = vmax.xlane.f32.xlu0 %v1588
  %v1590 = vpop.xlane.xlu0 %1589
  %v1591 = vsel %vm448, %v1580, -inf
  %1592 = vmax.xlane.f32.xlu0 %v1591
  %v1593 = vpop.xlane.xlu0 %1592
  %v1594 = vsel %vm448, %v1581, -inf
  %1595 = vmax.xlane.f32.xlu0 %v1594
  %v1596 = vpop.xlane.xlu0 %1595
  %v1597 = vsub.f32 %v1577, %v1584
  %v1598 = vsub.f32 %v1578, %v1587
  %v1599 = vsub.f32 %v1579, %v1590
  %v1600 = vsub.f32 %v1580, %v1593
  %v1601 = vsub.f32 %v1581, %v1596
  %v1602 = vmul.f32 %v1597, 1.442695
  %v1603 = vpow.pop %v1602
  %v1604 = vmul.f32 %v1598, 1.442695
  %v1605 = vpow.pop %v1604
  %v1606 = vmul.f32 %v1599, 1.442695
  %v1607 = vpow.pop %v1606
  %v1608 = vmul.f32 %v1600, 1.442695
  %v1609 = vpow.pop %v1608
  %v1610 = vmul.f32 %v1601, 1.442695
  %v1611 = vpow.pop %v1610
  %v1612 = vsel %vm448, %v1603, 0.0
  %1613 = vadd.xlane.f32.xlu0 %v1612
  %v1614 = vpop.xlane.xlu0 %1613
  %v1615 = vsel %vm448, %v1605, 0.0
  %1616 = vadd.xlane.f32.xlu0 %v1615
  %v1617 = vpop.xlane.xlu0 %1616
  %v1618 = vsel %vm448, %v1607, 0.0
  %1619 = vadd.xlane.f32.xlu0 %v1618
  %v1620 = vpop.xlane.xlu0 %1619
  %v1621 = vsel %vm448, %v1609, 0.0
  %1622 = vadd.xlane.f32.xlu0 %v1621
  %v1623 = vpop.xlane.xlu0 %1622
  %v1624 = vsel %vm448, %v1611, 0.0
  %1625 = vadd.xlane.f32.xlu0 %v1624
  %v1626 = vpop.xlane.xlu0 %1625
  %v1627 = vrcp.pop %v1614
  %v1628 = vrcp.pop %v1617
  %v1629 = vrcp.pop %v1620
  %v1630 = vrcp.pop %v1623
  %v1631 = vrcp.pop %v1626
  %v1632 = vmul.f32 %v1603, %v1627
  %v1633 = vmul.f32 %v1605, %v1628
  %v1634 = vmul.f32 %v1607, %v1629
  %v1635 = vmul.f32 %v1609, %v1630
  %v1636 = vmul.f32 %v1611, %v1631
  %v1637 = vpack.c.bf16 %v1633, %v1632
  %v1638 = vpack.c.bf16 %v1635, %v1634
  %v1639 = vpack.c.bf16 %v1636, %v1636
  %v1640 = vpack.c.bf16 %v1492, %v1490
  %v1641 = vpack.c.bf16 %v1497, %v1495
  %v1642 = vpack.c.bf16 %v1500, %v1500
  %v1644 = vsel %vm448, %v1637, 0
  %v1647 = vsel %vm448, %v1638, 0
  %v1650 = vsel %vm448, %v1639, 0
  %v1653 = vsel %vm519, %v1642, 0
  %1655 = vmatpush.bf16.msra.mxu0 0
  %1656 = vmatpush.bf16.msra.mxu0 0
  %1657 = vmatpush.bf16.msra.mxu0 0
  %1658 = vmatpush.bf16.msra.mxu0 0
  %1659 = vmatpush.bf16.msra.mxu0 0
  %1660 = vmatpush.bf16.msra.mxu0 %v1653
  %1661 = vmatpush.bf16.msra.mxu0 %v1641
  %1662 = vmatpush.bf16.msra.mxu0 %v1640
  %1663 = vmatmul.bf16.gmra.mxu0 %v1644
  %v1664 = vpop.f32.mrf.mxu0
  %v1665 = vadd.f32 0.0, %v1664
  %v1666 = vpop.f32.mrf.mxu0
  %v1667 = vadd.f32 0.0, %v1666
  %1668 = vmatmul.bf16.gmra.mxu0 %v1647
  %v1669 = vpop.f32.mrf.mxu0
  %v1670 = vadd.f32 0.0, %v1669
  %v1671 = vpop.f32.mrf.mxu0
  %v1672 = vadd.f32 0.0, %v1671
  %1673 = vmatmul.bf16.gmra.mxu0 %v1650
  %v1674 = vpop.f32.mrf.mxu0
  %v1675 = vadd.f32 0.0, %v1674
  %v1676 = vpop.f32.mrf.mxu0
  %1677 = vdwg.mxu0
  %s1678 = scalar_lea.vmem %s8, 96
  %v1679 = vld [vmem:[%s1678] sm:$0xff]
  %v1680 = vld [vmem:[%s1678 + $0x8] sm:$0xff]
  %v1681 = vld [vmem:[%s1678 + $0x10] sm:$0xff]
  %v1682 = vld [vmem:[%s1678 + $0x18] sm:$0xff]
  %v1683 = vpack.c.bf16 %v1667, %v1665
  %v1684 = vpack.c.bf16 %v1672, %v1670
  %v1685 = vpack.c.bf16 %v1675, %v1675
  %v1686 = vpack.c.bf16 %v1680, %v1679
  %v1687 = vpack.c.bf16 %v1682, %v1681
  %v1689 = vsel %vm405, %v1683, 0
  %v1692 = vsel %vm405, %v1684, 0
  %v1695 = vsel %vm405, %v1685, 0
  %1697 = vmatpush.bf16.msra.mxu0 0
  %1698 = vmatpush.bf16.msra.mxu0 0
  %1699 = vmatpush.bf16.msra.mxu0 0
  %1700 = vmatpush.bf16.msra.mxu0 0
  %1701 = vmatpush.bf16.msra.mxu0 0
  %1702 = vmatpush.bf16.msra.mxu0 0
  %1703 = vmatpush.bf16.msra.mxu0 %v1687
  %1704 = vmatpush.bf16.msra.mxu0 %v1686
  %1705 = vmatmul.bf16.gmra.mxu0 %v1689
  %v1706 = vpop.f32.mrf.mxu0
  %v1707 = vadd.f32 0.0, %v1706
  %v1708 = vpop.f32.mrf.mxu0
  %v1709 = vadd.f32 0.0, %v1708
  %1710 = vmatmul.bf16.gmra.mxu0 %v1692
  %v1711 = vpop.f32.mrf.mxu0
  %v1712 = vadd.f32 0.0, %v1711
  %v1713 = vpop.f32.mrf.mxu0
  %v1714 = vadd.f32 0.0, %v1713
  %1715 = vmatmul.bf16.gmra.mxu0 %v1695
  %v1716 = vpop.f32.mrf.mxu0
  %v1717 = vadd.f32 0.0, %v1716
  %v1718 = vpop.f32.mrf.mxu0
  %1719 = vdwg.mxu0
  %v1720 = vadd.f32 %v1339, %v1707
  %v1721 = vadd.f32 %v1340, %v1709
  %v1722 = vadd.f32 %v1341, %v1712
  %v1723 = vadd.f32 %v1342, %v1714
  %v1724 = vadd.f32 %v1343, %v1717
  %v1725 = vadd.f32 %v73, %v1720
  %v1726 = vadd.f32 %v74, %v1721
  %v1727 = vadd.f32 %v75, %v1722
  %v1728 = vadd.f32 %v76, %v1723
  %v1729 = vadd.f32 %v77, %v1724
  %v1730 = vld [vmem:[%s9] sm:$0x1]
  %v1732 = vperm.slane %v1730, 0
  %v1734 = vadd.f32 %v1725, %v1732
  %v1735 = vadd.f32 %v1726, %v1732
  %v1736 = vadd.f32 %v1727, %v1732
  %v1737 = vadd.f32 %v1728, %v1732
  %v1738 = vadd.f32 %v1729, %v1732
  %v1739 = vld [vmem:[%s10] sm:$0x1]
  %v1740 = vld [vmem:[%s11] sm:$0x1]
  %1741 = vadd.xlane.f32.xlu0 %v1734
  %v1742 = vpop.xlane.xlu0 %1741
  %1743 = vadd.xlane.f32.xlu0 %v1735
  %v1744 = vpop.xlane.xlu0 %1743
  %1745 = vadd.xlane.f32.xlu0 %v1736
  %v1746 = vpop.xlane.xlu0 %1745
  %1747 = vadd.xlane.f32.xlu0 %v1737
  %v1748 = vpop.xlane.xlu0 %1747
  %1749 = vadd.xlane.f32.xlu0 %v1738
  %v1750 = vpop.xlane.xlu0 %1749
  %v1751 = vmul.f32 %v1742, %v101
  %v1752 = vmul.f32 %v1744, %v101
  %v1753 = vmul.f32 %v1746, %v101
  %v1754 = vmul.f32 %v1748, %v101
  %v1755 = vmul.f32 %v1750, %v101
  %v1756 = vsub.f32 %v1734, %v1751
  %v1757 = vsub.f32 %v1735, %v1752
  %v1758 = vsub.f32 %v1736, %v1753
  %v1759 = vsub.f32 %v1737, %v1754
  %v1760 = vsub.f32 %v1738, %v1755
  %v1761 = vmul.f32 %v1756, %v1756
  %v1762 = vmul.f32 %v1757, %v1757
  %v1763 = vmul.f32 %v1758, %v1758
  %v1764 = vmul.f32 %v1759, %v1759
  %v1765 = vmul.f32 %v1760, %v1760
  %1766 = vadd.xlane.f32.xlu0 %v1761
  %v1767 = vpop.xlane.xlu0 %1766
  %1768 = vadd.xlane.f32.xlu0 %v1762
  %v1769 = vpop.xlane.xlu0 %1768
  %1770 = vadd.xlane.f32.xlu0 %v1763
  %v1771 = vpop.xlane.xlu0 %1770
  %1772 = vadd.xlane.f32.xlu0 %v1764
  %v1773 = vpop.xlane.xlu0 %1772
  %1774 = vadd.xlane.f32.xlu0 %v1765
  %v1775 = vpop.xlane.xlu0 %1774
  %v1776 = vmul.f32 %v1767, %v101
  %v1777 = vmul.f32 %v1769, %v101
  %v1778 = vmul.f32 %v1771, %v101
  %v1779 = vmul.f32 %v1773, %v101
  %v1780 = vmul.f32 %v1775, %v101
  %v1781 = vadd.f32 %v1776, 1e-05
  %v1782 = vadd.f32 %v1777, 1e-05
  %v1783 = vadd.f32 %v1778, 1e-05
  %v1784 = vadd.f32 %v1779, 1e-05
  %v1785 = vadd.f32 %v1780, 1e-05
  %v1786 = vrsqrt.pop %v1781
  %v1787 = vmul.f32 %v1786, %v1781
  %v1788 = vmul.f32 %v1787, %v1786
  %v1789 = vmul.f32 0.5, %v1788
  %v1790 = vsub.f32 1.5, %v1789
  %v1791 = vmul.f32 %v1786, %v1790
  %vm1792 = vweird.f32 %v1781
  %vm1793 = vweird.f32 %v1786
  %vm1794 = vmor %vm1792, %vm1793
  %v1795 = vsel %vm1794, %v1786, %v1791
  %v1796 = vrsqrt.pop %v1782
  %v1797 = vmul.f32 %v1796, %v1782
  %v1798 = vmul.f32 %v1797, %v1796
  %v1799 = vmul.f32 0.5, %v1798
  %v1800 = vsub.f32 1.5, %v1799
  %v1801 = vmul.f32 %v1796, %v1800
  %vm1802 = vweird.f32 %v1782
  %vm1803 = vweird.f32 %v1796
  %vm1804 = vmor %vm1802, %vm1803
  %v1805 = vsel %vm1804, %v1796, %v1801
  %v1806 = vrsqrt.pop %v1783
  %v1807 = vmul.f32 %v1806, %v1783
  %v1808 = vmul.f32 %v1807, %v1806
  %v1809 = vmul.f32 0.5, %v1808
  %v1810 = vsub.f32 1.5, %v1809
  %v1811 = vmul.f32 %v1806, %v1810
  %vm1812 = vweird.f32 %v1783
  %vm1813 = vweird.f32 %v1806
  %vm1814 = vmor %vm1812, %vm1813
  %v1815 = vsel %vm1814, %v1806, %v1811
  %v1816 = vrsqrt.pop %v1784
  %v1817 = vmul.f32 %v1816, %v1784
  %v1818 = vmul.f32 %v1817, %v1816
  %v1819 = vmul.f32 0.5, %v1818
  %v1820 = vsub.f32 1.5, %v1819
  %v1821 = vmul.f32 %v1816, %v1820
  %vm1822 = vweird.f32 %v1784
  %vm1823 = vweird.f32 %v1816
  %vm1824 = vmor %vm1822, %vm1823
  %v1825 = vsel %vm1824, %v1816, %v1821
  %v1826 = vrsqrt.pop %v1785
  %v1827 = vmul.f32 %v1826, %v1785
  %v1828 = vmul.f32 %v1827, %v1826
  %v1829 = vmul.f32 0.5, %v1828
  %v1830 = vsub.f32 1.5, %v1829
  %v1831 = vmul.f32 %v1826, %v1830
  %vm1832 = vweird.f32 %v1785
  %vm1833 = vweird.f32 %v1826
  %vm1834 = vmor %vm1832, %vm1833
  %v1835 = vsel %vm1834, %v1826, %v1831
  %v1836 = vmul.f32 %v1756, %v1795
  %v1837 = vmul.f32 %v1757, %v1805
  %v1838 = vmul.f32 %v1758, %v1815
  %v1839 = vmul.f32 %v1759, %v1825
  %v1840 = vmul.f32 %v1760, %v1835
  %v1842 = vperm.slane %v1739, 0
  %v1844 = vmul.f32 %v1836, %v1842
  %v1845 = vmul.f32 %v1837, %v1842
  %v1846 = vmul.f32 %v1838, %v1842
  %v1847 = vmul.f32 %v1839, %v1842
  %v1848 = vmul.f32 %v1840, %v1842
  %v1850 = vperm.slane %v1740, 0
  %v1852 = vadd.f32 %v1844, %v1850
  %v1853 = vadd.f32 %v1845, %v1850
  %v1854 = vadd.f32 %v1846, %v1850
  %v1855 = vadd.f32 %v1847, %v1850
  %v1856 = vadd.f32 %v1848, %v1850
  %v1857 = vld [vmem:[%s12] sm:$0xff]
  %v1858 = vld [vmem:[%s12 + $0x8] sm:$0xff]
  %v1859 = vld [vmem:[%s12 + $0x10] sm:$0xff]
  %v1860 = vld [vmem:[%s12 + $0x18] sm:$0xff]
  %v1861 = vld [vmem:[%s12 + $0x20] sm:$0xff]
  %v1862 = vld [vmem:[%s12 + $0x28] sm:$0xff]
  %v1863 = vld [vmem:[%s12 + $0x30] sm:$0xff]
  %v1864 = vld [vmem:[%s12 + $0x38] sm:$0xff]
  %v1865 = vld [vmem:[%s12 + $0x40] sm:$0xff]
  %v1866 = vld [vmem:[%s12 + $0x48] sm:$0xff]
  %v1867 = vld [vmem:[%s12 + $0x50] sm:$0xff]
  %v1868 = vld [vmem:[%s12 + $0x58] sm:$0xff]
  %v1869 = vld [vmem:[%s12 + $0x60] sm:$0xff]
  %v1870 = vld [vmem:[%s12 + $0x68] sm:$0xff]
  %v1871 = vld [vmem:[%s12 + $0x70] sm:$0xff]
  %v1872 = vld [vmem:[%s12 + $0x78] sm:$0xff]
  %v1873 = vld [vmem:[%s12 + $0x80] sm:$0xff]
  %v1874 = vld [vmem:[%s12 + $0x88] sm:$0xff]
  %v1875 = vld [vmem:[%s12 + $0x90] sm:$0xff]
  %v1876 = vld [vmem:[%s12 + $0x98] sm:$0xff]
  %v1877 = vld [vmem:[%s12 + $0xa0] sm:$0xff]
  %v1878 = vld [vmem:[%s12 + $0xa8] sm:$0xff]
  %v1879 = vld [vmem:[%s12 + $0xb0] sm:$0xff]
  %v1880 = vld [vmem:[%s12 + $0xb8] sm:$0xff]
  %v1881 = vld [vmem:[%s12 + $0xc0] sm:$0xff]
  %v1882 = vld [vmem:[%s12 + $0xc8] sm:$0xff]
  %v1883 = vld [vmem:[%s12 + $0xd0] sm:$0xff]
  %v1884 = vld [vmem:[%s12 + $0xd8] sm:$0xff]
  %v1885 = vld [vmem:[%s12 + $0xe0] sm:$0xff]
  %v1886 = vld [vmem:[%s12 + $0xe8] sm:$0xff]
  %v1887 = vld [vmem:[%s12 + $0xf0] sm:$0xff]
  %v1888 = vld [vmem:[%s12 + $0xf8] sm:$0xff]
  %v1889 = vld [vmem:[%s12 + $0x100] sm:$0xff]
  %v1890 = vld [vmem:[%s12 + $0x108] sm:$0xff]
  %v1891 = vld [vmem:[%s12 + $0x110] sm:$0xff]
  %v1892 = vld [vmem:[%s12 + $0x118] sm:$0xff]
  %v1893 = vld [vmem:[%s12 + $0x120] sm:$0xff]
  %v1894 = vld [vmem:[%s12 + $0x128] sm:$0xff]
  %v1895 = vld [vmem:[%s12 + $0x130] sm:$0xff]
  %v1896 = vld [vmem:[%s12 + $0x138] sm:$0xff]
  %v1897 = vld [vmem:[%s12 + $0x140] sm:$0xff]
  %v1898 = vld [vmem:[%s12 + $0x148] sm:$0xff]
  %v1899 = vld [vmem:[%s12 + $0x150] sm:$0xff]
  %v1900 = vld [vmem:[%s12 + $0x158] sm:$0xff]
  %v1901 = vld [vmem:[%s12 + $0x160] sm:$0xff]
  %v1902 = vld [vmem:[%s12 + $0x168] sm:$0xff]
  %v1903 = vld [vmem:[%s12 + $0x170] sm:$0xff]
  %v1904 = vld [vmem:[%s12 + $0x178] sm:$0xff]
  %v1905 = vld [vmem:[%s12 + $0x180] sm:$0xff]
  %v1906 = vld [vmem:[%s12 + $0x188] sm:$0xff]
  %v1907 = vld [vmem:[%s12 + $0x190] sm:$0xff]
  %v1908 = vld [vmem:[%s12 + $0x198] sm:$0xff]
  %v1909 = vld [vmem:[%s12 + $0x1a0] sm:$0xff]
  %v1910 = vld [vmem:[%s12 + $0x1a8] sm:$0xff]
  %v1911 = vld [vmem:[%s12 + $0x1b0] sm:$0xff]
  %v1912 = vld [vmem:[%s12 + $0x1b8] sm:$0xff]
  %v1913 = vld [vmem:[%s12 + $0x1c0] sm:$0xff]
  %v1914 = vld [vmem:[%s12 + $0x1c8] sm:$0xff]
  %v1915 = vld [vmem:[%s12 + $0x1d0] sm:$0xff]
  %v1916 = vld [vmem:[%s12 + $0x1d8] sm:$0xff]
  %v1917 = vld [vmem:[%s12 + $0x1e0] sm:$0xff]
  %v1918 = vld [vmem:[%s12 + $0x1e8] sm:$0xff]
  %v1919 = vld [vmem:[%s12 + $0x1f0] sm:$0xff]
  %v1920 = vld [vmem:[%s12 + $0x1f8] sm:$0xff]
  %v1921 = vpack.c.bf16 %v1853, %v1852
  %v1922 = vpack.c.bf16 %v1855, %v1854
  %v1923 = vpack.c.bf16 %v1856, %v1856
  %v1924 = vpack.c.bf16 %v1861, %v1857
  %v1925 = vpack.c.bf16 %v1862, %v1858
  %v1926 = vpack.c.bf16 %v1863, %v1859
  %v1927 = vpack.c.bf16 %v1864, %v1860
  %v1928 = vpack.c.bf16 %v1869, %v1865
  %v1929 = vpack.c.bf16 %v1870, %v1866
  %v1930 = vpack.c.bf16 %v1871, %v1867
  %v1931 = vpack.c.bf16 %v1872, %v1868
  %v1932 = vpack.c.bf16 %v1877, %v1873
  %v1933 = vpack.c.bf16 %v1878, %v1874
  %v1934 = vpack.c.bf16 %v1879, %v1875
  %v1935 = vpack.c.bf16 %v1880, %v1876
  %v1936 = vpack.c.bf16 %v1885, %v1881
  %v1937 = vpack.c.bf16 %v1886, %v1882
  %v1938 = vpack.c.bf16 %v1887, %v1883
  %v1939 = vpack.c.bf16 %v1888, %v1884
  %v1940 = vpack.c.bf16 %v1893, %v1889
  %v1941 = vpack.c.bf16 %v1894, %v1890
  %v1942 = vpack.c.bf16 %v1895, %v1891
  %v1943 = vpack.c.bf16 %v1896, %v1892
  %v1944 = vpack.c.bf16 %v1901, %v1897
  %v1945 = vpack.c.bf16 %v1902, %v1898
  %v1946 = vpack.c.bf16 %v1903, %v1899
  %v1947 = vpack.c.bf16 %v1904, %v1900
  %v1948 = vpack.c.bf16 %v1909, %v1905
  %v1949 = vpack.c.bf16 %v1910, %v1906
  %v1950 = vpack.c.bf16 %v1911, %v1907
  %v1951 = vpack.c.bf16 %v1912, %v1908
  %v1952 = vpack.c.bf16 %v1917, %v1913
  %v1953 = vpack.c.bf16 %v1918, %v1914
  %v1954 = vpack.c.bf16 %v1919, %v1915
  %v1955 = vpack.c.bf16 %v1920, %v1916
  %v1956 = vld [vmem:[%s13] sm:$0xf]
  %v1958 = vperm.slane %v1956, 0
  %v1959 = vperm.slane %v1956, 1
  %v1960 = vperm.slane %v1956, 2
  %v1961 = vperm.slane %v1956, 3
  %1966 = vmatpush.bf16.msra.mxu0 %v1952
  %1967 = vmatpush.bf16.msra.mxu0 %v1948
  %1968 = vmatpush.bf16.msra.mxu0 %v1944
  %1969 = vmatpush.bf16.msra.mxu0 %v1940
  %1970 = vmatpush.bf16.msra.mxu0 %v1936
  %1971 = vmatpush.bf16.msra.mxu0 %v1932
  %1972 = vmatpush.bf16.msra.mxu0 %v1928
  %1973 = vmatpush.bf16.msra.mxu0 %v1924
  %1974 = vmatmul.bf16.gmra.mxu0 %v1921
  %v1975 = vpop.f32.mrf.mxu0
  %v1976 = vadd.f32 %v1958, %v1975
  %v1977 = vpop.f32.mrf.mxu0
  %v1978 = vadd.f32 %v1958, %v1977
  %1979 = vmatmul.bf16.gmra.mxu0 %v1922
  %v1980 = vpop.f32.mrf.mxu0
  %v1981 = vadd.f32 %v1958, %v1980
  %v1982 = vpop.f32.mrf.mxu0
  %v1983 = vadd.f32 %v1958, %v1982
  %1984 = vmatmul.bf16.gmra.mxu0 %v1923
  %v1985 = vpop.f32.mrf.mxu0
  %v1986 = vadd.f32 %v1958, %v1985
  %v1987 = vpop.f32.mrf.mxu0
  %1988 = vdwg.mxu0
  %1989 = vmatpush.bf16.msra.mxu0 %v1953
  %1990 = vmatpush.bf16.msra.mxu0 %v1949
  %1991 = vmatpush.bf16.msra.mxu0 %v1945
  %1992 = vmatpush.bf16.msra.mxu0 %v1941
  %1993 = vmatpush.bf16.msra.mxu0 %v1937
  %1994 = vmatpush.bf16.msra.mxu0 %v1933
  %1995 = vmatpush.bf16.msra.mxu0 %v1929
  %1996 = vmatpush.bf16.msra.mxu0 %v1925
  %1997 = vmatmul.bf16.gmra.mxu0 %v1921
  %v1998 = vpop.f32.mrf.mxu0
  %v1999 = vadd.f32 %v1959, %v1998
  %v2000 = vpop.f32.mrf.mxu0
  %v2001 = vadd.f32 %v1959, %v2000
  %2002 = vmatmul.bf16.gmra.mxu0 %v1922
  %v2003 = vpop.f32.mrf.mxu0
  %v2004 = vadd.f32 %v1959, %v2003
  %v2005 = vpop.f32.mrf.mxu0
  %v2006 = vadd.f32 %v1959, %v2005
  %2007 = vmatmul.bf16.gmra.mxu0 %v1923
  %v2008 = vpop.f32.mrf.mxu0
  %v2009 = vadd.f32 %v1959, %v2008
  %v2010 = vpop.f32.mrf.mxu0
  %2011 = vdwg.mxu0
  %2012 = vmatpush.bf16.msra.mxu0 %v1954
  %2013 = vmatpush.bf16.msra.mxu0 %v1950
  %2014 = vmatpush.bf16.msra.mxu0 %v1946
  %2015 = vmatpush.bf16.msra.mxu0 %v1942
  %2016 = vmatpush.bf16.msra.mxu0 %v1938
  %2017 = vmatpush.bf16.msra.mxu0 %v1934
  %2018 = vmatpush.bf16.msra.mxu0 %v1930
  %2019 = vmatpush.bf16.msra.mxu0 %v1926
  %2020 = vmatmul.bf16.gmra.mxu0 %v1921
  %v2021 = vpop.f32.mrf.mxu0
  %v2022 = vadd.f32 %v1960, %v2021
  %v2023 = vpop.f32.mrf.mxu0
  %v2024 = vadd.f32 %v1960, %v2023
  %2025 = vmatmul.bf16.gmra.mxu0 %v1922
  %v2026 = vpop.f32.mrf.mxu0
  %v2027 = vadd.f32 %v1960, %v2026
  %v2028 = vpop.f32.mrf.mxu0
  %v2029 = vadd.f32 %v1960, %v2028
  %2030 = vmatmul.bf16.gmra.mxu0 %v1923
  %v2031 = vpop.f32.mrf.mxu0
  %v2032 = vadd.f32 %v1960, %v2031
  %v2033 = vpop.f32.mrf.mxu0
  %2034 = vdwg.mxu0
  %2035 = vmatpush.bf16.msra.mxu0 %v1955
  %2036 = vmatpush.bf16.msra.mxu0 %v1951
  %2037 = vmatpush.bf16.msra.mxu0 %v1947
  %2038 = vmatpush.bf16.msra.mxu0 %v1943
  %2039 = vmatpush.bf16.msra.mxu0 %v1939
  %2040 = vmatpush.bf16.msra.mxu0 %v1935
  %2041 = vmatpush.bf16.msra.mxu0 %v1931
  %2042 = vmatpush.bf16.msra.mxu0 %v1927
  %2043 = vmatmul.bf16.gmra.mxu0 %v1921
  %v2044 = vpop.f32.mrf.mxu0
  %v2045 = vadd.f32 %v1961, %v2044
  %v2046 = vpop.f32.mrf.mxu0
  %v2047 = vadd.f32 %v1961, %v2046
  %2048 = vmatmul.bf16.gmra.mxu0 %v1922
  %v2049 = vpop.f32.mrf.mxu0
  %v2050 = vadd.f32 %v1961, %v2049
  %v2051 = vpop.f32.mrf.mxu0
  %v2052 = vadd.f32 %v1961, %v2051
  %2053 = vmatmul.bf16.gmra.mxu0 %v1923
  %v2054 = vpop.f32.mrf.mxu0
  %v2055 = vadd.f32 %v1961, %v2054
  %v2056 = vpop.f32.mrf.mxu0
  %2057 = vdwg.mxu0
  %v2058 = vmul.f32 %v1976, 1.702
  %v2059 = vmul.f32 %v1999, 1.702
  %v2060 = vmul.f32 %v2022, 1.702
  %v2061 = vmul.f32 %v2045, 1.702
  %v2062 = vmul.f32 %v1978, 1.702
  %v2063 = vmul.f32 %v2001, 1.702
  %v2064 = vmul.f32 %v2024, 1.702
  %v2065 = vmul.f32 %v2047, 1.702
  %v2066 = vmul.f32 %v1981, 1.702
  %v2067 = vmul.f32 %v2004, 1.702
  %v2068 = vmul.f32 %v2027, 1.702
  %v2069 = vmul.f32 %v2050, 1.702
  %v2070 = vmul.f32 %v1983, 1.702
  %v2071 = vmul.f32 %v2006, 1.702
  %v2072 = vmul.f32 %v2029, 1.702
  %v2073 = vmul.f32 %v2052, 1.702
  %v2074 = vmul.f32 %v1986, 1.702
  %v2075 = vmul.f32 %v2009, 1.702
  %v2076 = vmul.f32 %v2032, 1.702
  %v2077 = vmul.f32 %v2055, 1.702
  %v2078 = vxor.u32 %v2058, 2147483648
  %v2079 = vxor.u32 %v2059, 2147483648
  %v2080 = vxor.u32 %v2060, 2147483648
  %v2081 = vxor.u32 %v2061, 2147483648
  %v2082 = vxor.u32 %v2062, 2147483648
  %v2083 = vxor.u32 %v2063, 2147483648
  %v2084 = vxor.u32 %v2064, 2147483648
  %v2085 = vxor.u32 %v2065, 2147483648
  %v2086 = vxor.u32 %v2066, 2147483648
  %v2087 = vxor.u32 %v2067, 2147483648
  %v2088 = vxor.u32 %v2068, 2147483648
  %v2089 = vxor.u32 %v2069, 2147483648
  %v2090 = vxor.u32 %v2070, 2147483648
  %v2091 = vxor.u32 %v2071, 2147483648
  %v2092 = vxor.u32 %v2072, 2147483648
  %v2093 = vxor.u32 %v2073, 2147483648
  %v2094 = vxor.u32 %v2074, 2147483648
  %v2095 = vxor.u32 %v2075, 2147483648
  %v2096 = vxor.u32 %v2076, 2147483648
  %v2097 = vxor.u32 %v2077, 2147483648
  %v2098 = vmul.f32 %v2078, 1.442695
  %v2099 = vpow.pop %v2098
  %v2100 = vmul.f32 %v2079, 1.442695
  %v2101 = vpow.pop %v2100
  %v2102 = vmul.f32 %v2080, 1.442695
  %v2103 = vpow.pop %v2102
  %v2104 = vmul.f32 %v2081, 1.442695
  %v2105 = vpow.pop %v2104
  %v2106 = vmul.f32 %v2082, 1.442695
  %v2107 = vpow.pop %v2106
  %v2108 = vmul.f32 %v2083, 1.442695
  %v2109 = vpow.pop %v2108
  %v2110 = vmul.f32 %v2084, 1.442695
  %v2111 = vpow.pop %v2110
  %v2112 = vmul.f32 %v2085, 1.442695
  %v2113 = vpow.pop %v2112
  %v2114 = vmul.f32 %v2086, 1.442695
  %v2115 = vpow.pop %v2114
  %v2116 = vmul.f32 %v2087, 1.442695
  %v2117 = vpow.pop %v2116
  %v2118 = vmul.f32 %v2088, 1.442695
  %v2119 = vpow.pop %v2118
  %v2120 = vmul.f32 %v2089, 1.442695
  %v2121 = vpow.pop %v2120
  %v2122 = vmul.f32 %v2090, 1.442695
  %v2123 = vpow.pop %v2122
  %v2124 = vmul.f32 %v2091, 1.442695
  %v2125 = vpow.pop %v2124
  %v2126 = vmul.f32 %v2092, 1.442695
  %v2127 = vpow.pop %v2126
  %v2128 = vmul.f32 %v2093, 1.442695
  %v2129 = vpow.pop %v2128
  %v2130 = vmul.f32 %v2094, 1.442695
  %v2131 = vpow.pop %v2130
  %v2132 = vmul.f32 %v2095, 1.442695
  %v2133 = vpow.pop %v2132
  %v2134 = vmul.f32 %v2096, 1.442695
  %v2135 = vpow.pop %v2134
  %v2136 = vmul.f32 %v2097, 1.442695
  %v2137 = vpow.pop %v2136
  %v2138 = vadd.f32 %v2099, 1.0
  %v2139 = vadd.f32 %v2101, 1.0
  %v2140 = vadd.f32 %v2103, 1.0
  %v2141 = vadd.f32 %v2105, 1.0
  %v2142 = vadd.f32 %v2107, 1.0
  %v2143 = vadd.f32 %v2109, 1.0
  %v2144 = vadd.f32 %v2111, 1.0
  %v2145 = vadd.f32 %v2113, 1.0
  %v2146 = vadd.f32 %v2115, 1.0
  %v2147 = vadd.f32 %v2117, 1.0
  %v2148 = vadd.f32 %v2119, 1.0
  %v2149 = vadd.f32 %v2121, 1.0
  %v2150 = vadd.f32 %v2123, 1.0
  %v2151 = vadd.f32 %v2125, 1.0
  %v2152 = vadd.f32 %v2127, 1.0
  %v2153 = vadd.f32 %v2129, 1.0
  %v2154 = vadd.f32 %v2131, 1.0
  %v2155 = vadd.f32 %v2133, 1.0
  %v2156 = vadd.f32 %v2135, 1.0
  %v2157 = vadd.f32 %v2137, 1.0
  %v2158 = vrcp.pop %v2138
  %v2159 = vmul.f32 %v2138, %v2158
  %v2160 = vsub.f32 1.0, %v2159
  %v2161 = vmul.f32 %v2158, %v2160
  %v2162 = vadd.f32 %v2158, %v2161
  %vm2163 = vweird.f32 %v2138
  %vm2164 = vweird.f32 %v2158
  %vm2165 = vmor %vm2163, %vm2164
  %v2166 = vsel %vm2165, %v2158, %v2162
  %v2167 = vand.u32 2147483647, %v2138
  %vm2168 = vcmp.eq.f32.partialorder %v2167, 8.507059e+37
  %v2169 = vand.u32 %v2138, 2147483648
  %v2170 = vor.u32 1.1754944e-38, %v2169
  %v2171 = vsel %vm2168, %v2170, %v2166
  %v2172 = vmul.f32 1.0, %v2171
  %v2173 = vrcp.pop %v2139
  %v2174 = vmul.f32 %v2139, %v2173
  %v2175 = vsub.f32 1.0, %v2174
  %v2176 = vmul.f32 %v2173, %v2175
  %v2177 = vadd.f32 %v2173, %v2176
  %vm2178 = vweird.f32 %v2139
  %vm2179 = vweird.f32 %v2173
  %vm2180 = vmor %vm2178, %vm2179
  %v2181 = vsel %vm2180, %v2173, %v2177
  %v2182 = vand.u32 2147483647, %v2139
  %vm2183 = vcmp.eq.f32.partialorder %v2182, 8.507059e+37
  %v2184 = vand.u32 %v2139, 2147483648
  %v2185 = vor.u32 1.1754944e-38, %v2184
  %v2186 = vsel %vm2183, %v2185, %v2181
  %v2187 = vmul.f32 1.0, %v2186
  %v2188 = vrcp.pop %v2140
  %v2189 = vmul.f32 %v2140, %v2188
  %v2190 = vsub.f32 1.0, %v2189
  %v2191 = vmul.f32 %v2188, %v2190
  %v2192 = vadd.f32 %v2188, %v2191
  %vm2193 = vweird.f32 %v2140
  %vm2194 = vweird.f32 %v2188
  %vm2195 = vmor %vm2193, %vm2194
  %v2196 = vsel %vm2195, %v2188, %v2192
  %v2197 = vand.u32 2147483647, %v2140
  %vm2198 = vcmp.eq.f32.partialorder %v2197, 8.507059e+37
  %v2199 = vand.u32 %v2140, 2147483648
  %v2200 = vor.u32 1.1754944e-38, %v2199
  %v2201 = vsel %vm2198, %v2200, %v2196
  %v2202 = vmul.f32 1.0, %v2201
  %v2203 = vrcp.pop %v2141
  %v2204 = vmul.f32 %v2141, %v2203
  %v2205 = vsub.f32 1.0, %v2204
  %v2206 = vmul.f32 %v2203, %v2205
  %v2207 = vadd.f32 %v2203, %v2206
  %vm2208 = vweird.f32 %v2141
  %vm2209 = vweird.f32 %v2203
  %vm2210 = vmor %vm2208, %vm2209
  %v2211 = vsel %vm2210, %v2203, %v2207
  %v2212 = vand.u32 2147483647, %v2141
  %vm2213 = vcmp.eq.f32.partialorder %v2212, 8.507059e+37
  %v2214 = vand.u32 %v2141, 2147483648
  %v2215 = vor.u32 1.1754944e-38, %v2214
  %v2216 = vsel %vm2213, %v2215, %v2211
  %v2217 = vmul.f32 1.0, %v2216
  %v2218 = vrcp.pop %v2142
  %v2219 = vmul.f32 %v2142, %v2218
  %v2220 = vsub.f32 1.0, %v2219
  %v2221 = vmul.f32 %v2218, %v2220
  %v2222 = vadd.f32 %v2218, %v2221
  %vm2223 = vweird.f32 %v2142
  %vm2224 = vweird.f32 %v2218
  %vm2225 = vmor %vm2223, %vm2224
  %v2226 = vsel %vm2225, %v2218, %v2222
  %v2227 = vand.u32 2147483647, %v2142
  %vm2228 = vcmp.eq.f32.partialorder %v2227, 8.507059e+37
  %v2229 = vand.u32 %v2142, 2147483648
  %v2230 = vor.u32 1.1754944e-38, %v2229
  %v2231 = vsel %vm2228, %v2230, %v2226
  %v2232 = vmul.f32 1.0, %v2231
  %v2233 = vrcp.pop %v2143
  %v2234 = vmul.f32 %v2143, %v2233
  %v2235 = vsub.f32 1.0, %v2234
  %v2236 = vmul.f32 %v2233, %v2235
  %v2237 = vadd.f32 %v2233, %v2236
  %vm2238 = vweird.f32 %v2143
  %vm2239 = vweird.f32 %v2233
  %vm2240 = vmor %vm2238, %vm2239
  %v2241 = vsel %vm2240, %v2233, %v2237
  %v2242 = vand.u32 2147483647, %v2143
  %vm2243 = vcmp.eq.f32.partialorder %v2242, 8.507059e+37
  %v2244 = vand.u32 %v2143, 2147483648
  %v2245 = vor.u32 1.1754944e-38, %v2244
  %v2246 = vsel %vm2243, %v2245, %v2241
  %v2247 = vmul.f32 1.0, %v2246
  %v2248 = vrcp.pop %v2144
  %v2249 = vmul.f32 %v2144, %v2248
  %v2250 = vsub.f32 1.0, %v2249
  %v2251 = vmul.f32 %v2248, %v2250
  %v2252 = vadd.f32 %v2248, %v2251
  %vm2253 = vweird.f32 %v2144
  %vm2254 = vweird.f32 %v2248
  %vm2255 = vmor %vm2253, %vm2254
  %v2256 = vsel %vm2255, %v2248, %v2252
  %v2257 = vand.u32 2147483647, %v2144
  %vm2258 = vcmp.eq.f32.partialorder %v2257, 8.507059e+37
  %v2259 = vand.u32 %v2144, 2147483648
  %v2260 = vor.u32 1.1754944e-38, %v2259
  %v2261 = vsel %vm2258, %v2260, %v2256
  %v2262 = vmul.f32 1.0, %v2261
  %v2263 = vrcp.pop %v2145
  %v2264 = vmul.f32 %v2145, %v2263
  %v2265 = vsub.f32 1.0, %v2264
  %v2266 = vmul.f32 %v2263, %v2265
  %v2267 = vadd.f32 %v2263, %v2266
  %vm2268 = vweird.f32 %v2145
  %vm2269 = vweird.f32 %v2263
  %vm2270 = vmor %vm2268, %vm2269
  %v2271 = vsel %vm2270, %v2263, %v2267
  %v2272 = vand.u32 2147483647, %v2145
  %vm2273 = vcmp.eq.f32.partialorder %v2272, 8.507059e+37
  %v2274 = vand.u32 %v2145, 2147483648
  %v2275 = vor.u32 1.1754944e-38, %v2274
  %v2276 = vsel %vm2273, %v2275, %v2271
  %v2277 = vmul.f32 1.0, %v2276
  %v2278 = vrcp.pop %v2146
  %v2279 = vmul.f32 %v2146, %v2278
  %v2280 = vsub.f32 1.0, %v2279
  %v2281 = vmul.f32 %v2278, %v2280
  %v2282 = vadd.f32 %v2278, %v2281
  %vm2283 = vweird.f32 %v2146
  %vm2284 = vweird.f32 %v2278
  %vm2285 = vmor %vm2283, %vm2284
  %v2286 = vsel %vm2285, %v2278, %v2282
  %v2287 = vand.u32 2147483647, %v2146
  %vm2288 = vcmp.eq.f32.partialorder %v2287, 8.507059e+37
  %v2289 = vand.u32 %v2146, 2147483648
  %v2290 = vor.u32 1.1754944e-38, %v2289
  %v2291 = vsel %vm2288, %v2290, %v2286
  %v2292 = vmul.f32 1.0, %v2291
  %v2293 = vrcp.pop %v2147
  %v2294 = vmul.f32 %v2147, %v2293
  %v2295 = vsub.f32 1.0, %v2294
  %v2296 = vmul.f32 %v2293, %v2295
  %v2297 = vadd.f32 %v2293, %v2296
  %vm2298 = vweird.f32 %v2147
  %vm2299 = vweird.f32 %v2293
  %vm2300 = vmor %vm2298, %vm2299
  %v2301 = vsel %vm2300, %v2293, %v2297
  %v2302 = vand.u32 2147483647, %v2147
  %vm2303 = vcmp.eq.f32.partialorder %v2302, 8.507059e+37
  %v2304 = vand.u32 %v2147, 2147483648
  %v2305 = vor.u32 1.1754944e-38, %v2304
  %v2306 = vsel %vm2303, %v2305, %v2301
  %v2307 = vmul.f32 1.0, %v2306
  %v2308 = vrcp.pop %v2148
  %v2309 = vmul.f32 %v2148, %v2308
  %v2310 = vsub.f32 1.0, %v2309
  %v2311 = vmul.f32 %v2308, %v2310
  %v2312 = vadd.f32 %v2308, %v2311
  %vm2313 = vweird.f32 %v2148
  %vm2314 = vweird.f32 %v2308
  %vm2315 = vmor %vm2313, %vm2314
  %v2316 = vsel %vm2315, %v2308, %v2312
  %v2317 = vand.u32 2147483647, %v2148
  %vm2318 = vcmp.eq.f32.partialorder %v2317, 8.507059e+37
  %v2319 = vand.u32 %v2148, 2147483648
  %v2320 = vor.u32 1.1754944e-38, %v2319
  %v2321 = vsel %vm2318, %v2320, %v2316
  %v2322 = vmul.f32 1.0, %v2321
  %v2323 = vrcp.pop %v2149
  %v2324 = vmul.f32 %v2149, %v2323
  %v2325 = vsub.f32 1.0, %v2324
  %v2326 = vmul.f32 %v2323, %v2325
  %v2327 = vadd.f32 %v2323, %v2326
  %vm2328 = vweird.f32 %v2149
  %vm2329 = vweird.f32 %v2323
  %vm2330 = vmor %vm2328, %vm2329
  %v2331 = vsel %vm2330, %v2323, %v2327
  %v2332 = vand.u32 2147483647, %v2149
  %vm2333 = vcmp.eq.f32.partialorder %v2332, 8.507059e+37
  %v2334 = vand.u32 %v2149, 2147483648
  %v2335 = vor.u32 1.1754944e-38, %v2334
  %v2336 = vsel %vm2333, %v2335, %v2331
  %v2337 = vmul.f32 1.0, %v2336
  %v2338 = vrcp.pop %v2150
  %v2339 = vmul.f32 %v2150, %v2338
  %v2340 = vsub.f32 1.0, %v2339
  %v2341 = vmul.f32 %v2338, %v2340
  %v2342 = vadd.f32 %v2338, %v2341
  %vm2343 = vweird.f32 %v2150
  %vm2344 = vweird.f32 %v2338
  %vm2345 = vmor %vm2343, %vm2344
  %v2346 = vsel %vm2345, %v2338, %v2342
  %v2347 = vand.u32 2147483647, %v2150
  %vm2348 = vcmp.eq.f32.partialorder %v2347, 8.507059e+37
  %v2349 = vand.u32 %v2150, 2147483648
  %v2350 = vor.u32 1.1754944e-38, %v2349
  %v2351 = vsel %vm2348, %v2350, %v2346
  %v2352 = vmul.f32 1.0, %v2351
  %v2353 = vrcp.pop %v2151
  %v2354 = vmul.f32 %v2151, %v2353
  %v2355 = vsub.f32 1.0, %v2354
  %v2356 = vmul.f32 %v2353, %v2355
  %v2357 = vadd.f32 %v2353, %v2356
  %vm2358 = vweird.f32 %v2151
  %vm2359 = vweird.f32 %v2353
  %vm2360 = vmor %vm2358, %vm2359
  %v2361 = vsel %vm2360, %v2353, %v2357
  %v2362 = vand.u32 2147483647, %v2151
  %vm2363 = vcmp.eq.f32.partialorder %v2362, 8.507059e+37
  %v2364 = vand.u32 %v2151, 2147483648
  %v2365 = vor.u32 1.1754944e-38, %v2364
  %v2366 = vsel %vm2363, %v2365, %v2361
  %v2367 = vmul.f32 1.0, %v2366
  %v2368 = vrcp.pop %v2152
  %v2369 = vmul.f32 %v2152, %v2368
  %v2370 = vsub.f32 1.0, %v2369
  %v2371 = vmul.f32 %v2368, %v2370
  %v2372 = vadd.f32 %v2368, %v2371
  %vm2373 = vweird.f32 %v2152
  %vm2374 = vweird.f32 %v2368
  %vm2375 = vmor %vm2373, %vm2374
  %v2376 = vsel %vm2375, %v2368, %v2372
  %v2377 = vand.u32 2147483647, %v2152
  %vm2378 = vcmp.eq.f32.partialorder %v2377, 8.507059e+37
  %v2379 = vand.u32 %v2152, 2147483648
  %v2380 = vor.u32 1.1754944e-38, %v2379
  %v2381 = vsel %vm2378, %v2380, %v2376
  %v2382 = vmul.f32 1.0, %v2381
  %v2383 = vrcp.pop %v2153
  %v2384 = vmul.f32 %v2153, %v2383
  %v2385 = vsub.f32 1.0, %v2384
  %v2386 = vmul.f32 %v2383, %v2385
  %v2387 = vadd.f32 %v2383, %v2386
  %vm2388 = vweird.f32 %v2153
  %vm2389 = vweird.f32 %v2383
  %vm2390 = vmor %vm2388, %vm2389
  %v2391 = vsel %vm2390, %v2383, %v2387
  %v2392 = vand.u32 2147483647, %v2153
  %vm2393 = vcmp.eq.f32.partialorder %v2392, 8.507059e+37
  %v2394 = vand.u32 %v2153, 2147483648
  %v2395 = vor.u32 1.1754944e-38, %v2394
  %v2396 = vsel %vm2393, %v2395, %v2391
  %v2397 = vmul.f32 1.0, %v2396
  %v2398 = vrcp.pop %v2154
  %v2399 = vmul.f32 %v2154, %v2398
  %v2400 = vsub.f32 1.0, %v2399
  %v2401 = vmul.f32 %v2398, %v2400
  %v2402 = vadd.f32 %v2398, %v2401
  %vm2403 = vweird.f32 %v2154
  %vm2404 = vweird.f32 %v2398
  %vm2405 = vmor %vm2403, %vm2404
  %v2406 = vsel %vm2405, %v2398, %v2402
  %v2407 = vand.u32 2147483647, %v2154
  %vm2408 = vcmp.eq.f32.partialorder %v2407, 8.507059e+37
  %v2409 = vand.u32 %v2154, 2147483648
  %v2410 = vor.u32 1.1754944e-38, %v2409
  %v2411 = vsel %vm2408, %v2410, %v2406
  %v2412 = vmul.f32 1.0, %v2411
  %v2413 = vrcp.pop %v2155
  %v2414 = vmul.f32 %v2155, %v2413
  %v2415 = vsub.f32 1.0, %v2414
  %v2416 = vmul.f32 %v2413, %v2415
  %v2417 = vadd.f32 %v2413, %v2416
  %vm2418 = vweird.f32 %v2155
  %vm2419 = vweird.f32 %v2413
  %vm2420 = vmor %vm2418, %vm2419
  %v2421 = vsel %vm2420, %v2413, %v2417
  %v2422 = vand.u32 2147483647, %v2155
  %vm2423 = vcmp.eq.f32.partialorder %v2422, 8.507059e+37
  %v2424 = vand.u32 %v2155, 2147483648
  %v2425 = vor.u32 1.1754944e-38, %v2424
  %v2426 = vsel %vm2423, %v2425, %v2421
  %v2427 = vmul.f32 1.0, %v2426
  %v2428 = vrcp.pop %v2156
  %v2429 = vmul.f32 %v2156, %v2428
  %v2430 = vsub.f32 1.0, %v2429
  %v2431 = vmul.f32 %v2428, %v2430
  %v2432 = vadd.f32 %v2428, %v2431
  %vm2433 = vweird.f32 %v2156
  %vm2434 = vweird.f32 %v2428
  %vm2435 = vmor %vm2433, %vm2434
  %v2436 = vsel %vm2435, %v2428, %v2432
  %v2437 = vand.u32 2147483647, %v2156
  %vm2438 = vcmp.eq.f32.partialorder %v2437, 8.507059e+37
  %v2439 = vand.u32 %v2156, 2147483648
  %v2440 = vor.u32 1.1754944e-38, %v2439
  %v2441 = vsel %vm2438, %v2440, %v2436
  %v2442 = vmul.f32 1.0, %v2441
  %v2443 = vrcp.pop %v2157
  %v2444 = vmul.f32 %v2157, %v2443
  %v2445 = vsub.f32 1.0, %v2444
  %v2446 = vmul.f32 %v2443, %v2445
  %v2447 = vadd.f32 %v2443, %v2446
  %vm2448 = vweird.f32 %v2157
  %vm2449 = vweird.f32 %v2443
  %vm2450 = vmor %vm2448, %vm2449
  %v2451 = vsel %vm2450, %v2443, %v2447
  %v2452 = vand.u32 2147483647, %v2157
  %vm2453 = vcmp.eq.f32.partialorder %v2452, 8.507059e+37
  %v2454 = vand.u32 %v2157, 2147483648
  %v2455 = vor.u32 1.1754944e-38, %v2454
  %v2456 = vsel %vm2453, %v2455, %v2451
  %v2457 = vmul.f32 1.0, %v2456
  %v2458 = vmul.f32 %v1976, %v2172
  %v2459 = vmul.f32 %v1999, %v2187
  %v2460 = vmul.f32 %v2022, %v2202
  %v2461 = vmul.f32 %v2045, %v2217
  %v2462 = vmul.f32 %v1978, %v2232
  %v2463 = vmul.f32 %v2001, %v2247
  %v2464 = vmul.f32 %v2024, %v2262
  %v2465 = vmul.f32 %v2047, %v2277
  %v2466 = vmul.f32 %v1981, %v2292
  %v2467 = vmul.f32 %v2004, %v2307
  %v2468 = vmul.f32 %v2027, %v2322
  %v2469 = vmul.f32 %v2050, %v2337
  %v2470 = vmul.f32 %v1983, %v2352
  %v2471 = vmul.f32 %v2006, %v2367
  %v2472 = vmul.f32 %v2029, %v2382
  %v2473 = vmul.f32 %v2052, %v2397
  %v2474 = vmul.f32 %v1986, %v2412
  %v2475 = vmul.f32 %v2009, %v2427
  %v2476 = vmul.f32 %v2032, %v2442
  %v2477 = vmul.f32 %v2055, %v2457
  %v2478 = vld [vmem:[%s14] sm:$0xff]
  %v2479 = vld [vmem:[%s14 + $0x8] sm:$0xff]
  %v2480 = vld [vmem:[%s14 + $0x10] sm:$0xff]
  %v2481 = vld [vmem:[%s14 + $0x18] sm:$0xff]
  %v2482 = vld [vmem:[%s14 + $0x20] sm:$0xff]
  %v2483 = vld [vmem:[%s14 + $0x28] sm:$0xff]
  %v2484 = vld [vmem:[%s14 + $0x30] sm:$0xff]
  %v2485 = vld [vmem:[%s14 + $0x38] sm:$0xff]
  %v2486 = vld [vmem:[%s14 + $0x40] sm:$0xff]
  %v2487 = vld [vmem:[%s14 + $0x48] sm:$0xff]
  %v2488 = vld [vmem:[%s14 + $0x50] sm:$0xff]
  %v2489 = vld [vmem:[%s14 + $0x58] sm:$0xff]
  %v2490 = vld [vmem:[%s14 + $0x60] sm:$0xff]
  %v2491 = vld [vmem:[%s14 + $0x68] sm:$0xff]
  %v2492 = vld [vmem:[%s14 + $0x70] sm:$0xff]
  %v2493 = vld [vmem:[%s14 + $0x78] sm:$0xff]
  %v2494 = vld [vmem:[%s14 + $0x80] sm:$0xff]
  %v2495 = vld [vmem:[%s14 + $0x88] sm:$0xff]
  %v2496 = vld [vmem:[%s14 + $0x90] sm:$0xff]
  %v2497 = vld [vmem:[%s14 + $0x98] sm:$0xff]
  %v2498 = vld [vmem:[%s14 + $0xa0] sm:$0xff]
  %v2499 = vld [vmem:[%s14 + $0xa8] sm:$0xff]
  %v2500 = vld [vmem:[%s14 + $0xb0] sm:$0xff]
  %v2501 = vld [vmem:[%s14 + $0xb8] sm:$0xff]
  %v2502 = vld [vmem:[%s14 + $0xc0] sm:$0xff]
  %v2503 = vld [vmem:[%s14 + $0xc8] sm:$0xff]
  %v2504 = vld [vmem:[%s14 + $0xd0] sm:$0xff]
  %v2505 = vld [vmem:[%s14 + $0xd8] sm:$0xff]
  %v2506 = vld [vmem:[%s14 + $0xe0] sm:$0xff]
  %v2507 = vld [vmem:[%s14 + $0xe8] sm:$0xff]
  %v2508 = vld [vmem:[%s14 + $0xf0] sm:$0xff]
  %v2509 = vld [vmem:[%s14 + $0xf8] sm:$0xff]
  %v2510 = vld [vmem:[%s14 + $0x100] sm:$0xff]
  %v2511 = vld [vmem:[%s14 + $0x108] sm:$0xff]
  %v2512 = vld [vmem:[%s14 + $0x110] sm:$0xff]
  %v2513 = vld [vmem:[%s14 + $0x118] sm:$0xff]
  %v2514 = vld [vmem:[%s14 + $0x120] sm:$0xff]
  %v2515 = vld [vmem:[%s14 + $0x128] sm:$0xff]
  %v2516 = vld [vmem:[%s14 + $0x130] sm:$0xff]
  %v2517 = vld [vmem:[%s14 + $0x138] sm:$0xff]
  %v2518 = vld [vmem:[%s14 + $0x140] sm:$0xff]
  %v2519 = vld [vmem:[%s14 + $0x148] sm:$0xff]
  %v2520 = vld [vmem:[%s14 + $0x150] sm:$0xff]
  %v2521 = vld [vmem:[%s14 + $0x158] sm:$0xff]
  %v2522 = vld [vmem:[%s14 + $0x160] sm:$0xff]
  %v2523 = vld [vmem:[%s14 + $0x168] sm:$0xff]
  %v2524 = vld [vmem:[%s14 + $0x170] sm:$0xff]
  %v2525 = vld [vmem:[%s14 + $0x178] sm:$0xff]
  %v2526 = vld [vmem:[%s14 + $0x180] sm:$0xff]
  %v2527 = vld [vmem:[%s14 + $0x188] sm:$0xff]
  %v2528 = vld [vmem:[%s14 + $0x190] sm:$0xff]
  %v2529 = vld [vmem:[%s14 + $0x198] sm:$0xff]
  %v2530 = vld [vmem:[%s14 + $0x1a0] sm:$0xff]
  %v2531 = vld [vmem:[%s14 + $0x1a8] sm:$0xff]
  %v2532 = vld [vmem:[%s14 + $0x1b0] sm:$0xff]
  %v2533 = vld [vmem:[%s14 + $0x1b8] sm:$0xff]
  %v2534 = vld [vmem:[%s14 + $0x1c0] sm:$0xff]
  %v2535 = vld [vmem:[%s14 + $0x1c8] sm:$0xff]
  %v2536 = vld [vmem:[%s14 + $0x1d0] sm:$0xff]
  %v2537 = vld [vmem:[%s14 + $0x1d8] sm:$0xff]
  %v2538 = vld [vmem:[%s14 + $0x1e0] sm:$0xff]
  %v2539 = vld [vmem:[%s14 + $0x1e8] sm:$0xff]
  %v2540 = vld [vmem:[%s14 + $0x1f0] sm:$0xff]
  %v2541 = vld [vmem:[%s14 + $0x1f8] sm:$0xff]
  %v2542 = vpack.c.bf16 %v2462, %v2458
  %v2543 = vpack.c.bf16 %v2463, %v2459
  %v2544 = vpack.c.bf16 %v2464, %v2460
  %v2545 = vpack.c.bf16 %v2465, %v2461
  %v2546 = vpack.c.bf16 %v2470, %v2466
  %v2547 = vpack.c.bf16 %v2471, %v2467
  %v2548 = vpack.c.bf16 %v2472, %v2468
  %v2549 = vpack.c.bf16 %v2473, %v2469
  %v2550 = vpack.c.bf16 %v2474, %v2474
  %v2551 = vpack.c.bf16 %v2475, %v2475
  %v2552 = vpack.c.bf16 %v2476, %v2476
  %v2553 = vpack.c.bf16 %v2477, %v2477
  %v2554 = vpack.c.bf16 %v2479, %v2478
  %v2555 = vpack.c.bf16 %v2481, %v2480
  %v2556 = vpack.c.bf16 %v2483, %v2482
  %v2557 = vpack.c.bf16 %v2485, %v2484
  %v2558 = vpack.c.bf16 %v2487, %v2486
  %v2559 = vpack.c.bf16 %v2489, %v2488
  %v2560 = vpack.c.bf16 %v2491, %v2490
  %v2561 = vpack.c.bf16 %v2493, %v2492
  %v2562 = vpack.c.bf16 %v2495, %v2494
  %v2563 = vpack.c.bf16 %v2497, %v2496
  %v2564 = vpack.c.bf16 %v2499, %v2498
  %v2565 = vpack.c.bf16 %v2501, %v2500
  %v2566 = vpack.c.bf16 %v2503, %v2502
  %v2567 = vpack.c.bf16 %v2505, %v2504
  %v2568 = vpack.c.bf16 %v2507, %v2506
  %v2569 = vpack.c.bf16 %v2509, %v2508
  %v2570 = vpack.c.bf16 %v2511, %v2510
  %v2571 = vpack.c.bf16 %v2513, %v2512
  %v2572 = vpack.c.bf16 %v2515, %v2514
  %v2573 = vpack.c.bf16 %v2517, %v2516
  %v2574 = vpack.c.bf16 %v2519, %v2518
  %v2575 = vpack.c.bf16 %v2521, %v2520
  %v2576 = vpack.c.bf16 %v2523, %v2522
  %v2577 = vpack.c.bf16 %v2525, %v2524
  %v2578 = vpack.c.bf16 %v2527, %v2526
  %v2579 = vpack.c.bf16 %v2529, %v2528
  %v2580 = vpack.c.bf16 %v2531, %v2530
  %v2581 = vpack.c.bf16 %v2533, %v2532
  %v2582 = vpack.c.bf16 %v2535, %v2534
  %v2583 = vpack.c.bf16 %v2537, %v2536
  %v2584 = vpack.c.bf16 %v2539, %v2538
  %v2585 = vpack.c.bf16 %v2541, %v2540
  %2586 = vmatpush.bf16.msra.mxu0 %v2561
  %2587 = vmatpush.bf16.msra.mxu0 %v2560
  %2588 = vmatpush.bf16.msra.mxu0 %v2559
  %2589 = vmatpush.bf16.msra.mxu0 %v2558
  %2590 = vmatpush.bf16.msra.mxu0 %v2557
  %2591 = vmatpush.bf16.msra.mxu0 %v2556
  %2592 = vmatpush.bf16.msra.mxu0 %v2555
  %2593 = vmatpush.bf16.msra.mxu0 %v2554
  %2594 = vmatmul.bf16.gmra.mxu0 %v2542
  %v2595 = vpop.f32.mrf.mxu0
  %v2596 = vadd.f32 0.0, %v2595
  %v2597 = vpop.f32.mrf.mxu0
  %v2598 = vadd.f32 0.0, %v2597
  %2599 = vmatmul.bf16.gmra.mxu0 %v2546
  %v2600 = vpop.f32.mrf.mxu0
  %v2601 = vadd.f32 0.0, %v2600
  %v2602 = vpop.f32.mrf.mxu0
  %v2603 = vadd.f32 0.0, %v2602
  %2604 = vmatmul.bf16.gmra.mxu0 %v2550
  %v2605 = vpop.f32.mrf.mxu0
  %v2606 = vadd.f32 0.0, %v2605
  %v2607 = vpop.f32.mrf.mxu0
  %2608 = vdwg.mxu0
  %2609 = vmatpush.bf16.msra.mxu0 %v2569
  %2610 = vmatpush.bf16.msra.mxu0 %v2568
  %2611 = vmatpush.bf16.msra.mxu0 %v2567
  %2612 = vmatpush.bf16.msra.mxu0 %v2566
  %2613 = vmatpush.bf16.msra.mxu0 %v2565
  %2614 = vmatpush.bf16.msra.mxu0 %v2564
  %2615 = vmatpush.bf16.msra.mxu0 %v2563
  %2616 = vmatpush.bf16.msra.mxu0 %v2562
  %2617 = vmatmul.bf16.gmra.mxu0 %v2543
  %v2618 = vpop.f32.mrf.mxu0
  %v2619 = vadd.f32 %v2596, %v2618
  %v2620 = vpop.f32.mrf.mxu0
  %v2621 = vadd.f32 %v2598, %v2620
  %2622 = vmatmul.bf16.gmra.mxu0 %v2547
  %v2623 = vpop.f32.mrf.mxu0
  %v2624 = vadd.f32 %v2601, %v2623
  %v2625 = vpop.f32.mrf.mxu0
  %v2626 = vadd.f32 %v2603, %v2625
  %2627 = vmatmul.bf16.gmra.mxu0 %v2551
  %v2628 = vpop.f32.mrf.mxu0
  %v2629 = vadd.f32 %v2606, %v2628
  %v2630 = vpop.f32.mrf.mxu0
  %2631 = vdwg.mxu0
  %2632 = vmatpush.bf16.msra.mxu0 %v2577
  %2633 = vmatpush.bf16.msra.mxu0 %v2576
  %2634 = vmatpush.bf16.msra.mxu0 %v2575
  %2635 = vmatpush.bf16.msra.mxu0 %v2574
  %2636 = vmatpush.bf16.msra.mxu0 %v2573
  %2637 = vmatpush.bf16.msra.mxu0 %v2572
  %2638 = vmatpush.bf16.msra.mxu0 %v2571
  %2639 = vmatpush.bf16.msra.mxu0 %v2570
  %2640 = vmatmul.bf16.gmra.mxu0 %v2544
  %v2641 = vpop.f32.mrf.mxu0
  %v2642 = vadd.f32 %v2619, %v2641
  %v2643 = vpop.f32.mrf.mxu0
  %v2644 = vadd.f32 %v2621, %v2643
  %2645 = vmatmul.bf16.gmra.mxu0 %v2548
  %v2646 = vpop.f32.mrf.mxu0
  %v2647 = vadd.f32 %v2624, %v2646
  %v2648 = vpop.f32.mrf.mxu0
  %v2649 = vadd.f32 %v2626, %v2648
  %2650 = vmatmul.bf16.gmra.mxu0 %v2552
  %v2651 = vpop.f32.mrf.mxu0
  %v2652 = vadd.f32 %v2629, %v2651
  %v2653 = vpop.f32.mrf.mxu0
  %2654 = vdwg.mxu0
  %2655 = vmatpush.bf16.msra.mxu0 %v2585
  %2656 = vmatpush.bf16.msra.mxu0 %v2584
  %2657 = vmatpush.bf16.msra.mxu0 %v2583
  %2658 = vmatpush.bf16.msra.mxu0 %v2582
  %2659 = vmatpush.bf16.msra.mxu0 %v2581
  %2660 = vmatpush.bf16.msra.mxu0 %v2580
  %2661 = vmatpush.bf16.msra.mxu0 %v2579
  %2662 = vmatpush.bf16.msra.mxu0 %v2578
  %2663 = vmatmul.bf16.gmra.mxu0 %v2545
  %v2664 = vpop.f32.mrf.mxu0
  %v2665 = vadd.f32 %v2642, %v2664
  %v2666 = vpop.f32.mrf.mxu0
  %v2667 = vadd.f32 %v2644, %v2666
  %2668 = vmatmul.bf16.gmra.mxu0 %v2549
  %v2669 = vpop.f32.mrf.mxu0
  %v2670 = vadd.f32 %v2647, %v2669
  %v2671 = vpop.f32.mrf.mxu0
  %v2672 = vadd.f32 %v2649, %v2671
  %2673 = vmatmul.bf16.gmra.mxu0 %v2553
  %v2674 = vpop.f32.mrf.mxu0
  %v2675 = vadd.f32 %v2652, %v2674
  %v2676 = vpop.f32.mrf.mxu0
  %2677 = vdwg.mxu0
  %v2678 = vadd.f32 %v1734, %v2665
  %v2679 = vadd.f32 %v1735, %v2667
  %v2680 = vadd.f32 %v1736, %v2670
  %v2681 = vadd.f32 %v1737, %v2672
  %v2682 = vadd.f32 %v1738, %v2675
  %v2683 = vld [vmem:[%s15] sm:$0x1]
  %v2685 = vperm.slane %v2683, 0
  %v2687 = vadd.f32 %v2678, %v2685
  %v2688 = vadd.f32 %v2679, %v2685
  %v2689 = vadd.f32 %v2680, %v2685
  %v2690 = vadd.f32 %v2681, %v2685
  %v2691 = vadd.f32 %v2682, %v2685
  %s2692 = scalar_lea.vmem %s4, 1
  %v2693 = vld [vmem:[%s2692] sm:$0x1]
  %s2694 = scalar_lea.vmem %s5, 1
  %v2695 = vld [vmem:[%s2694] sm:$0x1]
  %2696 = vadd.xlane.f32.xlu0 %v2687
  %v2697 = vpop.xlane.xlu0 %2696
  %2698 = vadd.xlane.f32.xlu0 %v2688
  %v2699 = vpop.xlane.xlu0 %2698
  %2700 = vadd.xlane.f32.xlu0 %v2689
  %v2701 = vpop.xlane.xlu0 %2700
  %2702 = vadd.xlane.f32.xlu0 %v2690
  %v2703 = vpop.xlane.xlu0 %2702
  %2704 = vadd.xlane.f32.xlu0 %v2691
  %v2705 = vpop.xlane.xlu0 %2704
  %v2706 = vmul.f32 %v2697, %v101
  %v2707 = vmul.f32 %v2699, %v101
  %v2708 = vmul.f32 %v2701, %v101
  %v2709 = vmul.f32 %v2703, %v101
  %v2710 = vmul.f32 %v2705, %v101
  %v2711 = vsub.f32 %v2687, %v2706
  %v2712 = vsub.f32 %v2688, %v2707
  %v2713 = vsub.f32 %v2689, %v2708
  %v2714 = vsub.f32 %v2690, %v2709
  %v2715 = vsub.f32 %v2691, %v2710
  %v2716 = vmul.f32 %v2711, %v2711
  %v2717 = vmul.f32 %v2712, %v2712
  %v2718 = vmul.f32 %v2713, %v2713
  %v2719 = vmul.f32 %v2714, %v2714
  %v2720 = vmul.f32 %v2715, %v2715
  %2721 = vadd.xlane.f32.xlu0 %v2716
  %v2722 = vpop.xlane.xlu0 %2721
  %2723 = vadd.xlane.f32.xlu0 %v2717
  %v2724 = vpop.xlane.xlu0 %2723
  %2725 = vadd.xlane.f32.xlu0 %v2718
  %v2726 = vpop.xlane.xlu0 %2725
  %2727 = vadd.xlane.f32.xlu0 %v2719
  %v2728 = vpop.xlane.xlu0 %2727
  %2729 = vadd.xlane.f32.xlu0 %v2720
  %v2730 = vpop.xlane.xlu0 %2729
  %v2731 = vmul.f32 %v2722, %v101
  %v2732 = vmul.f32 %v2724, %v101
  %v2733 = vmul.f32 %v2726, %v101
  %v2734 = vmul.f32 %v2728, %v101
  %v2735 = vmul.f32 %v2730, %v101
  %v2736 = vadd.f32 %v2731, 1e-05
  %v2737 = vadd.f32 %v2732, 1e-05
  %v2738 = vadd.f32 %v2733, 1e-05
  %v2739 = vadd.f32 %v2734, 1e-05
  %v2740 = vadd.f32 %v2735, 1e-05
  %v2741 = vrsqrt.pop %v2736
  %v2742 = vmul.f32 %v2741, %v2736
  %v2743 = vmul.f32 %v2742, %v2741
  %v2744 = vmul.f32 0.5, %v2743
  %v2745 = vsub.f32 1.5, %v2744
  %v2746 = vmul.f32 %v2741, %v2745
  %vm2747 = vweird.f32 %v2736
  %vm2748 = vweird.f32 %v2741
  %vm2749 = vmor %vm2747, %vm2748
  %v2750 = vsel %vm2749, %v2741, %v2746
  %v2751 = vrsqrt.pop %v2737
  %v2752 = vmul.f32 %v2751, %v2737
  %v2753 = vmul.f32 %v2752, %v2751
  %v2754 = vmul.f32 0.5, %v2753
  %v2755 = vsub.f32 1.5, %v2754
  %v2756 = vmul.f32 %v2751, %v2755
  %vm2757 = vweird.f32 %v2737
  %vm2758 = vweird.f32 %v2751
  %vm2759 = vmor %vm2757, %vm2758
  %v2760 = vsel %vm2759, %v2751, %v2756
  %v2761 = vrsqrt.pop %v2738
  %v2762 = vmul.f32 %v2761, %v2738
  %v2763 = vmul.f32 %v2762, %v2761
  %v2764 = vmul.f32 0.5, %v2763
  %v2765 = vsub.f32 1.5, %v2764
  %v2766 = vmul.f32 %v2761, %v2765
  %vm2767 = vweird.f32 %v2738
  %vm2768 = vweird.f32 %v2761
  %vm2769 = vmor %vm2767, %vm2768
  %v2770 = vsel %vm2769, %v2761, %v2766
  %v2771 = vrsqrt.pop %v2739
  %v2772 = vmul.f32 %v2771, %v2739
  %v2773 = vmul.f32 %v2772, %v2771
  %v2774 = vmul.f32 0.5, %v2773
  %v2775 = vsub.f32 1.5, %v2774
  %v2776 = vmul.f32 %v2771, %v2775
  %vm2777 = vweird.f32 %v2739
  %vm2778 = vweird.f32 %v2771
  %vm2779 = vmor %vm2777, %vm2778
  %v2780 = vsel %vm2779, %v2771, %v2776
  %v2781 = vrsqrt.pop %v2740
  %v2782 = vmul.f32 %v2781, %v2740
  %v2783 = vmul.f32 %v2782, %v2781
  %v2784 = vmul.f32 0.5, %v2783
  %v2785 = vsub.f32 1.5, %v2784
  %v2786 = vmul.f32 %v2781, %v2785
  %vm2787 = vweird.f32 %v2740
  %vm2788 = vweird.f32 %v2781
  %vm2789 = vmor %vm2787, %vm2788
  %v2790 = vsel %vm2789, %v2781, %v2786
  %v2791 = vmul.f32 %v2711, %v2750
  %v2792 = vmul.f32 %v2712, %v2760
  %v2793 = vmul.f32 %v2713, %v2770
  %v2794 = vmul.f32 %v2714, %v2780
  %v2795 = vmul.f32 %v2715, %v2790
  %v2797 = vperm.slane %v2693, 0
  %v2799 = vmul.f32 %v2791, %v2797
  %v2800 = vmul.f32 %v2792, %v2797
  %v2801 = vmul.f32 %v2793, %v2797
  %v2802 = vmul.f32 %v2794, %v2797
  %v2803 = vmul.f32 %v2795, %v2797
  %v2805 = vperm.slane %v2695, 0
  %v2807 = vadd.f32 %v2799, %v2805
  %v2808 = vadd.f32 %v2800, %v2805
  %v2809 = vadd.f32 %v2801, %v2805
  %v2810 = vadd.f32 %v2802, %v2805
  %v2811 = vadd.f32 %v2803, %v2805
  %s2812 = scalar_lea.vmem %s6, 1536
  %v2813 = vld [vmem:[%s2812] sm:$0xff]
  %v2814 = vld [vmem:[%s2812 + $0x8] sm:$0xff]
  %v2815 = vld [vmem:[%s2812 + $0x10] sm:$0xff]
  %v2816 = vld [vmem:[%s2812 + $0x18] sm:$0xff]
  %v2817 = vld [vmem:[%s2812 + $0x20] sm:$0xff]
  %v2818 = vld [vmem:[%s2812 + $0x28] sm:$0xff]
  %v2819 = vld [vmem:[%s2812 + $0x30] sm:$0xff]
  %v2820 = vld [vmem:[%s2812 + $0x38] sm:$0xff]
  %v2821 = vld [vmem:[%s2812 + $0x40] sm:$0xff]
  %v2822 = vld [vmem:[%s2812 + $0x48] sm:$0xff]
  %v2823 = vld [vmem:[%s2812 + $0x50] sm:$0xff]
  %v2824 = vld [vmem:[%s2812 + $0x58] sm:$0xff]
  %v2825 = vld [vmem:[%s2812 + $0x60] sm:$0xff]
  %v2826 = vld [vmem:[%s2812 + $0x68] sm:$0xff]
  %v2827 = vld [vmem:[%s2812 + $0x70] sm:$0xff]
  %v2828 = vld [vmem:[%s2812 + $0x78] sm:$0xff]
  %v2829 = vpack.c.bf16 %v2808, %v2807
  %v2830 = vpack.c.bf16 %v2810, %v2809
  %v2831 = vpack.c.bf16 %v2811, %v2811
  %v2832 = vpack.c.bf16 %v2814, %v2813
  %v2833 = vpack.c.bf16 %v2816, %v2815
  %v2834 = vpack.c.bf16 %v2818, %v2817
  %v2835 = vpack.c.bf16 %v2820, %v2819
  %v2836 = vpack.c.bf16 %v2822, %v2821
  %v2837 = vpack.c.bf16 %v2824, %v2823
  %v2838 = vpack.c.bf16 %v2826, %v2825
  %v2839 = vpack.c.bf16 %v2828, %v2827
  %s2840 = scalar_lea.vmem %s7, 12
  %v2841 = vld [vmem:[%s2840] sm:$0x1]
  %v2843 = vperm.slane %v2841, 0
  %2845 = vmatpush.bf16.msra.mxu0 %v2839
  %2846 = vmatpush.bf16.msra.mxu0 %v2838
  %2847 = vmatpush.bf16.msra.mxu0 %v2837
  %2848 = vmatpush.bf16.msra.mxu0 %v2836
  %2849 = vmatpush.bf16.msra.mxu0 %v2835
  %2850 = vmatpush.bf16.msra.mxu0 %v2834
  %2851 = vmatpush.bf16.msra.mxu0 %v2833
  %2852 = vmatpush.bf16.msra.mxu0 %v2832
  %2853 = vmatmul.bf16.gmra.mxu0 %v2829
  %v2854 = vpop.f32.mrf.mxu0
  %v2855 = vadd.f32 %v2843, %v2854
  %v2856 = vpop.f32.mrf.mxu0
  %v2857 = vadd.f32 %v2843, %v2856
  %2858 = vmatmul.bf16.gmra.mxu0 %v2830
  %v2859 = vpop.f32.mrf.mxu0
  %v2860 = vadd.f32 %v2843, %v2859
  %v2861 = vpop.f32.mrf.mxu0
  %v2862 = vadd.f32 %v2843, %v2861
  %2863 = vmatmul.bf16.gmra.mxu0 %v2831
  %v2864 = vpop.f32.mrf.mxu0
  %v2865 = vadd.f32 %v2843, %v2864
  %v2866 = vpop.f32.mrf.mxu0
  %2867 = vdwg.mxu0
  %s2868 = scalar_lea.vmem %s6, 2048
  %v2869 = vld [vmem:[%s2868] sm:$0xff]
  %v2870 = vld [vmem:[%s2868 + $0x8] sm:$0xff]
  %v2871 = vld [vmem:[%s2868 + $0x10] sm:$0xff]
  %v2872 = vld [vmem:[%s2868 + $0x18] sm:$0xff]
  %v2873 = vld [vmem:[%s2868 + $0x20] sm:$0xff]
  %v2874 = vld [vmem:[%s2868 + $0x28] sm:$0xff]
  %v2875 = vld [vmem:[%s2868 + $0x30] sm:$0xff]
  %v2876 = vld [vmem:[%s2868 + $0x38] sm:$0xff]
  %v2877 = vld [vmem:[%s2868 + $0x40] sm:$0xff]
  %v2878 = vld [vmem:[%s2868 + $0x48] sm:$0xff]
  %v2879 = vld [vmem:[%s2868 + $0x50] sm:$0xff]
  %v2880 = vld [vmem:[%s2868 + $0x58] sm:$0xff]
  %v2881 = vld [vmem:[%s2868 + $0x60] sm:$0xff]
  %v2882 = vld [vmem:[%s2868 + $0x68] sm:$0xff]
  %v2883 = vld [vmem:[%s2868 + $0x70] sm:$0xff]
  %v2884 = vld [vmem:[%s2868 + $0x78] sm:$0xff]
  %v2885 = vpack.c.bf16 %v2870, %v2869
  %v2886 = vpack.c.bf16 %v2872, %v2871
  %v2887 = vpack.c.bf16 %v2874, %v2873
  %v2888 = vpack.c.bf16 %v2876, %v2875
  %v2889 = vpack.c.bf16 %v2878, %v2877
  %v2890 = vpack.c.bf16 %v2880, %v2879
  %v2891 = vpack.c.bf16 %v2882, %v2881
  %v2892 = vpack.c.bf16 %v2884, %v2883
  %s2893 = scalar_lea.vmem %s7, 16
  %v2894 = vld [vmem:[%s2893] sm:$0x1]
  %v2896 = vperm.slane %v2894, 0
  %2898 = vmatpush.bf16.msra.mxu0 %v2892
  %2899 = vmatpush.bf16.msra.mxu0 %v2891
  %2900 = vmatpush.bf16.msra.mxu0 %v2890
  %2901 = vmatpush.bf16.msra.mxu0 %v2889
  %2902 = vmatpush.bf16.msra.mxu0 %v2888
  %2903 = vmatpush.bf16.msra.mxu0 %v2887
  %2904 = vmatpush.bf16.msra.mxu0 %v2886
  %2905 = vmatpush.bf16.msra.mxu0 %v2885
  %2906 = vmatmul.bf16.gmra.mxu0 %v2829
  %v2907 = vpop.f32.mrf.mxu0
  %v2908 = vadd.f32 %v2896, %v2907
  %v2909 = vpop.f32.mrf.mxu0
  %v2910 = vadd.f32 %v2896, %v2909
  %2911 = vmatmul.bf16.gmra.mxu0 %v2830
  %v2912 = vpop.f32.mrf.mxu0
  %v2913 = vadd.f32 %v2896, %v2912
  %v2914 = vpop.f32.mrf.mxu0
  %v2915 = vadd.f32 %v2896, %v2914
  %2916 = vmatmul.bf16.gmra.mxu0 %v2831
  %v2917 = vpop.f32.mrf.mxu0
  %v2918 = vadd.f32 %v2896, %v2917
  %v2919 = vpop.f32.mrf.mxu0
  %2920 = vdwg.mxu0
  %s2921 = scalar_lea.vmem %s6, 2560
  %v2922 = vld [vmem:[%s2921] sm:$0xff]
  %v2923 = vld [vmem:[%s2921 + $0x8] sm:$0xff]
  %v2924 = vld [vmem:[%s2921 + $0x10] sm:$0xff]
  %v2925 = vld [vmem:[%s2921 + $0x18] sm:$0xff]
  %v2926 = vld [vmem:[%s2921 + $0x20] sm:$0xff]
  %v2927 = vld [vmem:[%s2921 + $0x28] sm:$0xff]
  %v2928 = vld [vmem:[%s2921 + $0x30] sm:$0xff]
  %v2929 = vld [vmem:[%s2921 + $0x38] sm:$0xff]
  %v2930 = vld [vmem:[%s2921 + $0x40] sm:$0xff]
  %v2931 = vld [vmem:[%s2921 + $0x48] sm:$0xff]
  %v2932 = vld [vmem:[%s2921 + $0x50] sm:$0xff]
  %v2933 = vld [vmem:[%s2921 + $0x58] sm:$0xff]
  %v2934 = vld [vmem:[%s2921 + $0x60] sm:$0xff]
  %v2935 = vld [vmem:[%s2921 + $0x68] sm:$0xff]
  %v2936 = vld [vmem:[%s2921 + $0x70] sm:$0xff]
  %v2937 = vld [vmem:[%s2921 + $0x78] sm:$0xff]
  %v2938 = vpack.c.bf16 %v2923, %v2922
  %v2939 = vpack.c.bf16 %v2925, %v2924
  %v2940 = vpack.c.bf16 %v2927, %v2926
  %v2941 = vpack.c.bf16 %v2929, %v2928
  %v2942 = vpack.c.bf16 %v2931, %v2930
  %v2943 = vpack.c.bf16 %v2933, %v2932
  %v2944 = vpack.c.bf16 %v2935, %v2934
  %v2945 = vpack.c.bf16 %v2937, %v2936
  %s2946 = scalar_lea.vmem %s7, 20
  %v2947 = vld [vmem:[%s2946] sm:$0x1]
  %v2949 = vperm.slane %v2947, 0
  %2951 = vmatpush.bf16.msra.mxu0 %v2945
  %2952 = vmatpush.bf16.msra.mxu0 %v2944
  %2953 = vmatpush.bf16.msra.mxu0 %v2943
  %2954 = vmatpush.bf16.msra.mxu0 %v2942
  %2955 = vmatpush.bf16.msra.mxu0 %v2941
  %2956 = vmatpush.bf16.msra.mxu0 %v2940
  %2957 = vmatpush.bf16.msra.mxu0 %v2939
  %2958 = vmatpush.bf16.msra.mxu0 %v2938
  %2959 = vmatmul.bf16.gmra.mxu0 %v2829
  %v2960 = vpop.f32.mrf.mxu0
  %v2961 = vadd.f32 %v2949, %v2960
  %v2962 = vpop.f32.mrf.mxu0
  %v2963 = vadd.f32 %v2949, %v2962
  %2964 = vmatmul.bf16.gmra.mxu0 %v2830
  %v2965 = vpop.f32.mrf.mxu0
  %v2966 = vadd.f32 %v2949, %v2965
  %v2967 = vpop.f32.mrf.mxu0
  %v2968 = vadd.f32 %v2949, %v2967
  %2969 = vmatmul.bf16.gmra.mxu0 %v2831
  %v2970 = vpop.f32.mrf.mxu0
  %v2971 = vadd.f32 %v2949, %v2970
  %v2972 = vpop.f32.mrf.mxu0
  %2973 = vdwg.mxu0
  %2974 = vxpose.xlu0.b32.start [1/16] %v2908, 128
  %2975 = vxpose.xlu0.b32.cont [2/16] %v2910, 128
  %2976 = vxpose.xlu0.b32.cont [3/16] %v2913, 128
  %2977 = vxpose.xlu0.b32.cont [4/16] %v2915, 128
  %2978 = vxpose.xlu0.b32.cont [5/16] %v2918, 128
  %2979 = vxpose.xlu0.b32.cont [6/16] 0.0, 128
  %2980 = vxpose.xlu0.b32.cont [7/16] 0.0, 128
  %2981 = vxpose.xlu0.b32.cont [8/16] 0.0, 128
  %2982 = vxpose.xlu0.b32.cont [9/16] 0.0, 128
  %2983 = vxpose.xlu0.b32.cont [10/16] 0.0, 128
  %2984 = vxpose.xlu0.b32.cont [11/16] 0.0, 128
  %2985 = vxpose.xlu0.b32.cont [12/16] 0.0, 128
  %2986 = vxpose.xlu0.b32.cont [13/16] 0.0, 128
  %2987 = vxpose.xlu0.b32.cont [14/16] 0.0, 128
  %2988 = vxpose.xlu0.b32.cont [15/16] 0.0, 128
  %2989 = vxpose.xlu0.b32.end [16/16] 0.0, 128
  %v2990 = vpop.trf.xlu0
  %v2991 = vpop.trf.xlu0
  %v2992 = vpop.trf.xlu0
  %v2993 = vpop.trf.xlu0
  %v2994 = vpop.trf.xlu0
  %v2995 = vpop.trf.xlu0
  %v2996 = vpop.trf.xlu0
  %v2997 = vpop.trf.xlu0
  %v2998 = vpop.trf.xlu0
  %v2999 = vpop.trf.xlu0
  %v3000 = vpop.trf.xlu0
  %v3001 = vpop.trf.xlu0
  %v3002 = vpop.trf.xlu0
  %v3003 = vpop.trf.xlu0
  %v3004 = vpop.trf.xlu0
  %v3005 = vpop.trf.xlu0
  %v3006 = vpack.c.bf16 %v2857, %v2855
  %v3007 = vpack.c.bf16 %v2862, %v2860
  %v3008 = vpack.c.bf16 %v2865, %v2865
  %v3009 = vpack.c.bf16 %v2991, %v2990
  %v3010 = vpack.c.bf16 %v2993, %v2992
  %v3012 = vsel %vm405, %v3006, 0
  %v3015 = vsel %vm405, %v3007, 0
  %v3018 = vsel %vm405, %v3008, 0
  %3020 = vmatpush.bf16.msra.mxu0 0
  %3021 = vmatpush.bf16.msra.mxu0 0
  %3022 = vmatpush.bf16.msra.mxu0 0
  %3023 = vmatpush.bf16.msra.mxu0 0
  %3024 = vmatpush.bf16.msra.mxu0 0
  %3025 = vmatpush.bf16.msra.mxu0 0
  %3026 = vmatpush.bf16.msra.mxu0 %v3010
  %3027 = vmatpush.bf16.msra.mxu0 %v3009
  %3028 = vmatmul.bf16.gmra.mxu0 %v3012
  %v3029 = vpop.f32.mrf.mxu0
  %v3030 = vadd.f32 0.0, %v3029
  %v3031 = vpop.f32.mrf.mxu0
  %v3032 = vadd.f32 0.0, %v3031
  %3033 = vmatmul.bf16.gmra.mxu0 %v3015
  %v3034 = vpop.f32.mrf.mxu0
  %v3035 = vadd.f32 0.0, %v3034
  %v3036 = vpop.f32.mrf.mxu0
  %v3037 = vadd.f32 0.0, %v3036
  %3038 = vmatmul.bf16.gmra.mxu0 %v3018
  %v3039 = vpop.f32.mrf.mxu0
  %v3040 = vadd.f32 0.0, %v3039
  %v3041 = vpop.f32.mrf.mxu0
  %3042 = vdwg.mxu0
  %v3043 = vmul.f32 %v3030, 0.17677669
  %v3044 = vmul.f32 %v3032, 0.17677669
  %v3045 = vmul.f32 %v3035, 0.17677669
  %v3046 = vmul.f32 %v3037, 0.17677669
  %v3047 = vmul.f32 %v3040, 0.17677669
  %v3048 = vadd.f32 %v3043, %v78
  %v3049 = vadd.f32 %v3044, %v79
  %v3050 = vadd.f32 %v3045, %v80
  %v3051 = vadd.f32 %v3046, %v81
  %v3052 = vadd.f32 %v3047, %v82
  %v3053 = vsel %vm448, %v3048, -inf
  %3054 = vmax.xlane.f32.xlu0 %v3053
  %v3055 = vpop.xlane.xlu0 %3054
  %v3056 = vsel %vm448, %v3049, -inf
  %3057 = vmax.xlane.f32.xlu0 %v3056
  %v3058 = vpop.xlane.xlu0 %3057
  %v3059 = vsel %vm448, %v3050, -inf
  %3060 = vmax.xlane.f32.xlu0 %v3059
  %v3061 = vpop.xlane.xlu0 %3060
  %v3062 = vsel %vm448, %v3051, -inf
  %3063 = vmax.xlane.f32.xlu0 %v3062
  %v3064 = vpop.xlane.xlu0 %3063
  %v3065 = vsel %vm448, %v3052, -inf
  %3066 = vmax.xlane.f32.xlu0 %v3065
  %v3067 = vpop.xlane.xlu0 %3066
  %v3068 = vsub.f32 %v3048, %v3055
  %v3069 = vsub.f32 %v3049, %v3058
  %v3070 = vsub.f32 %v3050, %v3061
  %v3071 = vsub.f32 %v3051, %v3064
  %v3072 = vsub.f32 %v3052, %v3067
  %v3073 = vmul.f32 %v3068, 1.442695
  %v3074 = vpow.pop %v3073
  %v3075 = vmul.f32 %v3069, 1.442695
  %v3076 = vpow.pop %v3075
  %v3077 = vmul.f32 %v3070, 1.442695
  %v3078 = vpow.pop %v3077
  %v3079 = vmul.f32 %v3071, 1.442695
  %v3080 = vpow.pop %v3079
  %v3081 = vmul.f32 %v3072, 1.442695
  %v3082 = vpow.pop %v3081
  %v3083 = vsel %vm448, %v3074, 0.0
  %3084 = vadd.xlane.f32.xlu0 %v3083
  %v3085 = vpop.xlane.xlu0 %3084
  %v3086 = vsel %vm448, %v3076, 0.0
  %3087 = vadd.xlane.f32.xlu0 %v3086
  %v3088 = vpop.xlane.xlu0 %3087
  %v3089 = vsel %vm448, %v3078, 0.0
  %3090 = vadd.xlane.f32.xlu0 %v3089
  %v3091 = vpop.xlane.xlu0 %3090
  %v3092 = vsel %vm448, %v3080, 0.0
  %3093 = vadd.xlane.f32.xlu0 %v3092
  %v3094 = vpop.xlane.xlu0 %3093
  %v3095 = vsel %vm448, %v3082, 0.0
  %3096 = vadd.xlane.f32.xlu0 %v3095
  %v3097 = vpop.xlane.xlu0 %3096
  %v3098 = vrcp.pop %v3085
  %v3099 = vrcp.pop %v3088
  %v3100 = vrcp.pop %v3091
  %v3101 = vrcp.pop %v3094
  %v3102 = vrcp.pop %v3097
  %v3103 = vmul.f32 %v3074, %v3098
  %v3104 = vmul.f32 %v3076, %v3099
  %v3105 = vmul.f32 %v3078, %v3100
  %v3106 = vmul.f32 %v3080, %v3101
  %v3107 = vmul.f32 %v3082, %v3102
  %v3108 = vpack.c.bf16 %v3104, %v3103
  %v3109 = vpack.c.bf16 %v3106, %v3105
  %v3110 = vpack.c.bf16 %v3107, %v3107
  %v3111 = vpack.c.bf16 %v2963, %v2961
  %v3112 = vpack.c.bf16 %v2968, %v2966
  %v3113 = vpack.c.bf16 %v2971, %v2971
  %v3115 = vsel %vm448, %v3108, 0
  %v3118 = vsel %vm448, %v3109, 0
  %v3121 = vsel %vm448, %v3110, 0
  %v3124 = vsel %vm519, %v3113, 0
  %3126 = vmatpush.bf16.msra.mxu0 0
  %3127 = vmatpush.bf16.msra.mxu0 0
  %3128 = vmatpush.bf16.msra.mxu0 0
  %3129 = vmatpush.bf16.msra.mxu0 0
  %3130 = vmatpush.bf16.msra.mxu0 0
  %3131 = vmatpush.bf16.msra.mxu0 %v3124
  %3132 = vmatpush.bf16.msra.mxu0 %v3112
  %3133 = vmatpush.bf16.msra.mxu0 %v3111
  %3134 = vmatmul.bf16.gmra.mxu0 %v3115
  %v3135 = vpop.f32.mrf.mxu0
  %v3136 = vadd.f32 0.0, %v3135
  %v3137 = vpop.f32.mrf.mxu0
  %v3138 = vadd.f32 0.0, %v3137
  %3139 = vmatmul.bf16.gmra.mxu0 %v3118
  %v3140 = vpop.f32.mrf.mxu0
  %v3141 = vadd.f32 0.0, %v3140
  %v3142 = vpop.f32.mrf.mxu0
  %v3143 = vadd.f32 0.0, %v3142
  %3144 = vmatmul.bf16.gmra.mxu0 %v3121
  %v3145 = vpop.f32.mrf.mxu0
  %v3146 = vadd.f32 0.0, %v3145
  %v3147 = vpop.f32.mrf.mxu0
  %3148 = vdwg.mxu0
  %s3149 = scalar_lea.vmem %s8, 128
  %v3150 = vld [vmem:[%s3149] sm:$0xff]
  %v3151 = vld [vmem:[%s3149 + $0x8] sm:$0xff]
  %v3152 = vld [vmem:[%s3149 + $0x10] sm:$0xff]
  %v3153 = vld [vmem:[%s3149 + $0x18] sm:$0xff]
  %v3154 = vpack.c.bf16 %v3138, %v3136
  %v3155 = vpack.c.bf16 %v3143, %v3141
  %v3156 = vpack.c.bf16 %v3146, %v3146
  %v3157 = vpack.c.bf16 %v3151, %v3150
  %v3158 = vpack.c.bf16 %v3153, %v3152
  %s3159 = scalar_lea.vmem %s6, 1664
  %v3160 = vld [vmem:[%s3159] sm:$0xff]
  %v3161 = vld [vmem:[%s3159 + $0x8] sm:$0xff]
  %v3162 = vld [vmem:[%s3159 + $0x10] sm:$0xff]
  %v3163 = vld [vmem:[%s3159 + $0x18] sm:$0xff]
  %v3164 = vld [vmem:[%s3159 + $0x20] sm:$0xff]
  %v3165 = vld [vmem:[%s3159 + $0x28] sm:$0xff]
  %v3166 = vld [vmem:[%s3159 + $0x30] sm:$0xff]
  %v3167 = vld [vmem:[%s3159 + $0x38] sm:$0xff]
  %v3168 = vld [vmem:[%s3159 + $0x40] sm:$0xff]
  %v3169 = vld [vmem:[%s3159 + $0x48] sm:$0xff]
  %v3170 = vld [vmem:[%s3159 + $0x50] sm:$0xff]
  %v3171 = vld [vmem:[%s3159 + $0x58] sm:$0xff]
  %v3172 = vld [vmem:[%s3159 + $0x60] sm:$0xff]
  %v3173 = vld [vmem:[%s3159 + $0x68] sm:$0xff]
  %v3174 = vld [vmem:[%s3159 + $0x70] sm:$0xff]
  %v3175 = vld [vmem:[%s3159 + $0x78] sm:$0xff]
  %v3176 = vpack.c.bf16 %v3161, %v3160
  %v3177 = vpack.c.bf16 %v3163, %v3162
  %v3178 = vpack.c.bf16 %v3165, %v3164
  %v3179 = vpack.c.bf16 %v3167, %v3166
  %v3180 = vpack.c.bf16 %v3169, %v3168
  %v3181 = vpack.c.bf16 %v3171, %v3170
  %v3182 = vpack.c.bf16 %v3173, %v3172
  %v3183 = vpack.c.bf16 %v3175, %v3174
  %s3184 = scalar_lea.vmem %s7, 13
  %v3185 = vld [vmem:[%s3184] sm:$0x1]
  %v3187 = vperm.slane %v3185, 0
  %3189 = vmatpush.bf16.msra.mxu0 %v3183
  %3190 = vmatpush.bf16.msra.mxu0 %v3182
  %3191 = vmatpush.bf16.msra.mxu0 %v3181
  %3192 = vmatpush.bf16.msra.mxu0 %v3180
  %3193 = vmatpush.bf16.msra.mxu0 %v3179
  %3194 = vmatpush.bf16.msra.mxu0 %v3178
  %3195 = vmatpush.bf16.msra.mxu0 %v3177
  %3196 = vmatpush.bf16.msra.mxu0 %v3176
  %3197 = vmatmul.bf16.gmra.mxu0 %v2829
  %v3198 = vpop.f32.mrf.mxu0
  %v3199 = vadd.f32 %v3187, %v3198
  %v3200 = vpop.f32.mrf.mxu0
  %v3201 = vadd.f32 %v3187, %v3200
  %3202 = vmatmul.bf16.gmra.mxu0 %v2830
  %v3203 = vpop.f32.mrf.mxu0
  %v3204 = vadd.f32 %v3187, %v3203
  %v3205 = vpop.f32.mrf.mxu0
  %v3206 = vadd.f32 %v3187, %v3205
  %3207 = vmatmul.bf16.gmra.mxu0 %v2831
  %v3208 = vpop.f32.mrf.mxu0
  %v3209 = vadd.f32 %v3187, %v3208
  %v3210 = vpop.f32.mrf.mxu0
  %3211 = vdwg.mxu0
  %s3212 = scalar_lea.vmem %s6, 2176
  %v3213 = vld [vmem:[%s3212] sm:$0xff]
  %v3214 = vld [vmem:[%s3212 + $0x8] sm:$0xff]
  %v3215 = vld [vmem:[%s3212 + $0x10] sm:$0xff]
  %v3216 = vld [vmem:[%s3212 + $0x18] sm:$0xff]
  %v3217 = vld [vmem:[%s3212 + $0x20] sm:$0xff]
  %v3218 = vld [vmem:[%s3212 + $0x28] sm:$0xff]
  %v3219 = vld [vmem:[%s3212 + $0x30] sm:$0xff]
  %v3220 = vld [vmem:[%s3212 + $0x38] sm:$0xff]
  %v3221 = vld [vmem:[%s3212 + $0x40] sm:$0xff]
  %v3222 = vld [vmem:[%s3212 + $0x48] sm:$0xff]
  %v3223 = vld [vmem:[%s3212 + $0x50] sm:$0xff]
  %v3224 = vld [vmem:[%s3212 + $0x58] sm:$0xff]
  %v3225 = vld [vmem:[%s3212 + $0x60] sm:$0xff]
  %v3226 = vld [vmem:[%s3212 + $0x68] sm:$0xff]
  %v3227 = vld [vmem:[%s3212 + $0x70] sm:$0xff]
  %v3228 = vld [vmem:[%s3212 + $0x78] sm:$0xff]
  %v3229 = vpack.c.bf16 %v3214, %v3213
  %v3230 = vpack.c.bf16 %v3216, %v3215
  %v3231 = vpack.c.bf16 %v3218, %v3217
  %v3232 = vpack.c.bf16 %v3220, %v3219
  %v3233 = vpack.c.bf16 %v3222, %v3221
  %v3234 = vpack.c.bf16 %v3224, %v3223
  %v3235 = vpack.c.bf16 %v3226, %v3225
  %v3236 = vpack.c.bf16 %v3228, %v3227
  %s3237 = scalar_lea.vmem %s7, 17
  %v3238 = vld [vmem:[%s3237] sm:$0x1]
  %v3240 = vperm.slane %v3238, 0
  %3242 = vmatpush.bf16.msra.mxu0 %v3236
  %3243 = vmatpush.bf16.msra.mxu0 %v3235
  %3244 = vmatpush.bf16.msra.mxu0 %v3234
  %3245 = vmatpush.bf16.msra.mxu0 %v3233
  %3246 = vmatpush.bf16.msra.mxu0 %v3232
  %3247 = vmatpush.bf16.msra.mxu0 %v3231
  %3248 = vmatpush.bf16.msra.mxu0 %v3230
  %3249 = vmatpush.bf16.msra.mxu0 %v3229
  %3250 = vmatmul.bf16.gmra.mxu0 %v2829
  %v3251 = vpop.f32.mrf.mxu0
  %v3252 = vadd.f32 %v3240, %v3251
  %v3253 = vpop.f32.mrf.mxu0
  %v3254 = vadd.f32 %v3240, %v3253
  %3255 = vmatmul.bf16.gmra.mxu0 %v2830
  %v3256 = vpop.f32.mrf.mxu0
  %v3257 = vadd.f32 %v3240, %v3256
  %v3258 = vpop.f32.mrf.mxu0
  %v3259 = vadd.f32 %v3240, %v3258
  %3260 = vmatmul.bf16.gmra.mxu0 %v2831
  %v3261 = vpop.f32.mrf.mxu0
  %v3262 = vadd.f32 %v3240, %v3261
  %v3263 = vpop.f32.mrf.mxu0
  %3264 = vdwg.mxu0
  %s3265 = scalar_lea.vmem %s6, 2688
  %v3266 = vld [vmem:[%s3265] sm:$0xff]
  %v3267 = vld [vmem:[%s3265 + $0x8] sm:$0xff]
  %v3268 = vld [vmem:[%s3265 + $0x10] sm:$0xff]
  %v3269 = vld [vmem:[%s3265 + $0x18] sm:$0xff]
  %v3270 = vld [vmem:[%s3265 + $0x20] sm:$0xff]
  %v3271 = vld [vmem:[%s3265 + $0x28] sm:$0xff]
  %v3272 = vld [vmem:[%s3265 + $0x30] sm:$0xff]
  %v3273 = vld [vmem:[%s3265 + $0x38] sm:$0xff]
  %v3274 = vld [vmem:[%s3265 + $0x40] sm:$0xff]
  %v3275 = vld [vmem:[%s3265 + $0x48] sm:$0xff]
  %v3276 = vld [vmem:[%s3265 + $0x50] sm:$0xff]
  %v3277 = vld [vmem:[%s3265 + $0x58] sm:$0xff]
  %v3278 = vld [vmem:[%s3265 + $0x60] sm:$0xff]
  %v3279 = vld [vmem:[%s3265 + $0x68] sm:$0xff]
  %v3280 = vld [vmem:[%s3265 + $0x70] sm:$0xff]
  %v3281 = vld [vmem:[%s3265 + $0x78] sm:$0xff]
  %v3282 = vpack.c.bf16 %v3267, %v3266
  %v3283 = vpack.c.bf16 %v3269, %v3268
  %v3284 = vpack.c.bf16 %v3271, %v3270
  %v3285 = vpack.c.bf16 %v3273, %v3272
  %v3286 = vpack.c.bf16 %v3275, %v3274
  %v3287 = vpack.c.bf16 %v3277, %v3276
  %v3288 = vpack.c.bf16 %v3279, %v3278
  %v3289 = vpack.c.bf16 %v3281, %v3280
  %s3290 = scalar_lea.vmem %s7, 21
  %v3291 = vld [vmem:[%s3290] sm:$0x1]
  %v3293 = vperm.slane %v3291, 0
  %3295 = vmatpush.bf16.msra.mxu0 %v3289
  %3296 = vmatpush.bf16.msra.mxu0 %v3288
  %3297 = vmatpush.bf16.msra.mxu0 %v3287
  %3298 = vmatpush.bf16.msra.mxu0 %v3286
  %3299 = vmatpush.bf16.msra.mxu0 %v3285
  %3300 = vmatpush.bf16.msra.mxu0 %v3284
  %3301 = vmatpush.bf16.msra.mxu0 %v3283
  %3302 = vmatpush.bf16.msra.mxu0 %v3282
  %3303 = vmatmul.bf16.gmra.mxu0 %v2829
  %v3304 = vpop.f32.mrf.mxu0
  %v3305 = vadd.f32 %v3293, %v3304
  %v3306 = vpop.f32.mrf.mxu0
  %v3307 = vadd.f32 %v3293, %v3306
  %3308 = vmatmul.bf16.gmra.mxu0 %v2830
  %v3309 = vpop.f32.mrf.mxu0
  %v3310 = vadd.f32 %v3293, %v3309
  %v3311 = vpop.f32.mrf.mxu0
  %v3312 = vadd.f32 %v3293, %v3311
  %3313 = vmatmul.bf16.gmra.mxu0 %v2831
  %v3314 = vpop.f32.mrf.mxu0
  %v3315 = vadd.f32 %v3293, %v3314
  %v3316 = vpop.f32.mrf.mxu0
  %3317 = vdwg.mxu0
  %3318 = vxpose.xlu0.b32.start [1/16] %v3252, 128
  %3319 = vxpose.xlu0.b32.cont [2/16] %v3254, 128
  %3320 = vxpose.xlu0.b32.cont [3/16] %v3257, 128
  %3321 = vxpose.xlu0.b32.cont [4/16] %v3259, 128
  %3322 = vxpose.xlu0.b32.cont [5/16] %v3262, 128
  %3323 = vxpose.xlu0.b32.cont [6/16] 0.0, 128
  %3324 = vxpose.xlu0.b32.cont [7/16] 0.0, 128
  %3325 = vxpose.xlu0.b32.cont [8/16] 0.0, 128
  %3326 = vxpose.xlu0.b32.cont [9/16] 0.0, 128
  %3327 = vxpose.xlu0.b32.cont [10/16] 0.0, 128
  %3328 = vxpose.xlu0.b32.cont [11/16] 0.0, 128
  %3329 = vxpose.xlu0.b32.cont [12/16] 0.0, 128
  %3330 = vxpose.xlu0.b32.cont [13/16] 0.0, 128
  %3331 = vxpose.xlu0.b32.cont [14/16] 0.0, 128
  %3332 = vxpose.xlu0.b32.cont [15/16] 0.0, 128
  %3333 = vxpose.xlu0.b32.end [16/16] 0.0, 128
  %v3334 = vpop.trf.xlu0
  %v3335 = vpop.trf.xlu0
  %v3336 = vpop.trf.xlu0
  %v3337 = vpop.trf.xlu0
  %v3338 = vpop.trf.xlu0
  %v3339 = vpop.trf.xlu0
  %v3340 = vpop.trf.xlu0
  %v3341 = vpop.trf.xlu0
  %v3342 = vpop.trf.xlu0
  %v3343 = vpop.trf.xlu0
  %v3344 = vpop.trf.xlu0
  %v3345 = vpop.trf.xlu0
  %v3346 = vpop.trf.xlu0
  %v3347 = vpop.trf.xlu0
  %v3348 = vpop.trf.xlu0
  %v3349 = vpop.trf.xlu0
  %v3350 = vpack.c.bf16 %v3201, %v3199
  %v3351 = vpack.c.bf16 %v3206, %v3204
  %v3352 = vpack.c.bf16 %v3209, %v3209
  %v3353 = vpack.c.bf16 %v3335, %v3334
  %v3354 = vpack.c.bf16 %v3337, %v3336
  %v3356 = vsel %vm405, %v3350, 0
  %v3359 = vsel %vm405, %v3351, 0
  %v3362 = vsel %vm405, %v3352, 0
  %3364 = vmatpush.bf16.msra.mxu0 0
  %3365 = vmatpush.bf16.msra.mxu0 0
  %3366 = vmatpush.bf16.msra.mxu0 0
  %3367 = vmatpush.bf16.msra.mxu0 0
  %3368 = vmatpush.bf16.msra.mxu0 0
  %3369 = vmatpush.bf16.msra.mxu0 0
  %3370 = vmatpush.bf16.msra.mxu0 %v3354
  %3371 = vmatpush.bf16.msra.mxu0 %v3353
  %3372 = vmatmul.bf16.gmra.mxu0 %v3356
  %v3373 = vpop.f32.mrf.mxu0
  %v3374 = vadd.f32 0.0, %v3373
  %v3375 = vpop.f32.mrf.mxu0
  %v3376 = vadd.f32 0.0, %v3375
  %3377 = vmatmul.bf16.gmra.mxu0 %v3359
  %v3378 = vpop.f32.mrf.mxu0
  %v3379 = vadd.f32 0.0, %v3378
  %v3380 = vpop.f32.mrf.mxu0
  %v3381 = vadd.f32 0.0, %v3380
  %3382 = vmatmul.bf16.gmra.mxu0 %v3362
  %v3383 = vpop.f32.mrf.mxu0
  %v3384 = vadd.f32 0.0, %v3383
  %v3385 = vpop.f32.mrf.mxu0
  %3386 = vdwg.mxu0
  %v3387 = vmul.f32 %v3374, 0.17677669
  %v3388 = vmul.f32 %v3376, 0.17677669
  %v3389 = vmul.f32 %v3379, 0.17677669
  %v3390 = vmul.f32 %v3381, 0.17677669
  %v3391 = vmul.f32 %v3384, 0.17677669
  %v3392 = vadd.f32 %v3387, %v78
  %v3393 = vadd.f32 %v3388, %v79
  %v3394 = vadd.f32 %v3389, %v80
  %v3395 = vadd.f32 %v3390, %v81
  %v3396 = vadd.f32 %v3391, %v82
  %v3397 = vsel %vm448, %v3392, -inf
  %3398 = vmax.xlane.f32.xlu0 %v3397
  %v3399 = vpop.xlane.xlu0 %3398
  %v3400 = vsel %vm448, %v3393, -inf
  %3401 = vmax.xlane.f32.xlu0 %v3400
  %v3402 = vpop.xlane.xlu0 %3401
  %v3403 = vsel %vm448, %v3394, -inf
  %3404 = vmax.xlane.f32.xlu0 %v3403
  %v3405 = vpop.xlane.xlu0 %3404
  %v3406 = vsel %vm448, %v3395, -inf
  %3407 = vmax.xlane.f32.xlu0 %v3406
  %v3408 = vpop.xlane.xlu0 %3407
  %v3409 = vsel %vm448, %v3396, -inf
  %3410 = vmax.xlane.f32.xlu0 %v3409
  %v3411 = vpop.xlane.xlu0 %3410
  %v3412 = vsub.f32 %v3392, %v3399
  %v3413 = vsub.f32 %v3393, %v3402
  %v3414 = vsub.f32 %v3394, %v3405
  %v3415 = vsub.f32 %v3395, %v3408
  %v3416 = vsub.f32 %v3396, %v3411
  %v3417 = vmul.f32 %v3412, 1.442695
  %v3418 = vpow.pop %v3417
  %v3419 = vmul.f32 %v3413, 1.442695
  %v3420 = vpow.pop %v3419
  %v3421 = vmul.f32 %v3414, 1.442695
  %v3422 = vpow.pop %v3421
  %v3423 = vmul.f32 %v3415, 1.442695
  %v3424 = vpow.pop %v3423
  %v3425 = vmul.f32 %v3416, 1.442695
  %v3426 = vpow.pop %v3425
  %v3427 = vsel %vm448, %v3418, 0.0
  %3428 = vadd.xlane.f32.xlu0 %v3427
  %v3429 = vpop.xlane.xlu0 %3428
  %v3430 = vsel %vm448, %v3420, 0.0
  %3431 = vadd.xlane.f32.xlu0 %v3430
  %v3432 = vpop.xlane.xlu0 %3431
  %v3433 = vsel %vm448, %v3422, 0.0
  %3434 = vadd.xlane.f32.xlu0 %v3433
  %v3435 = vpop.xlane.xlu0 %3434
  %v3436 = vsel %vm448, %v3424, 0.0
  %3437 = vadd.xlane.f32.xlu0 %v3436
  %v3438 = vpop.xlane.xlu0 %3437
  %v3439 = vsel %vm448, %v3426, 0.0
  %3440 = vadd.xlane.f32.xlu0 %v3439
  %v3441 = vpop.xlane.xlu0 %3440
  %v3442 = vrcp.pop %v3429
  %v3443 = vrcp.pop %v3432
  %v3444 = vrcp.pop %v3435
  %v3445 = vrcp.pop %v3438
  %v3446 = vrcp.pop %v3441
  %v3447 = vmul.f32 %v3418, %v3442
  %v3448 = vmul.f32 %v3420, %v3443
  %v3449 = vmul.f32 %v3422, %v3444
  %v3450 = vmul.f32 %v3424, %v3445
  %v3451 = vmul.f32 %v3426, %v3446
  %v3452 = vpack.c.bf16 %v3448, %v3447
  %v3453 = vpack.c.bf16 %v3450, %v3449
  %v3454 = vpack.c.bf16 %v3451, %v3451
  %v3455 = vpack.c.bf16 %v3307, %v3305
  %v3456 = vpack.c.bf16 %v3312, %v3310
  %v3457 = vpack.c.bf16 %v3315, %v3315
  %v3459 = vsel %vm448, %v3452, 0
  %v3462 = vsel %vm448, %v3453, 0
  %v3465 = vsel %vm448, %v3454, 0
  %v3468 = vsel %vm519, %v3457, 0
  %3470 = vmatpush.bf16.msra.mxu0 0
  %3471 = vmatpush.bf16.msra.mxu0 0
  %3472 = vmatpush.bf16.msra.mxu0 0
  %3473 = vmatpush.bf16.msra.mxu0 0
  %3474 = vmatpush.bf16.msra.mxu0 0
  %3475 = vmatpush.bf16.msra.mxu0 %v3468
  %3476 = vmatpush.bf16.msra.mxu0 %v3456
  %3477 = vmatpush.bf16.msra.mxu0 %v3455
  %3478 = vmatmul.bf16.gmra.mxu0 %v3459
  %v3479 = vpop.f32.mrf.mxu0
  %v3480 = vadd.f32 0.0, %v3479
  %v3481 = vpop.f32.mrf.mxu0
  %v3482 = vadd.f32 0.0, %v3481
  %3483 = vmatmul.bf16.gmra.mxu0 %v3462
  %v3484 = vpop.f32.mrf.mxu0
  %v3485 = vadd.f32 0.0, %v3484
  %v3486 = vpop.f32.mrf.mxu0
  %v3487 = vadd.f32 0.0, %v3486
  %3488 = vmatmul.bf16.gmra.mxu0 %v3465
  %v3489 = vpop.f32.mrf.mxu0
  %v3490 = vadd.f32 0.0, %v3489
  %v3491 = vpop.f32.mrf.mxu0
  %3492 = vdwg.mxu0
  %s3493 = scalar_lea.vmem %s8, 160
  %v3494 = vld [vmem:[%s3493] sm:$0xff]
  %v3495 = vld [vmem:[%s3493 + $0x8] sm:$0xff]
  %v3496 = vld [vmem:[%s3493 + $0x10] sm:$0xff]
  %v3497 = vld [vmem:[%s3493 + $0x18] sm:$0xff]
  %v3498 = vpack.c.bf16 %v3482, %v3480
  %v3499 = vpack.c.bf16 %v3487, %v3485
  %v3500 = vpack.c.bf16 %v3490, %v3490
  %v3501 = vpack.c.bf16 %v3495, %v3494
  %v3502 = vpack.c.bf16 %v3497, %v3496
  %v3504 = vsel %vm405, %v3498, 0
  %v3507 = vsel %vm405, %v3499, 0
  %v3510 = vsel %vm405, %v3500, 0
  %3512 = vmatpush.bf16.msra.mxu0 0
  %3513 = vmatpush.bf16.msra.mxu0 0
  %3514 = vmatpush.bf16.msra.mxu0 0
  %3515 = vmatpush.bf16.msra.mxu0 0
  %3516 = vmatpush.bf16.msra.mxu0 0
  %3517 = vmatpush.bf16.msra.mxu0 0
  %3518 = vmatpush.bf16.msra.mxu0 %v3502
  %3519 = vmatpush.bf16.msra.mxu0 %v3501
  %3520 = vmatmul.bf16.gmra.mxu0 %v3504
  %v3521 = vpop.f32.mrf.mxu0
  %v3522 = vadd.f32 0.0, %v3521
  %v3523 = vpop.f32.mrf.mxu0
  %v3524 = vadd.f32 0.0, %v3523
  %3525 = vmatmul.bf16.gmra.mxu0 %v3507
  %v3526 = vpop.f32.mrf.mxu0
  %v3527 = vadd.f32 0.0, %v3526
  %v3528 = vpop.f32.mrf.mxu0
  %v3529 = vadd.f32 0.0, %v3528
  %3530 = vmatmul.bf16.gmra.mxu0 %v3510
  %v3531 = vpop.f32.mrf.mxu0
  %v3532 = vadd.f32 0.0, %v3531
  %v3533 = vpop.f32.mrf.mxu0
  %3534 = vdwg.mxu0
  %v3536 = vsel %vm405, %v3154, 0
  %v3539 = vsel %vm405, %v3155, 0
  %v3542 = vsel %vm405, %v3156, 0
  %3544 = vmatpush.bf16.msra.mxu0 0
  %3545 = vmatpush.bf16.msra.mxu0 0
  %3546 = vmatpush.bf16.msra.mxu0 0
  %3547 = vmatpush.bf16.msra.mxu0 0
  %3548 = vmatpush.bf16.msra.mxu0 0
  %3549 = vmatpush.bf16.msra.mxu0 0
  %3550 = vmatpush.bf16.msra.mxu0 %v3158
  %3551 = vmatpush.bf16.msra.mxu0 %v3157
  %3552 = vmatmul.bf16.gmra.mxu0 %v3536
  %v3553 = vpop.f32.mrf.mxu0
  %v3554 = vadd.f32 %v3522, %v3553
  %v3555 = vpop.f32.mrf.mxu0
  %v3556 = vadd.f32 %v3524, %v3555
  %3557 = vmatmul.bf16.gmra.mxu0 %v3539
  %v3558 = vpop.f32.mrf.mxu0
  %v3559 = vadd.f32 %v3527, %v3558
  %v3560 = vpop.f32.mrf.mxu0
  %v3561 = vadd.f32 %v3529, %v3560
  %3562 = vmatmul.bf16.gmra.mxu0 %v3542
  %v3563 = vpop.f32.mrf.mxu0
  %v3564 = vadd.f32 %v3532, %v3563
  %v3565 = vpop.f32.mrf.mxu0
  %3566 = vdwg.mxu0
  %s3567 = scalar_lea.vmem %s6, 1792
  %v3568 = vld [vmem:[%s3567] sm:$0xff]
  %v3569 = vld [vmem:[%s3567 + $0x8] sm:$0xff]
  %v3570 = vld [vmem:[%s3567 + $0x10] sm:$0xff]
  %v3571 = vld [vmem:[%s3567 + $0x18] sm:$0xff]
  %v3572 = vld [vmem:[%s3567 + $0x20] sm:$0xff]
  %v3573 = vld [vmem:[%s3567 + $0x28] sm:$0xff]
  %v3574 = vld [vmem:[%s3567 + $0x30] sm:$0xff]
  %v3575 = vld [vmem:[%s3567 + $0x38] sm:$0xff]
  %v3576 = vld [vmem:[%s3567 + $0x40] sm:$0xff]
  %v3577 = vld [vmem:[%s3567 + $0x48] sm:$0xff]
  %v3578 = vld [vmem:[%s3567 + $0x50] sm:$0xff]
  %v3579 = vld [vmem:[%s3567 + $0x58] sm:$0xff]
  %v3580 = vld [vmem:[%s3567 + $0x60] sm:$0xff]
  %v3581 = vld [vmem:[%s3567 + $0x68] sm:$0xff]
  %v3582 = vld [vmem:[%s3567 + $0x70] sm:$0xff]
  %v3583 = vld [vmem:[%s3567 + $0x78] sm:$0xff]
  %v3584 = vpack.c.bf16 %v3569, %v3568
  %v3585 = vpack.c.bf16 %v3571, %v3570
  %v3586 = vpack.c.bf16 %v3573, %v3572
  %v3587 = vpack.c.bf16 %v3575, %v3574
  %v3588 = vpack.c.bf16 %v3577, %v3576
  %v3589 = vpack.c.bf16 %v3579, %v3578
  %v3590 = vpack.c.bf16 %v3581, %v3580
  %v3591 = vpack.c.bf16 %v3583, %v3582
  %s3592 = scalar_lea.vmem %s7, 14
  %v3593 = vld [vmem:[%s3592] sm:$0x1]
  %v3595 = vperm.slane %v3593, 0
  %3597 = vmatpush.bf16.msra.mxu0 %v3591
  %3598 = vmatpush.bf16.msra.mxu0 %v3590
  %3599 = vmatpush.bf16.msra.mxu0 %v3589
  %3600 = vmatpush.bf16.msra.mxu0 %v3588
  %3601 = vmatpush.bf16.msra.mxu0 %v3587
  %3602 = vmatpush.bf16.msra.mxu0 %v3586
  %3603 = vmatpush.bf16.msra.mxu0 %v3585
  %3604 = vmatpush.bf16.msra.mxu0 %v3584
  %3605 = vmatmul.bf16.gmra.mxu0 %v2829
  %v3606 = vpop.f32.mrf.mxu0
  %v3607 = vadd.f32 %v3595, %v3606
  %v3608 = vpop.f32.mrf.mxu0
  %v3609 = vadd.f32 %v3595, %v3608
  %3610 = vmatmul.bf16.gmra.mxu0 %v2830
  %v3611 = vpop.f32.mrf.mxu0
  %v3612 = vadd.f32 %v3595, %v3611
  %v3613 = vpop.f32.mrf.mxu0
  %v3614 = vadd.f32 %v3595, %v3613
  %3615 = vmatmul.bf16.gmra.mxu0 %v2831
  %v3616 = vpop.f32.mrf.mxu0
  %v3617 = vadd.f32 %v3595, %v3616
  %v3618 = vpop.f32.mrf.mxu0
  %3619 = vdwg.mxu0
  %s3620 = scalar_lea.vmem %s6, 2304
  %v3621 = vld [vmem:[%s3620] sm:$0xff]
  %v3622 = vld [vmem:[%s3620 + $0x8] sm:$0xff]
  %v3623 = vld [vmem:[%s3620 + $0x10] sm:$0xff]
  %v3624 = vld [vmem:[%s3620 + $0x18] sm:$0xff]
  %v3625 = vld [vmem:[%s3620 + $0x20] sm:$0xff]
  %v3626 = vld [vmem:[%s3620 + $0x28] sm:$0xff]
  %v3627 = vld [vmem:[%s3620 + $0x30] sm:$0xff]
  %v3628 = vld [vmem:[%s3620 + $0x38] sm:$0xff]
  %v3629 = vld [vmem:[%s3620 + $0x40] sm:$0xff]
  %v3630 = vld [vmem:[%s3620 + $0x48] sm:$0xff]
  %v3631 = vld [vmem:[%s3620 + $0x50] sm:$0xff]
  %v3632 = vld [vmem:[%s3620 + $0x58] sm:$0xff]
  %v3633 = vld [vmem:[%s3620 + $0x60] sm:$0xff]
  %v3634 = vld [vmem:[%s3620 + $0x68] sm:$0xff]
  %v3635 = vld [vmem:[%s3620 + $0x70] sm:$0xff]
  %v3636 = vld [vmem:[%s3620 + $0x78] sm:$0xff]
  %v3637 = vpack.c.bf16 %v3622, %v3621
  %v3638 = vpack.c.bf16 %v3624, %v3623
  %v3639 = vpack.c.bf16 %v3626, %v3625
  %v3640 = vpack.c.bf16 %v3628, %v3627
  %v3641 = vpack.c.bf16 %v3630, %v3629
  %v3642 = vpack.c.bf16 %v3632, %v3631
  %v3643 = vpack.c.bf16 %v3634, %v3633
  %v3644 = vpack.c.bf16 %v3636, %v3635
  %s3645 = scalar_lea.vmem %s7, 18
  %v3646 = vld [vmem:[%s3645] sm:$0x1]
  %v3648 = vperm.slane %v3646, 0
  %3650 = vmatpush.bf16.msra.mxu0 %v3644
  %3651 = vmatpush.bf16.msra.mxu0 %v3643
  %3652 = vmatpush.bf16.msra.mxu0 %v3642
  %3653 = vmatpush.bf16.msra.mxu0 %v3641
  %3654 = vmatpush.bf16.msra.mxu0 %v3640
  %3655 = vmatpush.bf16.msra.mxu0 %v3639
  %3656 = vmatpush.bf16.msra.mxu0 %v3638
  %3657 = vmatpush.bf16.msra.mxu0 %v3637
  %3658 = vmatmul.bf16.gmra.mxu0 %v2829
  %v3659 = vpop.f32.mrf.mxu0
  %v3660 = vadd.f32 %v3648, %v3659
  %v3661 = vpop.f32.mrf.mxu0
  %v3662 = vadd.f32 %v3648, %v3661
  %3663 = vmatmul.bf16.gmra.mxu0 %v2830
  %v3664 = vpop.f32.mrf.mxu0
  %v3665 = vadd.f32 %v3648, %v3664
  %v3666 = vpop.f32.mrf.mxu0
  %v3667 = vadd.f32 %v3648, %v3666
  %3668 = vmatmul.bf16.gmra.mxu0 %v2831
  %v3669 = vpop.f32.mrf.mxu0
  %v3670 = vadd.f32 %v3648, %v3669
  %v3671 = vpop.f32.mrf.mxu0
  %3672 = vdwg.mxu0
  %s3673 = scalar_lea.vmem %s6, 2816
  %v3674 = vld [vmem:[%s3673] sm:$0xff]
  %v3675 = vld [vmem:[%s3673 + $0x8] sm:$0xff]
  %v3676 = vld [vmem:[%s3673 + $0x10] sm:$0xff]
  %v3677 = vld [vmem:[%s3673 + $0x18] sm:$0xff]
  %v3678 = vld [vmem:[%s3673 + $0x20] sm:$0xff]
  %v3679 = vld [vmem:[%s3673 + $0x28] sm:$0xff]
  %v3680 = vld [vmem:[%s3673 + $0x30] sm:$0xff]
  %v3681 = vld [vmem:[%s3673 + $0x38] sm:$0xff]
  %v3682 = vld [vmem:[%s3673 + $0x40] sm:$0xff]
  %v3683 = vld [vmem:[%s3673 + $0x48] sm:$0xff]
  %v3684 = vld [vmem:[%s3673 + $0x50] sm:$0xff]
  %v3685 = vld [vmem:[%s3673 + $0x58] sm:$0xff]
  %v3686 = vld [vmem:[%s3673 + $0x60] sm:$0xff]
  %v3687 = vld [vmem:[%s3673 + $0x68] sm:$0xff]
  %v3688 = vld [vmem:[%s3673 + $0x70] sm:$0xff]
  %v3689 = vld [vmem:[%s3673 + $0x78] sm:$0xff]
  %v3690 = vpack.c.bf16 %v3675, %v3674
  %v3691 = vpack.c.bf16 %v3677, %v3676
  %v3692 = vpack.c.bf16 %v3679, %v3678
  %v3693 = vpack.c.bf16 %v3681, %v3680
  %v3694 = vpack.c.bf16 %v3683, %v3682
  %v3695 = vpack.c.bf16 %v3685, %v3684
  %v3696 = vpack.c.bf16 %v3687, %v3686
  %v3697 = vpack.c.bf16 %v3689, %v3688
  %s3698 = scalar_lea.vmem %s7, 22
  %v3699 = vld [vmem:[%s3698] sm:$0x1]
  %v3701 = vperm.slane %v3699, 0
  %3703 = vmatpush.bf16.msra.mxu0 %v3697
  %3704 = vmatpush.bf16.msra.mxu0 %v3696
  %3705 = vmatpush.bf16.msra.mxu0 %v3695
  %3706 = vmatpush.bf16.msra.mxu0 %v3694
  %3707 = vmatpush.bf16.msra.mxu0 %v3693
  %3708 = vmatpush.bf16.msra.mxu0 %v3692
  %3709 = vmatpush.bf16.msra.mxu0 %v3691
  %3710 = vmatpush.bf16.msra.mxu0 %v3690
  %3711 = vmatmul.bf16.gmra.mxu0 %v2829
  %v3712 = vpop.f32.mrf.mxu0
  %v3713 = vadd.f32 %v3701, %v3712
  %v3714 = vpop.f32.mrf.mxu0
  %v3715 = vadd.f32 %v3701, %v3714
  %3716 = vmatmul.bf16.gmra.mxu0 %v2830
  %v3717 = vpop.f32.mrf.mxu0
  %v3718 = vadd.f32 %v3701, %v3717
  %v3719 = vpop.f32.mrf.mxu0
  %v3720 = vadd.f32 %v3701, %v3719
  %3721 = vmatmul.bf16.gmra.mxu0 %v2831
  %v3722 = vpop.f32.mrf.mxu0
  %v3723 = vadd.f32 %v3701, %v3722
  %v3724 = vpop.f32.mrf.mxu0
  %3725 = vdwg.mxu0
  %3726 = vxpose.xlu0.b32.start [1/16] %v3660, 128
  %3727 = vxpose.xlu0.b32.cont [2/16] %v3662, 128
  %3728 = vxpose.xlu0.b32.cont [3/16] %v3665, 128
  %3729 = vxpose.xlu0.b32.cont [4/16] %v3667, 128
  %3730 = vxpose.xlu0.b32.cont [5/16] %v3670, 128
  %3731 = vxpose.xlu0.b32.cont [6/16] 0.0, 128
  %3732 = vxpose.xlu0.b32.cont [7/16] 0.0, 128
  %3733 = vxpose.xlu0.b32.cont [8/16] 0.0, 128
  %3734 = vxpose.xlu0.b32.cont [9/16] 0.0, 128
  %3735 = vxpose.xlu0.b32.cont [10/16] 0.0, 128
  %3736 = vxpose.xlu0.b32.cont [11/16] 0.0, 128
  %3737 = vxpose.xlu0.b32.cont [12/16] 0.0, 128
  %3738 = vxpose.xlu0.b32.cont [13/16] 0.0, 128
  %3739 = vxpose.xlu0.b32.cont [14/16] 0.0, 128
  %3740 = vxpose.xlu0.b32.cont [15/16] 0.0, 128
  %3741 = vxpose.xlu0.b32.end [16/16] 0.0, 128
  %v3742 = vpop.trf.xlu0
  %v3743 = vpop.trf.xlu0
  %v3744 = vpop.trf.xlu0
  %v3745 = vpop.trf.xlu0
  %v3746 = vpop.trf.xlu0
  %v3747 = vpop.trf.xlu0
  %v3748 = vpop.trf.xlu0
  %v3749 = vpop.trf.xlu0
  %v3750 = vpop.trf.xlu0
  %v3751 = vpop.trf.xlu0
  %v3752 = vpop.trf.xlu0
  %v3753 = vpop.trf.xlu0
  %v3754 = vpop.trf.xlu0
  %v3755 = vpop.trf.xlu0
  %v3756 = vpop.trf.xlu0
  %v3757 = vpop.trf.xlu0
  %v3758 = vpack.c.bf16 %v3609, %v3607
  %v3759 = vpack.c.bf16 %v3614, %v3612
  %v3760 = vpack.c.bf16 %v3617, %v3617
  %v3761 = vpack.c.bf16 %v3743, %v3742
  %v3762 = vpack.c.bf16 %v3745, %v3744
  %v3764 = vsel %vm405, %v3758, 0
  %v3767 = vsel %vm405, %v3759, 0
  %v3770 = vsel %vm405, %v3760, 0
  %3772 = vmatpush.bf16.msra.mxu0 0
  %3773 = vmatpush.bf16.msra.mxu0 0
  %3774 = vmatpush.bf16.msra.mxu0 0
  %3775 = vmatpush.bf16.msra.mxu0 0
  %3776 = vmatpush.bf16.msra.mxu0 0
  %3777 = vmatpush.bf16.msra.mxu0 0
  %3778 = vmatpush.bf16.msra.mxu0 %v3762
  %3779 = vmatpush.bf16.msra.mxu0 %v3761
  %3780 = vmatmul.bf16.gmra.mxu0 %v3764
  %v3781 = vpop.f32.mrf.mxu0
  %v3782 = vadd.f32 0.0, %v3781
  %v3783 = vpop.f32.mrf.mxu0
  %v3784 = vadd.f32 0.0, %v3783
  %3785 = vmatmul.bf16.gmra.mxu0 %v3767
  %v3786 = vpop.f32.mrf.mxu0
  %v3787 = vadd.f32 0.0, %v3786
  %v3788 = vpop.f32.mrf.mxu0
  %v3789 = vadd.f32 0.0, %v3788
  %3790 = vmatmul.bf16.gmra.mxu0 %v3770
  %v3791 = vpop.f32.mrf.mxu0
  %v3792 = vadd.f32 0.0, %v3791
  %v3793 = vpop.f32.mrf.mxu0
  %3794 = vdwg.mxu0
  %v3795 = vmul.f32 %v3782, 0.17677669
  %v3796 = vmul.f32 %v3784, 0.17677669
  %v3797 = vmul.f32 %v3787, 0.17677669
  %v3798 = vmul.f32 %v3789, 0.17677669
  %v3799 = vmul.f32 %v3792, 0.17677669
  %v3800 = vadd.f32 %v3795, %v78
  %v3801 = vadd.f32 %v3796, %v79
  %v3802 = vadd.f32 %v3797, %v80
  %v3803 = vadd.f32 %v3798, %v81
  %v3804 = vadd.f32 %v3799, %v82
  %v3805 = vsel %vm448, %v3800, -inf
  %3806 = vmax.xlane.f32.xlu0 %v3805
  %v3807 = vpop.xlane.xlu0 %3806
  %v3808 = vsel %vm448, %v3801, -inf
  %3809 = vmax.xlane.f32.xlu0 %v3808
  %v3810 = vpop.xlane.xlu0 %3809
  %v3811 = vsel %vm448, %v3802, -inf
  %3812 = vmax.xlane.f32.xlu0 %v3811
  %v3813 = vpop.xlane.xlu0 %3812
  %v3814 = vsel %vm448, %v3803, -inf
  %3815 = vmax.xlane.f32.xlu0 %v3814
  %v3816 = vpop.xlane.xlu0 %3815
  %v3817 = vsel %vm448, %v3804, -inf
  %3818 = vmax.xlane.f32.xlu0 %v3817
  %v3819 = vpop.xlane.xlu0 %3818
  %v3820 = vsub.f32 %v3800, %v3807
  %v3821 = vsub.f32 %v3801, %v3810
  %v3822 = vsub.f32 %v3802, %v3813
  %v3823 = vsub.f32 %v3803, %v3816
  %v3824 = vsub.f32 %v3804, %v3819
  %v3825 = vmul.f32 %v3820, 1.442695
  %v3826 = vpow.pop %v3825
  %v3827 = vmul.f32 %v3821, 1.442695
  %v3828 = vpow.pop %v3827
  %v3829 = vmul.f32 %v3822, 1.442695
  %v3830 = vpow.pop %v3829
  %v3831 = vmul.f32 %v3823, 1.442695
  %v3832 = vpow.pop %v3831
  %v3833 = vmul.f32 %v3824, 1.442695
  %v3834 = vpow.pop %v3833
  %v3835 = vsel %vm448, %v3826, 0.0
  %3836 = vadd.xlane.f32.xlu0 %v3835
  %v3837 = vpop.xlane.xlu0 %3836
  %v3838 = vsel %vm448, %v3828, 0.0
  %3839 = vadd.xlane.f32.xlu0 %v3838
  %v3840 = vpop.xlane.xlu0 %3839
  %v3841 = vsel %vm448, %v3830, 0.0
  %3842 = vadd.xlane.f32.xlu0 %v3841
  %v3843 = vpop.xlane.xlu0 %3842
  %v3844 = vsel %vm448, %v3832, 0.0
  %3845 = vadd.xlane.f32.xlu0 %v3844
  %v3846 = vpop.xlane.xlu0 %3845
  %v3847 = vsel %vm448, %v3834, 0.0
  %3848 = vadd.xlane.f32.xlu0 %v3847
  %v3849 = vpop.xlane.xlu0 %3848
  %v3850 = vrcp.pop %v3837
  %v3851 = vrcp.pop %v3840
  %v3852 = vrcp.pop %v3843
  %v3853 = vrcp.pop %v3846
  %v3854 = vrcp.pop %v3849
  %v3855 = vmul.f32 %v3826, %v3850
  %v3856 = vmul.f32 %v3828, %v3851
  %v3857 = vmul.f32 %v3830, %v3852
  %v3858 = vmul.f32 %v3832, %v3853
  %v3859 = vmul.f32 %v3834, %v3854
  %v3860 = vpack.c.bf16 %v3856, %v3855
  %v3861 = vpack.c.bf16 %v3858, %v3857
  %v3862 = vpack.c.bf16 %v3859, %v3859
  %v3863 = vpack.c.bf16 %v3715, %v3713
  %v3864 = vpack.c.bf16 %v3720, %v3718
  %v3865 = vpack.c.bf16 %v3723, %v3723
  %v3867 = vsel %vm448, %v3860, 0
  %v3870 = vsel %vm448, %v3861, 0
  %v3873 = vsel %vm448, %v3862, 0
  %v3876 = vsel %vm519, %v3865, 0
  %3878 = vmatpush.bf16.msra.mxu0 0
  %3879 = vmatpush.bf16.msra.mxu0 0
  %3880 = vmatpush.bf16.msra.mxu0 0
  %3881 = vmatpush.bf16.msra.mxu0 0
  %3882 = vmatpush.bf16.msra.mxu0 0
  %3883 = vmatpush.bf16.msra.mxu0 %v3876
  %3884 = vmatpush.bf16.msra.mxu0 %v3864
  %3885 = vmatpush.bf16.msra.mxu0 %v3863
  %3886 = vmatmul.bf16.gmra.mxu0 %v3867
  %v3887 = vpop.f32.mrf.mxu0
  %v3888 = vadd.f32 0.0, %v3887
  %v3889 = vpop.f32.mrf.mxu0
  %v3890 = vadd.f32 0.0, %v3889
  %3891 = vmatmul.bf16.gmra.mxu0 %v3870
  %v3892 = vpop.f32.mrf.mxu0
  %v3893 = vadd.f32 0.0, %v3892
  %v3894 = vpop.f32.mrf.mxu0
  %v3895 = vadd.f32 0.0, %v3894
  %3896 = vmatmul.bf16.gmra.mxu0 %v3873
  %v3897 = vpop.f32.mrf.mxu0
  %v3898 = vadd.f32 0.0, %v3897
  %v3899 = vpop.f32.mrf.mxu0
  %3900 = vdwg.mxu0
  %s3901 = scalar_lea.vmem %s8, 192
  %v3902 = vld [vmem:[%s3901] sm:$0xff]
  %v3903 = vld [vmem:[%s3901 + $0x8] sm:$0xff]
  %v3904 = vld [vmem:[%s3901 + $0x10] sm:$0xff]
  %v3905 = vld [vmem:[%s3901 + $0x18] sm:$0xff]
  %v3906 = vpack.c.bf16 %v3890, %v3888
  %v3907 = vpack.c.bf16 %v3895, %v3893
  %v3908 = vpack.c.bf16 %v3898, %v3898
  %v3909 = vpack.c.bf16 %v3903, %v3902
  %v3910 = vpack.c.bf16 %v3905, %v3904
  %v3912 = vsel %vm405, %v3906, 0
  %v3915 = vsel %vm405, %v3907, 0
  %v3918 = vsel %vm405, %v3908, 0
  %3920 = vmatpush.bf16.msra.mxu0 0
  %3921 = vmatpush.bf16.msra.mxu0 0
  %3922 = vmatpush.bf16.msra.mxu0 0
  %3923 = vmatpush.bf16.msra.mxu0 0
  %3924 = vmatpush.bf16.msra.mxu0 0
  %3925 = vmatpush.bf16.msra.mxu0 0
  %3926 = vmatpush.bf16.msra.mxu0 %v3910
  %3927 = vmatpush.bf16.msra.mxu0 %v3909
  %3928 = vmatmul.bf16.gmra.mxu0 %v3912
  %v3929 = vpop.f32.mrf.mxu0
  %v3930 = vadd.f32 0.0, %v3929
  %v3931 = vpop.f32.mrf.mxu0
  %v3932 = vadd.f32 0.0, %v3931
  %3933 = vmatmul.bf16.gmra.mxu0 %v3915
  %v3934 = vpop.f32.mrf.mxu0
  %v3935 = vadd.f32 0.0, %v3934
  %v3936 = vpop.f32.mrf.mxu0
  %v3937 = vadd.f32 0.0, %v3936
  %3938 = vmatmul.bf16.gmra.mxu0 %v3918
  %v3939 = vpop.f32.mrf.mxu0
  %v3940 = vadd.f32 0.0, %v3939
  %v3941 = vpop.f32.mrf.mxu0
  %3942 = vdwg.mxu0
  %v3943 = vadd.f32 %v3554, %v3930
  %v3944 = vadd.f32 %v3556, %v3932
  %v3945 = vadd.f32 %v3559, %v3935
  %v3946 = vadd.f32 %v3561, %v3937
  %v3947 = vadd.f32 %v3564, %v3940
  %s3948 = scalar_lea.vmem %s6, 1920
  %v3949 = vld [vmem:[%s3948] sm:$0xff]
  %v3950 = vld [vmem:[%s3948 + $0x8] sm:$0xff]
  %v3951 = vld [vmem:[%s3948 + $0x10] sm:$0xff]
  %v3952 = vld [vmem:[%s3948 + $0x18] sm:$0xff]
  %v3953 = vld [vmem:[%s3948 + $0x20] sm:$0xff]
  %v3954 = vld [vmem:[%s3948 + $0x28] sm:$0xff]
  %v3955 = vld [vmem:[%s3948 + $0x30] sm:$0xff]
  %v3956 = vld [vmem:[%s3948 + $0x38] sm:$0xff]
  %v3957 = vld [vmem:[%s3948 + $0x40] sm:$0xff]
  %v3958 = vld [vmem:[%s3948 + $0x48] sm:$0xff]
  %v3959 = vld [vmem:[%s3948 + $0x50] sm:$0xff]
  %v3960 = vld [vmem:[%s3948 + $0x58] sm:$0xff]
  %v3961 = vld [vmem:[%s3948 + $0x60] sm:$0xff]
  %v3962 = vld [vmem:[%s3948 + $0x68] sm:$0xff]
  %v3963 = vld [vmem:[%s3948 + $0x70] sm:$0xff]
  %v3964 = vld [vmem:[%s3948 + $0x78] sm:$0xff]
  %v3965 = vpack.c.bf16 %v3950, %v3949
  %v3966 = vpack.c.bf16 %v3952, %v3951
  %v3967 = vpack.c.bf16 %v3954, %v3953
  %v3968 = vpack.c.bf16 %v3956, %v3955
  %v3969 = vpack.c.bf16 %v3958, %v3957
  %v3970 = vpack.c.bf16 %v3960, %v3959
  %v3971 = vpack.c.bf16 %v3962, %v3961
  %v3972 = vpack.c.bf16 %v3964, %v3963
  %s3973 = scalar_lea.vmem %s7, 15
  %v3974 = vld [vmem:[%s3973] sm:$0x1]
  %v3976 = vperm.slane %v3974, 0
  %3978 = vmatpush.bf16.msra.mxu0 %v3972
  %3979 = vmatpush.bf16.msra.mxu0 %v3971
  %3980 = vmatpush.bf16.msra.mxu0 %v3970
  %3981 = vmatpush.bf16.msra.mxu0 %v3969
  %3982 = vmatpush.bf16.msra.mxu0 %v3968
  %3983 = vmatpush.bf16.msra.mxu0 %v3967
  %3984 = vmatpush.bf16.msra.mxu0 %v3966
  %3985 = vmatpush.bf16.msra.mxu0 %v3965
  %3986 = vmatmul.bf16.gmra.mxu0 %v2829
  %v3987 = vpop.f32.mrf.mxu0
  %v3988 = vadd.f32 %v3976, %v3987
  %v3989 = vpop.f32.mrf.mxu0
  %v3990 = vadd.f32 %v3976, %v3989
  %3991 = vmatmul.bf16.gmra.mxu0 %v2830
  %v3992 = vpop.f32.mrf.mxu0
  %v3993 = vadd.f32 %v3976, %v3992
  %v3994 = vpop.f32.mrf.mxu0
  %v3995 = vadd.f32 %v3976, %v3994
  %3996 = vmatmul.bf16.gmra.mxu0 %v2831
  %v3997 = vpop.f32.mrf.mxu0
  %v3998 = vadd.f32 %v3976, %v3997
  %v3999 = vpop.f32.mrf.mxu0
  %4000 = vdwg.mxu0
  %s4001 = scalar_lea.vmem %s6, 2432
  %v4002 = vld [vmem:[%s4001] sm:$0xff]
  %v4003 = vld [vmem:[%s4001 + $0x8] sm:$0xff]
  %v4004 = vld [vmem:[%s4001 + $0x10] sm:$0xff]
  %v4005 = vld [vmem:[%s4001 + $0x18] sm:$0xff]
  %v4006 = vld [vmem:[%s4001 + $0x20] sm:$0xff]
  %v4007 = vld [vmem:[%s4001 + $0x28] sm:$0xff]
  %v4008 = vld [vmem:[%s4001 + $0x30] sm:$0xff]
  %v4009 = vld [vmem:[%s4001 + $0x38] sm:$0xff]
  %v4010 = vld [vmem:[%s4001 + $0x40] sm:$0xff]
  %v4011 = vld [vmem:[%s4001 + $0x48] sm:$0xff]
  %v4012 = vld [vmem:[%s4001 + $0x50] sm:$0xff]
  %v4013 = vld [vmem:[%s4001 + $0x58] sm:$0xff]
  %v4014 = vld [vmem:[%s4001 + $0x60] sm:$0xff]
  %v4015 = vld [vmem:[%s4001 + $0x68] sm:$0xff]
  %v4016 = vld [vmem:[%s4001 + $0x70] sm:$0xff]
  %v4017 = vld [vmem:[%s4001 + $0x78] sm:$0xff]
  %v4018 = vpack.c.bf16 %v4003, %v4002
  %v4019 = vpack.c.bf16 %v4005, %v4004
  %v4020 = vpack.c.bf16 %v4007, %v4006
  %v4021 = vpack.c.bf16 %v4009, %v4008
  %v4022 = vpack.c.bf16 %v4011, %v4010
  %v4023 = vpack.c.bf16 %v4013, %v4012
  %v4024 = vpack.c.bf16 %v4015, %v4014
  %v4025 = vpack.c.bf16 %v4017, %v4016
  %s4026 = scalar_lea.vmem %s7, 19
  %v4027 = vld [vmem:[%s4026] sm:$0x1]
  %v4029 = vperm.slane %v4027, 0
  %4031 = vmatpush.bf16.msra.mxu0 %v4025
  %4032 = vmatpush.bf16.msra.mxu0 %v4024
  %4033 = vmatpush.bf16.msra.mxu0 %v4023
  %4034 = vmatpush.bf16.msra.mxu0 %v4022
  %4035 = vmatpush.bf16.msra.mxu0 %v4021
  %4036 = vmatpush.bf16.msra.mxu0 %v4020
  %4037 = vmatpush.bf16.msra.mxu0 %v4019
  %4038 = vmatpush.bf16.msra.mxu0 %v4018
  %4039 = vmatmul.bf16.gmra.mxu0 %v2829
  %v4040 = vpop.f32.mrf.mxu0
  %v4041 = vadd.f32 %v4029, %v4040
  %v4042 = vpop.f32.mrf.mxu0
  %v4043 = vadd.f32 %v4029, %v4042
  %4044 = vmatmul.bf16.gmra.mxu0 %v2830
  %v4045 = vpop.f32.mrf.mxu0
  %v4046 = vadd.f32 %v4029, %v4045
  %v4047 = vpop.f32.mrf.mxu0
  %v4048 = vadd.f32 %v4029, %v4047
  %4049 = vmatmul.bf16.gmra.mxu0 %v2831
  %v4050 = vpop.f32.mrf.mxu0
  %v4051 = vadd.f32 %v4029, %v4050
  %v4052 = vpop.f32.mrf.mxu0
  %4053 = vdwg.mxu0
  %s4054 = scalar_lea.vmem %s6, 2944
  %v4055 = vld [vmem:[%s4054] sm:$0xff]
  %v4056 = vld [vmem:[%s4054 + $0x8] sm:$0xff]
  %v4057 = vld [vmem:[%s4054 + $0x10] sm:$0xff]
  %v4058 = vld [vmem:[%s4054 + $0x18] sm:$0xff]
  %v4059 = vld [vmem:[%s4054 + $0x20] sm:$0xff]
  %v4060 = vld [vmem:[%s4054 + $0x28] sm:$0xff]
  %v4061 = vld [vmem:[%s4054 + $0x30] sm:$0xff]
  %v4062 = vld [vmem:[%s4054 + $0x38] sm:$0xff]
  %v4063 = vld [vmem:[%s4054 + $0x40] sm:$0xff]
  %v4064 = vld [vmem:[%s4054 + $0x48] sm:$0xff]
  %v4065 = vld [vmem:[%s4054 + $0x50] sm:$0xff]
  %v4066 = vld [vmem:[%s4054 + $0x58] sm:$0xff]
  %v4067 = vld [vmem:[%s4054 + $0x60] sm:$0xff]
  %v4068 = vld [vmem:[%s4054 + $0x68] sm:$0xff]
  %v4069 = vld [vmem:[%s4054 + $0x70] sm:$0xff]
  %v4070 = vld [vmem:[%s4054 + $0x78] sm:$0xff]
  %v4071 = vpack.c.bf16 %v4056, %v4055
  %v4072 = vpack.c.bf16 %v4058, %v4057
  %v4073 = vpack.c.bf16 %v4060, %v4059
  %v4074 = vpack.c.bf16 %v4062, %v4061
  %v4075 = vpack.c.bf16 %v4064, %v4063
  %v4076 = vpack.c.bf16 %v4066, %v4065
  %v4077 = vpack.c.bf16 %v4068, %v4067
  %v4078 = vpack.c.bf16 %v4070, %v4069
  %s4079 = scalar_lea.vmem %s7, 23
  %v4080 = vld [vmem:[%s4079] sm:$0x1]
  %v4082 = vperm.slane %v4080, 0
  %4084 = vmatpush.bf16.msra.mxu0 %v4078
  %4085 = vmatpush.bf16.msra.mxu0 %v4077
  %4086 = vmatpush.bf16.msra.mxu0 %v4076
  %4087 = vmatpush.bf16.msra.mxu0 %v4075
  %4088 = vmatpush.bf16.msra.mxu0 %v4074
  %4089 = vmatpush.bf16.msra.mxu0 %v4073
  %4090 = vmatpush.bf16.msra.mxu0 %v4072
  %4091 = vmatpush.bf16.msra.mxu0 %v4071
  %4092 = vmatmul.bf16.gmra.mxu0 %v2829
  %v4093 = vpop.f32.mrf.mxu0
  %v4094 = vadd.f32 %v4082, %v4093
  %v4095 = vpop.f32.mrf.mxu0
  %v4096 = vadd.f32 %v4082, %v4095
  %4097 = vmatmul.bf16.gmra.mxu0 %v2830
  %v4098 = vpop.f32.mrf.mxu0
  %v4099 = vadd.f32 %v4082, %v4098
  %v4100 = vpop.f32.mrf.mxu0
  %v4101 = vadd.f32 %v4082, %v4100
  %4102 = vmatmul.bf16.gmra.mxu0 %v2831
  %v4103 = vpop.f32.mrf.mxu0
  %v4104 = vadd.f32 %v4082, %v4103
  %v4105 = vpop.f32.mrf.mxu0
  %4106 = vdwg.mxu0
  %4107 = vxpose.xlu0.b32.start [1/16] %v4041, 128
  %4108 = vxpose.xlu0.b32.cont [2/16] %v4043, 128
  %4109 = vxpose.xlu0.b32.cont [3/16] %v4046, 128
  %4110 = vxpose.xlu0.b32.cont [4/16] %v4048, 128
  %4111 = vxpose.xlu0.b32.cont [5/16] %v4051, 128
  %4112 = vxpose.xlu0.b32.cont [6/16] 0.0, 128
  %4113 = vxpose.xlu0.b32.cont [7/16] 0.0, 128
  %4114 = vxpose.xlu0.b32.cont [8/16] 0.0, 128
  %4115 = vxpose.xlu0.b32.cont [9/16] 0.0, 128
  %4116 = vxpose.xlu0.b32.cont [10/16] 0.0, 128
  %4117 = vxpose.xlu0.b32.cont [11/16] 0.0, 128
  %4118 = vxpose.xlu0.b32.cont [12/16] 0.0, 128
  %4119 = vxpose.xlu0.b32.cont [13/16] 0.0, 128
  %4120 = vxpose.xlu0.b32.cont [14/16] 0.0, 128
  %4121 = vxpose.xlu0.b32.cont [15/16] 0.0, 128
  %4122 = vxpose.xlu0.b32.end [16/16] 0.0, 128
  %v4123 = vpop.trf.xlu0
  %v4124 = vpop.trf.xlu0
  %v4125 = vpop.trf.xlu0
  %v4126 = vpop.trf.xlu0
  %v4127 = vpop.trf.xlu0
  %v4128 = vpop.trf.xlu0
  %v4129 = vpop.trf.xlu0
  %v4130 = vpop.trf.xlu0
  %v4131 = vpop.trf.xlu0
  %v4132 = vpop.trf.xlu0
  %v4133 = vpop.trf.xlu0
  %v4134 = vpop.trf.xlu0
  %v4135 = vpop.trf.xlu0
  %v4136 = vpop.trf.xlu0
  %v4137 = vpop.trf.xlu0
  %v4138 = vpop.trf.xlu0
  %v4139 = vpack.c.bf16 %v3990, %v3988
  %v4140 = vpack.c.bf16 %v3995, %v3993
  %v4141 = vpack.c.bf16 %v3998, %v3998
  %v4142 = vpack.c.bf16 %v4124, %v4123
  %v4143 = vpack.c.bf16 %v4126, %v4125
  %v4145 = vsel %vm405, %v4139, 0
  %v4148 = vsel %vm405, %v4140, 0
  %v4151 = vsel %vm405, %v4141, 0
  %4153 = vmatpush.bf16.msra.mxu0 0
  %4154 = vmatpush.bf16.msra.mxu0 0
  %4155 = vmatpush.bf16.msra.mxu0 0
  %4156 = vmatpush.bf16.msra.mxu0 0
  %4157 = vmatpush.bf16.msra.mxu0 0
  %4158 = vmatpush.bf16.msra.mxu0 0
  %4159 = vmatpush.bf16.msra.mxu0 %v4143
  %4160 = vmatpush.bf16.msra.mxu0 %v4142
  %4161 = vmatmul.bf16.gmra.mxu0 %v4145
  %v4162 = vpop.f32.mrf.mxu0
  %v4163 = vadd.f32 0.0, %v4162
  %v4164 = vpop.f32.mrf.mxu0
  %v4165 = vadd.f32 0.0, %v4164
  %4166 = vmatmul.bf16.gmra.mxu0 %v4148
  %v4167 = vpop.f32.mrf.mxu0
  %v4168 = vadd.f32 0.0, %v4167
  %v4169 = vpop.f32.mrf.mxu0
  %v4170 = vadd.f32 0.0, %v4169
  %4171 = vmatmul.bf16.gmra.mxu0 %v4151
  %v4172 = vpop.f32.mrf.mxu0
  %v4173 = vadd.f32 0.0, %v4172
  %v4174 = vpop.f32.mrf.mxu0
  %4175 = vdwg.mxu0
  %v4176 = vmul.f32 %v4163, 0.17677669
  %v4177 = vmul.f32 %v4165, 0.17677669
  %v4178 = vmul.f32 %v4168, 0.17677669
  %v4179 = vmul.f32 %v4170, 0.17677669
  %v4180 = vmul.f32 %v4173, 0.17677669
  %v4181 = vadd.f32 %v4176, %v78
  %v4182 = vadd.f32 %v4177, %v79
  %v4183 = vadd.f32 %v4178, %v80
  %v4184 = vadd.f32 %v4179, %v81
  %v4185 = vadd.f32 %v4180, %v82
  %v4186 = vsel %vm448, %v4181, -inf
  %4187 = vmax.xlane.f32.xlu0 %v4186
  %v4188 = vpop.xlane.xlu0 %4187
  %v4189 = vsel %vm448, %v4182, -inf
  %4190 = vmax.xlane.f32.xlu0 %v4189
  %v4191 = vpop.xlane.xlu0 %4190
  %v4192 = vsel %vm448, %v4183, -inf
  %4193 = vmax.xlane.f32.xlu0 %v4192
  %v4194 = vpop.xlane.xlu0 %4193
  %v4195 = vsel %vm448, %v4184, -inf
  %4196 = vmax.xlane.f32.xlu0 %v4195
  %v4197 = vpop.xlane.xlu0 %4196
  %v4198 = vsel %vm448, %v4185, -inf
  %4199 = vmax.xlane.f32.xlu0 %v4198
  %v4200 = vpop.xlane.xlu0 %4199
  %v4201 = vsub.f32 %v4181, %v4188
  %v4202 = vsub.f32 %v4182, %v4191
  %v4203 = vsub.f32 %v4183, %v4194
  %v4204 = vsub.f32 %v4184, %v4197
  %v4205 = vsub.f32 %v4185, %v4200
  %v4206 = vmul.f32 %v4201, 1.442695
  %v4207 = vpow.pop %v4206
  %v4208 = vmul.f32 %v4202, 1.442695
  %v4209 = vpow.pop %v4208
  %v4210 = vmul.f32 %v4203, 1.442695
  %v4211 = vpow.pop %v4210
  %v4212 = vmul.f32 %v4204, 1.442695
  %v4213 = vpow.pop %v4212
  %v4214 = vmul.f32 %v4205, 1.442695
  %v4215 = vpow.pop %v4214
  %v4216 = vsel %vm448, %v4207, 0.0
  %4217 = vadd.xlane.f32.xlu0 %v4216
  %v4218 = vpop.xlane.xlu0 %4217
  %v4219 = vsel %vm448, %v4209, 0.0
  %4220 = vadd.xlane.f32.xlu0 %v4219
  %v4221 = vpop.xlane.xlu0 %4220
  %v4222 = vsel %vm448, %v4211, 0.0
  %4223 = vadd.xlane.f32.xlu0 %v4222
  %v4224 = vpop.xlane.xlu0 %4223
  %v4225 = vsel %vm448, %v4213, 0.0
  %4226 = vadd.xlane.f32.xlu0 %v4225
  %v4227 = vpop.xlane.xlu0 %4226
  %v4228 = vsel %vm448, %v4215, 0.0
  %4229 = vadd.xlane.f32.xlu0 %v4228
  %v4230 = vpop.xlane.xlu0 %4229
  %v4231 = vrcp.pop %v4218
  %v4232 = vrcp.pop %v4221
  %v4233 = vrcp.pop %v4224
  %v4234 = vrcp.pop %v4227
  %v4235 = vrcp.pop %v4230
  %v4236 = vmul.f32 %v4207, %v4231
  %v4237 = vmul.f32 %v4209, %v4232
  %v4238 = vmul.f32 %v4211, %v4233
  %v4239 = vmul.f32 %v4213, %v4234
  %v4240 = vmul.f32 %v4215, %v4235
  %v4241 = vpack.c.bf16 %v4237, %v4236
  %v4242 = vpack.c.bf16 %v4239, %v4238
  %v4243 = vpack.c.bf16 %v4240, %v4240
  %v4244 = vpack.c.bf16 %v4096, %v4094
  %v4245 = vpack.c.bf16 %v4101, %v4099
  %v4246 = vpack.c.bf16 %v4104, %v4104
  %v4248 = vsel %vm448, %v4241, 0
  %v4251 = vsel %vm448, %v4242, 0
  %v4254 = vsel %vm448, %v4243, 0
  %v4257 = vsel %vm519, %v4246, 0
  %4259 = vmatpush.bf16.msra.mxu0 0
  %4260 = vmatpush.bf16.msra.mxu0 0
  %4261 = vmatpush.bf16.msra.mxu0 0
  %4262 = vmatpush.bf16.msra.mxu0 0
  %4263 = vmatpush.bf16.msra.mxu0 0
  %4264 = vmatpush.bf16.msra.mxu0 %v4257
  %4265 = vmatpush.bf16.msra.mxu0 %v4245
  %4266 = vmatpush.bf16.msra.mxu0 %v4244
  %4267 = vmatmul.bf16.gmra.mxu0 %v4248
  %v4268 = vpop.f32.mrf.mxu0
  %v4269 = vadd.f32 0.0, %v4268
  %v4270 = vpop.f32.mrf.mxu0
  %v4271 = vadd.f32 0.0, %v4270
  %4272 = vmatmul.bf16.gmra.mxu0 %v4251
  %v4273 = vpop.f32.mrf.mxu0
  %v4274 = vadd.f32 0.0, %v4273
  %v4275 = vpop.f32.mrf.mxu0
  %v4276 = vadd.f32 0.0, %v4275
  %4277 = vmatmul.bf16.gmra.mxu0 %v4254
  %v4278 = vpop.f32.mrf.mxu0
  %v4279 = vadd.f32 0.0, %v4278
  %v4280 = vpop.f32.mrf.mxu0
  %4281 = vdwg.mxu0
  %s4282 = scalar_lea.vmem %s8, 224
  %v4283 = vld [vmem:[%s4282] sm:$0xff]
  %v4284 = vld [vmem:[%s4282 + $0x8] sm:$0xff]
  %v4285 = vld [vmem:[%s4282 + $0x10] sm:$0xff]
  %v4286 = vld [vmem:[%s4282 + $0x18] sm:$0xff]
  %v4287 = vpack.c.bf16 %v4271, %v4269
  %v4288 = vpack.c.bf16 %v4276, %v4274
  %v4289 = vpack.c.bf16 %v4279, %v4279
  %v4290 = vpack.c.bf16 %v4284, %v4283
  %v4291 = vpack.c.bf16 %v4286, %v4285
  %v4293 = vsel %vm405, %v4287, 0
  %v4296 = vsel %vm405, %v4288, 0
  %v4299 = vsel %vm405, %v4289, 0
  %4301 = vmatpush.bf16.msra.mxu0 0
  %4302 = vmatpush.bf16.msra.mxu0 0
  %4303 = vmatpush.bf16.msra.mxu0 0
  %4304 = vmatpush.bf16.msra.mxu0 0
  %4305 = vmatpush.bf16.msra.mxu0 0
  %4306 = vmatpush.bf16.msra.mxu0 0
  %4307 = vmatpush.bf16.msra.mxu0 %v4291
  %4308 = vmatpush.bf16.msra.mxu0 %v4290
  %4309 = vmatmul.bf16.gmra.mxu0 %v4293
  %v4310 = vpop.f32.mrf.mxu0
  %v4311 = vadd.f32 0.0, %v4310
  %v4312 = vpop.f32.mrf.mxu0
  %v4313 = vadd.f32 0.0, %v4312
  %4314 = vmatmul.bf16.gmra.mxu0 %v4296
  %v4315 = vpop.f32.mrf.mxu0
  %v4316 = vadd.f32 0.0, %v4315
  %v4317 = vpop.f32.mrf.mxu0
  %v4318 = vadd.f32 0.0, %v4317
  %4319 = vmatmul.bf16.gmra.mxu0 %v4299
  %v4320 = vpop.f32.mrf.mxu0
  %v4321 = vadd.f32 0.0, %v4320
  %v4322 = vpop.f32.mrf.mxu0
  %4323 = vdwg.mxu0
  %v4324 = vadd.f32 %v3943, %v4311
  %v4325 = vadd.f32 %v3944, %v4313
  %v4326 = vadd.f32 %v3945, %v4316
  %v4327 = vadd.f32 %v3946, %v4318
  %v4328 = vadd.f32 %v3947, %v4321
  %v4329 = vadd.f32 %v2687, %v4324
  %v4330 = vadd.f32 %v2688, %v4325
  %v4331 = vadd.f32 %v2689, %v4326
  %v4332 = vadd.f32 %v2690, %v4327
  %v4333 = vadd.f32 %v2691, %v4328
  %s4334 = scalar_lea.vmem %s9, 1
  %v4335 = vld [vmem:[%s4334] sm:$0x1]
  %v4337 = vperm.slane %v4335, 0
  %v4339 = vadd.f32 %v4329, %v4337
  %v4340 = vadd.f32 %v4330, %v4337
  %v4341 = vadd.f32 %v4331, %v4337
  %v4342 = vadd.f32 %v4332, %v4337
  %v4343 = vadd.f32 %v4333, %v4337
  %s4344 = scalar_lea.vmem %s10, 1
  %v4345 = vld [vmem:[%s4344] sm:$0x1]
  %s4346 = scalar_lea.vmem %s11, 1
  %v4347 = vld [vmem:[%s4346] sm:$0x1]
  %4348 = vadd.xlane.f32.xlu0 %v4339
  %v4349 = vpop.xlane.xlu0 %4348
  %4350 = vadd.xlane.f32.xlu0 %v4340
  %v4351 = vpop.xlane.xlu0 %4350
  %4352 = vadd.xlane.f32.xlu0 %v4341
  %v4353 = vpop.xlane.xlu0 %4352
  %4354 = vadd.xlane.f32.xlu0 %v4342
  %v4355 = vpop.xlane.xlu0 %4354
  %4356 = vadd.xlane.f32.xlu0 %v4343
  %v4357 = vpop.xlane.xlu0 %4356
  %v4358 = vmul.f32 %v4349, %v101
  %v4359 = vmul.f32 %v4351, %v101
  %v4360 = vmul.f32 %v4353, %v101
  %v4361 = vmul.f32 %v4355, %v101
  %v4362 = vmul.f32 %v4357, %v101
  %v4363 = vsub.f32 %v4339, %v4358
  %v4364 = vsub.f32 %v4340, %v4359
  %v4365 = vsub.f32 %v4341, %v4360
  %v4366 = vsub.f32 %v4342, %v4361
  %v4367 = vsub.f32 %v4343, %v4362
  %v4368 = vmul.f32 %v4363, %v4363
  %v4369 = vmul.f32 %v4364, %v4364
  %v4370 = vmul.f32 %v4365, %v4365
  %v4371 = vmul.f32 %v4366, %v4366
  %v4372 = vmul.f32 %v4367, %v4367
  %4373 = vadd.xlane.f32.xlu0 %v4368
  %v4374 = vpop.xlane.xlu0 %4373
  %4375 = vadd.xlane.f32.xlu0 %v4369
  %v4376 = vpop.xlane.xlu0 %4375
  %4377 = vadd.xlane.f32.xlu0 %v4370
  %v4378 = vpop.xlane.xlu0 %4377
  %4379 = vadd.xlane.f32.xlu0 %v4371
  %v4380 = vpop.xlane.xlu0 %4379
  %4381 = vadd.xlane.f32.xlu0 %v4372
  %v4382 = vpop.xlane.xlu0 %4381
  %v4383 = vmul.f32 %v4374, %v101
  %v4384 = vmul.f32 %v4376, %v101
  %v4385 = vmul.f32 %v4378, %v101
  %v4386 = vmul.f32 %v4380, %v101
  %v4387 = vmul.f32 %v4382, %v101
  %v4388 = vadd.f32 %v4383, 1e-05
  %v4389 = vadd.f32 %v4384, 1e-05
  %v4390 = vadd.f32 %v4385, 1e-05
  %v4391 = vadd.f32 %v4386, 1e-05
  %v4392 = vadd.f32 %v4387, 1e-05
  %v4393 = vrsqrt.pop %v4388
  %v4394 = vmul.f32 %v4393, %v4388
  %v4395 = vmul.f32 %v4394, %v4393
  %v4396 = vmul.f32 0.5, %v4395
  %v4397 = vsub.f32 1.5, %v4396
  %v4398 = vmul.f32 %v4393, %v4397
  %vm4399 = vweird.f32 %v4388
  %vm4400 = vweird.f32 %v4393
  %vm4401 = vmor %vm4399, %vm4400
  %v4402 = vsel %vm4401, %v4393, %v4398
  %v4403 = vrsqrt.pop %v4389
  %v4404 = vmul.f32 %v4403, %v4389
  %v4405 = vmul.f32 %v4404, %v4403
  %v4406 = vmul.f32 0.5, %v4405
  %v4407 = vsub.f32 1.5, %v4406
  %v4408 = vmul.f32 %v4403, %v4407
  %vm4409 = vweird.f32 %v4389
  %vm4410 = vweird.f32 %v4403
  %vm4411 = vmor %vm4409, %vm4410
  %v4412 = vsel %vm4411, %v4403, %v4408
  %v4413 = vrsqrt.pop %v4390
  %v4414 = vmul.f32 %v4413, %v4390
  %v4415 = vmul.f32 %v4414, %v4413
  %v4416 = vmul.f32 0.5, %v4415
  %v4417 = vsub.f32 1.5, %v4416
  %v4418 = vmul.f32 %v4413, %v4417
  %vm4419 = vweird.f32 %v4390
  %vm4420 = vweird.f32 %v4413
  %vm4421 = vmor %vm4419, %vm4420
  %v4422 = vsel %vm4421, %v4413, %v4418
  %v4423 = vrsqrt.pop %v4391
  %v4424 = vmul.f32 %v4423, %v4391
  %v4425 = vmul.f32 %v4424, %v4423
  %v4426 = vmul.f32 0.5, %v4425
  %v4427 = vsub.f32 1.5, %v4426
  %v4428 = vmul.f32 %v4423, %v4427
  %vm4429 = vweird.f32 %v4391
  %vm4430 = vweird.f32 %v4423
  %vm4431 = vmor %vm4429, %vm4430
  %v4432 = vsel %vm4431, %v4423, %v4428
  %v4433 = vrsqrt.pop %v4392
  %v4434 = vmul.f32 %v4433, %v4392
  %v4435 = vmul.f32 %v4434, %v4433
  %v4436 = vmul.f32 0.5, %v4435
  %v4437 = vsub.f32 1.5, %v4436
  %v4438 = vmul.f32 %v4433, %v4437
  %vm4439 = vweird.f32 %v4392
  %vm4440 = vweird.f32 %v4433
  %vm4441 = vmor %vm4439, %vm4440
  %v4442 = vsel %vm4441, %v4433, %v4438
  %v4443 = vmul.f32 %v4363, %v4402
  %v4444 = vmul.f32 %v4364, %v4412
  %v4445 = vmul.f32 %v4365, %v4422
  %v4446 = vmul.f32 %v4366, %v4432
  %v4447 = vmul.f32 %v4367, %v4442
  %v4449 = vperm.slane %v4345, 0
  %v4451 = vmul.f32 %v4443, %v4449
  %v4452 = vmul.f32 %v4444, %v4449
  %v4453 = vmul.f32 %v4445, %v4449
  %v4454 = vmul.f32 %v4446, %v4449
  %v4455 = vmul.f32 %v4447, %v4449
  %v4457 = vperm.slane %v4347, 0
  %v4459 = vadd.f32 %v4451, %v4457
  %v4460 = vadd.f32 %v4452, %v4457
  %v4461 = vadd.f32 %v4453, %v4457
  %v4462 = vadd.f32 %v4454, %v4457
  %v4463 = vadd.f32 %v4455, %v4457
  %s4464 = scalar_lea.vmem %s12, 512
  %v4465 = vld [vmem:[%s4464] sm:$0xff]
  %v4466 = vld [vmem:[%s4464 + $0x8] sm:$0xff]
  %v4467 = vld [vmem:[%s4464 + $0x10] sm:$0xff]
  %v4468 = vld [vmem:[%s4464 + $0x18] sm:$0xff]
  %v4469 = vld [vmem:[%s4464 + $0x20] sm:$0xff]
  %v4470 = vld [vmem:[%s4464 + $0x28] sm:$0xff]
  %v4471 = vld [vmem:[%s4464 + $0x30] sm:$0xff]
  %v4472 = vld [vmem:[%s4464 + $0x38] sm:$0xff]
  %v4473 = vld [vmem:[%s4464 + $0x40] sm:$0xff]
  %v4474 = vld [vmem:[%s4464 + $0x48] sm:$0xff]
  %v4475 = vld [vmem:[%s4464 + $0x50] sm:$0xff]
  %v4476 = vld [vmem:[%s4464 + $0x58] sm:$0xff]
  %v4477 = vld [vmem:[%s4464 + $0x60] sm:$0xff]
  %v4478 = vld [vmem:[%s4464 + $0x68] sm:$0xff]
  %v4479 = vld [vmem:[%s4464 + $0x70] sm:$0xff]
  %v4480 = vld [vmem:[%s4464 + $0x78] sm:$0xff]
  %v4481 = vld [vmem:[%s4464 + $0x80] sm:$0xff]
  %v4482 = vld [vmem:[%s4464 + $0x88] sm:$0xff]
  %v4483 = vld [vmem:[%s4464 + $0x90] sm:$0xff]
  %v4484 = vld [vmem:[%s4464 + $0x98] sm:$0xff]
  %v4485 = vld [vmem:[%s4464 + $0xa0] sm:$0xff]
  %v4486 = vld [vmem:[%s4464 + $0xa8] sm:$0xff]
  %v4487 = vld [vmem:[%s4464 + $0xb0] sm:$0xff]
  %v4488 = vld [vmem:[%s4464 + $0xb8] sm:$0xff]
  %v4489 = vld [vmem:[%s4464 + $0xc0] sm:$0xff]
  %v4490 = vld [vmem:[%s4464 + $0xc8] sm:$0xff]
  %v4491 = vld [vmem:[%s4464 + $0xd0] sm:$0xff]
  %v4492 = vld [vmem:[%s4464 + $0xd8] sm:$0xff]
  %v4493 = vld [vmem:[%s4464 + $0xe0] sm:$0xff]
  %v4494 = vld [vmem:[%s4464 + $0xe8] sm:$0xff]
  %v4495 = vld [vmem:[%s4464 + $0xf0] sm:$0xff]
  %v4496 = vld [vmem:[%s4464 + $0xf8] sm:$0xff]
  %v4497 = vld [vmem:[%s4464 + $0x100] sm:$0xff]
  %v4498 = vld [vmem:[%s4464 + $0x108] sm:$0xff]
  %v4499 = vld [vmem:[%s4464 + $0x110] sm:$0xff]
  %v4500 = vld [vmem:[%s4464 + $0x118] sm:$0xff]
  %v4501 = vld [vmem:[%s4464 + $0x120] sm:$0xff]
  %v4502 = vld [vmem:[%s4464 + $0x128] sm:$0xff]
  %v4503 = vld [vmem:[%s4464 + $0x130] sm:$0xff]
  %v4504 = vld [vmem:[%s4464 + $0x138] sm:$0xff]
  %v4505 = vld [vmem:[%s4464 + $0x140] sm:$0xff]
  %v4506 = vld [vmem:[%s4464 + $0x148] sm:$0xff]
  %v4507 = vld [vmem:[%s4464 + $0x150] sm:$0xff]
  %v4508 = vld [vmem:[%s4464 + $0x158] sm:$0xff]
  %v4509 = vld [vmem:[%s4464 + $0x160] sm:$0xff]
  %v4510 = vld [vmem:[%s4464 + $0x168] sm:$0xff]
  %v4511 = vld [vmem:[%s4464 + $0x170] sm:$0xff]
  %v4512 = vld [vmem:[%s4464 + $0x178] sm:$0xff]
  %v4513 = vld [vmem:[%s4464 + $0x180] sm:$0xff]
  %v4514 = vld [vmem:[%s4464 + $0x188] sm:$0xff]
  %v4515 = vld [vmem:[%s4464 + $0x190] sm:$0xff]
  %v4516 = vld [vmem:[%s4464 + $0x198] sm:$0xff]
  %v4517 = vld [vmem:[%s4464 + $0x1a0] sm:$0xff]
  %v4518 = vld [vmem:[%s4464 + $0x1a8] sm:$0xff]
  %v4519 = vld [vmem:[%s4464 + $0x1b0] sm:$0xff]
  %v4520 = vld [vmem:[%s4464 + $0x1b8] sm:$0xff]
  %v4521 = vld [vmem:[%s4464 + $0x1c0] sm:$0xff]
  %v4522 = vld [vmem:[%s4464 + $0x1c8] sm:$0xff]
  %v4523 = vld [vmem:[%s4464 + $0x1d0] sm:$0xff]
  %v4524 = vld [vmem:[%s4464 + $0x1d8] sm:$0xff]
  %v4525 = vld [vmem:[%s4464 + $0x1e0] sm:$0xff]
  %v4526 = vld [vmem:[%s4464 + $0x1e8] sm:$0xff]
  %v4527 = vld [vmem:[%s4464 + $0x1f0] sm:$0xff]
  %v4528 = vld [vmem:[%s4464 + $0x1f8] sm:$0xff]
  %v4529 = vpack.c.bf16 %v4460, %v4459
  %v4530 = vpack.c.bf16 %v4462, %v4461
  %v4531 = vpack.c.bf16 %v4463, %v4463
  %v4532 = vpack.c.bf16 %v4469, %v4465
  %v4533 = vpack.c.bf16 %v4470, %v4466
  %v4534 = vpack.c.bf16 %v4471, %v4467
  %v4535 = vpack.c.bf16 %v4472, %v4468
  %v4536 = vpack.c.bf16 %v4477, %v4473
  %v4537 = vpack.c.bf16 %v4478, %v4474
  %v4538 = vpack.c.bf16 %v4479, %v4475
  %v4539 = vpack.c.bf16 %v4480, %v4476
  %v4540 = vpack.c.bf16 %v4485, %v4481
  %v4541 = vpack.c.bf16 %v4486, %v4482
  %v4542 = vpack.c.bf16 %v4487, %v4483
  %v4543 = vpack.c.bf16 %v4488, %v4484
  %v4544 = vpack.c.bf16 %v4493, %v4489
  %v4545 = vpack.c.bf16 %v4494, %v4490
  %v4546 = vpack.c.bf16 %v4495, %v4491
  %v4547 = vpack.c.bf16 %v4496, %v4492
  %v4548 = vpack.c.bf16 %v4501, %v4497
  %v4549 = vpack.c.bf16 %v4502, %v4498
  %v4550 = vpack.c.bf16 %v4503, %v4499
  %v4551 = vpack.c.bf16 %v4504, %v4500
  %v4552 = vpack.c.bf16 %v4509, %v4505
  %v4553 = vpack.c.bf16 %v4510, %v4506
  %v4554 = vpack.c.bf16 %v4511, %v4507
  %v4555 = vpack.c.bf16 %v4512, %v4508
  %v4556 = vpack.c.bf16 %v4517, %v4513
  %v4557 = vpack.c.bf16 %v4518, %v4514
  %v4558 = vpack.c.bf16 %v4519, %v4515
  %v4559 = vpack.c.bf16 %v4520, %v4516
  %v4560 = vpack.c.bf16 %v4525, %v4521
  %v4561 = vpack.c.bf16 %v4526, %v4522
  %v4562 = vpack.c.bf16 %v4527, %v4523
  %v4563 = vpack.c.bf16 %v4528, %v4524
  %s4564 = scalar_lea.vmem %s13, 4
  %v4565 = vld [vmem:[%s4564] sm:$0xf]
  %v4567 = vperm.slane %v4565, 0
  %v4568 = vperm.slane %v4565, 1
  %v4569 = vperm.slane %v4565, 2
  %v4570 = vperm.slane %v4565, 3
  %4575 = vmatpush.bf16.msra.mxu0 %v4560
  %4576 = vmatpush.bf16.msra.mxu0 %v4556
  %4577 = vmatpush.bf16.msra.mxu0 %v4552
  %4578 = vmatpush.bf16.msra.mxu0 %v4548
  %4579 = vmatpush.bf16.msra.mxu0 %v4544
  %4580 = vmatpush.bf16.msra.mxu0 %v4540
  %4581 = vmatpush.bf16.msra.mxu0 %v4536
  %4582 = vmatpush.bf16.msra.mxu0 %v4532
  %4583 = vmatmul.bf16.gmra.mxu0 %v4529
  %v4584 = vpop.f32.mrf.mxu0
  %v4585 = vadd.f32 %v4567, %v4584
  %v4586 = vpop.f32.mrf.mxu0
  %v4587 = vadd.f32 %v4567, %v4586
  %4588 = vmatmul.bf16.gmra.mxu0 %v4530
  %v4589 = vpop.f32.mrf.mxu0
  %v4590 = vadd.f32 %v4567, %v4589
  %v4591 = vpop.f32.mrf.mxu0
  %v4592 = vadd.f32 %v4567, %v4591
  %4593 = vmatmul.bf16.gmra.mxu0 %v4531
  %v4594 = vpop.f32.mrf.mxu0
  %v4595 = vadd.f32 %v4567, %v4594
  %v4596 = vpop.f32.mrf.mxu0
  %4597 = vdwg.mxu0
  %4598 = vmatpush.bf16.msra.mxu0 %v4561
  %4599 = vmatpush.bf16.msra.mxu0 %v4557
  %4600 = vmatpush.bf16.msra.mxu0 %v4553
  %4601 = vmatpush.bf16.msra.mxu0 %v4549
  %4602 = vmatpush.bf16.msra.mxu0 %v4545
  %4603 = vmatpush.bf16.msra.mxu0 %v4541
  %4604 = vmatpush.bf16.msra.mxu0 %v4537
  %4605 = vmatpush.bf16.msra.mxu0 %v4533
  %4606 = vmatmul.bf16.gmra.mxu0 %v4529
  %v4607 = vpop.f32.mrf.mxu0
  %v4608 = vadd.f32 %v4568, %v4607
  %v4609 = vpop.f32.mrf.mxu0
  %v4610 = vadd.f32 %v4568, %v4609
  %4611 = vmatmul.bf16.gmra.mxu0 %v4530
  %v4612 = vpop.f32.mrf.mxu0
  %v4613 = vadd.f32 %v4568, %v4612
  %v4614 = vpop.f32.mrf.mxu0
  %v4615 = vadd.f32 %v4568, %v4614
  %4616 = vmatmul.bf16.gmra.mxu0 %v4531
  %v4617 = vpop.f32.mrf.mxu0
  %v4618 = vadd.f32 %v4568, %v4617
  %v4619 = vpop.f32.mrf.mxu0
  %4620 = vdwg.mxu0
  %4621 = vmatpush.bf16.msra.mxu0 %v4562
  %4622 = vmatpush.bf16.msra.mxu0 %v4558
  %4623 = vmatpush.bf16.msra.mxu0 %v4554
  %4624 = vmatpush.bf16.msra.mxu0 %v4550
  %4625 = vmatpush.bf16.msra.mxu0 %v4546
  %4626 = vmatpush.bf16.msra.mxu0 %v4542
  %4627 = vmatpush.bf16.msra.mxu0 %v4538
  %4628 = vmatpush.bf16.msra.mxu0 %v4534
  %4629 = vmatmul.bf16.gmra.mxu0 %v4529
  %v4630 = vpop.f32.mrf.mxu0
  %v4631 = vadd.f32 %v4569, %v4630
  %v4632 = vpop.f32.mrf.mxu0
  %v4633 = vadd.f32 %v4569, %v4632
  %4634 = vmatmul.bf16.gmra.mxu0 %v4530
  %v4635 = vpop.f32.mrf.mxu0
  %v4636 = vadd.f32 %v4569, %v4635
  %v4637 = vpop.f32.mrf.mxu0
  %v4638 = vadd.f32 %v4569, %v4637
  %4639 = vmatmul.bf16.gmra.mxu0 %v4531
  %v4640 = vpop.f32.mrf.mxu0
  %v4641 = vadd.f32 %v4569, %v4640
  %v4642 = vpop.f32.mrf.mxu0
  %4643 = vdwg.mxu0
  %4644 = vmatpush.bf16.msra.mxu0 %v4563
  %4645 = vmatpush.bf16.msra.mxu0 %v4559
  %4646 = vmatpush.bf16.msra.mxu0 %v4555
  %4647 = vmatpush.bf16.msra.mxu0 %v4551
  %4648 = vmatpush.bf16.msra.mxu0 %v4547
  %4649 = vmatpush.bf16.msra.mxu0 %v4543
  %4650 = vmatpush.bf16.msra.mxu0 %v4539
  %4651 = vmatpush.bf16.msra.mxu0 %v4535
  %4652 = vmatmul.bf16.gmra.mxu0 %v4529
  %v4653 = vpop.f32.mrf.mxu0
  %v4654 = vadd.f32 %v4570, %v4653
  %v4655 = vpop.f32.mrf.mxu0
  %v4656 = vadd.f32 %v4570, %v4655
  %4657 = vmatmul.bf16.gmra.mxu0 %v4530
  %v4658 = vpop.f32.mrf.mxu0
  %v4659 = vadd.f32 %v4570, %v4658
  %v4660 = vpop.f32.mrf.mxu0
  %v4661 = vadd.f32 %v4570, %v4660
  %4662 = vmatmul.bf16.gmra.mxu0 %v4531
  %v4663 = vpop.f32.mrf.mxu0
  %v4664 = vadd.f32 %v4570, %v4663
  %v4665 = vpop.f32.mrf.mxu0
  %4666 = vdwg.mxu0
  %v4667 = vmul.f32 %v4585, 1.702
  %v4668 = vmul.f32 %v4608, 1.702
  %v4669 = vmul.f32 %v4631, 1.702
  %v4670 = vmul.f32 %v4654, 1.702
  %v4671 = vmul.f32 %v4587, 1.702
  %v4672 = vmul.f32 %v4610, 1.702
  %v4673 = vmul.f32 %v4633, 1.702
  %v4674 = vmul.f32 %v4656, 1.702
  %v4675 = vmul.f32 %v4590, 1.702
  %v4676 = vmul.f32 %v4613, 1.702
  %v4677 = vmul.f32 %v4636, 1.702
  %v4678 = vmul.f32 %v4659, 1.702
  %v4679 = vmul.f32 %v4592, 1.702
  %v4680 = vmul.f32 %v4615, 1.702
  %v4681 = vmul.f32 %v4638, 1.702
  %v4682 = vmul.f32 %v4661, 1.702
  %v4683 = vmul.f32 %v4595, 1.702
  %v4684 = vmul.f32 %v4618, 1.702
  %v4685 = vmul.f32 %v4641, 1.702
  %v4686 = vmul.f32 %v4664, 1.702
  %v4687 = vxor.u32 %v4667, 2147483648
  %v4688 = vxor.u32 %v4668, 2147483648
  %v4689 = vxor.u32 %v4669, 2147483648
  %v4690 = vxor.u32 %v4670, 2147483648
  %v4691 = vxor.u32 %v4671, 2147483648
  %v4692 = vxor.u32 %v4672, 2147483648
  %v4693 = vxor.u32 %v4673, 2147483648
  %v4694 = vxor.u32 %v4674, 2147483648
  %v4695 = vxor.u32 %v4675, 2147483648
  %v4696 = vxor.u32 %v4676, 2147483648
  %v4697 = vxor.u32 %v4677, 2147483648
  %v4698 = vxor.u32 %v4678, 2147483648
  %v4699 = vxor.u32 %v4679, 2147483648
  %v4700 = vxor.u32 %v4680, 2147483648
  %v4701 = vxor.u32 %v4681, 2147483648
  %v4702 = vxor.u32 %v4682, 2147483648
  %v4703 = vxor.u32 %v4683, 2147483648
  %v4704 = vxor.u32 %v4684, 2147483648
  %v4705 = vxor.u32 %v4685, 2147483648
  %v4706 = vxor.u32 %v4686, 2147483648
  %v4707 = vmul.f32 %v4687, 1.442695
  %v4708 = vpow.pop %v4707
  %v4709 = vmul.f32 %v4688, 1.442695
  %v4710 = vpow.pop %v4709
  %v4711 = vmul.f32 %v4689, 1.442695
  %v4712 = vpow.pop %v4711
  %v4713 = vmul.f32 %v4690, 1.442695
  %v4714 = vpow.pop %v4713
  %v4715 = vmul.f32 %v4691, 1.442695
  %v4716 = vpow.pop %v4715
  %v4717 = vmul.f32 %v4692, 1.442695
  %v4718 = vpow.pop %v4717
  %v4719 = vmul.f32 %v4693, 1.442695
  %v4720 = vpow.pop %v4719
  %v4721 = vmul.f32 %v4694, 1.442695
  %v4722 = vpow.pop %v4721
  %v4723 = vmul.f32 %v4695, 1.442695
  %v4724 = vpow.pop %v4723
  %v4725 = vmul.f32 %v4696, 1.442695
  %v4726 = vpow.pop %v4725
  %v4727 = vmul.f32 %v4697, 1.442695
  %v4728 = vpow.pop %v4727
  %v4729 = vmul.f32 %v4698, 1.442695
  %v4730 = vpow.pop %v4729
  %v4731 = vmul.f32 %v4699, 1.442695
  %v4732 = vpow.pop %v4731
  %v4733 = vmul.f32 %v4700, 1.442695
  %v4734 = vpow.pop %v4733
  %v4735 = vmul.f32 %v4701, 1.442695
  %v4736 = vpow.pop %v4735
  %v4737 = vmul.f32 %v4702, 1.442695
  %v4738 = vpow.pop %v4737
  %v4739 = vmul.f32 %v4703, 1.442695
  %v4740 = vpow.pop %v4739
  %v4741 = vmul.f32 %v4704, 1.442695
  %v4742 = vpow.pop %v4741
  %v4743 = vmul.f32 %v4705, 1.442695
  %v4744 = vpow.pop %v4743
  %v4745 = vmul.f32 %v4706, 1.442695
  %v4746 = vpow.pop %v4745
  %v4747 = vadd.f32 %v4708, 1.0
  %v4748 = vadd.f32 %v4710, 1.0
  %v4749 = vadd.f32 %v4712, 1.0
  %v4750 = vadd.f32 %v4714, 1.0
  %v4751 = vadd.f32 %v4716, 1.0
  %v4752 = vadd.f32 %v4718, 1.0
  %v4753 = vadd.f32 %v4720, 1.0
  %v4754 = vadd.f32 %v4722, 1.0
  %v4755 = vadd.f32 %v4724, 1.0
  %v4756 = vadd.f32 %v4726, 1.0
  %v4757 = vadd.f32 %v4728, 1.0
  %v4758 = vadd.f32 %v4730, 1.0
  %v4759 = vadd.f32 %v4732, 1.0
  %v4760 = vadd.f32 %v4734, 1.0
  %v4761 = vadd.f32 %v4736, 1.0
  %v4762 = vadd.f32 %v4738, 1.0
  %v4763 = vadd.f32 %v4740, 1.0
  %v4764 = vadd.f32 %v4742, 1.0
  %v4765 = vadd.f32 %v4744, 1.0
  %v4766 = vadd.f32 %v4746, 1.0
  %v4767 = vrcp.pop %v4747
  %v4768 = vmul.f32 %v4747, %v4767
  %v4769 = vsub.f32 1.0, %v4768
  %v4770 = vmul.f32 %v4767, %v4769
  %v4771 = vadd.f32 %v4767, %v4770
  %vm4772 = vweird.f32 %v4747
  %vm4773 = vweird.f32 %v4767
  %vm4774 = vmor %vm4772, %vm4773
  %v4775 = vsel %vm4774, %v4767, %v4771
  %v4776 = vand.u32 2147483647, %v4747
  %vm4777 = vcmp.eq.f32.partialorder %v4776, 8.507059e+37
  %v4778 = vand.u32 %v4747, 2147483648
  %v4779 = vor.u32 1.1754944e-38, %v4778
  %v4780 = vsel %vm4777, %v4779, %v4775
  %v4781 = vmul.f32 1.0, %v4780
  %v4782 = vrcp.pop %v4748
  %v4783 = vmul.f32 %v4748, %v4782
  %v4784 = vsub.f32 1.0, %v4783
  %v4785 = vmul.f32 %v4782, %v4784
  %v4786 = vadd.f32 %v4782, %v4785
  %vm4787 = vweird.f32 %v4748
  %vm4788 = vweird.f32 %v4782
  %vm4789 = vmor %vm4787, %vm4788
  %v4790 = vsel %vm4789, %v4782, %v4786
  %v4791 = vand.u32 2147483647, %v4748
  %vm4792 = vcmp.eq.f32.partialorder %v4791, 8.507059e+37
  %v4793 = vand.u32 %v4748, 2147483648
  %v4794 = vor.u32 1.1754944e-38, %v4793
  %v4795 = vsel %vm4792, %v4794, %v4790
  %v4796 = vmul.f32 1.0, %v4795
  %v4797 = vrcp.pop %v4749
  %v4798 = vmul.f32 %v4749, %v4797
  %v4799 = vsub.f32 1.0, %v4798
  %v4800 = vmul.f32 %v4797, %v4799
  %v4801 = vadd.f32 %v4797, %v4800
  %vm4802 = vweird.f32 %v4749
  %vm4803 = vweird.f32 %v4797
  %vm4804 = vmor %vm4802, %vm4803
  %v4805 = vsel %vm4804, %v4797, %v4801
  %v4806 = vand.u32 2147483647, %v4749
  %vm4807 = vcmp.eq.f32.partialorder %v4806, 8.507059e+37
  %v4808 = vand.u32 %v4749, 2147483648
  %v4809 = vor.u32 1.1754944e-38, %v4808
  %v4810 = vsel %vm4807, %v4809, %v4805
  %v4811 = vmul.f32 1.0, %v4810
  %v4812 = vrcp.pop %v4750
  %v4813 = vmul.f32 %v4750, %v4812
  %v4814 = vsub.f32 1.0, %v4813
  %v4815 = vmul.f32 %v4812, %v4814
  %v4816 = vadd.f32 %v4812, %v4815
  %vm4817 = vweird.f32 %v4750
  %vm4818 = vweird.f32 %v4812
  %vm4819 = vmor %vm4817, %vm4818
  %v4820 = vsel %vm4819, %v4812, %v4816
  %v4821 = vand.u32 2147483647, %v4750
  %vm4822 = vcmp.eq.f32.partialorder %v4821, 8.507059e+37
  %v4823 = vand.u32 %v4750, 2147483648
  %v4824 = vor.u32 1.1754944e-38, %v4823
  %v4825 = vsel %vm4822, %v4824, %v4820
  %v4826 = vmul.f32 1.0, %v4825
  %v4827 = vrcp.pop %v4751
  %v4828 = vmul.f32 %v4751, %v4827
  %v4829 = vsub.f32 1.0, %v4828
  %v4830 = vmul.f32 %v4827, %v4829
  %v4831 = vadd.f32 %v4827, %v4830
  %vm4832 = vweird.f32 %v4751
  %vm4833 = vweird.f32 %v4827
  %vm4834 = vmor %vm4832, %vm4833
  %v4835 = vsel %vm4834, %v4827, %v4831
  %v4836 = vand.u32 2147483647, %v4751
  %vm4837 = vcmp.eq.f32.partialorder %v4836, 8.507059e+37
  %v4838 = vand.u32 %v4751, 2147483648
  %v4839 = vor.u32 1.1754944e-38, %v4838
  %v4840 = vsel %vm4837, %v4839, %v4835
  %v4841 = vmul.f32 1.0, %v4840
  %v4842 = vrcp.pop %v4752
  %v4843 = vmul.f32 %v4752, %v4842
  %v4844 = vsub.f32 1.0, %v4843
  %v4845 = vmul.f32 %v4842, %v4844
  %v4846 = vadd.f32 %v4842, %v4845
  %vm4847 = vweird.f32 %v4752
  %vm4848 = vweird.f32 %v4842
  %vm4849 = vmor %vm4847, %vm4848
  %v4850 = vsel %vm4849, %v4842, %v4846
  %v4851 = vand.u32 2147483647, %v4752
  %vm4852 = vcmp.eq.f32.partialorder %v4851, 8.507059e+37
  %v4853 = vand.u32 %v4752, 2147483648
  %v4854 = vor.u32 1.1754944e-38, %v4853
  %v4855 = vsel %vm4852, %v4854, %v4850
  %v4856 = vmul.f32 1.0, %v4855
  %v4857 = vrcp.pop %v4753
  %v4858 = vmul.f32 %v4753, %v4857
  %v4859 = vsub.f32 1.0, %v4858
  %v4860 = vmul.f32 %v4857, %v4859
  %v4861 = vadd.f32 %v4857, %v4860
  %vm4862 = vweird.f32 %v4753
  %vm4863 = vweird.f32 %v4857
  %vm4864 = vmor %vm4862, %vm4863
  %v4865 = vsel %vm4864, %v4857, %v4861
  %v4866 = vand.u32 2147483647, %v4753
  %vm4867 = vcmp.eq.f32.partialorder %v4866, 8.507059e+37
  %v4868 = vand.u32 %v4753, 2147483648
  %v4869 = vor.u32 1.1754944e-38, %v4868
  %v4870 = vsel %vm4867, %v4869, %v4865
  %v4871 = vmul.f32 1.0, %v4870
  %v4872 = vrcp.pop %v4754
  %v4873 = vmul.f32 %v4754, %v4872
  %v4874 = vsub.f32 1.0, %v4873
  %v4875 = vmul.f32 %v4872, %v4874
  %v4876 = vadd.f32 %v4872, %v4875
  %vm4877 = vweird.f32 %v4754
  %vm4878 = vweird.f32 %v4872
  %vm4879 = vmor %vm4877, %vm4878
  %v4880 = vsel %vm4879, %v4872, %v4876
  %v4881 = vand.u32 2147483647, %v4754
  %vm4882 = vcmp.eq.f32.partialorder %v4881, 8.507059e+37
  %v4883 = vand.u32 %v4754, 2147483648
  %v4884 = vor.u32 1.1754944e-38, %v4883
  %v4885 = vsel %vm4882, %v4884, %v4880
  %v4886 = vmul.f32 1.0, %v4885
  %v4887 = vrcp.pop %v4755
  %v4888 = vmul.f32 %v4755, %v4887
  %v4889 = vsub.f32 1.0, %v4888
  %v4890 = vmul.f32 %v4887, %v4889
  %v4891 = vadd.f32 %v4887, %v4890
  %vm4892 = vweird.f32 %v4755
  %vm4893 = vweird.f32 %v4887
  %vm4894 = vmor %vm4892, %vm4893
  %v4895 = vsel %vm4894, %v4887, %v4891
  %v4896 = vand.u32 2147483647, %v4755
  %vm4897 = vcmp.eq.f32.partialorder %v4896, 8.507059e+37
  %v4898 = vand.u32 %v4755, 2147483648
  %v4899 = vor.u32 1.1754944e-38, %v4898
  %v4900 = vsel %vm4897, %v4899, %v4895
  %v4901 = vmul.f32 1.0, %v4900
  %v4902 = vrcp.pop %v4756
  %v4903 = vmul.f32 %v4756, %v4902
  %v4904 = vsub.f32 1.0, %v4903
  %v4905 = vmul.f32 %v4902, %v4904
  %v4906 = vadd.f32 %v4902, %v4905
  %vm4907 = vweird.f32 %v4756
  %vm4908 = vweird.f32 %v4902
  %vm4909 = vmor %vm4907, %vm4908
  %v4910 = vsel %vm4909, %v4902, %v4906
  %v4911 = vand.u32 2147483647, %v4756
  %vm4912 = vcmp.eq.f32.partialorder %v4911, 8.507059e+37
  %v4913 = vand.u32 %v4756, 2147483648
  %v4914 = vor.u32 1.1754944e-38, %v4913
  %v4915 = vsel %vm4912, %v4914, %v4910
  %v4916 = vmul.f32 1.0, %v4915
  %v4917 = vrcp.pop %v4757
  %v4918 = vmul.f32 %v4757, %v4917
  %v4919 = vsub.f32 1.0, %v4918
  %v4920 = vmul.f32 %v4917, %v4919
  %v4921 = vadd.f32 %v4917, %v4920
  %vm4922 = vweird.f32 %v4757
  %vm4923 = vweird.f32 %v4917
  %vm4924 = vmor %vm4922, %vm4923
  %v4925 = vsel %vm4924, %v4917, %v4921
  %v4926 = vand.u32 2147483647, %v4757
  %vm4927 = vcmp.eq.f32.partialorder %v4926, 8.507059e+37
  %v4928 = vand.u32 %v4757, 2147483648
  %v4929 = vor.u32 1.1754944e-38, %v4928
  %v4930 = vsel %vm4927, %v4929, %v4925
  %v4931 = vmul.f32 1.0, %v4930
  %v4932 = vrcp.pop %v4758
  %v4933 = vmul.f32 %v4758, %v4932
  %v4934 = vsub.f32 1.0, %v4933
  %v4935 = vmul.f32 %v4932, %v4934
  %v4936 = vadd.f32 %v4932, %v4935
  %vm4937 = vweird.f32 %v4758
  %vm4938 = vweird.f32 %v4932
  %vm4939 = vmor %vm4937, %vm4938
  %v4940 = vsel %vm4939, %v4932, %v4936
  %v4941 = vand.u32 2147483647, %v4758
  %vm4942 = vcmp.eq.f32.partialorder %v4941, 8.507059e+37
  %v4943 = vand.u32 %v4758, 2147483648
  %v4944 = vor.u32 1.1754944e-38, %v4943
  %v4945 = vsel %vm4942, %v4944, %v4940
  %v4946 = vmul.f32 1.0, %v4945
  %v4947 = vrcp.pop %v4759
  %v4948 = vmul.f32 %v4759, %v4947
  %v4949 = vsub.f32 1.0, %v4948
  %v4950 = vmul.f32 %v4947, %v4949
  %v4951 = vadd.f32 %v4947, %v4950
  %vm4952 = vweird.f32 %v4759
  %vm4953 = vweird.f32 %v4947
  %vm4954 = vmor %vm4952, %vm4953
  %v4955 = vsel %vm4954, %v4947, %v4951
  %v4956 = vand.u32 2147483647, %v4759
  %vm4957 = vcmp.eq.f32.partialorder %v4956, 8.507059e+37
  %v4958 = vand.u32 %v4759, 2147483648
  %v4959 = vor.u32 1.1754944e-38, %v4958
  %v4960 = vsel %vm4957, %v4959, %v4955
  %v4961 = vmul.f32 1.0, %v4960
  %v4962 = vrcp.pop %v4760
  %v4963 = vmul.f32 %v4760, %v4962
  %v4964 = vsub.f32 1.0, %v4963
  %v4965 = vmul.f32 %v4962, %v4964
  %v4966 = vadd.f32 %v4962, %v4965
  %vm4967 = vweird.f32 %v4760
  %vm4968 = vweird.f32 %v4962
  %vm4969 = vmor %vm4967, %vm4968
  %v4970 = vsel %vm4969, %v4962, %v4966
  %v4971 = vand.u32 2147483647, %v4760
  %vm4972 = vcmp.eq.f32.partialorder %v4971, 8.507059e+37
  %v4973 = vand.u32 %v4760, 2147483648
  %v4974 = vor.u32 1.1754944e-38, %v4973
  %v4975 = vsel %vm4972, %v4974, %v4970
  %v4976 = vmul.f32 1.0, %v4975
  %v4977 = vrcp.pop %v4761
  %v4978 = vmul.f32 %v4761, %v4977
  %v4979 = vsub.f32 1.0, %v4978
  %v4980 = vmul.f32 %v4977, %v4979
  %v4981 = vadd.f32 %v4977, %v4980
  %vm4982 = vweird.f32 %v4761
  %vm4983 = vweird.f32 %v4977
  %vm4984 = vmor %vm4982, %vm4983
  %v4985 = vsel %vm4984, %v4977, %v4981
  %v4986 = vand.u32 2147483647, %v4761
  %vm4987 = vcmp.eq.f32.partialorder %v4986, 8.507059e+37
  %v4988 = vand.u32 %v4761, 2147483648
  %v4989 = vor.u32 1.1754944e-38, %v4988
  %v4990 = vsel %vm4987, %v4989, %v4985
  %v4991 = vmul.f32 1.0, %v4990
  %v4992 = vrcp.pop %v4762
  %v4993 = vmul.f32 %v4762, %v4992
  %v4994 = vsub.f32 1.0, %v4993
  %v4995 = vmul.f32 %v4992, %v4994
  %v4996 = vadd.f32 %v4992, %v4995
  %vm4997 = vweird.f32 %v4762
  %vm4998 = vweird.f32 %v4992
  %vm4999 = vmor %vm4997, %vm4998
  %v5000 = vsel %vm4999, %v4992, %v4996
  %v5001 = vand.u32 2147483647, %v4762
  %vm5002 = vcmp.eq.f32.partialorder %v5001, 8.507059e+37
  %v5003 = vand.u32 %v4762, 2147483648
  %v5004 = vor.u32 1.1754944e-38, %v5003
  %v5005 = vsel %vm5002, %v5004, %v5000
  %v5006 = vmul.f32 1.0, %v5005
  %v5007 = vrcp.pop %v4763
  %v5008 = vmul.f32 %v4763, %v5007
  %v5009 = vsub.f32 1.0, %v5008
  %v5010 = vmul.f32 %v5007, %v5009
  %v5011 = vadd.f32 %v5007, %v5010
  %vm5012 = vweird.f32 %v4763
  %vm5013 = vweird.f32 %v5007
  %vm5014 = vmor %vm5012, %vm5013
  %v5015 = vsel %vm5014, %v5007, %v5011
  %v5016 = vand.u32 2147483647, %v4763
  %vm5017 = vcmp.eq.f32.partialorder %v5016, 8.507059e+37
  %v5018 = vand.u32 %v4763, 2147483648
  %v5019 = vor.u32 1.1754944e-38, %v5018
  %v5020 = vsel %vm5017, %v5019, %v5015
  %v5021 = vmul.f32 1.0, %v5020
  %v5022 = vrcp.pop %v4764
  %v5023 = vmul.f32 %v4764, %v5022
  %v5024 = vsub.f32 1.0, %v5023
  %v5025 = vmul.f32 %v5022, %v5024
  %v5026 = vadd.f32 %v5022, %v5025
  %vm5027 = vweird.f32 %v4764
  %vm5028 = vweird.f32 %v5022
  %vm5029 = vmor %vm5027, %vm5028
  %v5030 = vsel %vm5029, %v5022, %v5026
  %v5031 = vand.u32 2147483647, %v4764
  %vm5032 = vcmp.eq.f32.partialorder %v5031, 8.507059e+37
  %v5033 = vand.u32 %v4764, 2147483648
  %v5034 = vor.u32 1.1754944e-38, %v5033
  %v5035 = vsel %vm5032, %v5034, %v5030
  %v5036 = vmul.f32 1.0, %v5035
  %v5037 = vrcp.pop %v4765
  %v5038 = vmul.f32 %v4765, %v5037
  %v5039 = vsub.f32 1.0, %v5038
  %v5040 = vmul.f32 %v5037, %v5039
  %v5041 = vadd.f32 %v5037, %v5040
  %vm5042 = vweird.f32 %v4765
  %vm5043 = vweird.f32 %v5037
  %vm5044 = vmor %vm5042, %vm5043
  %v5045 = vsel %vm5044, %v5037, %v5041
  %v5046 = vand.u32 2147483647, %v4765
  %vm5047 = vcmp.eq.f32.partialorder %v5046, 8.507059e+37
  %v5048 = vand.u32 %v4765, 2147483648
  %v5049 = vor.u32 1.1754944e-38, %v5048
  %v5050 = vsel %vm5047, %v5049, %v5045
  %v5051 = vmul.f32 1.0, %v5050
  %v5052 = vrcp.pop %v4766
  %v5053 = vmul.f32 %v4766, %v5052
  %v5054 = vsub.f32 1.0, %v5053
  %v5055 = vmul.f32 %v5052, %v5054
  %v5056 = vadd.f32 %v5052, %v5055
  %vm5057 = vweird.f32 %v4766
  %vm5058 = vweird.f32 %v5052
  %vm5059 = vmor %vm5057, %vm5058
  %v5060 = vsel %vm5059, %v5052, %v5056
  %v5061 = vand.u32 2147483647, %v4766
  %vm5062 = vcmp.eq.f32.partialorder %v5061, 8.507059e+37
  %v5063 = vand.u32 %v4766, 2147483648
  %v5064 = vor.u32 1.1754944e-38, %v5063
  %v5065 = vsel %vm5062, %v5064, %v5060
  %v5066 = vmul.f32 1.0, %v5065
  %v5067 = vmul.f32 %v4585, %v4781
  %v5068 = vmul.f32 %v4608, %v4796
  %v5069 = vmul.f32 %v4631, %v4811
  %v5070 = vmul.f32 %v4654, %v4826
  %v5071 = vmul.f32 %v4587, %v4841
  %v5072 = vmul.f32 %v4610, %v4856
  %v5073 = vmul.f32 %v4633, %v4871
  %v5074 = vmul.f32 %v4656, %v4886
  %v5075 = vmul.f32 %v4590, %v4901
  %v5076 = vmul.f32 %v4613, %v4916
  %v5077 = vmul.f32 %v4636, %v4931
  %v5078 = vmul.f32 %v4659, %v4946
  %v5079 = vmul.f32 %v4592, %v4961
  %v5080 = vmul.f32 %v4615, %v4976
  %v5081 = vmul.f32 %v4638, %v4991
  %v5082 = vmul.f32 %v4661, %v5006
  %v5083 = vmul.f32 %v4595, %v5021
  %v5084 = vmul.f32 %v4618, %v5036
  %v5085 = vmul.f32 %v4641, %v5051
  %v5086 = vmul.f32 %v4664, %v5066
  %s5087 = scalar_lea.vmem %s14, 512
  %v5088 = vld [vmem:[%s5087] sm:$0xff]
  %v5089 = vld [vmem:[%s5087 + $0x8] sm:$0xff]
  %v5090 = vld [vmem:[%s5087 + $0x10] sm:$0xff]
  %v5091 = vld [vmem:[%s5087 + $0x18] sm:$0xff]
  %v5092 = vld [vmem:[%s5087 + $0x20] sm:$0xff]
  %v5093 = vld [vmem:[%s5087 + $0x28] sm:$0xff]
  %v5094 = vld [vmem:[%s5087 + $0x30] sm:$0xff]
  %v5095 = vld [vmem:[%s5087 + $0x38] sm:$0xff]
  %v5096 = vld [vmem:[%s5087 + $0x40] sm:$0xff]
  %v5097 = vld [vmem:[%s5087 + $0x48] sm:$0xff]
  %v5098 = vld [vmem:[%s5087 + $0x50] sm:$0xff]
  %v5099 = vld [vmem:[%s5087 + $0x58] sm:$0xff]
  %v5100 = vld [vmem:[%s5087 + $0x60] sm:$0xff]
  %v5101 = vld [vmem:[%s5087 + $0x68] sm:$0xff]
  %v5102 = vld [vmem:[%s5087 + $0x70] sm:$0xff]
  %v5103 = vld [vmem:[%s5087 + $0x78] sm:$0xff]
  %v5104 = vld [vmem:[%s5087 + $0x80] sm:$0xff]
  %v5105 = vld [vmem:[%s5087 + $0x88] sm:$0xff]
  %v5106 = vld [vmem:[%s5087 + $0x90] sm:$0xff]
  %v5107 = vld [vmem:[%s5087 + $0x98] sm:$0xff]
  %v5108 = vld [vmem:[%s5087 + $0xa0] sm:$0xff]
  %v5109 = vld [vmem:[%s5087 + $0xa8] sm:$0xff]
  %v5110 = vld [vmem:[%s5087 + $0xb0] sm:$0xff]
  %v5111 = vld [vmem:[%s5087 + $0xb8] sm:$0xff]
  %v5112 = vld [vmem:[%s5087 + $0xc0] sm:$0xff]
  %v5113 = vld [vmem:[%s5087 + $0xc8] sm:$0xff]
  %v5114 = vld [vmem:[%s5087 + $0xd0] sm:$0xff]
  %v5115 = vld [vmem:[%s5087 + $0xd8] sm:$0xff]
  %v5116 = vld [vmem:[%s5087 + $0xe0] sm:$0xff]
  %v5117 = vld [vmem:[%s5087 + $0xe8] sm:$0xff]
  %v5118 = vld [vmem:[%s5087 + $0xf0] sm:$0xff]
  %v5119 = vld [vmem:[%s5087 + $0xf8] sm:$0xff]
  %v5120 = vld [vmem:[%s5087 + $0x100] sm:$0xff]
  %v5121 = vld [vmem:[%s5087 + $0x108] sm:$0xff]
  %v5122 = vld [vmem:[%s5087 + $0x110] sm:$0xff]
  %v5123 = vld [vmem:[%s5087 + $0x118] sm:$0xff]
  %v5124 = vld [vmem:[%s5087 + $0x120] sm:$0xff]
  %v5125 = vld [vmem:[%s5087 + $0x128] sm:$0xff]
  %v5126 = vld [vmem:[%s5087 + $0x130] sm:$0xff]
  %v5127 = vld [vmem:[%s5087 + $0x138] sm:$0xff]
  %v5128 = vld [vmem:[%s5087 + $0x140] sm:$0xff]
  %v5129 = vld [vmem:[%s5087 + $0x148] sm:$0xff]
  %v5130 = vld [vmem:[%s5087 + $0x150] sm:$0xff]
  %v5131 = vld [vmem:[%s5087 + $0x158] sm:$0xff]
  %v5132 = vld [vmem:[%s5087 + $0x160] sm:$0xff]
  %v5133 = vld [vmem:[%s5087 + $0x168] sm:$0xff]
  %v5134 = vld [vmem:[%s5087 + $0x170] sm:$0xff]
  %v5135 = vld [vmem:[%s5087 + $0x178] sm:$0xff]
  %v5136 = vld [vmem:[%s5087 + $0x180] sm:$0xff]
  %v5137 = vld [vmem:[%s5087 + $0x188] sm:$0xff]
  %v5138 = vld [vmem:[%s5087 + $0x190] sm:$0xff]
  %v5139 = vld [vmem:[%s5087 + $0x198] sm:$0xff]
  %v5140 = vld [vmem:[%s5087 + $0x1a0] sm:$0xff]
  %v5141 = vld [vmem:[%s5087 + $0x1a8] sm:$0xff]
  %v5142 = vld [vmem:[%s5087 + $0x1b0] sm:$0xff]
  %v5143 = vld [vmem:[%s5087 + $0x1b8] sm:$0xff]
  %v5144 = vld [vmem:[%s5087 + $0x1c0] sm:$0xff]
  %v5145 = vld [vmem:[%s5087 + $0x1c8] sm:$0xff]
  %v5146 = vld [vmem:[%s5087 + $0x1d0] sm:$0xff]
  %v5147 = vld [vmem:[%s5087 + $0x1d8] sm:$0xff]
  %v5148 = vld [vmem:[%s5087 + $0x1e0] sm:$0xff]
  %v5149 = vld [vmem:[%s5087 + $0x1e8] sm:$0xff]
  %v5150 = vld [vmem:[%s5087 + $0x1f0] sm:$0xff]
  %v5151 = vld [vmem:[%s5087 + $0x1f8] sm:$0xff]
  %v5152 = vpack.c.bf16 %v5071, %v5067
  %v5153 = vpack.c.bf16 %v5072, %v5068
  %v5154 = vpack.c.bf16 %v5073, %v5069
  %v5155 = vpack.c.bf16 %v5074, %v5070
  %v5156 = vpack.c.bf16 %v5079, %v5075
  %v5157 = vpack.c.bf16 %v5080, %v5076
  %v5158 = vpack.c.bf16 %v5081, %v5077
  %v5159 = vpack.c.bf16 %v5082, %v5078
  %v5160 = vpack.c.bf16 %v5083, %v5083
  %v5161 = vpack.c.bf16 %v5084, %v5084
  %v5162 = vpack.c.bf16 %v5085, %v5085
  %v5163 = vpack.c.bf16 %v5086, %v5086
  %v5164 = vpack.c.bf16 %v5089, %v5088
  %v5165 = vpack.c.bf16 %v5091, %v5090
  %v5166 = vpack.c.bf16 %v5093, %v5092
  %v5167 = vpack.c.bf16 %v5095, %v5094
  %v5168 = vpack.c.bf16 %v5097, %v5096
  %v5169 = vpack.c.bf16 %v5099, %v5098
  %v5170 = vpack.c.bf16 %v5101, %v5100
  %v5171 = vpack.c.bf16 %v5103, %v5102
  %v5172 = vpack.c.bf16 %v5105, %v5104
  %v5173 = vpack.c.bf16 %v5107, %v5106
  %v5174 = vpack.c.bf16 %v5109, %v5108
  %v5175 = vpack.c.bf16 %v5111, %v5110
  %v5176 = vpack.c.bf16 %v5113, %v5112
  %v5177 = vpack.c.bf16 %v5115, %v5114
  %v5178 = vpack.c.bf16 %v5117, %v5116
  %v5179 = vpack.c.bf16 %v5119, %v5118
  %v5180 = vpack.c.bf16 %v5121, %v5120
  %v5181 = vpack.c.bf16 %v5123, %v5122
  %v5182 = vpack.c.bf16 %v5125, %v5124
  %v5183 = vpack.c.bf16 %v5127, %v5126
  %v5184 = vpack.c.bf16 %v5129, %v5128
  %v5185 = vpack.c.bf16 %v5131, %v5130
  %v5186 = vpack.c.bf16 %v5133, %v5132
  %v5187 = vpack.c.bf16 %v5135, %v5134
  %v5188 = vpack.c.bf16 %v5137, %v5136
  %v5189 = vpack.c.bf16 %v5139, %v5138
  %v5190 = vpack.c.bf16 %v5141, %v5140
  %v5191 = vpack.c.bf16 %v5143, %v5142
  %v5192 = vpack.c.bf16 %v5145, %v5144
  %v5193 = vpack.c.bf16 %v5147, %v5146
  %v5194 = vpack.c.bf16 %v5149, %v5148
  %v5195 = vpack.c.bf16 %v5151, %v5150
  %5196 = vmatpush.bf16.msra.mxu0 %v5171
  %5197 = vmatpush.bf16.msra.mxu0 %v5170
  %5198 = vmatpush.bf16.msra.mxu0 %v5169
  %5199 = vmatpush.bf16.msra.mxu0 %v5168
  %5200 = vmatpush.bf16.msra.mxu0 %v5167
  %5201 = vmatpush.bf16.msra.mxu0 %v5166
  %5202 = vmatpush.bf16.msra.mxu0 %v5165
  %5203 = vmatpush.bf16.msra.mxu0 %v5164
  %5204 = vmatmul.bf16.gmra.mxu0 %v5152
  %v5205 = vpop.f32.mrf.mxu0
  %v5206 = vadd.f32 0.0, %v5205
  %v5207 = vpop.f32.mrf.mxu0
  %v5208 = vadd.f32 0.0, %v5207
  %5209 = vmatmul.bf16.gmra.mxu0 %v5156
  %v5210 = vpop.f32.mrf.mxu0
  %v5211 = vadd.f32 0.0, %v5210
  %v5212 = vpop.f32.mrf.mxu0
  %v5213 = vadd.f32 0.0, %v5212
  %5214 = vmatmul.bf16.gmra.mxu0 %v5160
  %v5215 = vpop.f32.mrf.mxu0
  %v5216 = vadd.f32 0.0, %v5215
  %v5217 = vpop.f32.mrf.mxu0
  %5218 = vdwg.mxu0
  %5219 = vmatpush.bf16.msra.mxu0 %v5179
  %5220 = vmatpush.bf16.msra.mxu0 %v5178
  %5221 = vmatpush.bf16.msra.mxu0 %v5177
  %5222 = vmatpush.bf16.msra.mxu0 %v5176
  %5223 = vmatpush.bf16.msra.mxu0 %v5175
  %5224 = vmatpush.bf16.msra.mxu0 %v5174
  %5225 = vmatpush.bf16.msra.mxu0 %v5173
  %5226 = vmatpush.bf16.msra.mxu0 %v5172
  %5227 = vmatmul.bf16.gmra.mxu0 %v5153
  %v5228 = vpop.f32.mrf.mxu0
  %v5229 = vadd.f32 %v5206, %v5228
  %v5230 = vpop.f32.mrf.mxu0
  %v5231 = vadd.f32 %v5208, %v5230
  %5232 = vmatmul.bf16.gmra.mxu0 %v5157
  %v5233 = vpop.f32.mrf.mxu0
  %v5234 = vadd.f32 %v5211, %v5233
  %v5235 = vpop.f32.mrf.mxu0
  %v5236 = vadd.f32 %v5213, %v5235
  %5237 = vmatmul.bf16.gmra.mxu0 %v5161
  %v5238 = vpop.f32.mrf.mxu0
  %v5239 = vadd.f32 %v5216, %v5238
  %v5240 = vpop.f32.mrf.mxu0
  %5241 = vdwg.mxu0
  %5242 = vmatpush.bf16.msra.mxu0 %v5187
  %5243 = vmatpush.bf16.msra.mxu0 %v5186
  %5244 = vmatpush.bf16.msra.mxu0 %v5185
  %5245 = vmatpush.bf16.msra.mxu0 %v5184
  %5246 = vmatpush.bf16.msra.mxu0 %v5183
  %5247 = vmatpush.bf16.msra.mxu0 %v5182
  %5248 = vmatpush.bf16.msra.mxu0 %v5181
  %5249 = vmatpush.bf16.msra.mxu0 %v5180
  %5250 = vmatmul.bf16.gmra.mxu0 %v5154
  %v5251 = vpop.f32.mrf.mxu0
  %v5252 = vadd.f32 %v5229, %v5251
  %v5253 = vpop.f32.mrf.mxu0
  %v5254 = vadd.f32 %v5231, %v5253
  %5255 = vmatmul.bf16.gmra.mxu0 %v5158
  %v5256 = vpop.f32.mrf.mxu0
  %v5257 = vadd.f32 %v5234, %v5256
  %v5258 = vpop.f32.mrf.mxu0
  %v5259 = vadd.f32 %v5236, %v5258
  %5260 = vmatmul.bf16.gmra.mxu0 %v5162
  %v5261 = vpop.f32.mrf.mxu0
  %v5262 = vadd.f32 %v5239, %v5261
  %v5263 = vpop.f32.mrf.mxu0
  %5264 = vdwg.mxu0
  %5265 = vmatpush.bf16.msra.mxu0 %v5195
  %5266 = vmatpush.bf16.msra.mxu0 %v5194
  %5267 = vmatpush.bf16.msra.mxu0 %v5193
  %5268 = vmatpush.bf16.msra.mxu0 %v5192
  %5269 = vmatpush.bf16.msra.mxu0 %v5191
  %5270 = vmatpush.bf16.msra.mxu0 %v5190
  %5271 = vmatpush.bf16.msra.mxu0 %v5189
  %5272 = vmatpush.bf16.msra.mxu0 %v5188
  %5273 = vmatmul.bf16.gmra.mxu0 %v5155
  %v5274 = vpop.f32.mrf.mxu0
  %v5275 = vadd.f32 %v5252, %v5274
  %v5276 = vpop.f32.mrf.mxu0
  %v5277 = vadd.f32 %v5254, %v5276
  %5278 = vmatmul.bf16.gmra.mxu0 %v5159
  %v5279 = vpop.f32.mrf.mxu0
  %v5280 = vadd.f32 %v5257, %v5279
  %v5281 = vpop.f32.mrf.mxu0
  %v5282 = vadd.f32 %v5259, %v5281
  %5283 = vmatmul.bf16.gmra.mxu0 %v5163
  %v5284 = vpop.f32.mrf.mxu0
  %v5285 = vadd.f32 %v5262, %v5284
  %v5286 = vpop.f32.mrf.mxu0
  %5287 = vdwg.mxu0
  %v5288 = vadd.f32 %v4339, %v5275
  %v5289 = vadd.f32 %v4340, %v5277
  %v5290 = vadd.f32 %v4341, %v5280
  %v5291 = vadd.f32 %v4342, %v5282
  %v5292 = vadd.f32 %v4343, %v5285
  %s5293 = scalar_lea.vmem %s15, 1
  %v5294 = vld [vmem:[%s5293] sm:$0x1]
  %v5296 = vperm.slane %v5294, 0
  %v5298 = vadd.f32 %v5288, %v5296
  %v5299 = vadd.f32 %v5289, %v5296
  %v5300 = vadd.f32 %v5290, %v5296
  %v5301 = vadd.f32 %v5291, %v5296
  %v5302 = vadd.f32 %v5292, %v5296
  %v5303 = vld [vmem:[%s16] sm:$0x1]
  %v5304 = vld [vmem:[%s17] sm:$0x1]
  %5305 = vadd.xlane.f32.xlu0 %v5298
  %v5306 = vpop.xlane.xlu0 %5305
  %5307 = vadd.xlane.f32.xlu0 %v5299
  %v5308 = vpop.xlane.xlu0 %5307
  %5309 = vadd.xlane.f32.xlu0 %v5300
  %v5310 = vpop.xlane.xlu0 %5309
  %5311 = vadd.xlane.f32.xlu0 %v5301
  %v5312 = vpop.xlane.xlu0 %5311
  %5313 = vadd.xlane.f32.xlu0 %v5302
  %v5314 = vpop.xlane.xlu0 %5313
  %v5315 = vmul.f32 %v5306, %v101
  %v5316 = vmul.f32 %v5308, %v101
  %v5317 = vmul.f32 %v5310, %v101
  %v5318 = vmul.f32 %v5312, %v101
  %v5319 = vmul.f32 %v5314, %v101
  %v5320 = vsub.f32 %v5298, %v5315
  %v5321 = vsub.f32 %v5299, %v5316
  %v5322 = vsub.f32 %v5300, %v5317
  %v5323 = vsub.f32 %v5301, %v5318
  %v5324 = vsub.f32 %v5302, %v5319
  %v5325 = vmul.f32 %v5320, %v5320
  %v5326 = vmul.f32 %v5321, %v5321
  %v5327 = vmul.f32 %v5322, %v5322
  %v5328 = vmul.f32 %v5323, %v5323
  %v5329 = vmul.f32 %v5324, %v5324
  %5330 = vadd.xlane.f32.xlu0 %v5325
  %v5331 = vpop.xlane.xlu0 %5330
  %5332 = vadd.xlane.f32.xlu0 %v5326
  %v5333 = vpop.xlane.xlu0 %5332
  %5334 = vadd.xlane.f32.xlu0 %v5327
  %v5335 = vpop.xlane.xlu0 %5334
  %5336 = vadd.xlane.f32.xlu0 %v5328
  %v5337 = vpop.xlane.xlu0 %5336
  %5338 = vadd.xlane.f32.xlu0 %v5329
  %v5339 = vpop.xlane.xlu0 %5338
  %v5340 = vmul.f32 %v5331, %v101
  %v5341 = vmul.f32 %v5333, %v101
  %v5342 = vmul.f32 %v5335, %v101
  %v5343 = vmul.f32 %v5337, %v101
  %v5344 = vmul.f32 %v5339, %v101
  %v5345 = vadd.f32 %v5340, 1e-05
  %v5346 = vadd.f32 %v5341, 1e-05
  %v5347 = vadd.f32 %v5342, 1e-05
  %v5348 = vadd.f32 %v5343, 1e-05
  %v5349 = vadd.f32 %v5344, 1e-05
  %v5350 = vrsqrt.pop %v5345
  %v5351 = vmul.f32 %v5350, %v5345
  %v5352 = vmul.f32 %v5351, %v5350
  %v5353 = vmul.f32 0.5, %v5352
  %v5354 = vsub.f32 1.5, %v5353
  %v5355 = vmul.f32 %v5350, %v5354
  %vm5356 = vweird.f32 %v5345
  %vm5357 = vweird.f32 %v5350
  %vm5358 = vmor %vm5356, %vm5357
  %v5359 = vsel %vm5358, %v5350, %v5355
  %v5360 = vrsqrt.pop %v5346
  %v5361 = vmul.f32 %v5360, %v5346
  %v5362 = vmul.f32 %v5361, %v5360
  %v5363 = vmul.f32 0.5, %v5362
  %v5364 = vsub.f32 1.5, %v5363
  %v5365 = vmul.f32 %v5360, %v5364
  %vm5366 = vweird.f32 %v5346
  %vm5367 = vweird.f32 %v5360
  %vm5368 = vmor %vm5366, %vm5367
  %v5369 = vsel %vm5368, %v5360, %v5365
  %v5370 = vrsqrt.pop %v5347
  %v5371 = vmul.f32 %v5370, %v5347
  %v5372 = vmul.f32 %v5371, %v5370
  %v5373 = vmul.f32 0.5, %v5372
  %v5374 = vsub.f32 1.5, %v5373
  %v5375 = vmul.f32 %v5370, %v5374
  %vm5376 = vweird.f32 %v5347
  %vm5377 = vweird.f32 %v5370
  %vm5378 = vmor %vm5376, %vm5377
  %v5379 = vsel %vm5378, %v5370, %v5375
  %v5380 = vrsqrt.pop %v5348
  %v5381 = vmul.f32 %v5380, %v5348
  %v5382 = vmul.f32 %v5381, %v5380
  %v5383 = vmul.f32 0.5, %v5382
  %v5384 = vsub.f32 1.5, %v5383
  %v5385 = vmul.f32 %v5380, %v5384
  %vm5386 = vweird.f32 %v5348
  %vm5387 = vweird.f32 %v5380
  %vm5388 = vmor %vm5386, %vm5387
  %v5389 = vsel %vm5388, %v5380, %v5385
  %v5390 = vrsqrt.pop %v5349
  %v5391 = vmul.f32 %v5390, %v5349
  %v5392 = vmul.f32 %v5391, %v5390
  %v5393 = vmul.f32 0.5, %v5392
  %v5394 = vsub.f32 1.5, %v5393
  %v5395 = vmul.f32 %v5390, %v5394
  %vm5396 = vweird.f32 %v5349
  %vm5397 = vweird.f32 %v5390
  %vm5398 = vmor %vm5396, %vm5397
  %v5399 = vsel %vm5398, %v5390, %v5395
  %v5400 = vmul.f32 %v5320, %v5359
  %v5401 = vmul.f32 %v5321, %v5369
  %v5402 = vmul.f32 %v5322, %v5379
  %v5403 = vmul.f32 %v5323, %v5389
  %v5404 = vmul.f32 %v5324, %v5399
  %v5406 = vperm.slane %v5303, 0
  %v5408 = vmul.f32 %v5400, %v5406
  %v5409 = vmul.f32 %v5401, %v5406
  %v5410 = vmul.f32 %v5402, %v5406
  %v5411 = vmul.f32 %v5403, %v5406
  %v5412 = vmul.f32 %v5404, %v5406
  %v5414 = vperm.slane %v5304, 0
  %v5416 = vadd.f32 %v5408, %v5414
  %v5417 = vadd.f32 %v5409, %v5414
  %v5418 = vadd.f32 %v5410, %v5414
  %v5419 = vadd.f32 %v5411, %v5414
  %v5420 = vadd.f32 %v5412, %v5414
  %v5421 = vld [vmem:[%s3] sm:$0x1f]
  %v5423 = vsel %vm448, %v5421, 0
  %5425 = vmatpush.msra.mxu0 0.0
  %5426 = vmatpush.msra.mxu0 0.0
  %5427 = vmatpush.msra.mxu0 0.0
  %5428 = vmatpush.msra.mxu0 0.0
  %5429 = vmatpush.msra.mxu0 0.0
  %5430 = vmatpush.msra.mxu0 0.0
  %5431 = vmatpush.msra.mxu0 0.0
  %5432 = vmatpush.msra.mxu0 0.0
  %5433 = vmatpush.msra.mxu0 0.0
  %5434 = vmatpush.msra.mxu0 0.0
  %5435 = vmatpush.msra.mxu0 0.0
  %5436 = vmatpush.msra.mxu0 %v5420
  %5437 = vmatpush.msra.mxu0 %v5419
  %5438 = vmatpush.msra.mxu0 %v5418
  %5439 = vmatpush.msra.mxu0 %v5417
  %5440 = vmatpush.msra.mxu0 %v5416
  %5441 = vmatmul.f32.gmra.mxu0 %v5423
  %v5442 = vpop.f32.mrf.mxu0
  %v5443 = vadd.f32 0.0, %v5442
  %5444 = vdwg.mxu0
  %v5445 = vld [vmem:[%s18] sm:$0xff]
  %v5446 = vld [vmem:[%s18 + $0x8] sm:$0xff]
  %v5447 = vld [vmem:[%s18 + $0x10] sm:$0xff]
  %v5448 = vld [vmem:[%s18 + $0x18] sm:$0xff]
  %v5449 = vld [vmem:[%s18 + $0x20] sm:$0xff]
  %v5450 = vld [vmem:[%s18 + $0x28] sm:$0xff]
  %v5451 = vld [vmem:[%s18 + $0x30] sm:$0xff]
  %v5452 = vld [vmem:[%s18 + $0x38] sm:$0xff]
  %v5453 = vld [vmem:[%s18 + $0x40] sm:$0xff]
  %v5454 = vld [vmem:[%s18 + $0x48] sm:$0xff]
  %v5455 = vld [vmem:[%s18 + $0x50] sm:$0xff]
  %v5456 = vld [vmem:[%s18 + $0x58] sm:$0xff]
  %v5457 = vld [vmem:[%s18 + $0x60] sm:$0xff]
  %v5458 = vld [vmem:[%s18 + $0x68] sm:$0xff]
  %v5459 = vld [vmem:[%s18 + $0x70] sm:$0xff]
  %v5460 = vld [vmem:[%s18 + $0x78] sm:$0xff]
  %v5461 = vpack.c.bf16 %v5443, %v5443
  %v5462 = vpack.c.bf16 %v5446, %v5445
  %v5463 = vpack.c.bf16 %v5448, %v5447
  %v5464 = vpack.c.bf16 %v5450, %v5449
  %v5465 = vpack.c.bf16 %v5452, %v5451
  %v5466 = vpack.c.bf16 %v5454, %v5453
  %v5467 = vpack.c.bf16 %v5456, %v5455
  %v5468 = vpack.c.bf16 %v5458, %v5457
  %v5469 = vpack.c.bf16 %v5460, %v5459
  %5470 = vmatpush.bf16.msra.mxu0 %v5469
  %5471 = vmatpush.bf16.msra.mxu0 %v5468
  %5472 = vmatpush.bf16.msra.mxu0 %v5467
  %5473 = vmatpush.bf16.msra.mxu0 %v5466
  %5474 = vmatpush.bf16.msra.mxu0 %v5465
  %5475 = vmatpush.bf16.msra.mxu0 %v5464
  %5476 = vmatpush.bf16.msra.mxu0 %v5463
  %5477 = vmatpush.bf16.msra.mxu0 %v5462
  %5478 = vmatmul.bf16.gmra.mxu0 %v5461
  %v5479 = vpop.f32.mrf.mxu0
  %v5480 = vadd.f32 0.0, %v5479
  %v5481 = vpop.f32.mrf.mxu0
  %5482 = vdwg.mxu0
  %v5483 = vmul.f32 %v5480, %v5480
  %vm5484 = vcmask 1044480
  %v5485 = vsel %vm5484, %v5483, 0.0
  %5486 = vadd.xlane.f32.xlu0 %v5485
  %v5487 = vpop.xlane.xlu0 %5486
  %v5488 = vadd.f32 %v5487, 1e-12
  %v5489 = vrsqrt.pop %v5488
  %v5490 = vmul.f32 %v5489, %v5488
  %v5491 = vmul.f32 %v5490, %v5489
  %v5492 = vmul.f32 0.5, %v5491
  %v5493 = vsub.f32 1.5, %v5492
  %v5494 = vmul.f32 %v5489, %v5493
  %vm5495 = vweird.f32 %v5488
  %vm5496 = vweird.f32 %v5489
  %vm5497 = vmor %vm5495, %vm5496
  %v5498 = vsel %vm5497, %v5489, %v5494
  %v5499 = vmul.f32 %v5480, %v5498
  %5500 = vst [vmem:[%s19] sm:$0x1f] %v5499
  // Predicated region
  $region78: #{ordinalclip_forward.2} parent=0 // pred_check
    _
  $region79: #{ordinalclip_forward.2} parent=0 // pred_check_branch
    %5502 = sbr.rel (0) target = $region81
  $region80: #{ordinalclip_forward.2} parent=0 // pred_region
    _
  $region81: #{ordinalclip_forward.2} parent=0 // pred_fallthru
    _
  // Predicated region
  $region82: #{ordinalclip_forward.2} parent=0 // pred_check
    _
  $region83: #{ordinalclip_forward.2} parent=0 // pred_check_branch
    %5504 = sbr.rel (0) target = $region85
  $region84: #{ordinalclip_forward.2} parent=0 // pred_region
    _
  $region85: #{ordinalclip_forward.2} parent=0 // pred_fallthru
    _

</llo_original>
